<compile_context>
chip_gen: v7x
topology: tpu7x:2x2x1
jax: 0.10.0
libtpu: 0.0.40
codegen_flags: <defaults>
</compile_context>

<pallas_src>
import jax
import jax.numpy as jnp
from jax.experimental import pallas as pl
from jax.experimental.pallas import tpu as pltpu


# ---------------------------------------------------------------------------
# Fused Pallas kernel: whole forward pass, single invocation, all in VMEM.
# ---------------------------------------------------------------------------
def _dqn_fused_kernel(x_ref, w1_ref, b1_ref, w2_ref, b2_ref, w3_ref, b3_ref,
                      wa_ref, ba_ref, wf1c0_ref, wf1c1_ref, bf1_ref,
                      wf2_ref, bf2_ref,
                      xval_ref, xact_ref,
                      pad2_ref, pad3_ref):
    B, Hp, Wp, cin1 = x_ref.shape
    H, W = Hp - 2, Wp - 2
    HW = H * W
    M = B * HW

    def conv3x3_relu(src_ref, cin, w_ref, b_ref, cout):
        """3x3 'same' conv + ReLU as 9 accumulating MXU dots.

        src_ref: (B, H+2, W+2, cin) zero-padded NHWC activation (VMEM).
        w_ref:   (9*cin, cout), rows ordered (ky, kx, cin).
        Returns  (B*H*W, cout) with rows in (b, h, w) order.
        """
        acc = jnp.zeros((M, cout), jnp.float32)
        for t in range(9):                       # static unroll: 9 taps
            ky, kx = t // 3, t % 3
            tap = src_ref[:, ky:ky + H, kx:kx + W, :]          # (B, H, W, cin)
            lhs = tap.reshape(M, cin)
            acc = acc + jnp.dot(lhs, w_ref[t * cin:(t + 1) * cin, :],
                                preferred_element_type=jnp.float32)
        return jnp.maximum(acc + b_ref[...], 0.0)

    # conv1: 5 (zero-padded to 8) -> 32
    y = conv3x3_relu(x_ref, cin1, w1_ref, b1_ref, 32)

    # conv2: 32 -> 64  (re-pad spatially inside VMEM scratch)
    pad2_ref[...] = jnp.zeros(pad2_ref.shape, pad2_ref.dtype)
    pad2_ref[:, 1:1 + H, 1:1 + W, :] = y.reshape(B, H, W, 32)
    y = conv3x3_relu(pad2_ref, 32, w2_ref, b2_ref, 64)

    # conv3: 64 -> 128
    pad3_ref[...] = jnp.zeros(pad3_ref.shape, pad3_ref.dtype)
    pad3_ref[:, 1:1 + H, 1:1 + W, :] = y.reshape(B, H, W, 64)
    y3 = conv3x3_relu(pad3_ref, 64, w3_ref, b3_ref, 128)        # (M, 128)

    # act_conv1: 1x1 conv (pure channel matmul), 128 -> 2, ReLU
    ya = jnp.maximum(
        jnp.dot(y3, wa_ref[...], preferred_element_type=jnp.float32) + ba_ref[...],
        0.0)                                                    # (M, 2)

    # ---- fc tail in "column" form: (actions/hidden on sublanes, batch on lanes).
    # Torch flattens the act_conv1 output channel-major; instead of reshaping /
    # transposing the lane-sparse (M, 2) tensor we split act_fc1's weight into
    # its two per-channel blocks and contract each against the per-batch
    # per-channel activation columns.
    ya0 = jnp.concatenate([ya[b * HW:(b + 1) * HW, 0:1] for b in range(B)],
                          axis=1)                               # (HW, B)
    ya1 = jnp.concatenate([ya[b * HW:(b + 1) * HW, 1:2] for b in range(B)],
                          axis=1)                               # (HW, B)
    h1 = (jnp.dot(wf1c0_ref[...], ya0, preferred_element_type=jnp.float32)
          + jnp.dot(wf1c1_ref[...], ya1, preferred_element_type=jnp.float32)
          + bf1_ref[...])
    h1 = jnp.maximum(h1, 0.0)                                   # (64, B)

    v = jnp.dot(wf2_ref[...], h1, preferred_element_type=jnp.float32) + bf2_ref[...]
    xval_ref[...] = v                                           # (A, B)

    # fused log_softmax over the action axis (axis 0 in column form)
    m = jnp.max(v, axis=0, keepdims=True)
    s = jnp.sum(jnp.exp(v - m), axis=0, keepdims=True)
    xact_ref[...] = v - m - jnp.log(s)


# ---------------------------------------------------------------------------
# Parameters: PyTorch layouts -> one-time relayout into kernel layout.
# ---------------------------------------------------------------------------
def init_torch_params(key, board_width, board_height):
    """Deterministic synthetic parameters in the exact PyTorch layouts."""
    num_actions = board_width * board_height
    ks = jax.random.split(key, 12)

    def w(k, shape):
        return 0.1 * jax.random.normal(k, shape, jnp.float32)

    return {
        "conv1":     {"weight": w(ks[0], (32, 5, 3, 3)),   "bias": w(ks[1], (32,))},
        "conv2":     {"weight": w(ks[2], (64, 32, 3, 3)),  "bias": w(ks[3], (64,))},
        "conv3":     {"weight": w(ks[4], (128, 64, 3, 3)), "bias": w(ks[5], (128,))},
        "act_conv1": {"weight": w(ks[6], (2, 128, 1, 1)),  "bias": w(ks[7], (2,))},
        "act_fc1":   {"weight": w(ks[8], (64, 2 * num_actions)), "bias": w(ks[9], (64,))},
        "act_fc2":   {"weight": w(ks[10], (num_actions, 64)),    "bias": w(ks[11], (num_actions,))},
    }


def prepare_params(torch_params, board_width, board_height):
    """One-time relayout of PyTorch-style weights into the fused-kernel layout."""
    hw = board_width * board_height

    def conv_taps(wt, cin_pad=None):
        # (Cout, Cin, 3, 3) -> (9*Cin', Cout), row order (ky, kx, cin).
        cout, cin, _, _ = wt.shape
        cin_p = cin if cin_pad is None else cin_pad
        w = jnp.transpose(wt, (2, 3, 1, 0))                    # (ky, kx, cin, cout)
        if cin_p != cin:
            w = jnp.pad(w, ((0, 0), (0, 0), (0, cin_p - cin), (0, 0)))
        return w.reshape(9 * cin_p, cout)

    return {
        "w1": conv_taps(torch_params["conv1"]["weight"], cin_pad=8),
        "b1": torch_params["conv1"]["bias"].reshape(1, -1),
        "w2": conv_taps(torch_params["conv2"]["weight"]),
        "b2": torch_params["conv2"]["bias"].reshape(1, -1),
        "w3": conv_taps(torch_params["conv3"]["weight"]),
        "b3": torch_params["conv3"]["bias"].reshape(1, -1),
        # 1x1 conv == channel matmul, stored (Cin, Cout)
        "wa": jnp.transpose(torch_params["act_conv1"]["weight"].reshape(2, 128)),
        "ba": torch_params["act_conv1"]["bias"].reshape(1, -1),
        # act_fc1 split into its two per-channel blocks (torch flatten order is
        # channel-major: columns [0:hw] belong to channel 0, [hw:2hw] to ch 1).
        "wf1c0": torch_params["act_fc1"]["weight"][:, :hw],
        "wf1c1": torch_params["act_fc1"]["weight"][:, hw:],
        "bf1": torch_params["act_fc1"]["bias"].reshape(-1, 1),
        "wf2": torch_params["act_fc2"]["weight"],              # (A, 64) torch layout
        "bf2": torch_params["act_fc2"]["bias"].reshape(-1, 1),
    }


# ---------------------------------------------------------------------------
# Forward pass wrapper (one pallas_call).
# ---------------------------------------------------------------------------
def dqn_forward(kparams, state_input_nchw):
    """Forward pass of DQN; returns (x_act, x_val) like the torch module."""
    B, C, H, W = state_input_nchw.shape
    num_actions = H * W
    cin_pad = 8  # conv1 input channels zero-padded 5 -> 8 (sublane multiple)

    x = jnp.transpose(state_input_nchw, (0, 2, 3, 1))              # NCHW -> NHWC
    x = jnp.pad(x, ((0, 0), (1, 1), (1, 1), (0, cin_pad - C)))     # (B, H+2, W+2, 8)

    xval_t, xact_t = pl.pallas_call(
        _dqn_fused_kernel,
        out_shape=(
            jax.ShapeDtypeStruct((num_actions, B), jnp.float32),   # x_val (column form)
            jax.ShapeDtypeStruct((num_actions, B), jnp.float32),   # x_act (column form)
        ),
        scratch_shapes=[
            pltpu.VMEM((B, H + 2, W + 2, 32), jnp.float32),        # padded conv2 input
            pltpu.VMEM((B, H + 2, W + 2, 64), jnp.float32),        # padded conv3 input
        ],
    )(x, kparams["w1"], kparams["b1"], kparams["w2"], kparams["b2"],
      kparams["w3"], kparams["b3"], kparams["wa"], kparams["ba"],
      kparams["wf1c0"], kparams["wf1c1"], kparams["bf1"],
      kparams["wf2"], kparams["bf2"])

    # tiny (A, B) -> (B, A) transposes of the two small outputs (fused by XLA)
    return xact_t.T, xval_t.T


# ---------------------------------------------------------------------------
# Pure-JAX reference (mirrors the PyTorch module exactly) for validation.
# ---------------------------------------------------------------------------
def dqn_reference(torch_params, state_input_nchw):
    P = jax.lax.Precision.HIGHEST

    def conv(x, w, b, pad):
        y = jax.lax.conv_general_dilated(
            x, w, window_strides=(1, 1), padding=[(pad, pad), (pad, pad)],
            dimension_numbers=("NCHW", "OIHW", "NCHW"), precision=P)
        return y + b.reshape(1, -1, 1, 1)

    x = jax.nn.relu(conv(state_input_nchw, torch_params["conv1"]["weight"],
                         torch_params["conv1"]["bias"], 1))
    x = jax.nn.relu(conv(x, torch_params["conv2"]["weight"],
                         torch_params["conv2"]["bias"], 1))
    x = jax.nn.relu(conv(x, torch_params["conv3"]["weight"],
                         torch_params["conv3"]["bias"], 1))
    xv = jax.nn.relu(conv(x, torch_params["act_conv1"]["weight"],
                          torch_params["act_conv1"]["bias"], 0))
    B = xv.shape[0]
    xv = xv.reshape(B, -1)                                     # torch NCHW flatten
    xv = jax.nn.relu(jnp.dot(xv, torch_params["act_fc1"]["weight"].T, precision=P)
                     + torch_params["act_fc1"]["bias"])
    x_val = (jnp.dot(xv, torch_params["act_fc2"]["weight"].T, precision=P)
             + torch_params["act_fc2"]["bias"])
    x_act = jax.nn.log_softmax(x_val, axis=1)
    return x_act, x_val


# ---------------------------------------------------------------------------
if __name__ == "__main__":
    board_width = board_height = 8
    batch = 2

    key = jax.random.PRNGKey(0)
    k_param, k_input = jax.random.split(key)

    torch_params = init_torch_params(k_param, board_width, board_height)
    kparams = prepare_params(torch_params, board_width, board_height)

    # PyTorch conv input layout NCHW: (batch, 5 planes, H, W)
    state_input = jax.random.normal(
        k_input, (batch, 5, board_height, board_width), jnp.float32)

    x_act, x_val = jax.jit(dqn_forward)(kparams, state_input)
    jax.block_until_ready((x_act, x_val))

    num_actions = board_width * board_height
    assert x_act.shape == (batch, num_actions)
    assert x_val.shape == (batch, num_actions)

    # log_softmax rows must sum to ~1 in probability space
    assert bool(jnp.all(jnp.abs(jnp.sum(jnp.exp(x_act), axis=1) - 1.0) < 1e-4))

    # match the pure-JAX reference of the PyTorch module
    ref_act, ref_val = jax.jit(dqn_reference)(torch_params, state_input)
    assert bool(jnp.max(jnp.abs(x_val - ref_val)) < 2e-2), "x_val mismatch vs reference"
    assert bool(jnp.max(jnp.abs(x_act - ref_act)) < 2e-2), "x_act mismatch vs reference"

    print("KERNEL_OK")
</pallas_src>

<mosaic_0001>
module attributes {stable_mosaic.version = 11 : i64} {
  func.func @_dqn_fused_kernel(%arg0: memref<2x10x10x8xf32, #tpu.memory_space<vmem>>, %arg1: memref<72x32xf32, #tpu.memory_space<vmem>>, %arg2: memref<1x32xf32, #tpu.memory_space<vmem>>, %arg3: memref<288x64xf32, #tpu.memory_space<vmem>>, %arg4: memref<1x64xf32, #tpu.memory_space<vmem>>, %arg5: memref<576x128xf32, #tpu.memory_space<vmem>>, %arg6: memref<1x128xf32, #tpu.memory_space<vmem>>, %arg7: memref<128x2xf32, #tpu.memory_space<vmem>>, %arg8: memref<1x2xf32, #tpu.memory_space<vmem>>, %arg9: memref<64x64xf32, #tpu.memory_space<vmem>>, %arg10: memref<64x64xf32, #tpu.memory_space<vmem>>, %arg11: memref<64x1xf32, #tpu.memory_space<vmem>>, %arg12: memref<64x64xf32, #tpu.memory_space<vmem>>, %arg13: memref<64x1xf32, #tpu.memory_space<vmem>>, %arg14: memref<64x2xf32, #tpu.memory_space<vmem>>, %arg15: memref<64x2xf32, #tpu.memory_space<vmem>>, %arg16: memref<2x10x10x32xf32, #tpu.memory_space<vmem>>, %arg17: memref<2x10x10x64xf32, #tpu.memory_space<vmem>>) attributes {dimension_semantics = [], scalar_prefetch = 0 : i64, scratch_operands = 2 : i64, tpu.core_type = #tpu.core_type<tc>} {
    %cst = arith.constant 0.000000e+00 : f32
    %0 = vector.broadcast %cst : f32 to vector<128x32xf32>
    %c0 = arith.constant 0 : index
    %c0_0 = arith.constant 0 : index
    %c0_1 = arith.constant 0 : index
    %c0_2 = arith.constant 0 : index
    %1 = vector.load %arg0[%c0, %c0_0, %c0_1, %c0_2] : memref<2x10x10x8xf32, #tpu.memory_space<vmem>>, vector<2x8x8x8xf32>
    %2 = vector.shape_cast %1 : vector<2x8x8x8xf32> to vector<128x8xf32>
    %c0_3 = arith.constant 0 : index
    %c0_4 = arith.constant 0 : index
    %3 = vector.load %arg1[%c0_3, %c0_4] : memref<72x32xf32, #tpu.memory_space<vmem>>, vector<8x32xf32>
    %cst_5 = arith.constant dense<0.000000e+00> : vector<128x32xf32>
    %4 = tpu.matmul %2, %3, %cst_5 {dimension_numbers = #tpu.dot_dimension_numbers<[1], [0], [0], [1], [0, 0, 1, 1], [], []>} : vector<128x8xf32>, vector<8x32xf32>, vector<128x32xf32> -> vector<128x32xf32>
    %5 = arith.addf %0, %4 : vector<128x32xf32>
    %c0_6 = arith.constant 0 : index
    %c0_7 = arith.constant 0 : index
    %c1 = arith.constant 1 : index
    %c0_8 = arith.constant 0 : index
    %6 = vector.load %arg0[%c0_6, %c0_7, %c1, %c0_8] : memref<2x10x10x8xf32, #tpu.memory_space<vmem>>, vector<2x8x8x8xf32>
    %7 = vector.shape_cast %6 : vector<2x8x8x8xf32> to vector<128x8xf32>
    %c8 = arith.constant 8 : index
    %c0_9 = arith.constant 0 : index
    %8 = vector.load %arg1[%c8, %c0_9] : memref<72x32xf32, #tpu.memory_space<vmem>>, vector<8x32xf32>
    %cst_10 = arith.constant dense<0.000000e+00> : vector<128x32xf32>
    %9 = tpu.matmul %7, %8, %cst_10 {dimension_numbers = #tpu.dot_dimension_numbers<[1], [0], [0], [1], [0, 0, 1, 1], [], []>} : vector<128x8xf32>, vector<8x32xf32>, vector<128x32xf32> -> vector<128x32xf32>
    %10 = arith.addf %5, %9 : vector<128x32xf32>
    %c0_11 = arith.constant 0 : index
    %c0_12 = arith.constant 0 : index
    %c2 = arith.constant 2 : index
    %c0_13 = arith.constant 0 : index
    %11 = vector.load %arg0[%c0_11, %c0_12, %c2, %c0_13] : memref<2x10x10x8xf32, #tpu.memory_space<vmem>>, vector<2x8x8x8xf32>
    %12 = vector.shape_cast %11 : vector<2x8x8x8xf32> to vector<128x8xf32>
    %c16 = arith.constant 16 : index
    %c0_14 = arith.constant 0 : index
    %13 = vector.load %arg1[%c16, %c0_14] : memref<72x32xf32, #tpu.memory_space<vmem>>, vector<8x32xf32>
    %cst_15 = arith.constant dense<0.000000e+00> : vector<128x32xf32>
    %14 = tpu.matmul %12, %13, %cst_15 {dimension_numbers = #tpu.dot_dimension_numbers<[1], [0], [0], [1], [0, 0, 1, 1], [], []>} : vector<128x8xf32>, vector<8x32xf32>, vector<128x32xf32> -> vector<128x32xf32>
    %15 = arith.addf %10, %14 : vector<128x32xf32>
    %c0_16 = arith.constant 0 : index
    %c1_17 = arith.constant 1 : index
    %c0_18 = arith.constant 0 : index
    %c0_19 = arith.constant 0 : index
    %16 = vector.load %arg0[%c0_16, %c1_17, %c0_18, %c0_19] : memref<2x10x10x8xf32, #tpu.memory_space<vmem>>, vector<2x8x8x8xf32>
    %17 = vector.shape_cast %16 : vector<2x8x8x8xf32> to vector<128x8xf32>
    %c24 = arith.constant 24 : index
    %c0_20 = arith.constant 0 : index
    %18 = vector.load %arg1[%c24, %c0_20] : memref<72x32xf32, #tpu.memory_space<vmem>>, vector<8x32xf32>
    %cst_21 = arith.constant dense<0.000000e+00> : vector<128x32xf32>
    %19 = tpu.matmul %17, %18, %cst_21 {dimension_numbers = #tpu.dot_dimension_numbers<[1], [0], [0], [1], [0, 0, 1, 1], [], []>} : vector<128x8xf32>, vector<8x32xf32>, vector<128x32xf32> -> vector<128x32xf32>
    %20 = arith.addf %15, %19 : vector<128x32xf32>
    %c0_22 = arith.constant 0 : index
    %c1_23 = arith.constant 1 : index
    %c1_24 = arith.constant 1 : index
    %c0_25 = arith.constant 0 : index
    %21 = vector.load %arg0[%c0_22, %c1_23, %c1_24, %c0_25] : memref<2x10x10x8xf32, #tpu.memory_space<vmem>>, vector<2x8x8x8xf32>
    %22 = vector.shape_cast %21 : vector<2x8x8x8xf32> to vector<128x8xf32>
    %c32 = arith.constant 32 : index
    %c0_26 = arith.constant 0 : index
    %23 = vector.load %arg1[%c32, %c0_26] : memref<72x32xf32, #tpu.memory_space<vmem>>, vector<8x32xf32>
    %cst_27 = arith.constant dense<0.000000e+00> : vector<128x32xf32>
    %24 = tpu.matmul %22, %23, %cst_27 {dimension_numbers = #tpu.dot_dimension_numbers<[1], [0], [0], [1], [0, 0, 1, 1], [], []>} : vector<128x8xf32>, vector<8x32xf32>, vector<128x32xf32> -> vector<128x32xf32>
    %25 = arith.addf %20, %24 : vector<128x32xf32>
    %c0_28 = arith.constant 0 : index
    %c1_29 = arith.constant 1 : index
    %c2_30 = arith.constant 2 : index
    %c0_31 = arith.constant 0 : index
    %26 = vector.load %arg0[%c0_28, %c1_29, %c2_30, %c0_31] : memref<2x10x10x8xf32, #tpu.memory_space<vmem>>, vector<2x8x8x8xf32>
    %27 = vector.shape_cast %26 : vector<2x8x8x8xf32> to vector<128x8xf32>
    %c40 = arith.constant 40 : index
    %c0_32 = arith.constant 0 : index
    %28 = vector.load %arg1[%c40, %c0_32] : memref<72x32xf32, #tpu.memory_space<vmem>>, vector<8x32xf32>
    %cst_33 = arith.constant dense<0.000000e+00> : vector<128x32xf32>
    %29 = tpu.matmul %27, %28, %cst_33 {dimension_numbers = #tpu.dot_dimension_numbers<[1], [0], [0], [1], [0, 0, 1, 1], [], []>} : vector<128x8xf32>, vector<8x32xf32>, vector<128x32xf32> -> vector<128x32xf32>
    %30 = arith.addf %25, %29 : vector<128x32xf32>
    %c0_34 = arith.constant 0 : index
    %c2_35 = arith.constant 2 : index
    %c0_36 = arith.constant 0 : index
    %c0_37 = arith.constant 0 : index
    %31 = vector.load %arg0[%c0_34, %c2_35, %c0_36, %c0_37] : memref<2x10x10x8xf32, #tpu.memory_space<vmem>>, vector<2x8x8x8xf32>
    %32 = vector.shape_cast %31 : vector<2x8x8x8xf32> to vector<128x8xf32>
    %c48 = arith.constant 48 : index
    %c0_38 = arith.constant 0 : index
    %33 = vector.load %arg1[%c48, %c0_38] : memref<72x32xf32, #tpu.memory_space<vmem>>, vector<8x32xf32>
    %cst_39 = arith.constant dense<0.000000e+00> : vector<128x32xf32>
    %34 = tpu.matmul %32, %33, %cst_39 {dimension_numbers = #tpu.dot_dimension_numbers<[1], [0], [0], [1], [0, 0, 1, 1], [], []>} : vector<128x8xf32>, vector<8x32xf32>, vector<128x32xf32> -> vector<128x32xf32>
    %35 = arith.addf %30, %34 : vector<128x32xf32>
    %c0_40 = arith.constant 0 : index
    %c2_41 = arith.constant 2 : index
    %c1_42 = arith.constant 1 : index
    %c0_43 = arith.constant 0 : index
    %36 = vector.load %arg0[%c0_40, %c2_41, %c1_42, %c0_43] : memref<2x10x10x8xf32, #tpu.memory_space<vmem>>, vector<2x8x8x8xf32>
    %37 = vector.shape_cast %36 : vector<2x8x8x8xf32> to vector<128x8xf32>
    %c56 = arith.constant 56 : index
    %c0_44 = arith.constant 0 : index
    %38 = vector.load %arg1[%c56, %c0_44] : memref<72x32xf32, #tpu.memory_space<vmem>>, vector<8x32xf32>
    %cst_45 = arith.constant dense<0.000000e+00> : vector<128x32xf32>
    %39 = tpu.matmul %37, %38, %cst_45 {dimension_numbers = #tpu.dot_dimension_numbers<[1], [0], [0], [1], [0, 0, 1, 1], [], []>} : vector<128x8xf32>, vector<8x32xf32>, vector<128x32xf32> -> vector<128x32xf32>
    %40 = arith.addf %35, %39 : vector<128x32xf32>
    %c0_46 = arith.constant 0 : index
    %c2_47 = arith.constant 2 : index
    %c2_48 = arith.constant 2 : index
    %c0_49 = arith.constant 0 : index
    %41 = vector.load %arg0[%c0_46, %c2_47, %c2_48, %c0_49] : memref<2x10x10x8xf32, #tpu.memory_space<vmem>>, vector<2x8x8x8xf32>
    %42 = vector.shape_cast %41 : vector<2x8x8x8xf32> to vector<128x8xf32>
    %c64 = arith.constant 64 : index
    %c0_50 = arith.constant 0 : index
    %43 = vector.load %arg1[%c64, %c0_50] : memref<72x32xf32, #tpu.memory_space<vmem>>, vector<8x32xf32>
    %cst_51 = arith.constant dense<0.000000e+00> : vector<128x32xf32>
    %44 = tpu.matmul %42, %43, %cst_51 {dimension_numbers = #tpu.dot_dimension_numbers<[1], [0], [0], [1], [0, 0, 1, 1], [], []>} : vector<128x8xf32>, vector<8x32xf32>, vector<128x32xf32> -> vector<128x32xf32>
    %45 = arith.addf %40, %44 : vector<128x32xf32>
    %c0_52 = arith.constant 0 : index
    %c0_53 = arith.constant 0 : index
    %46 = vector.load %arg2[%c0_52, %c0_53] : memref<1x32xf32, #tpu.memory_space<vmem>>, vector<1x32xf32>
    %47 = vector.broadcast %46 : vector<1x32xf32> to vector<128x32xf32>
    %48 = arith.addf %45, %47 : vector<128x32xf32>
    %cst_54 = arith.constant 0.000000e+00 : f32
    %49 = vector.broadcast %cst_54 : f32 to vector<128x32xf32>
    %50 = arith.maximumf %48, %49 : vector<128x32xf32>
    %cst_55 = arith.constant 0.000000e+00 : f32
    %51 = vector.broadcast %cst_55 : f32 to vector<2x10x10x32xf32>
    %c0_56 = arith.constant 0 : index
    %c0_57 = arith.constant 0 : index
    %c0_58 = arith.constant 0 : index
    %c0_59 = arith.constant 0 : index
    %52 = vector.load %arg16[%c0_56, %c0_57, %c0_58, %c0_59] : memref<2x10x10x32xf32, #tpu.memory_space<vmem>>, vector<2x10x10x32xf32>
    tpu.vector_store %arg16[%c0_56, %c0_57, %c0_58, %c0_59], %51 {strides = array<i32>} : memref<2x10x10x32xf32, #tpu.memory_space<vmem>>, vector<2x10x10x32xf32>,
    %53 = vector.shape_cast %50 : vector<128x32xf32> to vector<2x8x8x32xf32>
    %c0_60 = arith.constant 0 : index
    %c1_61 = arith.constant 1 : index
    %c1_62 = arith.constant 1 : index
    %c0_63 = arith.constant 0 : index
    %54 = vector.load %arg16[%c0_60, %c1_61, %c1_62, %c0_63] : memref<2x10x10x32xf32, #tpu.memory_space<vmem>>, vector<2x8x8x32xf32>
    tpu.vector_store %arg16[%c0_60, %c1_61, %c1_62, %c0_63], %53 {strides = array<i32>} : memref<2x10x10x32xf32, #tpu.memory_space<vmem>>, vector<2x8x8x32xf32>,
    %cst_64 = arith.constant 0.000000e+00 : f32
    %55 = vector.broadcast %cst_64 : f32 to vector<128x64xf32>
    %c0_65 = arith.constant 0 : index
    %c0_66 = arith.constant 0 : index
    %c0_67 = arith.constant 0 : index
    %c0_68 = arith.constant 0 : index
    %56 = vector.load %arg16[%c0_65, %c0_66, %c0_67, %c0_68] : memref<2x10x10x32xf32, #tpu.memory_space<vmem>>, vector<2x8x8x32xf32>
    %57 = vector.shape_cast %56 : vector<2x8x8x32xf32> to vector<128x32xf32>
    %c0_69 = arith.constant 0 : index
    %c0_70 = arith.constant 0 : index
    %58 = vector.load %arg3[%c0_69, %c0_70] : memref<288x64xf32, #tpu.memory_space<vmem>>, vector<32x64xf32>
    %cst_71 = arith.constant dense<0.000000e+00> : vector<128x64xf32>
    %59 = tpu.matmul %57, %58, %cst_71 {dimension_numbers = #tpu.dot_dimension_numbers<[1], [0], [0], [1], [0, 0, 1, 1], [], []>} : vector<128x32xf32>, vector<32x64xf32>, vector<128x64xf32> -> vector<128x64xf32>
    %60 = arith.addf %55, %59 : vector<128x64xf32>
    %c0_72 = arith.constant 0 : index
    %c0_73 = arith.constant 0 : index
    %c1_74 = arith.constant 1 : index
    %c0_75 = arith.constant 0 : index
    %61 = vector.load %arg16[%c0_72, %c0_73, %c1_74, %c0_75] : memref<2x10x10x32xf32, #tpu.memory_space<vmem>>, vector<2x8x8x32xf32>
    %62 = vector.shape_cast %61 : vector<2x8x8x32xf32> to vector<128x32xf32>
    %c32_76 = arith.constant 32 : index
    %c0_77 = arith.constant 0 : index
    %63 = vector.load %arg3[%c32_76, %c0_77] : memref<288x64xf32, #tpu.memory_space<vmem>>, vector<32x64xf32>
    %cst_78 = arith.constant dense<0.000000e+00> : vector<128x64xf32>
    %64 = tpu.matmul %62, %63, %cst_78 {dimension_numbers = #tpu.dot_dimension_numbers<[1], [0], [0], [1], [0, 0, 1, 1], [], []>} : vector<128x32xf32>, vector<32x64xf32>, vector<128x64xf32> -> vector<128x64xf32>
    %65 = arith.addf %60, %64 : vector<128x64xf32>
    %c0_79 = arith.constant 0 : index
    %c0_80 = arith.constant 0 : index
    %c2_81 = arith.constant 2 : index
    %c0_82 = arith.constant 0 : index
    %66 = vector.load %arg16[%c0_79, %c0_80, %c2_81, %c0_82] : memref<2x10x10x32xf32, #tpu.memory_space<vmem>>, vector<2x8x8x32xf32>
    %67 = vector.shape_cast %66 : vector<2x8x8x32xf32> to vector<128x32xf32>
    %c64_83 = arith.constant 64 : index
    %c0_84 = arith.constant 0 : index
    %68 = vector.load %arg3[%c64_83, %c0_84] : memref<288x64xf32, #tpu.memory_space<vmem>>, vector<32x64xf32>
    %cst_85 = arith.constant dense<0.000000e+00> : vector<128x64xf32>
    %69 = tpu.matmul %67, %68, %cst_85 {dimension_numbers = #tpu.dot_dimension_numbers<[1], [0], [0], [1], [0, 0, 1, 1], [], []>} : vector<128x32xf32>, vector<32x64xf32>, vector<128x64xf32> -> vector<128x64xf32>
    %70 = arith.addf %65, %69 : vector<128x64xf32>
    %c0_86 = arith.constant 0 : index
    %c1_87 = arith.constant 1 : index
    %c0_88 = arith.constant 0 : index
    %c0_89 = arith.constant 0 : index
    %71 = vector.load %arg16[%c0_86, %c1_87, %c0_88, %c0_89] : memref<2x10x10x32xf32, #tpu.memory_space<vmem>>, vector<2x8x8x32xf32>
    %72 = vector.shape_cast %71 : vector<2x8x8x32xf32> to vector<128x32xf32>
    %c96 = arith.constant 96 : index
    %c0_90 = arith.constant 0 : index
    %73 = vector.load %arg3[%c96, %c0_90] : memref<288x64xf32, #tpu.memory_space<vmem>>, vector<32x64xf32>
    %cst_91 = arith.constant dense<0.000000e+00> : vector<128x64xf32>
    %74 = tpu.matmul %72, %73, %cst_91 {dimension_numbers = #tpu.dot_dimension_numbers<[1], [0], [0], [1], [0, 0, 1, 1], [], []>} : vector<128x32xf32>, vector<32x64xf32>, vector<128x64xf32> -> vector<128x64xf32>
    %75 = arith.addf %70, %74 : vector<128x64xf32>
    %c0_92 = arith.constant 0 : index
    %c1_93 = arith.constant 1 : index
    %c1_94 = arith.constant 1 : index
    %c0_95 = arith.constant 0 : index
    %76 = vector.load %arg16[%c0_92, %c1_93, %c1_94, %c0_95] : memref<2x10x10x32xf32, #tpu.memory_space<vmem>>, vector<2x8x8x32xf32>
    %77 = vector.shape_cast %76 : vector<2x8x8x32xf32> to vector<128x32xf32>
    %c128 = arith.constant 128 : index
    %c0_96 = arith.constant 0 : index
    %78 = vector.load %arg3[%c128, %c0_96] : memref<288x64xf32, #tpu.memory_space<vmem>>, vector<32x64xf32>
    %cst_97 = arith.constant dense<0.000000e+00> : vector<128x64xf32>
    %79 = tpu.matmul %77, %78, %cst_97 {dimension_numbers = #tpu.dot_dimension_numbers<[1], [0], [0], [1], [0, 0, 1, 1], [], []>} : vector<128x32xf32>, vector<32x64xf32>, vector<128x64xf32> -> vector<128x64xf32>
    %80 = arith.addf %75, %79 : vector<128x64xf32>
    %c0_98 = arith.constant 0 : index
    %c1_99 = arith.constant 1 : index
    %c2_100 = arith.constant 2 : index
    %c0_101 = arith.constant 0 : index
    %81 = vector.load %arg16[%c0_98, %c1_99, %c2_100, %c0_101] : memref<2x10x10x32xf32, #tpu.memory_space<vmem>>, vector<2x8x8x32xf32>
    %82 = vector.shape_cast %81 : vector<2x8x8x32xf32> to vector<128x32xf32>
    %c160 = arith.constant 160 : index
    %c0_102 = arith.constant 0 : index
    %83 = vector.load %arg3[%c160, %c0_102] : memref<288x64xf32, #tpu.memory_space<vmem>>, vector<32x64xf32>
    %cst_103 = arith.constant dense<0.000000e+00> : vector<128x64xf32>
    %84 = tpu.matmul %82, %83, %cst_103 {dimension_numbers = #tpu.dot_dimension_numbers<[1], [0], [0], [1], [0, 0, 1, 1], [], []>} : vector<128x32xf32>, vector<32x64xf32>, vector<128x64xf32> -> vector<128x64xf32>
    %85 = arith.addf %80, %84 : vector<128x64xf32>
    %c0_104 = arith.constant 0 : index
    %c2_105 = arith.constant 2 : index
    %c0_106 = arith.constant 0 : index
    %c0_107 = arith.constant 0 : index
    %86 = vector.load %arg16[%c0_104, %c2_105, %c0_106, %c0_107] : memref<2x10x10x32xf32, #tpu.memory_space<vmem>>, vector<2x8x8x32xf32>
    %87 = vector.shape_cast %86 : vector<2x8x8x32xf32> to vector<128x32xf32>
    %c192 = arith.constant 192 : index
    %c0_108 = arith.constant 0 : index
    %88 = vector.load %arg3[%c192, %c0_108] : memref<288x64xf32, #tpu.memory_space<vmem>>, vector<32x64xf32>
    %cst_109 = arith.constant dense<0.000000e+00> : vector<128x64xf32>
    %89 = tpu.matmul %87, %88, %cst_109 {dimension_numbers = #tpu.dot_dimension_numbers<[1], [0], [0], [1], [0, 0, 1, 1], [], []>} : vector<128x32xf32>, vector<32x64xf32>, vector<128x64xf32> -> vector<128x64xf32>
    %90 = arith.addf %85, %89 : vector<128x64xf32>
    %c0_110 = arith.constant 0 : index
    %c2_111 = arith.constant 2 : index
    %c1_112 = arith.constant 1 : index
    %c0_113 = arith.constant 0 : index
    %91 = vector.load %arg16[%c0_110, %c2_111, %c1_112, %c0_113] : memref<2x10x10x32xf32, #tpu.memory_space<vmem>>, vector<2x8x8x32xf32>
    %92 = vector.shape_cast %91 : vector<2x8x8x32xf32> to vector<128x32xf32>
    %c224 = arith.constant 224 : index
    %c0_114 = arith.constant 0 : index
    %93 = vector.load %arg3[%c224, %c0_114] : memref<288x64xf32, #tpu.memory_space<vmem>>, vector<32x64xf32>
    %cst_115 = arith.constant dense<0.000000e+00> : vector<128x64xf32>
    %94 = tpu.matmul %92, %93, %cst_115 {dimension_numbers = #tpu.dot_dimension_numbers<[1], [0], [0], [1], [0, 0, 1, 1], [], []>} : vector<128x32xf32>, vector<32x64xf32>, vector<128x64xf32> -> vector<128x64xf32>
    %95 = arith.addf %90, %94 : vector<128x64xf32>
    %c0_116 = arith.constant 0 : index
    %c2_117 = arith.constant 2 : index
    %c2_118 = arith.constant 2 : index
    %c0_119 = arith.constant 0 : index
    %96 = vector.load %arg16[%c0_116, %c2_117, %c2_118, %c0_119] : memref<2x10x10x32xf32, #tpu.memory_space<vmem>>, vector<2x8x8x32xf32>
    %97 = vector.shape_cast %96 : vector<2x8x8x32xf32> to vector<128x32xf32>
    %c256 = arith.constant 256 : index
    %c0_120 = arith.constant 0 : index
    %98 = vector.load %arg3[%c256, %c0_120] : memref<288x64xf32, #tpu.memory_space<vmem>>, vector<32x64xf32>
    %cst_121 = arith.constant dense<0.000000e+00> : vector<128x64xf32>
    %99 = tpu.matmul %97, %98, %cst_121 {dimension_numbers = #tpu.dot_dimension_numbers<[1], [0], [0], [1], [0, 0, 1, 1], [], []>} : vector<128x32xf32>, vector<32x64xf32>, vector<128x64xf32> -> vector<128x64xf32>
    %100 = arith.addf %95, %99 : vector<128x64xf32>
    %c0_122 = arith.constant 0 : index
    %c0_123 = arith.constant 0 : index
    %101 = vector.load %arg4[%c0_122, %c0_123] : memref<1x64xf32, #tpu.memory_space<vmem>>, vector<1x64xf32>
    %102 = vector.broadcast %101 : vector<1x64xf32> to vector<128x64xf32>
    %103 = arith.addf %100, %102 : vector<128x64xf32>
    %cst_124 = arith.constant 0.000000e+00 : f32
    %104 = vector.broadcast %cst_124 : f32 to vector<128x64xf32>
    %105 = arith.maximumf %103, %104 : vector<128x64xf32>
    %cst_125 = arith.constant 0.000000e+00 : f32
    %106 = vector.broadcast %cst_125 : f32 to vector<2x10x10x64xf32>
    %c0_126 = arith.constant 0 : index
    %c0_127 = arith.constant 0 : index
    %c0_128 = arith.constant 0 : index
    %c0_129 = arith.constant 0 : index
    %107 = vector.load %arg17[%c0_126, %c0_127, %c0_128, %c0_129] : memref<2x10x10x64xf32, #tpu.memory_space<vmem>>, vector<2x10x10x64xf32>
    tpu.vector_store %arg17[%c0_126, %c0_127, %c0_128, %c0_129], %106 {strides = array<i32>} : memref<2x10x10x64xf32, #tpu.memory_space<vmem>>, vector<2x10x10x64xf32>,
    %108 = vector.shape_cast %105 : vector<128x64xf32> to vector<2x8x8x64xf32>
    %c0_130 = arith.constant 0 : index
    %c1_131 = arith.constant 1 : index
    %c1_132 = arith.constant 1 : index
    %c0_133 = arith.constant 0 : index
    %109 = vector.load %arg17[%c0_130, %c1_131, %c1_132, %c0_133] : memref<2x10x10x64xf32, #tpu.memory_space<vmem>>, vector<2x8x8x64xf32>
    tpu.vector_store %arg17[%c0_130, %c1_131, %c1_132, %c0_133], %108 {strides = array<i32>} : memref<2x10x10x64xf32, #tpu.memory_space<vmem>>, vector<2x8x8x64xf32>,
    %cst_134 = arith.constant 0.000000e+00 : f32
    %110 = vector.broadcast %cst_134 : f32 to vector<128x128xf32>
    %c0_135 = arith.constant 0 : index
    %c0_136 = arith.constant 0 : index
    %c0_137 = arith.constant 0 : index
    %c0_138 = arith.constant 0 : index
    %111 = vector.load %arg17[%c0_135, %c0_136, %c0_137, %c0_138] : memref<2x10x10x64xf32, #tpu.memory_space<vmem>>, vector<2x8x8x64xf32>
    %112 = vector.shape_cast %111 : vector<2x8x8x64xf32> to vector<128x64xf32>
    %c0_139 = arith.constant 0 : index
    %c0_140 = arith.constant 0 : index
    %113 = vector.load %arg5[%c0_139, %c0_140] : memref<576x128xf32, #tpu.memory_space<vmem>>, vector<64x128xf32>
    %cst_141 = arith.constant dense<0.000000e+00> : vector<128x128xf32>
    %114 = tpu.matmul %112, %113, %cst_141 {dimension_numbers = #tpu.dot_dimension_numbers<[1], [0], [0], [1], [0, 0, 1, 1], [], []>} : vector<128x64xf32>, vector<64x128xf32>, vector<128x128xf32> -> vector<128x128xf32>
    %115 = arith.addf %110, %114 : vector<128x128xf32>
    %c0_142 = arith.constant 0 : index
    %c0_143 = arith.constant 0 : index
    %c1_144 = arith.constant 1 : index
    %c0_145 = arith.constant 0 : index
    %116 = vector.load %arg17[%c0_142, %c0_143, %c1_144, %c0_145] : memref<2x10x10x64xf32, #tpu.memory_space<vmem>>, vector<2x8x8x64xf32>
    %117 = vector.shape_cast %116 : vector<2x8x8x64xf32> to vector<128x64xf32>
    %c64_146 = arith.constant 64 : index
    %c0_147 = arith.constant 0 : index
    %118 = vector.load %arg5[%c64_146, %c0_147] : memref<576x128xf32, #tpu.memory_space<vmem>>, vector<64x128xf32>
    %cst_148 = arith.constant dense<0.000000e+00> : vector<128x128xf32>
    %119 = tpu.matmul %117, %118, %cst_148 {dimension_numbers = #tpu.dot_dimension_numbers<[1], [0], [0], [1], [0, 0, 1, 1], [], []>} : vector<128x64xf32>, vector<64x128xf32>, vector<128x128xf32> -> vector<128x128xf32>
    %120 = arith.addf %115, %119 : vector<128x128xf32>
    %c0_149 = arith.constant 0 : index
    %c0_150 = arith.constant 0 : index
    %c2_151 = arith.constant 2 : index
    %c0_152 = arith.constant 0 : index
    %121 = vector.load %arg17[%c0_149, %c0_150, %c2_151, %c0_152] : memref<2x10x10x64xf32, #tpu.memory_space<vmem>>, vector<2x8x8x64xf32>
    %122 = vector.shape_cast %121 : vector<2x8x8x64xf32> to vector<128x64xf32>
    %c128_153 = arith.constant 128 : index
    %c0_154 = arith.constant 0 : index
    %123 = vector.load %arg5[%c128_153, %c0_154] : memref<576x128xf32, #tpu.memory_space<vmem>>, vector<64x128xf32>
    %cst_155 = arith.constant dense<0.000000e+00> : vector<128x128xf32>
    %124 = tpu.matmul %122, %123, %cst_155 {dimension_numbers = #tpu.dot_dimension_numbers<[1], [0], [0], [1], [0, 0, 1, 1], [], []>} : vector<128x64xf32>, vector<64x128xf32>, vector<128x128xf32> -> vector<128x128xf32>
    %125 = arith.addf %120, %124 : vector<128x128xf32>
    %c0_156 = arith.constant 0 : index
    %c1_157 = arith.constant 1 : index
    %c0_158 = arith.constant 0 : index
    %c0_159 = arith.constant 0 : index
    %126 = vector.load %arg17[%c0_156, %c1_157, %c0_158, %c0_159] : memref<2x10x10x64xf32, #tpu.memory_space<vmem>>, vector<2x8x8x64xf32>
    %127 = vector.shape_cast %126 : vector<2x8x8x64xf32> to vector<128x64xf32>
    %c192_160 = arith.constant 192 : index
    %c0_161 = arith.constant 0 : index
    %128 = vector.load %arg5[%c192_160, %c0_161] : memref<576x128xf32, #tpu.memory_space<vmem>>, vector<64x128xf32>
    %cst_162 = arith.constant dense<0.000000e+00> : vector<128x128xf32>
    %129 = tpu.matmul %127, %128, %cst_162 {dimension_numbers = #tpu.dot_dimension_numbers<[1], [0], [0], [1], [0, 0, 1, 1], [], []>} : vector<128x64xf32>, vector<64x128xf32>, vector<128x128xf32> -> vector<128x128xf32>
    %130 = arith.addf %125, %129 : vector<128x128xf32>
    %c0_163 = arith.constant 0 : index
    %c1_164 = arith.constant 1 : index
    %c1_165 = arith.constant 1 : index
    %c0_166 = arith.constant 0 : index
    %131 = vector.load %arg17[%c0_163, %c1_164, %c1_165, %c0_166] : memref<2x10x10x64xf32, #tpu.memory_space<vmem>>, vector<2x8x8x64xf32>
    %132 = vector.shape_cast %131 : vector<2x8x8x64xf32> to vector<128x64xf32>
    %c256_167 = arith.constant 256 : index
    %c0_168 = arith.constant 0 : index
    %133 = vector.load %arg5[%c256_167, %c0_168] : memref<576x128xf32, #tpu.memory_space<vmem>>, vector<64x128xf32>
    %cst_169 = arith.constant dense<0.000000e+00> : vector<128x128xf32>
    %134 = tpu.matmul %132, %133, %cst_169 {dimension_numbers = #tpu.dot_dimension_numbers<[1], [0], [0], [1], [0, 0, 1, 1], [], []>} : vector<128x64xf32>, vector<64x128xf32>, vector<128x128xf32> -> vector<128x128xf32>
    %135 = arith.addf %130, %134 : vector<128x128xf32>
    %c0_170 = arith.constant 0 : index
    %c1_171 = arith.constant 1 : index
    %c2_172 = arith.constant 2 : index
    %c0_173 = arith.constant 0 : index
    %136 = vector.load %arg17[%c0_170, %c1_171, %c2_172, %c0_173] : memref<2x10x10x64xf32, #tpu.memory_space<vmem>>, vector<2x8x8x64xf32>
    %137 = vector.shape_cast %136 : vector<2x8x8x64xf32> to vector<128x64xf32>
    %c320 = arith.constant 320 : index
    %c0_174 = arith.constant 0 : index
    %138 = vector.load %arg5[%c320, %c0_174] : memref<576x128xf32, #tpu.memory_space<vmem>>, vector<64x128xf32>
    %cst_175 = arith.constant dense<0.000000e+00> : vector<128x128xf32>
    %139 = tpu.matmul %137, %138, %cst_175 {dimension_numbers = #tpu.dot_dimension_numbers<[1], [0], [0], [1], [0, 0, 1, 1], [], []>} : vector<128x64xf32>, vector<64x128xf32>, vector<128x128xf32> -> vector<128x128xf32>
    %140 = arith.addf %135, %139 : vector<128x128xf32>
    %c0_176 = arith.constant 0 : index
    %c2_177 = arith.constant 2 : index
    %c0_178 = arith.constant 0 : index
    %c0_179 = arith.constant 0 : index
    %141 = vector.load %arg17[%c0_176, %c2_177, %c0_178, %c0_179] : memref<2x10x10x64xf32, #tpu.memory_space<vmem>>, vector<2x8x8x64xf32>
    %142 = vector.shape_cast %141 : vector<2x8x8x64xf32> to vector<128x64xf32>
    %c384 = arith.constant 384 : index
    %c0_180 = arith.constant 0 : index
    %143 = vector.load %arg5[%c384, %c0_180] : memref<576x128xf32, #tpu.memory_space<vmem>>, vector<64x128xf32>
    %cst_181 = arith.constant dense<0.000000e+00> : vector<128x128xf32>
    %144 = tpu.matmul %142, %143, %cst_181 {dimension_numbers = #tpu.dot_dimension_numbers<[1], [0], [0], [1], [0, 0, 1, 1], [], []>} : vector<128x64xf32>, vector<64x128xf32>, vector<128x128xf32> -> vector<128x128xf32>
    %145 = arith.addf %140, %144 : vector<128x128xf32>
    %c0_182 = arith.constant 0 : index
    %c2_183 = arith.constant 2 : index
    %c1_184 = arith.constant 1 : index
    %c0_185 = arith.constant 0 : index
    %146 = vector.load %arg17[%c0_182, %c2_183, %c1_184, %c0_185] : memref<2x10x10x64xf32, #tpu.memory_space<vmem>>, vector<2x8x8x64xf32>
    %147 = vector.shape_cast %146 : vector<2x8x8x64xf32> to vector<128x64xf32>
    %c448 = arith.constant 448 : index
    %c0_186 = arith.constant 0 : index
    %148 = vector.load %arg5[%c448, %c0_186] : memref<576x128xf32, #tpu.memory_space<vmem>>, vector<64x128xf32>
    %cst_187 = arith.constant dense<0.000000e+00> : vector<128x128xf32>
    %149 = tpu.matmul %147, %148, %cst_187 {dimension_numbers = #tpu.dot_dimension_numbers<[1], [0], [0], [1], [0, 0, 1, 1], [], []>} : vector<128x64xf32>, vector<64x128xf32>, vector<128x128xf32> -> vector<128x128xf32>
    %150 = arith.addf %145, %149 : vector<128x128xf32>
    %c0_188 = arith.constant 0 : index
    %c2_189 = arith.constant 2 : index
    %c2_190 = arith.constant 2 : index
    %c0_191 = arith.constant 0 : index
    %151 = vector.load %arg17[%c0_188, %c2_189, %c2_190, %c0_191] : memref<2x10x10x64xf32, #tpu.memory_space<vmem>>, vector<2x8x8x64xf32>
    %152 = vector.shape_cast %151 : vector<2x8x8x64xf32> to vector<128x64xf32>
    %c512 = arith.constant 512 : index
    %c0_192 = arith.constant 0 : index
    %153 = vector.load %arg5[%c512, %c0_192] : memref<576x128xf32, #tpu.memory_space<vmem>>, vector<64x128xf32>
    %cst_193 = arith.constant dense<0.000000e+00> : vector<128x128xf32>
    %154 = tpu.matmul %152, %153, %cst_193 {dimension_numbers = #tpu.dot_dimension_numbers<[1], [0], [0], [1], [0, 0, 1, 1], [], []>} : vector<128x64xf32>, vector<64x128xf32>, vector<128x128xf32> -> vector<128x128xf32>
    %155 = arith.addf %150, %154 : vector<128x128xf32>
    %c0_194 = arith.constant 0 : index
    %c0_195 = arith.constant 0 : index
    %156 = vector.load %arg6[%c0_194, %c0_195] : memref<1x128xf32, #tpu.memory_space<vmem>>, vector<1x128xf32>
    %157 = vector.broadcast %156 : vector<1x128xf32> to vector<128x128xf32>
    %158 = arith.addf %155, %157 : vector<128x128xf32>
    %cst_196 = arith.constant 0.000000e+00 : f32
    %159 = vector.broadcast %cst_196 : f32 to vector<128x128xf32>
    %160 = arith.maximumf %158, %159 : vector<128x128xf32>
    %c0_197 = arith.constant 0 : index
    %c0_198 = arith.constant 0 : index
    %161 = vector.load %arg7[%c0_197, %c0_198] : memref<128x2xf32, #tpu.memory_space<vmem>>, vector<128x2xf32>
    %cst_199 = arith.constant dense<0.000000e+00> : vector<128x2xf32>
    %162 = tpu.matmul %160, %161, %cst_199 {dimension_numbers = #tpu.dot_dimension_numbers<[1], [0], [0], [1], [0, 0, 1, 1], [], []>} : vector<128x128xf32>, vector<128x2xf32>, vector<128x2xf32> -> vector<128x2xf32>
    %c0_200 = arith.constant 0 : index
    %c0_201 = arith.constant 0 : index
    %163 = vector.load %arg8[%c0_200, %c0_201] : memref<1x2xf32, #tpu.memory_space<vmem>>, vector<1x2xf32>
    %164 = vector.broadcast %163 : vector<1x2xf32> to vector<128x2xf32>
    %165 = arith.addf %162, %164 : vector<128x2xf32>
    %cst_202 = arith.constant 0.000000e+00 : f32
    %166 = vector.broadcast %cst_202 : f32 to vector<128x2xf32>
    %167 = arith.maximumf %165, %166 : vector<128x2xf32>
    %168 = vector.extract_strided_slice %167 {offsets = [0, 0], sizes = [64, 1], strides = [1, 1]} : vector<128x2xf32> to vector<64x1xf32>
    %169 = vector.extract_strided_slice %167 {offsets = [64, 0], sizes = [64, 1], strides = [1, 1]} : vector<128x2xf32> to vector<64x1xf32>
    %170 = tpu.concatenate %168, %169 in 1 : vector<64x1xf32>, vector<64x1xf32> -> vector<64x2xf32>
    %171 = vector.extract_strided_slice %167 {offsets = [0, 1], sizes = [64, 1], strides = [1, 1]} : vector<128x2xf32> to vector<64x1xf32>
    %172 = vector.extract_strided_slice %167 {offsets = [64, 1], sizes = [64, 1], strides = [1, 1]} : vector<128x2xf32> to vector<64x1xf32>
    %173 = tpu.concatenate %171, %172 in 1 : vector<64x1xf32>, vector<64x1xf32> -> vector<64x2xf32>
    %c0_203 = arith.constant 0 : index
    %c0_204 = arith.constant 0 : index
    %174 = vector.load %arg9[%c0_203, %c0_204] : memref<64x64xf32, #tpu.memory_space<vmem>>, vector<64x64xf32>
    %cst_205 = arith.constant dense<0.000000e+00> : vector<64x2xf32>
    %175 = tpu.matmul %174, %170, %cst_205 {dimension_numbers = #tpu.dot_dimension_numbers<[1], [0], [0], [1], [0, 0, 1, 1], [], []>} : vector<64x64xf32>, vector<64x2xf32>, vector<64x2xf32> -> vector<64x2xf32>
    %c0_206 = arith.constant 0 : index
    %c0_207 = arith.constant 0 : index
    %176 = vector.load %arg10[%c0_206, %c0_207] : memref<64x64xf32, #tpu.memory_space<vmem>>, vector<64x64xf32>
    %cst_208 = arith.constant dense<0.000000e+00> : vector<64x2xf32>
    %177 = tpu.matmul %176, %173, %cst_208 {dimension_numbers = #tpu.dot_dimension_numbers<[1], [0], [0], [1], [0, 0, 1, 1], [], []>} : vector<64x64xf32>, vector<64x2xf32>, vector<64x2xf32> -> vector<64x2xf32>
    %178 = arith.addf %175, %177 : vector<64x2xf32>
    %c0_209 = arith.constant 0 : index
    %c0_210 = arith.constant 0 : index
    %179 = vector.load %arg11[%c0_209, %c0_210] : memref<64x1xf32, #tpu.memory_space<vmem>>, vector<64x1xf32>
    %180 = vector.broadcast %179 : vector<64x1xf32> to vector<64x2xf32>
    %181 = arith.addf %178, %180 : vector<64x2xf32>
    %cst_211 = arith.constant 0.000000e+00 : f32
    %182 = vector.broadcast %cst_211 : f32 to vector<64x2xf32>
    %183 = arith.maximumf %181, %182 : vector<64x2xf32>
    %c0_212 = arith.constant 0 : index
    %c0_213 = arith.constant 0 : index
    %184 = vector.load %arg12[%c0_212, %c0_213] : memref<64x64xf32, #tpu.memory_space<vmem>>, vector<64x64xf32>
    %cst_214 = arith.constant dense<0.000000e+00> : vector<64x2xf32>
    %185 = tpu.matmul %184, %183, %cst_214 {dimension_numbers = #tpu.dot_dimension_numbers<[1], [0], [0], [1], [0, 0, 1, 1], [], []>} : vector<64x64xf32>, vector<64x2xf32>, vector<64x2xf32> -> vector<64x2xf32>
    %c0_215 = arith.constant 0 : index
    %c0_216 = arith.constant 0 : index
    %186 = vector.load %arg13[%c0_215, %c0_216] : memref<64x1xf32, #tpu.memory_space<vmem>>, vector<64x1xf32>
    %187 = vector.broadcast %186 : vector<64x1xf32> to vector<64x2xf32>
    %188 = arith.addf %185, %187 : vector<64x2xf32>
    %c0_217 = arith.constant 0 : index
    %c0_218 = arith.constant 0 : index
    %189 = vector.load %arg14[%c0_217, %c0_218] : memref<64x2xf32, #tpu.memory_space<vmem>>, vector<64x2xf32>
    tpu.vector_store %arg14[%c0_217, %c0_218], %188 {strides = array<i32>} : memref<64x2xf32, #tpu.memory_space<vmem>>, vector<64x2xf32>,
    %cst_219 = arith.constant dense<0xFF800000> : vector<2xf32>
    %190 = vector.multi_reduction <maximumf>, %188, %cst_219 [0] : vector<64x2xf32> to vector<2xf32>
    %191 = vector.shape_cast %190 : vector<2xf32> to vector<1x2xf32>
    %192 = vector.broadcast %191 : vector<1x2xf32> to vector<64x2xf32>
    %193 = arith.subf %188, %192 : vector<64x2xf32>
    %194 = math.exp %193 : vector<64x2xf32>
    %cst_220 = arith.constant dense<0.000000e+00> : vector<2xf32>
    %195 = vector.multi_reduction <add>, %194, %cst_220 [0] : vector<64x2xf32> to vector<2xf32>
    %196 = vector.shape_cast %195 : vector<2xf32> to vector<1x2xf32>
    %197 = vector.broadcast %191 : vector<1x2xf32> to vector<64x2xf32>
    %198 = arith.subf %188, %197 : vector<64x2xf32>
    %199 = math.log %196 : vector<1x2xf32>
    %200 = vector.broadcast %199 : vector<1x2xf32> to vector<64x2xf32>
    %201 = arith.subf %198, %200 : vector<64x2xf32>
    %c0_221 = arith.constant 0 : index
    %c0_222 = arith.constant 0 : index
    %202 = vector.load %arg15[%c0_221, %c0_222] : memref<64x2xf32, #tpu.memory_space<vmem>>, vector<64x2xf32>
    tpu.vector_store %arg15[%c0_221, %c0_222], %201 {strides = array<i32>} : memref<64x2xf32, #tpu.memory_space<vmem>>, vector<64x2xf32>,
    return
  }
}

</mosaic_0001>

<llo_original>
// kernel: dqn_forward.1
$region0: #{dqn_forward.1}
  #allocation0 [shape = 'u32[]', space=smem, size = 0x4, offset = 0x4, fixed_abs, tag = 'smem constant byte address 0x4 - core index']
  #allocation1 [shape = 'u32[144,128]{1,0:T(1,128)}', space=vmem, size = 0x12000, scoped, tag = 'internal scratch']
  #allocation2 [shape = 'f32[2,10,10,32]{3,2,1,0:T(8,128)}', space=vmem, size = 0x28000, scoped, tag = 'scratch operand']
  #allocation3 [shape = 'f32[2,10,10,64]{3,2,1,0:T(8,128)}', space=vmem, size = 0x28000, scoped, tag = 'scratch operand']
  %s0 = inlined_call_operand.vmem [shape: f32[2,10,10,8], index: 0, kind: input, shape index: {}]
  %s1 = inlined_call_operand.vmem [shape: f32[72,32], index: 1, kind: input, shape index: {}]
  %s2 = inlined_call_operand.vmem [shape: f32[1,32], index: 2, kind: input, shape index: {}]
  %s3 = inlined_call_operand.vmem [shape: f32[288,64], index: 3, kind: input, shape index: {}]
  %s4 = inlined_call_operand.vmem [shape: f32[1,64], index: 4, kind: input, shape index: {}]
  %s5 = inlined_call_operand.vmem [shape: f32[576,128], index: 5, kind: input, shape index: {}]
  %s6 = inlined_call_operand.vmem [shape: f32[1,128], index: 6, kind: input, shape index: {}]
  %s7 = inlined_call_operand.vmem [shape: f32[128,2], index: 7, kind: input, shape index: {}]
  %s8 = inlined_call_operand.vmem [shape: f32[1,2], index: 8, kind: input, shape index: {}]
  %s9 = inlined_call_operand.vmem [shape: f32[64,64], index: 9, kind: input, shape index: {}]
  %s10 = inlined_call_operand.vmem [shape: f32[64,64], index: 10, kind: input, shape index: {}]
  %s11 = inlined_call_operand.vmem [shape: f32[64,1], index: 11, kind: input, shape index: {}]
  %s12 = inlined_call_operand.vmem [shape: f32[64,64], index: 12, kind: input, shape index: {}]
  %s13 = inlined_call_operand.vmem [shape: f32[64,1], index: 13, kind: input, shape index: {}]
  %s14 = inlined_call_operand.vmem [shape: f32[64,2], index: 14, kind: output, shape index: {0}]
  %s15 = inlined_call_operand.vmem [shape: f32[64,2], index: 15, kind: output, shape index: {1}]
  %16 = xla_tuple %s14, %s15
  %s17 = sld [smem:[#allocation0]]
  $region74: #{dqn_forward.1} parent=0
    _
  %s19 = ssub.s32 1, %s17
  %s20 = scalar_select 0, %s19, %s17
  // Predicated region
  $region2: #{dqn_forward.1} parent=0 // pred_check
    _
  $region3: #{dqn_forward.1} parent=0 // pred_check_branch
    %22 = sbr.rel (0) target = $region5
  $region4: #{dqn_forward.1} parent=0 // pred_region
    _
  $region5: #{dqn_forward.1} parent=0 // pred_fallthru
    _
  // Predicated region
  $region6: #{dqn_forward.1} parent=0 // pred_check
    _
  $region7: #{dqn_forward.1} parent=0 // pred_check_branch
    %24 = sbr.rel (0) target = $region9
  $region8: #{dqn_forward.1} parent=0 // pred_region
    _
  $region9: #{dqn_forward.1} parent=0 // pred_fallthru
    _
  // Predicated region
  $region10: #{dqn_forward.1} parent=0 // pred_check
    _
  $region11: #{dqn_forward.1} parent=0 // pred_check_branch
    %26 = sbr.rel (0) target = $region13
  $region12: #{dqn_forward.1} parent=0 // pred_region
    _
  $region13: #{dqn_forward.1} parent=0 // pred_fallthru
    _
  // Predicated region
  $region14: #{dqn_forward.1} parent=0 // pred_check
    _
  $region15: #{dqn_forward.1} parent=0 // pred_check_branch
    %28 = sbr.rel (0) target = $region17
  $region16: #{dqn_forward.1} parent=0 // pred_region
    _
  $region17: #{dqn_forward.1} parent=0 // pred_fallthru
    _
  // Predicated region
  $region18: #{dqn_forward.1} parent=0 // pred_check
    _
  $region19: #{dqn_forward.1} parent=0 // pred_check_branch
    %30 = sbr.rel (0) target = $region21
  $region20: #{dqn_forward.1} parent=0 // pred_region
    _
  $region21: #{dqn_forward.1} parent=0 // pred_fallthru
    _
  // Predicated region
  $region22: #{dqn_forward.1} parent=0 // pred_check
    _
  $region23: #{dqn_forward.1} parent=0 // pred_check_branch
    %32 = sbr.rel (0) target = $region25
  $region24: #{dqn_forward.1} parent=0 // pred_region
    _
  $region25: #{dqn_forward.1} parent=0 // pred_fallthru
    _
  // Predicated region
  $region26: #{dqn_forward.1} parent=0 // pred_check
    _
  $region27: #{dqn_forward.1} parent=0 // pred_check_branch
    %34 = sbr.rel (0) target = $region29
  $region28: #{dqn_forward.1} parent=0 // pred_region
    _
  $region29: #{dqn_forward.1} parent=0 // pred_fallthru
    _
  // Predicated region
  $region30: #{dqn_forward.1} parent=0 // pred_check
    _
  $region31: #{dqn_forward.1} parent=0 // pred_check_branch
    %36 = sbr.rel (0) target = $region33
  $region32: #{dqn_forward.1} parent=0 // pred_region
    _
  $region33: #{dqn_forward.1} parent=0 // pred_fallthru
    _
  // Predicated region
  $region34: #{dqn_forward.1} parent=0 // pred_check
    _
  $region35: #{dqn_forward.1} parent=0 // pred_check_branch
    %38 = sbr.rel (0) target = $region37
  $region36: #{dqn_forward.1} parent=0 // pred_region
    _
  $region37: #{dqn_forward.1} parent=0 // pred_fallthru
    _
  // Predicated region
  $region38: #{dqn_forward.1} parent=0 // pred_check
    _
  $region39: #{dqn_forward.1} parent=0 // pred_check_branch
    %40 = sbr.rel (0) target = $region41
  $region40: #{dqn_forward.1} parent=0 // pred_region
    _
  $region41: #{dqn_forward.1} parent=0 // pred_fallthru
    _
  // Predicated region
  $region42: #{dqn_forward.1} parent=0 // pred_check
    _
  $region43: #{dqn_forward.1} parent=0 // pred_check_branch
    %42 = sbr.rel (0) target = $region45
  $region44: #{dqn_forward.1} parent=0 // pred_region
    _
  $region45: #{dqn_forward.1} parent=0 // pred_fallthru
    _
  // Predicated region
  $region46: #{dqn_forward.1} parent=0 // pred_check
    _
  $region47: #{dqn_forward.1} parent=0 // pred_check_branch
    %44 = sbr.rel (0) target = $region49
  $region48: #{dqn_forward.1} parent=0 // pred_region
    _
  $region49: #{dqn_forward.1} parent=0 // pred_fallthru
    _
  // Predicated region
  $region50: #{dqn_forward.1} parent=0 // pred_check
    _
  $region51: #{dqn_forward.1} parent=0 // pred_check_branch
    %46 = sbr.rel (0) target = $region53
  $region52: #{dqn_forward.1} parent=0 // pred_region
    _
  $region53: #{dqn_forward.1} parent=0 // pred_fallthru
    _
  // Predicated region
  $region54: #{dqn_forward.1} parent=0 // pred_check
    _
  $region55: #{dqn_forward.1} parent=0 // pred_check_branch
    %48 = sbr.rel (0) target = $region57
  $region56: #{dqn_forward.1} parent=0 // pred_region
    _
  $region57: #{dqn_forward.1} parent=0 // pred_fallthru
    _
  %v49 = vld [vmem:[%s0] sm:$0xff]
  %v50 = vld [vmem:[%s0 + $0x10] sm:$0xff]
  %v51 = vld [vmem:[%s0 + $0x20] sm:$0xff]
  %v52 = vld [vmem:[%s0 + $0x30] sm:$0xff]
  %v53 = vld [vmem:[%s0 + $0x40] sm:$0xff]
  %v54 = vld [vmem:[%s0 + $0x50] sm:$0xff]
  %v55 = vld [vmem:[%s0 + $0x60] sm:$0xff]
  %v56 = vld [vmem:[%s0 + $0x70] sm:$0xff]
  %v57 = vld [vmem:[%s0 + $0xa0] sm:$0xff]
  %v58 = vld [vmem:[%s0 + $0xb0] sm:$0xff]
  %v59 = vld [vmem:[%s0 + $0xc0] sm:$0xff]
  %v60 = vld [vmem:[%s0 + $0xd0] sm:$0xff]
  %v61 = vld [vmem:[%s0 + $0xe0] sm:$0xff]
  %v62 = vld [vmem:[%s0 + $0xf0] sm:$0xff]
  %v63 = vld [vmem:[%s0 + $0x100] sm:$0xff]
  %v64 = vld [vmem:[%s0 + $0x110] sm:$0xff]
  %v65 = vld [vmem:[%s1] sm:$0xff]
  %v66 = vld [vmem:[%s0 + $0x1] sm:$0xff]
  %v67 = vld [vmem:[%s0 + $0x11] sm:$0xff]
  %v68 = vld [vmem:[%s0 + $0x21] sm:$0xff]
  %v69 = vld [vmem:[%s0 + $0x31] sm:$0xff]
  %v70 = vld [vmem:[%s0 + $0x41] sm:$0xff]
  %v71 = vld [vmem:[%s0 + $0x51] sm:$0xff]
  %v72 = vld [vmem:[%s0 + $0x61] sm:$0xff]
  %v73 = vld [vmem:[%s0 + $0x71] sm:$0xff]
  %v74 = vld [vmem:[%s0 + $0xa1] sm:$0xff]
  %v75 = vld [vmem:[%s0 + $0xb1] sm:$0xff]
  %v76 = vld [vmem:[%s0 + $0xc1] sm:$0xff]
  %v77 = vld [vmem:[%s0 + $0xd1] sm:$0xff]
  %v78 = vld [vmem:[%s0 + $0xe1] sm:$0xff]
  %v79 = vld [vmem:[%s0 + $0xf1] sm:$0xff]
  %v80 = vld [vmem:[%s0 + $0x101] sm:$0xff]
  %v81 = vld [vmem:[%s0 + $0x111] sm:$0xff]
  %v82 = vld [vmem:[%s1 + $0x8] sm:$0xff]
  %vm83 = vcmask 64512
  %v85 = vsel %vm83, %v66, 0
  %v88 = vsel %vm83, %v67, 0
  %v91 = vsel %vm83, %v68, 0
  %v94 = vsel %vm83, %v69, 0
  %v97 = vsel %vm83, %v70, 0
  %v100 = vsel %vm83, %v71, 0
  %v103 = vsel %vm83, %v72, 0
  %v106 = vsel %vm83, %v73, 0
  %v109 = vsel %vm83, %v74, 0
  %v112 = vsel %vm83, %v75, 0
  %v115 = vsel %vm83, %v76, 0
  %v118 = vsel %vm83, %v77, 0
  %v121 = vsel %vm83, %v78, 0
  %v124 = vsel %vm83, %v79, 0
  %v127 = vsel %vm83, %v80, 0
  %v130 = vsel %vm83, %v81, 0
  %132 = vmatprep.subr.mxu0 0.0
  %133 = vmatpush1.msra.mxu0 %v82
  %134 = vmatprep.subr.mxu0 0.0
  %135 = vmatpush1.msra.mxu0 0.0
  %136 = vmatprep.subr.mxu0 0.0
  %137 = vmatpush1.msra.mxu0 0.0
  %138 = vmatprep.subr.mxu0 0.0
  %139 = vmatpush1.msra.mxu0 0.0
  %140 = vmatprep.subr.mxu0 0.0
  %141 = vmatpush1.msra.mxu0 0.0
  %142 = vmatprep.subr.mxu0 0.0
  %143 = vmatpush1.msra.mxu0 0.0
  %144 = vmatprep.subr.mxu0 0.0
  %145 = vmatpush1.msra.mxu0 0.0
  %146 = vmatprep.subr.mxu0 0.0
  %147 = vmatpush1.msra.mxu0 0.0
  %148 = vmatprep.subr.mxu0 0.0
  %149 = vmatpush1.msra.mxu0 0.0
  %150 = vmatprep.subr.mxu0 0.0
  %151 = vmatpush1.msra.mxu0 0.0
  %152 = vmatprep.subr.mxu0 0.0
  %153 = vmatpush1.msra.mxu0 0.0
  %154 = vmatprep.subr.mxu0 0.0
  %155 = vmatpush1.msra.mxu0 0.0
  %156 = vmatprep.subr.mxu0 0.0
  %157 = vmatpush1.msra.mxu0 0.0
  %158 = vmatprep.subr.mxu0 0.0
  %159 = vmatpush1.msra.mxu0 0.0
  %160 = vmatprep.subr.mxu0 0.0
  %161 = vmatpush1.msra.mxu0 0.0
  %162 = vmatprep.subr.mxu0 0.0
  %163 = vmatpush1.msra.mxu0 0.0
  %164 = vmatprep.subr.mxu0 0.0
  %165 = vmatpush1.msra.mxu0 0.0
  %166 = vmatprep.subr.mxu0 0.0
  %167 = vmatpush1.msra.mxu0 0.0
  %168 = vmatprep.subr.mxu0 0.0
  %169 = vmatpush1.msra.mxu0 0.0
  %170 = vmatprep.subr.mxu0 0.0
  %171 = vmatpush1.msra.mxu0 0.0
  %172 = vmatprep.subr.mxu0 0.0
  %173 = vmatpush1.msra.mxu0 0.0
  %174 = vmatprep.subr.mxu0 0.0
  %175 = vmatpush1.msra.mxu0 0.0
  %176 = vmatprep.subr.mxu0 0.0
  %177 = vmatpush1.msra.mxu0 0.0
  %178 = vmatprep.subr.mxu0 0.0
  %179 = vmatpush1.msra.mxu0 0.0
  %180 = vmatprep.subr.mxu0 0.0
  %181 = vmatpush1.msra.mxu0 0.0
  %182 = vmatprep.subr.mxu0 0.0
  %183 = vmatpush1.msra.mxu0 0.0
  %184 = vmatprep.subr.mxu0 0.0
  %185 = vmatpush1.msra.mxu0 0.0
  %186 = vmatprep.subr.mxu0 0.0
  %187 = vmatpush1.msra.mxu0 0.0
  %188 = vmatprep.subr.mxu0 0.0
  %189 = vmatpush1.msra.mxu0 0.0
  %190 = vmatprep.subr.mxu0 0.0
  %191 = vmatpush1.msra.mxu0 0.0
  %192 = vmatprep.subr.mxu0 0.0
  %193 = vmatpush1.msra.mxu0 0.0
  %194 = vmatprep.subr.mxu0 0.0
  %195 = vmatpush1.msra.mxu0 0.0
  %196 = vmatprep.mubr.f32.mxu0 0.0
  %197 = vmatmul.mubr.f32.gmra.mrb[0].mxu0 %v85
  %v198 = vpop.f32.mrb[0].mxu0
  %v199 = vadd.f32 0.0, %v198
  %v200 = vpop.f32.mrb[0].mxu0
  %201 = vmatprep.mubr.f32.mxu0 0.0
  %202 = vmatmul.mubr.f32.gmra.mrb[0].mxu0 %v88
  %v203 = vpop.f32.mrb[0].mxu0
  %v204 = vadd.f32 0.0, %v203
  %v205 = vpop.f32.mrb[0].mxu0
  %206 = vmatprep.mubr.f32.mxu0 0.0
  %207 = vmatmul.mubr.f32.gmra.mrb[0].mxu0 %v91
  %v208 = vpop.f32.mrb[0].mxu0
  %v209 = vadd.f32 0.0, %v208
  %v210 = vpop.f32.mrb[0].mxu0
  %211 = vmatprep.mubr.f32.mxu0 0.0
  %212 = vmatmul.mubr.f32.gmra.mrb[0].mxu0 %v94
  %v213 = vpop.f32.mrb[0].mxu0
  %v214 = vadd.f32 0.0, %v213
  %v215 = vpop.f32.mrb[0].mxu0
  %216 = vmatprep.mubr.f32.mxu0 0.0
  %217 = vmatmul.mubr.f32.gmra.mrb[0].mxu0 %v97
  %v218 = vpop.f32.mrb[0].mxu0
  %v219 = vadd.f32 0.0, %v218
  %v220 = vpop.f32.mrb[0].mxu0
  %221 = vmatprep.mubr.f32.mxu0 0.0
  %222 = vmatmul.mubr.f32.gmra.mrb[0].mxu0 %v100
  %v223 = vpop.f32.mrb[0].mxu0
  %v224 = vadd.f32 0.0, %v223
  %v225 = vpop.f32.mrb[0].mxu0
  %226 = vmatprep.mubr.f32.mxu0 0.0
  %227 = vmatmul.mubr.f32.gmra.mrb[0].mxu0 %v103
  %v228 = vpop.f32.mrb[0].mxu0
  %v229 = vadd.f32 0.0, %v228
  %v230 = vpop.f32.mrb[0].mxu0
  %231 = vmatprep.mubr.f32.mxu0 0.0
  %232 = vmatmul.mubr.f32.gmra.mrb[0].mxu0 %v106
  %v233 = vpop.f32.mrb[0].mxu0
  %v234 = vadd.f32 0.0, %v233
  %v235 = vpop.f32.mrb[0].mxu0
  %236 = vmatprep.mubr.f32.mxu0 0.0
  %237 = vmatmul.mubr.f32.gmra.mrb[0].mxu0 %v109
  %v238 = vpop.f32.mrb[0].mxu0
  %v239 = vadd.f32 0.0, %v238
  %v240 = vpop.f32.mrb[0].mxu0
  %241 = vmatprep.mubr.f32.mxu0 0.0
  %242 = vmatmul.mubr.f32.gmra.mrb[0].mxu0 %v112
  %v243 = vpop.f32.mrb[0].mxu0
  %v244 = vadd.f32 0.0, %v243
  %v245 = vpop.f32.mrb[0].mxu0
  %246 = vmatprep.mubr.f32.mxu0 0.0
  %247 = vmatmul.mubr.f32.gmra.mrb[0].mxu0 %v115
  %v248 = vpop.f32.mrb[0].mxu0
  %v249 = vadd.f32 0.0, %v248
  %v250 = vpop.f32.mrb[0].mxu0
  %251 = vmatprep.mubr.f32.mxu0 0.0
  %252 = vmatmul.mubr.f32.gmra.mrb[0].mxu0 %v118
  %v253 = vpop.f32.mrb[0].mxu0
  %v254 = vadd.f32 0.0, %v253
  %v255 = vpop.f32.mrb[0].mxu0
  %256 = vmatprep.mubr.f32.mxu0 0.0
  %257 = vmatmul.mubr.f32.gmra.mrb[0].mxu0 %v121
  %v258 = vpop.f32.mrb[0].mxu0
  %v259 = vadd.f32 0.0, %v258
  %v260 = vpop.f32.mrb[0].mxu0
  %261 = vmatprep.mubr.f32.mxu0 0.0
  %262 = vmatmul.mubr.f32.gmra.mrb[0].mxu0 %v124
  %v263 = vpop.f32.mrb[0].mxu0
  %v264 = vadd.f32 0.0, %v263
  %v265 = vpop.f32.mrb[0].mxu0
  %266 = vmatprep.mubr.f32.mxu0 0.0
  %267 = vmatmul.mubr.f32.gmra.mrb[0].mxu0 %v127
  %v268 = vpop.f32.mrb[0].mxu0
  %v269 = vadd.f32 0.0, %v268
  %v270 = vpop.f32.mrb[0].mxu0
  %271 = vmatprep.mubr.f32.mxu0 0.0
  %272 = vmatmul.mubr.f32.gmra.mrb[0].mxu0 %v130
  %v273 = vpop.f32.mrb[0].mxu0
  %v274 = vadd.f32 0.0, %v273
  %v275 = vpop.f32.mrb[0].mxu0
  %276 = vdwg.mxu0
  %v278 = vsel %vm83, %v49, 0
  %v281 = vsel %vm83, %v50, 0
  %v284 = vsel %vm83, %v51, 0
  %v287 = vsel %vm83, %v52, 0
  %v290 = vsel %vm83, %v53, 0
  %v293 = vsel %vm83, %v54, 0
  %v296 = vsel %vm83, %v55, 0
  %v299 = vsel %vm83, %v56, 0
  %v302 = vsel %vm83, %v57, 0
  %v305 = vsel %vm83, %v58, 0
  %v308 = vsel %vm83, %v59, 0
  %v311 = vsel %vm83, %v60, 0
  %v314 = vsel %vm83, %v61, 0
  %v317 = vsel %vm83, %v62, 0
  %v320 = vsel %vm83, %v63, 0
  %v323 = vsel %vm83, %v64, 0
  %325 = vmatprep.subr.mxu0 0.0
  %326 = vmatpush1.msra.mxu0 %v65
  %327 = vmatprep.subr.mxu0 0.0
  %328 = vmatpush1.msra.mxu0 0.0
  %329 = vmatprep.subr.mxu0 0.0
  %330 = vmatpush1.msra.mxu0 0.0
  %331 = vmatprep.subr.mxu0 0.0
  %332 = vmatpush1.msra.mxu0 0.0
  %333 = vmatprep.subr.mxu0 0.0
  %334 = vmatpush1.msra.mxu0 0.0
  %335 = vmatprep.subr.mxu0 0.0
  %336 = vmatpush1.msra.mxu0 0.0
  %337 = vmatprep.subr.mxu0 0.0
  %338 = vmatpush1.msra.mxu0 0.0
  %339 = vmatprep.subr.mxu0 0.0
  %340 = vmatpush1.msra.mxu0 0.0
  %341 = vmatprep.subr.mxu0 0.0
  %342 = vmatpush1.msra.mxu0 0.0
  %343 = vmatprep.subr.mxu0 0.0
  %344 = vmatpush1.msra.mxu0 0.0
  %345 = vmatprep.subr.mxu0 0.0
  %346 = vmatpush1.msra.mxu0 0.0
  %347 = vmatprep.subr.mxu0 0.0
  %348 = vmatpush1.msra.mxu0 0.0
  %349 = vmatprep.subr.mxu0 0.0
  %350 = vmatpush1.msra.mxu0 0.0
  %351 = vmatprep.subr.mxu0 0.0
  %352 = vmatpush1.msra.mxu0 0.0
  %353 = vmatprep.subr.mxu0 0.0
  %354 = vmatpush1.msra.mxu0 0.0
  %355 = vmatprep.subr.mxu0 0.0
  %356 = vmatpush1.msra.mxu0 0.0
  %357 = vmatprep.subr.mxu0 0.0
  %358 = vmatpush1.msra.mxu0 0.0
  %359 = vmatprep.subr.mxu0 0.0
  %360 = vmatpush1.msra.mxu0 0.0
  %361 = vmatprep.subr.mxu0 0.0
  %362 = vmatpush1.msra.mxu0 0.0
  %363 = vmatprep.subr.mxu0 0.0
  %364 = vmatpush1.msra.mxu0 0.0
  %365 = vmatprep.subr.mxu0 0.0
  %366 = vmatpush1.msra.mxu0 0.0
  %367 = vmatprep.subr.mxu0 0.0
  %368 = vmatpush1.msra.mxu0 0.0
  %369 = vmatprep.subr.mxu0 0.0
  %370 = vmatpush1.msra.mxu0 0.0
  %371 = vmatprep.subr.mxu0 0.0
  %372 = vmatpush1.msra.mxu0 0.0
  %373 = vmatprep.subr.mxu0 0.0
  %374 = vmatpush1.msra.mxu0 0.0
  %375 = vmatprep.subr.mxu0 0.0
  %376 = vmatpush1.msra.mxu0 0.0
  %377 = vmatprep.subr.mxu0 0.0
  %378 = vmatpush1.msra.mxu0 0.0
  %379 = vmatprep.subr.mxu0 0.0
  %380 = vmatpush1.msra.mxu0 0.0
  %381 = vmatprep.subr.mxu0 0.0
  %382 = vmatpush1.msra.mxu0 0.0
  %383 = vmatprep.subr.mxu0 0.0
  %384 = vmatpush1.msra.mxu0 0.0
  %385 = vmatprep.subr.mxu0 0.0
  %386 = vmatpush1.msra.mxu0 0.0
  %387 = vmatprep.subr.mxu0 0.0
  %388 = vmatpush1.msra.mxu0 0.0
  %389 = vmatprep.mubr.f32.mxu0 0.0
  %390 = vmatmul.mubr.f32.gmra.mrb[0].mxu0 %v278
  %v391 = vpop.f32.mrb[0].mxu0
  %v392 = vadd.f32 %v199, %v391
  %v393 = vpop.f32.mrb[0].mxu0
  %394 = vmatprep.mubr.f32.mxu0 0.0
  %395 = vmatmul.mubr.f32.gmra.mrb[0].mxu0 %v281
  %v396 = vpop.f32.mrb[0].mxu0
  %v397 = vadd.f32 %v204, %v396
  %v398 = vpop.f32.mrb[0].mxu0
  %399 = vmatprep.mubr.f32.mxu0 0.0
  %400 = vmatmul.mubr.f32.gmra.mrb[0].mxu0 %v284
  %v401 = vpop.f32.mrb[0].mxu0
  %v402 = vadd.f32 %v209, %v401
  %v403 = vpop.f32.mrb[0].mxu0
  %404 = vmatprep.mubr.f32.mxu0 0.0
  %405 = vmatmul.mubr.f32.gmra.mrb[0].mxu0 %v287
  %v406 = vpop.f32.mrb[0].mxu0
  %v407 = vadd.f32 %v214, %v406
  %v408 = vpop.f32.mrb[0].mxu0
  %409 = vmatprep.mubr.f32.mxu0 0.0
  %410 = vmatmul.mubr.f32.gmra.mrb[0].mxu0 %v290
  %v411 = vpop.f32.mrb[0].mxu0
  %v412 = vadd.f32 %v219, %v411
  %v413 = vpop.f32.mrb[0].mxu0
  %414 = vmatprep.mubr.f32.mxu0 0.0
  %415 = vmatmul.mubr.f32.gmra.mrb[0].mxu0 %v293
  %v416 = vpop.f32.mrb[0].mxu0
  %v417 = vadd.f32 %v224, %v416
  %v418 = vpop.f32.mrb[0].mxu0
  %419 = vmatprep.mubr.f32.mxu0 0.0
  %420 = vmatmul.mubr.f32.gmra.mrb[0].mxu0 %v296
  %v421 = vpop.f32.mrb[0].mxu0
  %v422 = vadd.f32 %v229, %v421
  %v423 = vpop.f32.mrb[0].mxu0
  %424 = vmatprep.mubr.f32.mxu0 0.0
  %425 = vmatmul.mubr.f32.gmra.mrb[0].mxu0 %v299
  %v426 = vpop.f32.mrb[0].mxu0
  %v427 = vadd.f32 %v234, %v426
  %v428 = vpop.f32.mrb[0].mxu0
  %429 = vmatprep.mubr.f32.mxu0 0.0
  %430 = vmatmul.mubr.f32.gmra.mrb[0].mxu0 %v302
  %v431 = vpop.f32.mrb[0].mxu0
  %v432 = vadd.f32 %v239, %v431
  %v433 = vpop.f32.mrb[0].mxu0
  %434 = vmatprep.mubr.f32.mxu0 0.0
  %435 = vmatmul.mubr.f32.gmra.mrb[0].mxu0 %v305
  %v436 = vpop.f32.mrb[0].mxu0
  %v437 = vadd.f32 %v244, %v436
  %v438 = vpop.f32.mrb[0].mxu0
  %439 = vmatprep.mubr.f32.mxu0 0.0
  %440 = vmatmul.mubr.f32.gmra.mrb[0].mxu0 %v308
  %v441 = vpop.f32.mrb[0].mxu0
  %v442 = vadd.f32 %v249, %v441
  %v443 = vpop.f32.mrb[0].mxu0
  %444 = vmatprep.mubr.f32.mxu0 0.0
  %445 = vmatmul.mubr.f32.gmra.mrb[0].mxu0 %v311
  %v446 = vpop.f32.mrb[0].mxu0
  %v447 = vadd.f32 %v254, %v446
  %v448 = vpop.f32.mrb[0].mxu0
  %449 = vmatprep.mubr.f32.mxu0 0.0
  %450 = vmatmul.mubr.f32.gmra.mrb[0].mxu0 %v314
  %v451 = vpop.f32.mrb[0].mxu0
  %v452 = vadd.f32 %v259, %v451
  %v453 = vpop.f32.mrb[0].mxu0
  %454 = vmatprep.mubr.f32.mxu0 0.0
  %455 = vmatmul.mubr.f32.gmra.mrb[0].mxu0 %v317
  %v456 = vpop.f32.mrb[0].mxu0
  %v457 = vadd.f32 %v264, %v456
  %v458 = vpop.f32.mrb[0].mxu0
  %459 = vmatprep.mubr.f32.mxu0 0.0
  %460 = vmatmul.mubr.f32.gmra.mrb[0].mxu0 %v320
  %v461 = vpop.f32.mrb[0].mxu0
  %v462 = vadd.f32 %v269, %v461
  %v463 = vpop.f32.mrb[0].mxu0
  %464 = vmatprep.mubr.f32.mxu0 0.0
  %465 = vmatmul.mubr.f32.gmra.mrb[0].mxu0 %v323
  %v466 = vpop.f32.mrb[0].mxu0
  %v467 = vadd.f32 %v274, %v466
  %v468 = vpop.f32.mrb[0].mxu0
  %469 = vdwg.mxu0
  %v470 = vld [vmem:[%s0 + $0x2] sm:$0xff]
  %v471 = vld [vmem:[%s0 + $0x12] sm:$0xff]
  %v472 = vld [vmem:[%s0 + $0x22] sm:$0xff]
  %v473 = vld [vmem:[%s0 + $0x32] sm:$0xff]
  %v474 = vld [vmem:[%s0 + $0x42] sm:$0xff]
  %v475 = vld [vmem:[%s0 + $0x52] sm:$0xff]
  %v476 = vld [vmem:[%s0 + $0x62] sm:$0xff]
  %v477 = vld [vmem:[%s0 + $0x72] sm:$0xff]
  %v478 = vld [vmem:[%s0 + $0xa2] sm:$0xff]
  %v479 = vld [vmem:[%s0 + $0xb2] sm:$0xff]
  %v480 = vld [vmem:[%s0 + $0xc2] sm:$0xff]
  %v481 = vld [vmem:[%s0 + $0xd2] sm:$0xff]
  %v482 = vld [vmem:[%s0 + $0xe2] sm:$0xff]
  %v483 = vld [vmem:[%s0 + $0xf2] sm:$0xff]
  %v484 = vld [vmem:[%s0 + $0x102] sm:$0xff]
  %v485 = vld [vmem:[%s0 + $0x112] sm:$0xff]
  %v486 = vld [vmem:[%s1 + $0x10] sm:$0xff]
  %v488 = vsel %vm83, %v470, 0
  %v491 = vsel %vm83, %v471, 0
  %v494 = vsel %vm83, %v472, 0
  %v497 = vsel %vm83, %v473, 0
  %v500 = vsel %vm83, %v474, 0
  %v503 = vsel %vm83, %v475, 0
  %v506 = vsel %vm83, %v476, 0
  %v509 = vsel %vm83, %v477, 0
  %v512 = vsel %vm83, %v478, 0
  %v515 = vsel %vm83, %v479, 0
  %v518 = vsel %vm83, %v480, 0
  %v521 = vsel %vm83, %v481, 0
  %v524 = vsel %vm83, %v482, 0
  %v527 = vsel %vm83, %v483, 0
  %v530 = vsel %vm83, %v484, 0
  %v533 = vsel %vm83, %v485, 0
  %535 = vmatprep.subr.mxu0 0.0
  %536 = vmatpush1.msra.mxu0 %v486
  %537 = vmatprep.subr.mxu0 0.0
  %538 = vmatpush1.msra.mxu0 0.0
  %539 = vmatprep.subr.mxu0 0.0
  %540 = vmatpush1.msra.mxu0 0.0
  %541 = vmatprep.subr.mxu0 0.0
  %542 = vmatpush1.msra.mxu0 0.0
  %543 = vmatprep.subr.mxu0 0.0
  %544 = vmatpush1.msra.mxu0 0.0
  %545 = vmatprep.subr.mxu0 0.0
  %546 = vmatpush1.msra.mxu0 0.0
  %547 = vmatprep.subr.mxu0 0.0
  %548 = vmatpush1.msra.mxu0 0.0
  %549 = vmatprep.subr.mxu0 0.0
  %550 = vmatpush1.msra.mxu0 0.0
  %551 = vmatprep.subr.mxu0 0.0
  %552 = vmatpush1.msra.mxu0 0.0
  %553 = vmatprep.subr.mxu0 0.0
  %554 = vmatpush1.msra.mxu0 0.0
  %555 = vmatprep.subr.mxu0 0.0
  %556 = vmatpush1.msra.mxu0 0.0
  %557 = vmatprep.subr.mxu0 0.0
  %558 = vmatpush1.msra.mxu0 0.0
  %559 = vmatprep.subr.mxu0 0.0
  %560 = vmatpush1.msra.mxu0 0.0
  %561 = vmatprep.subr.mxu0 0.0
  %562 = vmatpush1.msra.mxu0 0.0
  %563 = vmatprep.subr.mxu0 0.0
  %564 = vmatpush1.msra.mxu0 0.0
  %565 = vmatprep.subr.mxu0 0.0
  %566 = vmatpush1.msra.mxu0 0.0
  %567 = vmatprep.subr.mxu0 0.0
  %568 = vmatpush1.msra.mxu0 0.0
  %569 = vmatprep.subr.mxu0 0.0
  %570 = vmatpush1.msra.mxu0 0.0
  %571 = vmatprep.subr.mxu0 0.0
  %572 = vmatpush1.msra.mxu0 0.0
  %573 = vmatprep.subr.mxu0 0.0
  %574 = vmatpush1.msra.mxu0 0.0
  %575 = vmatprep.subr.mxu0 0.0
  %576 = vmatpush1.msra.mxu0 0.0
  %577 = vmatprep.subr.mxu0 0.0
  %578 = vmatpush1.msra.mxu0 0.0
  %579 = vmatprep.subr.mxu0 0.0
  %580 = vmatpush1.msra.mxu0 0.0
  %581 = vmatprep.subr.mxu0 0.0
  %582 = vmatpush1.msra.mxu0 0.0
  %583 = vmatprep.subr.mxu0 0.0
  %584 = vmatpush1.msra.mxu0 0.0
  %585 = vmatprep.subr.mxu0 0.0
  %586 = vmatpush1.msra.mxu0 0.0
  %587 = vmatprep.subr.mxu0 0.0
  %588 = vmatpush1.msra.mxu0 0.0
  %589 = vmatprep.subr.mxu0 0.0
  %590 = vmatpush1.msra.mxu0 0.0
  %591 = vmatprep.subr.mxu0 0.0
  %592 = vmatpush1.msra.mxu0 0.0
  %593 = vmatprep.subr.mxu0 0.0
  %594 = vmatpush1.msra.mxu0 0.0
  %595 = vmatprep.subr.mxu0 0.0
  %596 = vmatpush1.msra.mxu0 0.0
  %597 = vmatprep.subr.mxu0 0.0
  %598 = vmatpush1.msra.mxu0 0.0
  %599 = vmatprep.mubr.f32.mxu0 0.0
  %600 = vmatmul.mubr.f32.gmra.mrb[0].mxu0 %v488
  %v601 = vpop.f32.mrb[0].mxu0
  %v602 = vadd.f32 0.0, %v601
  %v603 = vpop.f32.mrb[0].mxu0
  %604 = vmatprep.mubr.f32.mxu0 0.0
  %605 = vmatmul.mubr.f32.gmra.mrb[0].mxu0 %v491
  %v606 = vpop.f32.mrb[0].mxu0
  %v607 = vadd.f32 0.0, %v606
  %v608 = vpop.f32.mrb[0].mxu0
  %609 = vmatprep.mubr.f32.mxu0 0.0
  %610 = vmatmul.mubr.f32.gmra.mrb[0].mxu0 %v494
  %v611 = vpop.f32.mrb[0].mxu0
  %v612 = vadd.f32 0.0, %v611
  %v613 = vpop.f32.mrb[0].mxu0
  %614 = vmatprep.mubr.f32.mxu0 0.0
  %615 = vmatmul.mubr.f32.gmra.mrb[0].mxu0 %v497
  %v616 = vpop.f32.mrb[0].mxu0
  %v617 = vadd.f32 0.0, %v616
  %v618 = vpop.f32.mrb[0].mxu0
  %619 = vmatprep.mubr.f32.mxu0 0.0
  %620 = vmatmul.mubr.f32.gmra.mrb[0].mxu0 %v500
  %v621 = vpop.f32.mrb[0].mxu0
  %v622 = vadd.f32 0.0, %v621
  %v623 = vpop.f32.mrb[0].mxu0
  %624 = vmatprep.mubr.f32.mxu0 0.0
  %625 = vmatmul.mubr.f32.gmra.mrb[0].mxu0 %v503
  %v626 = vpop.f32.mrb[0].mxu0
  %v627 = vadd.f32 0.0, %v626
  %v628 = vpop.f32.mrb[0].mxu0
  %629 = vmatprep.mubr.f32.mxu0 0.0
  %630 = vmatmul.mubr.f32.gmra.mrb[0].mxu0 %v506
  %v631 = vpop.f32.mrb[0].mxu0
  %v632 = vadd.f32 0.0, %v631
  %v633 = vpop.f32.mrb[0].mxu0
  %634 = vmatprep.mubr.f32.mxu0 0.0
  %635 = vmatmul.mubr.f32.gmra.mrb[0].mxu0 %v509
  %v636 = vpop.f32.mrb[0].mxu0
  %v637 = vadd.f32 0.0, %v636
  %v638 = vpop.f32.mrb[0].mxu0
  %639 = vmatprep.mubr.f32.mxu0 0.0
  %640 = vmatmul.mubr.f32.gmra.mrb[0].mxu0 %v512
  %v641 = vpop.f32.mrb[0].mxu0
  %v642 = vadd.f32 0.0, %v641
  %v643 = vpop.f32.mrb[0].mxu0
  %644 = vmatprep.mubr.f32.mxu0 0.0
  %645 = vmatmul.mubr.f32.gmra.mrb[0].mxu0 %v515
  %v646 = vpop.f32.mrb[0].mxu0
  %v647 = vadd.f32 0.0, %v646
  %v648 = vpop.f32.mrb[0].mxu0
  %649 = vmatprep.mubr.f32.mxu0 0.0
  %650 = vmatmul.mubr.f32.gmra.mrb[0].mxu0 %v518
  %v651 = vpop.f32.mrb[0].mxu0
  %v652 = vadd.f32 0.0, %v651
  %v653 = vpop.f32.mrb[0].mxu0
  %654 = vmatprep.mubr.f32.mxu0 0.0
  %655 = vmatmul.mubr.f32.gmra.mrb[0].mxu0 %v521
  %v656 = vpop.f32.mrb[0].mxu0
  %v657 = vadd.f32 0.0, %v656
  %v658 = vpop.f32.mrb[0].mxu0
  %659 = vmatprep.mubr.f32.mxu0 0.0
  %660 = vmatmul.mubr.f32.gmra.mrb[0].mxu0 %v524
  %v661 = vpop.f32.mrb[0].mxu0
  %v662 = vadd.f32 0.0, %v661
  %v663 = vpop.f32.mrb[0].mxu0
  %664 = vmatprep.mubr.f32.mxu0 0.0
  %665 = vmatmul.mubr.f32.gmra.mrb[0].mxu0 %v527
  %v666 = vpop.f32.mrb[0].mxu0
  %v667 = vadd.f32 0.0, %v666
  %v668 = vpop.f32.mrb[0].mxu0
  %669 = vmatprep.mubr.f32.mxu0 0.0
  %670 = vmatmul.mubr.f32.gmra.mrb[0].mxu0 %v530
  %v671 = vpop.f32.mrb[0].mxu0
  %v672 = vadd.f32 0.0, %v671
  %v673 = vpop.f32.mrb[0].mxu0
  %674 = vmatprep.mubr.f32.mxu0 0.0
  %675 = vmatmul.mubr.f32.gmra.mrb[0].mxu0 %v533
  %v676 = vpop.f32.mrb[0].mxu0
  %v677 = vadd.f32 0.0, %v676
  %v678 = vpop.f32.mrb[0].mxu0
  %679 = vdwg.mxu0
  %v680 = vadd.f32 %v392, %v602
  %v681 = vadd.f32 %v397, %v607
  %v682 = vadd.f32 %v402, %v612
  %v683 = vadd.f32 %v407, %v617
  %v684 = vadd.f32 %v412, %v622
  %v685 = vadd.f32 %v417, %v627
  %v686 = vadd.f32 %v422, %v632
  %v687 = vadd.f32 %v427, %v637
  %v688 = vadd.f32 %v432, %v642
  %v689 = vadd.f32 %v437, %v647
  %v690 = vadd.f32 %v442, %v652
  %v691 = vadd.f32 %v447, %v657
  %v692 = vadd.f32 %v452, %v662
  %v693 = vadd.f32 %v457, %v667
  %v694 = vadd.f32 %v462, %v672
  %v695 = vadd.f32 %v467, %v677
  %s696 = scalar_lea.vmem %s0, 16
  %v697 = vld [vmem:[%s696] sm:$0xff]
  %v698 = vld [vmem:[%s696 + $0x10] sm:$0xff]
  %v699 = vld [vmem:[%s696 + $0x20] sm:$0xff]
  %v700 = vld [vmem:[%s696 + $0x30] sm:$0xff]
  %v701 = vld [vmem:[%s696 + $0x40] sm:$0xff]
  %v702 = vld [vmem:[%s696 + $0x50] sm:$0xff]
  %v703 = vld [vmem:[%s696 + $0x60] sm:$0xff]
  %v704 = vld [vmem:[%s696 + $0x70] sm:$0xff]
  %v705 = vld [vmem:[%s696 + $0xa0] sm:$0xff]
  %v706 = vld [vmem:[%s696 + $0xb0] sm:$0xff]
  %v707 = vld [vmem:[%s696 + $0xc0] sm:$0xff]
  %v708 = vld [vmem:[%s696 + $0xd0] sm:$0xff]
  %v709 = vld [vmem:[%s696 + $0xe0] sm:$0xff]
  %v710 = vld [vmem:[%s696 + $0xf0] sm:$0xff]
  %v711 = vld [vmem:[%s696 + $0x100] sm:$0xff]
  %v712 = vld [vmem:[%s696 + $0x110] sm:$0xff]
  %v713 = vld [vmem:[%s1 + $0x18] sm:$0xff]
  %v715 = vsel %vm83, %v697, 0
  %v718 = vsel %vm83, %v698, 0
  %v721 = vsel %vm83, %v699, 0
  %v724 = vsel %vm83, %v700, 0
  %v727 = vsel %vm83, %v701, 0
  %v730 = vsel %vm83, %v702, 0
  %v733 = vsel %vm83, %v703, 0
  %v736 = vsel %vm83, %v704, 0
  %v739 = vsel %vm83, %v705, 0
  %v742 = vsel %vm83, %v706, 0
  %v745 = vsel %vm83, %v707, 0
  %v748 = vsel %vm83, %v708, 0
  %v751 = vsel %vm83, %v709, 0
  %v754 = vsel %vm83, %v710, 0
  %v757 = vsel %vm83, %v711, 0
  %v760 = vsel %vm83, %v712, 0
  %762 = vmatprep.subr.mxu0 0.0
  %763 = vmatpush1.msra.mxu0 %v713
  %764 = vmatprep.subr.mxu0 0.0
  %765 = vmatpush1.msra.mxu0 0.0
  %766 = vmatprep.subr.mxu0 0.0
  %767 = vmatpush1.msra.mxu0 0.0
  %768 = vmatprep.subr.mxu0 0.0
  %769 = vmatpush1.msra.mxu0 0.0
  %770 = vmatprep.subr.mxu0 0.0
  %771 = vmatpush1.msra.mxu0 0.0
  %772 = vmatprep.subr.mxu0 0.0
  %773 = vmatpush1.msra.mxu0 0.0
  %774 = vmatprep.subr.mxu0 0.0
  %775 = vmatpush1.msra.mxu0 0.0
  %776 = vmatprep.subr.mxu0 0.0
  %777 = vmatpush1.msra.mxu0 0.0
  %778 = vmatprep.subr.mxu0 0.0
  %779 = vmatpush1.msra.mxu0 0.0
  %780 = vmatprep.subr.mxu0 0.0
  %781 = vmatpush1.msra.mxu0 0.0
  %782 = vmatprep.subr.mxu0 0.0
  %783 = vmatpush1.msra.mxu0 0.0
  %784 = vmatprep.subr.mxu0 0.0
  %785 = vmatpush1.msra.mxu0 0.0
  %786 = vmatprep.subr.mxu0 0.0
  %787 = vmatpush1.msra.mxu0 0.0
  %788 = vmatprep.subr.mxu0 0.0
  %789 = vmatpush1.msra.mxu0 0.0
  %790 = vmatprep.subr.mxu0 0.0
  %791 = vmatpush1.msra.mxu0 0.0
  %792 = vmatprep.subr.mxu0 0.0
  %793 = vmatpush1.msra.mxu0 0.0
  %794 = vmatprep.subr.mxu0 0.0
  %795 = vmatpush1.msra.mxu0 0.0
  %796 = vmatprep.subr.mxu0 0.0
  %797 = vmatpush1.msra.mxu0 0.0
  %798 = vmatprep.subr.mxu0 0.0
  %799 = vmatpush1.msra.mxu0 0.0
  %800 = vmatprep.subr.mxu0 0.0
  %801 = vmatpush1.msra.mxu0 0.0
  %802 = vmatprep.subr.mxu0 0.0
  %803 = vmatpush1.msra.mxu0 0.0
  %804 = vmatprep.subr.mxu0 0.0
  %805 = vmatpush1.msra.mxu0 0.0
  %806 = vmatprep.subr.mxu0 0.0
  %807 = vmatpush1.msra.mxu0 0.0
  %808 = vmatprep.subr.mxu0 0.0
  %809 = vmatpush1.msra.mxu0 0.0
  %810 = vmatprep.subr.mxu0 0.0
  %811 = vmatpush1.msra.mxu0 0.0
  %812 = vmatprep.subr.mxu0 0.0
  %813 = vmatpush1.msra.mxu0 0.0
  %814 = vmatprep.subr.mxu0 0.0
  %815 = vmatpush1.msra.mxu0 0.0
  %816 = vmatprep.subr.mxu0 0.0
  %817 = vmatpush1.msra.mxu0 0.0
  %818 = vmatprep.subr.mxu0 0.0
  %819 = vmatpush1.msra.mxu0 0.0
  %820 = vmatprep.subr.mxu0 0.0
  %821 = vmatpush1.msra.mxu0 0.0
  %822 = vmatprep.subr.mxu0 0.0
  %823 = vmatpush1.msra.mxu0 0.0
  %824 = vmatprep.subr.mxu0 0.0
  %825 = vmatpush1.msra.mxu0 0.0
  %826 = vmatprep.mubr.f32.mxu0 0.0
  %827 = vmatmul.mubr.f32.gmra.mrb[0].mxu0 %v715
  %v828 = vpop.f32.mrb[0].mxu0
  %v829 = vadd.f32 0.0, %v828
  %v830 = vpop.f32.mrb[0].mxu0
  %831 = vmatprep.mubr.f32.mxu0 0.0
  %832 = vmatmul.mubr.f32.gmra.mrb[0].mxu0 %v718
  %v833 = vpop.f32.mrb[0].mxu0
  %v834 = vadd.f32 0.0, %v833
  %v835 = vpop.f32.mrb[0].mxu0
  %836 = vmatprep.mubr.f32.mxu0 0.0
  %837 = vmatmul.mubr.f32.gmra.mrb[0].mxu0 %v721
  %v838 = vpop.f32.mrb[0].mxu0
  %v839 = vadd.f32 0.0, %v838
  %v840 = vpop.f32.mrb[0].mxu0
  %841 = vmatprep.mubr.f32.mxu0 0.0
  %842 = vmatmul.mubr.f32.gmra.mrb[0].mxu0 %v724
  %v843 = vpop.f32.mrb[0].mxu0
  %v844 = vadd.f32 0.0, %v843
  %v845 = vpop.f32.mrb[0].mxu0
  %846 = vmatprep.mubr.f32.mxu0 0.0
  %847 = vmatmul.mubr.f32.gmra.mrb[0].mxu0 %v727
  %v848 = vpop.f32.mrb[0].mxu0
  %v849 = vadd.f32 0.0, %v848
  %v850 = vpop.f32.mrb[0].mxu0
  %851 = vmatprep.mubr.f32.mxu0 0.0
  %852 = vmatmul.mubr.f32.gmra.mrb[0].mxu0 %v730
  %v853 = vpop.f32.mrb[0].mxu0
  %v854 = vadd.f32 0.0, %v853
  %v855 = vpop.f32.mrb[0].mxu0
  %856 = vmatprep.mubr.f32.mxu0 0.0
  %857 = vmatmul.mubr.f32.gmra.mrb[0].mxu0 %v733
  %v858 = vpop.f32.mrb[0].mxu0
  %v859 = vadd.f32 0.0, %v858
  %v860 = vpop.f32.mrb[0].mxu0
  %861 = vmatprep.mubr.f32.mxu0 0.0
  %862 = vmatmul.mubr.f32.gmra.mrb[0].mxu0 %v736
  %v863 = vpop.f32.mrb[0].mxu0
  %v864 = vadd.f32 0.0, %v863
  %v865 = vpop.f32.mrb[0].mxu0
  %866 = vmatprep.mubr.f32.mxu0 0.0
  %867 = vmatmul.mubr.f32.gmra.mrb[0].mxu0 %v739
  %v868 = vpop.f32.mrb[0].mxu0
  %v869 = vadd.f32 0.0, %v868
  %v870 = vpop.f32.mrb[0].mxu0
  %871 = vmatprep.mubr.f32.mxu0 0.0
  %872 = vmatmul.mubr.f32.gmra.mrb[0].mxu0 %v742
  %v873 = vpop.f32.mrb[0].mxu0
  %v874 = vadd.f32 0.0, %v873
  %v875 = vpop.f32.mrb[0].mxu0
  %876 = vmatprep.mubr.f32.mxu0 0.0
  %877 = vmatmul.mubr.f32.gmra.mrb[0].mxu0 %v745
  %v878 = vpop.f32.mrb[0].mxu0
  %v879 = vadd.f32 0.0, %v878
  %v880 = vpop.f32.mrb[0].mxu0
  %881 = vmatprep.mubr.f32.mxu0 0.0
  %882 = vmatmul.mubr.f32.gmra.mrb[0].mxu0 %v748
  %v883 = vpop.f32.mrb[0].mxu0
  %v884 = vadd.f32 0.0, %v883
  %v885 = vpop.f32.mrb[0].mxu0
  %886 = vmatprep.mubr.f32.mxu0 0.0
  %887 = vmatmul.mubr.f32.gmra.mrb[0].mxu0 %v751
  %v888 = vpop.f32.mrb[0].mxu0
  %v889 = vadd.f32 0.0, %v888
  %v890 = vpop.f32.mrb[0].mxu0
  %891 = vmatprep.mubr.f32.mxu0 0.0
  %892 = vmatmul.mubr.f32.gmra.mrb[0].mxu0 %v754
  %v893 = vpop.f32.mrb[0].mxu0
  %v894 = vadd.f32 0.0, %v893
  %v895 = vpop.f32.mrb[0].mxu0
  %896 = vmatprep.mubr.f32.mxu0 0.0
  %897 = vmatmul.mubr.f32.gmra.mrb[0].mxu0 %v757
  %v898 = vpop.f32.mrb[0].mxu0
  %v899 = vadd.f32 0.0, %v898
  %v900 = vpop.f32.mrb[0].mxu0
  %901 = vmatprep.mubr.f32.mxu0 0.0
  %902 = vmatmul.mubr.f32.gmra.mrb[0].mxu0 %v760
  %v903 = vpop.f32.mrb[0].mxu0
  %v904 = vadd.f32 0.0, %v903
  %v905 = vpop.f32.mrb[0].mxu0
  %906 = vdwg.mxu0
  %v907 = vadd.f32 %v680, %v829
  %v908 = vadd.f32 %v681, %v834
  %v909 = vadd.f32 %v682, %v839
  %v910 = vadd.f32 %v683, %v844
  %v911 = vadd.f32 %v684, %v849
  %v912 = vadd.f32 %v685, %v854
  %v913 = vadd.f32 %v686, %v859
  %v914 = vadd.f32 %v687, %v864
  %v915 = vadd.f32 %v688, %v869
  %v916 = vadd.f32 %v689, %v874
  %v917 = vadd.f32 %v690, %v879
  %v918 = vadd.f32 %v691, %v884
  %v919 = vadd.f32 %v692, %v889
  %v920 = vadd.f32 %v693, %v894
  %v921 = vadd.f32 %v694, %v899
  %v922 = vadd.f32 %v695, %v904
  %v923 = vld [vmem:[%s696 + $0x1] sm:$0xff]
  %v924 = vld [vmem:[%s696 + $0x11] sm:$0xff]
  %v925 = vld [vmem:[%s696 + $0x21] sm:$0xff]
  %v926 = vld [vmem:[%s696 + $0x31] sm:$0xff]
  %v927 = vld [vmem:[%s696 + $0x41] sm:$0xff]
  %v928 = vld [vmem:[%s696 + $0x51] sm:$0xff]
  %v929 = vld [vmem:[%s696 + $0x61] sm:$0xff]
  %v930 = vld [vmem:[%s696 + $0x71] sm:$0xff]
  %v931 = vld [vmem:[%s696 + $0xa1] sm:$0xff]
  %v932 = vld [vmem:[%s696 + $0xb1] sm:$0xff]
  %v933 = vld [vmem:[%s696 + $0xc1] sm:$0xff]
  %v934 = vld [vmem:[%s696 + $0xd1] sm:$0xff]
  %v935 = vld [vmem:[%s696 + $0xe1] sm:$0xff]
  %v936 = vld [vmem:[%s696 + $0xf1] sm:$0xff]
  %v937 = vld [vmem:[%s696 + $0x101] sm:$0xff]
  %v938 = vld [vmem:[%s696 + $0x111] sm:$0xff]
  %v939 = vld [vmem:[%s1 + $0x20] sm:$0xff]
  %v941 = vsel %vm83, %v923, 0
  %v944 = vsel %vm83, %v924, 0
  %v947 = vsel %vm83, %v925, 0
  %v950 = vsel %vm83, %v926, 0
  %v953 = vsel %vm83, %v927, 0
  %v956 = vsel %vm83, %v928, 0
  %v959 = vsel %vm83, %v929, 0
  %v962 = vsel %vm83, %v930, 0
  %v965 = vsel %vm83, %v931, 0
  %v968 = vsel %vm83, %v932, 0
  %v971 = vsel %vm83, %v933, 0
  %v974 = vsel %vm83, %v934, 0
  %v977 = vsel %vm83, %v935, 0
  %v980 = vsel %vm83, %v936, 0
  %v983 = vsel %vm83, %v937, 0
  %v986 = vsel %vm83, %v938, 0
  %988 = vmatprep.subr.mxu0 0.0
  %989 = vmatpush1.msra.mxu0 %v939
  %990 = vmatprep.subr.mxu0 0.0
  %991 = vmatpush1.msra.mxu0 0.0
  %992 = vmatprep.subr.mxu0 0.0
  %993 = vmatpush1.msra.mxu0 0.0
  %994 = vmatprep.subr.mxu0 0.0
  %995 = vmatpush1.msra.mxu0 0.0
  %996 = vmatprep.subr.mxu0 0.0
  %997 = vmatpush1.msra.mxu0 0.0
  %998 = vmatprep.subr.mxu0 0.0
  %999 = vmatpush1.msra.mxu0 0.0
  %1000 = vmatprep.subr.mxu0 0.0
  %1001 = vmatpush1.msra.mxu0 0.0
  %1002 = vmatprep.subr.mxu0 0.0
  %1003 = vmatpush1.msra.mxu0 0.0
  %1004 = vmatprep.subr.mxu0 0.0
  %1005 = vmatpush1.msra.mxu0 0.0
  %1006 = vmatprep.subr.mxu0 0.0
  %1007 = vmatpush1.msra.mxu0 0.0
  %1008 = vmatprep.subr.mxu0 0.0
  %1009 = vmatpush1.msra.mxu0 0.0
  %1010 = vmatprep.subr.mxu0 0.0
  %1011 = vmatpush1.msra.mxu0 0.0
  %1012 = vmatprep.subr.mxu0 0.0
  %1013 = vmatpush1.msra.mxu0 0.0
  %1014 = vmatprep.subr.mxu0 0.0
  %1015 = vmatpush1.msra.mxu0 0.0
  %1016 = vmatprep.subr.mxu0 0.0
  %1017 = vmatpush1.msra.mxu0 0.0
  %1018 = vmatprep.subr.mxu0 0.0
  %1019 = vmatpush1.msra.mxu0 0.0
  %1020 = vmatprep.subr.mxu0 0.0
  %1021 = vmatpush1.msra.mxu0 0.0
  %1022 = vmatprep.subr.mxu0 0.0
  %1023 = vmatpush1.msra.mxu0 0.0
  %1024 = vmatprep.subr.mxu0 0.0
  %1025 = vmatpush1.msra.mxu0 0.0
  %1026 = vmatprep.subr.mxu0 0.0
  %1027 = vmatpush1.msra.mxu0 0.0
  %1028 = vmatprep.subr.mxu0 0.0
  %1029 = vmatpush1.msra.mxu0 0.0
  %1030 = vmatprep.subr.mxu0 0.0
  %1031 = vmatpush1.msra.mxu0 0.0
  %1032 = vmatprep.subr.mxu0 0.0
  %1033 = vmatpush1.msra.mxu0 0.0
  %1034 = vmatprep.subr.mxu0 0.0
  %1035 = vmatpush1.msra.mxu0 0.0
  %1036 = vmatprep.subr.mxu0 0.0
  %1037 = vmatpush1.msra.mxu0 0.0
  %1038 = vmatprep.subr.mxu0 0.0
  %1039 = vmatpush1.msra.mxu0 0.0
  %1040 = vmatprep.subr.mxu0 0.0
  %1041 = vmatpush1.msra.mxu0 0.0
  %1042 = vmatprep.subr.mxu0 0.0
  %1043 = vmatpush1.msra.mxu0 0.0
  %1044 = vmatprep.subr.mxu0 0.0
  %1045 = vmatpush1.msra.mxu0 0.0
  %1046 = vmatprep.subr.mxu0 0.0
  %1047 = vmatpush1.msra.mxu0 0.0
  %1048 = vmatprep.subr.mxu0 0.0
  %1049 = vmatpush1.msra.mxu0 0.0
  %1050 = vmatprep.subr.mxu0 0.0
  %1051 = vmatpush1.msra.mxu0 0.0
  %1052 = vmatprep.mubr.f32.mxu0 0.0
  %1053 = vmatmul.mubr.f32.gmra.mrb[0].mxu0 %v941
  %v1054 = vpop.f32.mrb[0].mxu0
  %v1055 = vadd.f32 0.0, %v1054
  %v1056 = vpop.f32.mrb[0].mxu0
  %1057 = vmatprep.mubr.f32.mxu0 0.0
  %1058 = vmatmul.mubr.f32.gmra.mrb[0].mxu0 %v944
  %v1059 = vpop.f32.mrb[0].mxu0
  %v1060 = vadd.f32 0.0, %v1059
  %v1061 = vpop.f32.mrb[0].mxu0
  %1062 = vmatprep.mubr.f32.mxu0 0.0
  %1063 = vmatmul.mubr.f32.gmra.mrb[0].mxu0 %v947
  %v1064 = vpop.f32.mrb[0].mxu0
  %v1065 = vadd.f32 0.0, %v1064
  %v1066 = vpop.f32.mrb[0].mxu0
  %1067 = vmatprep.mubr.f32.mxu0 0.0
  %1068 = vmatmul.mubr.f32.gmra.mrb[0].mxu0 %v950
  %v1069 = vpop.f32.mrb[0].mxu0
  %v1070 = vadd.f32 0.0, %v1069
  %v1071 = vpop.f32.mrb[0].mxu0
  %1072 = vmatprep.mubr.f32.mxu0 0.0
  %1073 = vmatmul.mubr.f32.gmra.mrb[0].mxu0 %v953
  %v1074 = vpop.f32.mrb[0].mxu0
  %v1075 = vadd.f32 0.0, %v1074
  %v1076 = vpop.f32.mrb[0].mxu0
  %1077 = vmatprep.mubr.f32.mxu0 0.0
  %1078 = vmatmul.mubr.f32.gmra.mrb[0].mxu0 %v956
  %v1079 = vpop.f32.mrb[0].mxu0
  %v1080 = vadd.f32 0.0, %v1079
  %v1081 = vpop.f32.mrb[0].mxu0
  %1082 = vmatprep.mubr.f32.mxu0 0.0
  %1083 = vmatmul.mubr.f32.gmra.mrb[0].mxu0 %v959
  %v1084 = vpop.f32.mrb[0].mxu0
  %v1085 = vadd.f32 0.0, %v1084
  %v1086 = vpop.f32.mrb[0].mxu0
  %1087 = vmatprep.mubr.f32.mxu0 0.0
  %1088 = vmatmul.mubr.f32.gmra.mrb[0].mxu0 %v962
  %v1089 = vpop.f32.mrb[0].mxu0
  %v1090 = vadd.f32 0.0, %v1089
  %v1091 = vpop.f32.mrb[0].mxu0
  %1092 = vmatprep.mubr.f32.mxu0 0.0
  %1093 = vmatmul.mubr.f32.gmra.mrb[0].mxu0 %v965
  %v1094 = vpop.f32.mrb[0].mxu0
  %v1095 = vadd.f32 0.0, %v1094
  %v1096 = vpop.f32.mrb[0].mxu0
  %1097 = vmatprep.mubr.f32.mxu0 0.0
  %1098 = vmatmul.mubr.f32.gmra.mrb[0].mxu0 %v968
  %v1099 = vpop.f32.mrb[0].mxu0
  %v1100 = vadd.f32 0.0, %v1099
  %v1101 = vpop.f32.mrb[0].mxu0
  %1102 = vmatprep.mubr.f32.mxu0 0.0
  %1103 = vmatmul.mubr.f32.gmra.mrb[0].mxu0 %v971
  %v1104 = vpop.f32.mrb[0].mxu0
  %v1105 = vadd.f32 0.0, %v1104
  %v1106 = vpop.f32.mrb[0].mxu0
  %1107 = vmatprep.mubr.f32.mxu0 0.0
  %1108 = vmatmul.mubr.f32.gmra.mrb[0].mxu0 %v974
  %v1109 = vpop.f32.mrb[0].mxu0
  %v1110 = vadd.f32 0.0, %v1109
  %v1111 = vpop.f32.mrb[0].mxu0
  %1112 = vmatprep.mubr.f32.mxu0 0.0
  %1113 = vmatmul.mubr.f32.gmra.mrb[0].mxu0 %v977
  %v1114 = vpop.f32.mrb[0].mxu0
  %v1115 = vadd.f32 0.0, %v1114
  %v1116 = vpop.f32.mrb[0].mxu0
  %1117 = vmatprep.mubr.f32.mxu0 0.0
  %1118 = vmatmul.mubr.f32.gmra.mrb[0].mxu0 %v980
  %v1119 = vpop.f32.mrb[0].mxu0
  %v1120 = vadd.f32 0.0, %v1119
  %v1121 = vpop.f32.mrb[0].mxu0
  %1122 = vmatprep.mubr.f32.mxu0 0.0
  %1123 = vmatmul.mubr.f32.gmra.mrb[0].mxu0 %v983
  %v1124 = vpop.f32.mrb[0].mxu0
  %v1125 = vadd.f32 0.0, %v1124
  %v1126 = vpop.f32.mrb[0].mxu0
  %1127 = vmatprep.mubr.f32.mxu0 0.0
  %1128 = vmatmul.mubr.f32.gmra.mrb[0].mxu0 %v986
  %v1129 = vpop.f32.mrb[0].mxu0
  %v1130 = vadd.f32 0.0, %v1129
  %v1131 = vpop.f32.mrb[0].mxu0
  %1132 = vdwg.mxu0
  %v1133 = vadd.f32 %v907, %v1055
  %v1134 = vadd.f32 %v908, %v1060
  %v1135 = vadd.f32 %v909, %v1065
  %v1136 = vadd.f32 %v910, %v1070
  %v1137 = vadd.f32 %v911, %v1075
  %v1138 = vadd.f32 %v912, %v1080
  %v1139 = vadd.f32 %v913, %v1085
  %v1140 = vadd.f32 %v914, %v1090
  %v1141 = vadd.f32 %v915, %v1095
  %v1142 = vadd.f32 %v916, %v1100
  %v1143 = vadd.f32 %v917, %v1105
  %v1144 = vadd.f32 %v918, %v1110
  %v1145 = vadd.f32 %v919, %v1115
  %v1146 = vadd.f32 %v920, %v1120
  %v1147 = vadd.f32 %v921, %v1125
  %v1148 = vadd.f32 %v922, %v1130
  %v1149 = vld [vmem:[%s696 + $0x2] sm:$0xff]
  %v1150 = vld [vmem:[%s696 + $0x12] sm:$0xff]
  %v1151 = vld [vmem:[%s696 + $0x22] sm:$0xff]
  %v1152 = vld [vmem:[%s696 + $0x32] sm:$0xff]
  %v1153 = vld [vmem:[%s696 + $0x42] sm:$0xff]
  %v1154 = vld [vmem:[%s696 + $0x52] sm:$0xff]
  %v1155 = vld [vmem:[%s696 + $0x62] sm:$0xff]
  %v1156 = vld [vmem:[%s696 + $0x72] sm:$0xff]
  %v1157 = vld [vmem:[%s696 + $0xa2] sm:$0xff]
  %v1158 = vld [vmem:[%s696 + $0xb2] sm:$0xff]
  %v1159 = vld [vmem:[%s696 + $0xc2] sm:$0xff]
  %v1160 = vld [vmem:[%s696 + $0xd2] sm:$0xff]
  %v1161 = vld [vmem:[%s696 + $0xe2] sm:$0xff]
  %v1162 = vld [vmem:[%s696 + $0xf2] sm:$0xff]
  %v1163 = vld [vmem:[%s696 + $0x102] sm:$0xff]
  %v1164 = vld [vmem:[%s696 + $0x112] sm:$0xff]
  %v1165 = vld [vmem:[%s1 + $0x28] sm:$0xff]
  %v1167 = vsel %vm83, %v1149, 0
  %v1170 = vsel %vm83, %v1150, 0
  %v1173 = vsel %vm83, %v1151, 0
  %v1176 = vsel %vm83, %v1152, 0
  %v1179 = vsel %vm83, %v1153, 0
  %v1182 = vsel %vm83, %v1154, 0
  %v1185 = vsel %vm83, %v1155, 0
  %v1188 = vsel %vm83, %v1156, 0
  %v1191 = vsel %vm83, %v1157, 0
  %v1194 = vsel %vm83, %v1158, 0
  %v1197 = vsel %vm83, %v1159, 0
  %v1200 = vsel %vm83, %v1160, 0
  %v1203 = vsel %vm83, %v1161, 0
  %v1206 = vsel %vm83, %v1162, 0
  %v1209 = vsel %vm83, %v1163, 0
  %v1212 = vsel %vm83, %v1164, 0
  %1214 = vmatprep.subr.mxu0 0.0
  %1215 = vmatpush1.msra.mxu0 %v1165
  %1216 = vmatprep.subr.mxu0 0.0
  %1217 = vmatpush1.msra.mxu0 0.0
  %1218 = vmatprep.subr.mxu0 0.0
  %1219 = vmatpush1.msra.mxu0 0.0
  %1220 = vmatprep.subr.mxu0 0.0
  %1221 = vmatpush1.msra.mxu0 0.0
  %1222 = vmatprep.subr.mxu0 0.0
  %1223 = vmatpush1.msra.mxu0 0.0
  %1224 = vmatprep.subr.mxu0 0.0
  %1225 = vmatpush1.msra.mxu0 0.0
  %1226 = vmatprep.subr.mxu0 0.0
  %1227 = vmatpush1.msra.mxu0 0.0
  %1228 = vmatprep.subr.mxu0 0.0
  %1229 = vmatpush1.msra.mxu0 0.0
  %1230 = vmatprep.subr.mxu0 0.0
  %1231 = vmatpush1.msra.mxu0 0.0
  %1232 = vmatprep.subr.mxu0 0.0
  %1233 = vmatpush1.msra.mxu0 0.0
  %1234 = vmatprep.subr.mxu0 0.0
  %1235 = vmatpush1.msra.mxu0 0.0
  %1236 = vmatprep.subr.mxu0 0.0
  %1237 = vmatpush1.msra.mxu0 0.0
  %1238 = vmatprep.subr.mxu0 0.0
  %1239 = vmatpush1.msra.mxu0 0.0
  %1240 = vmatprep.subr.mxu0 0.0
  %1241 = vmatpush1.msra.mxu0 0.0
  %1242 = vmatprep.subr.mxu0 0.0
  %1243 = vmatpush1.msra.mxu0 0.0
  %1244 = vmatprep.subr.mxu0 0.0
  %1245 = vmatpush1.msra.mxu0 0.0
  %1246 = vmatprep.subr.mxu0 0.0
  %1247 = vmatpush1.msra.mxu0 0.0
  %1248 = vmatprep.subr.mxu0 0.0
  %1249 = vmatpush1.msra.mxu0 0.0
  %1250 = vmatprep.subr.mxu0 0.0
  %1251 = vmatpush1.msra.mxu0 0.0
  %1252 = vmatprep.subr.mxu0 0.0
  %1253 = vmatpush1.msra.mxu0 0.0
  %1254 = vmatprep.subr.mxu0 0.0
  %1255 = vmatpush1.msra.mxu0 0.0
  %1256 = vmatprep.subr.mxu0 0.0
  %1257 = vmatpush1.msra.mxu0 0.0
  %1258 = vmatprep.subr.mxu0 0.0
  %1259 = vmatpush1.msra.mxu0 0.0
  %1260 = vmatprep.subr.mxu0 0.0
  %1261 = vmatpush1.msra.mxu0 0.0
  %1262 = vmatprep.subr.mxu0 0.0
  %1263 = vmatpush1.msra.mxu0 0.0
  %1264 = vmatprep.subr.mxu0 0.0
  %1265 = vmatpush1.msra.mxu0 0.0
  %1266 = vmatprep.subr.mxu0 0.0
  %1267 = vmatpush1.msra.mxu0 0.0
  %1268 = vmatprep.subr.mxu0 0.0
  %1269 = vmatpush1.msra.mxu0 0.0
  %1270 = vmatprep.subr.mxu0 0.0
  %1271 = vmatpush1.msra.mxu0 0.0
  %1272 = vmatprep.subr.mxu0 0.0
  %1273 = vmatpush1.msra.mxu0 0.0
  %1274 = vmatprep.subr.mxu0 0.0
  %1275 = vmatpush1.msra.mxu0 0.0
  %1276 = vmatprep.subr.mxu0 0.0
  %1277 = vmatpush1.msra.mxu0 0.0
  %1278 = vmatprep.mubr.f32.mxu0 0.0
  %1279 = vmatmul.mubr.f32.gmra.mrb[0].mxu0 %v1167
  %v1280 = vpop.f32.mrb[0].mxu0
  %v1281 = vadd.f32 0.0, %v1280
  %v1282 = vpop.f32.mrb[0].mxu0
  %1283 = vmatprep.mubr.f32.mxu0 0.0
  %1284 = vmatmul.mubr.f32.gmra.mrb[0].mxu0 %v1170
  %v1285 = vpop.f32.mrb[0].mxu0
  %v1286 = vadd.f32 0.0, %v1285
  %v1287 = vpop.f32.mrb[0].mxu0
  %1288 = vmatprep.mubr.f32.mxu0 0.0
  %1289 = vmatmul.mubr.f32.gmra.mrb[0].mxu0 %v1173
  %v1290 = vpop.f32.mrb[0].mxu0
  %v1291 = vadd.f32 0.0, %v1290
  %v1292 = vpop.f32.mrb[0].mxu0
  %1293 = vmatprep.mubr.f32.mxu0 0.0
  %1294 = vmatmul.mubr.f32.gmra.mrb[0].mxu0 %v1176
  %v1295 = vpop.f32.mrb[0].mxu0
  %v1296 = vadd.f32 0.0, %v1295
  %v1297 = vpop.f32.mrb[0].mxu0
  %1298 = vmatprep.mubr.f32.mxu0 0.0
  %1299 = vmatmul.mubr.f32.gmra.mrb[0].mxu0 %v1179
  %v1300 = vpop.f32.mrb[0].mxu0
  %v1301 = vadd.f32 0.0, %v1300
  %v1302 = vpop.f32.mrb[0].mxu0
  %1303 = vmatprep.mubr.f32.mxu0 0.0
  %1304 = vmatmul.mubr.f32.gmra.mrb[0].mxu0 %v1182
  %v1305 = vpop.f32.mrb[0].mxu0
  %v1306 = vadd.f32 0.0, %v1305
  %v1307 = vpop.f32.mrb[0].mxu0
  %1308 = vmatprep.mubr.f32.mxu0 0.0
  %1309 = vmatmul.mubr.f32.gmra.mrb[0].mxu0 %v1185
  %v1310 = vpop.f32.mrb[0].mxu0
  %v1311 = vadd.f32 0.0, %v1310
  %v1312 = vpop.f32.mrb[0].mxu0
  %1313 = vmatprep.mubr.f32.mxu0 0.0
  %1314 = vmatmul.mubr.f32.gmra.mrb[0].mxu0 %v1188
  %v1315 = vpop.f32.mrb[0].mxu0
  %v1316 = vadd.f32 0.0, %v1315
  %v1317 = vpop.f32.mrb[0].mxu0
  %1318 = vmatprep.mubr.f32.mxu0 0.0
  %1319 = vmatmul.mubr.f32.gmra.mrb[0].mxu0 %v1191
  %v1320 = vpop.f32.mrb[0].mxu0
  %v1321 = vadd.f32 0.0, %v1320
  %v1322 = vpop.f32.mrb[0].mxu0
  %1323 = vmatprep.mubr.f32.mxu0 0.0
  %1324 = vmatmul.mubr.f32.gmra.mrb[0].mxu0 %v1194
  %v1325 = vpop.f32.mrb[0].mxu0
  %v1326 = vadd.f32 0.0, %v1325
  %v1327 = vpop.f32.mrb[0].mxu0
  %1328 = vmatprep.mubr.f32.mxu0 0.0
  %1329 = vmatmul.mubr.f32.gmra.mrb[0].mxu0 %v1197
  %v1330 = vpop.f32.mrb[0].mxu0
  %v1331 = vadd.f32 0.0, %v1330
  %v1332 = vpop.f32.mrb[0].mxu0
  %1333 = vmatprep.mubr.f32.mxu0 0.0
  %1334 = vmatmul.mubr.f32.gmra.mrb[0].mxu0 %v1200
  %v1335 = vpop.f32.mrb[0].mxu0
  %v1336 = vadd.f32 0.0, %v1335
  %v1337 = vpop.f32.mrb[0].mxu0
  %1338 = vmatprep.mubr.f32.mxu0 0.0
  %1339 = vmatmul.mubr.f32.gmra.mrb[0].mxu0 %v1203
  %v1340 = vpop.f32.mrb[0].mxu0
  %v1341 = vadd.f32 0.0, %v1340
  %v1342 = vpop.f32.mrb[0].mxu0
  %1343 = vmatprep.mubr.f32.mxu0 0.0
  %1344 = vmatmul.mubr.f32.gmra.mrb[0].mxu0 %v1206
  %v1345 = vpop.f32.mrb[0].mxu0
  %v1346 = vadd.f32 0.0, %v1345
  %v1347 = vpop.f32.mrb[0].mxu0
  %1348 = vmatprep.mubr.f32.mxu0 0.0
  %1349 = vmatmul.mubr.f32.gmra.mrb[0].mxu0 %v1209
  %v1350 = vpop.f32.mrb[0].mxu0
  %v1351 = vadd.f32 0.0, %v1350
  %v1352 = vpop.f32.mrb[0].mxu0
  %1353 = vmatprep.mubr.f32.mxu0 0.0
  %1354 = vmatmul.mubr.f32.gmra.mrb[0].mxu0 %v1212
  %v1355 = vpop.f32.mrb[0].mxu0
  %v1356 = vadd.f32 0.0, %v1355
  %v1357 = vpop.f32.mrb[0].mxu0
  %1358 = vdwg.mxu0
  %v1359 = vadd.f32 %v1133, %v1281
  %v1360 = vadd.f32 %v1134, %v1286
  %v1361 = vadd.f32 %v1135, %v1291
  %v1362 = vadd.f32 %v1136, %v1296
  %v1363 = vadd.f32 %v1137, %v1301
  %v1364 = vadd.f32 %v1138, %v1306
  %v1365 = vadd.f32 %v1139, %v1311
  %v1366 = vadd.f32 %v1140, %v1316
  %v1367 = vadd.f32 %v1141, %v1321
  %v1368 = vadd.f32 %v1142, %v1326
  %v1369 = vadd.f32 %v1143, %v1331
  %v1370 = vadd.f32 %v1144, %v1336
  %v1371 = vadd.f32 %v1145, %v1341
  %v1372 = vadd.f32 %v1146, %v1346
  %v1373 = vadd.f32 %v1147, %v1351
  %v1374 = vadd.f32 %v1148, %v1356
  %s1375 = scalar_lea.vmem %s0, 32
  %v1376 = vld [vmem:[%s1375] sm:$0xff]
  %v1377 = vld [vmem:[%s1375 + $0x10] sm:$0xff]
  %v1378 = vld [vmem:[%s1375 + $0x20] sm:$0xff]
  %v1379 = vld [vmem:[%s1375 + $0x30] sm:$0xff]
  %v1380 = vld [vmem:[%s1375 + $0x40] sm:$0xff]
  %v1381 = vld [vmem:[%s1375 + $0x50] sm:$0xff]
  %v1382 = vld [vmem:[%s1375 + $0x60] sm:$0xff]
  %v1383 = vld [vmem:[%s1375 + $0x70] sm:$0xff]
  %v1384 = vld [vmem:[%s1375 + $0xa0] sm:$0xff]
  %v1385 = vld [vmem:[%s1375 + $0xb0] sm:$0xff]
  %v1386 = vld [vmem:[%s1375 + $0xc0] sm:$0xff]
  %v1387 = vld [vmem:[%s1375 + $0xd0] sm:$0xff]
  %v1388 = vld [vmem:[%s1375 + $0xe0] sm:$0xff]
  %v1389 = vld [vmem:[%s1375 + $0xf0] sm:$0xff]
  %v1390 = vld [vmem:[%s1375 + $0x100] sm:$0xff]
  %v1391 = vld [vmem:[%s1375 + $0x110] sm:$0xff]
  %v1392 = vld [vmem:[%s1 + $0x30] sm:$0xff]
  %v1394 = vsel %vm83, %v1376, 0
  %v1397 = vsel %vm83, %v1377, 0
  %v1400 = vsel %vm83, %v1378, 0
  %v1403 = vsel %vm83, %v1379, 0
  %v1406 = vsel %vm83, %v1380, 0
  %v1409 = vsel %vm83, %v1381, 0
  %v1412 = vsel %vm83, %v1382, 0
  %v1415 = vsel %vm83, %v1383, 0
  %v1418 = vsel %vm83, %v1384, 0
  %v1421 = vsel %vm83, %v1385, 0
  %v1424 = vsel %vm83, %v1386, 0
  %v1427 = vsel %vm83, %v1387, 0
  %v1430 = vsel %vm83, %v1388, 0
  %v1433 = vsel %vm83, %v1389, 0
  %v1436 = vsel %vm83, %v1390, 0
  %v1439 = vsel %vm83, %v1391, 0
  %1441 = vmatprep.subr.mxu0 0.0
  %1442 = vmatpush1.msra.mxu0 %v1392
  %1443 = vmatprep.subr.mxu0 0.0
  %1444 = vmatpush1.msra.mxu0 0.0
  %1445 = vmatprep.subr.mxu0 0.0
  %1446 = vmatpush1.msra.mxu0 0.0
  %1447 = vmatprep.subr.mxu0 0.0
  %1448 = vmatpush1.msra.mxu0 0.0
  %1449 = vmatprep.subr.mxu0 0.0
  %1450 = vmatpush1.msra.mxu0 0.0
  %1451 = vmatprep.subr.mxu0 0.0
  %1452 = vmatpush1.msra.mxu0 0.0
  %1453 = vmatprep.subr.mxu0 0.0
  %1454 = vmatpush1.msra.mxu0 0.0
  %1455 = vmatprep.subr.mxu0 0.0
  %1456 = vmatpush1.msra.mxu0 0.0
  %1457 = vmatprep.subr.mxu0 0.0
  %1458 = vmatpush1.msra.mxu0 0.0
  %1459 = vmatprep.subr.mxu0 0.0
  %1460 = vmatpush1.msra.mxu0 0.0
  %1461 = vmatprep.subr.mxu0 0.0
  %1462 = vmatpush1.msra.mxu0 0.0
  %1463 = vmatprep.subr.mxu0 0.0
  %1464 = vmatpush1.msra.mxu0 0.0
  %1465 = vmatprep.subr.mxu0 0.0
  %1466 = vmatpush1.msra.mxu0 0.0
  %1467 = vmatprep.subr.mxu0 0.0
  %1468 = vmatpush1.msra.mxu0 0.0
  %1469 = vmatprep.subr.mxu0 0.0
  %1470 = vmatpush1.msra.mxu0 0.0
  %1471 = vmatprep.subr.mxu0 0.0
  %1472 = vmatpush1.msra.mxu0 0.0
  %1473 = vmatprep.subr.mxu0 0.0
  %1474 = vmatpush1.msra.mxu0 0.0
  %1475 = vmatprep.subr.mxu0 0.0
  %1476 = vmatpush1.msra.mxu0 0.0
  %1477 = vmatprep.subr.mxu0 0.0
  %1478 = vmatpush1.msra.mxu0 0.0
  %1479 = vmatprep.subr.mxu0 0.0
  %1480 = vmatpush1.msra.mxu0 0.0
  %1481 = vmatprep.subr.mxu0 0.0
  %1482 = vmatpush1.msra.mxu0 0.0
  %1483 = vmatprep.subr.mxu0 0.0
  %1484 = vmatpush1.msra.mxu0 0.0
  %1485 = vmatprep.subr.mxu0 0.0
  %1486 = vmatpush1.msra.mxu0 0.0
  %1487 = vmatprep.subr.mxu0 0.0
  %1488 = vmatpush1.msra.mxu0 0.0
  %1489 = vmatprep.subr.mxu0 0.0
  %1490 = vmatpush1.msra.mxu0 0.0
  %1491 = vmatprep.subr.mxu0 0.0
  %1492 = vmatpush1.msra.mxu0 0.0
  %1493 = vmatprep.subr.mxu0 0.0
  %1494 = vmatpush1.msra.mxu0 0.0
  %1495 = vmatprep.subr.mxu0 0.0
  %1496 = vmatpush1.msra.mxu0 0.0
  %1497 = vmatprep.subr.mxu0 0.0
  %1498 = vmatpush1.msra.mxu0 0.0
  %1499 = vmatprep.subr.mxu0 0.0
  %1500 = vmatpush1.msra.mxu0 0.0
  %1501 = vmatprep.subr.mxu0 0.0
  %1502 = vmatpush1.msra.mxu0 0.0
  %1503 = vmatprep.subr.mxu0 0.0
  %1504 = vmatpush1.msra.mxu0 0.0
  %1505 = vmatprep.mubr.f32.mxu0 0.0
  %1506 = vmatmul.mubr.f32.gmra.mrb[0].mxu0 %v1394
  %v1507 = vpop.f32.mrb[0].mxu0
  %v1508 = vadd.f32 0.0, %v1507
  %v1509 = vpop.f32.mrb[0].mxu0
  %1510 = vmatprep.mubr.f32.mxu0 0.0
  %1511 = vmatmul.mubr.f32.gmra.mrb[0].mxu0 %v1397
  %v1512 = vpop.f32.mrb[0].mxu0
  %v1513 = vadd.f32 0.0, %v1512
  %v1514 = vpop.f32.mrb[0].mxu0
  %1515 = vmatprep.mubr.f32.mxu0 0.0
  %1516 = vmatmul.mubr.f32.gmra.mrb[0].mxu0 %v1400
  %v1517 = vpop.f32.mrb[0].mxu0
  %v1518 = vadd.f32 0.0, %v1517
  %v1519 = vpop.f32.mrb[0].mxu0
  %1520 = vmatprep.mubr.f32.mxu0 0.0
  %1521 = vmatmul.mubr.f32.gmra.mrb[0].mxu0 %v1403
  %v1522 = vpop.f32.mrb[0].mxu0
  %v1523 = vadd.f32 0.0, %v1522
  %v1524 = vpop.f32.mrb[0].mxu0
  %1525 = vmatprep.mubr.f32.mxu0 0.0
  %1526 = vmatmul.mubr.f32.gmra.mrb[0].mxu0 %v1406
  %v1527 = vpop.f32.mrb[0].mxu0
  %v1528 = vadd.f32 0.0, %v1527
  %v1529 = vpop.f32.mrb[0].mxu0
  %1530 = vmatprep.mubr.f32.mxu0 0.0
  %1531 = vmatmul.mubr.f32.gmra.mrb[0].mxu0 %v1409
  %v1532 = vpop.f32.mrb[0].mxu0
  %v1533 = vadd.f32 0.0, %v1532
  %v1534 = vpop.f32.mrb[0].mxu0
  %1535 = vmatprep.mubr.f32.mxu0 0.0
  %1536 = vmatmul.mubr.f32.gmra.mrb[0].mxu0 %v1412
  %v1537 = vpop.f32.mrb[0].mxu0
  %v1538 = vadd.f32 0.0, %v1537
  %v1539 = vpop.f32.mrb[0].mxu0
  %1540 = vmatprep.mubr.f32.mxu0 0.0
  %1541 = vmatmul.mubr.f32.gmra.mrb[0].mxu0 %v1415
  %v1542 = vpop.f32.mrb[0].mxu0
  %v1543 = vadd.f32 0.0, %v1542
  %v1544 = vpop.f32.mrb[0].mxu0
  %1545 = vmatprep.mubr.f32.mxu0 0.0
  %1546 = vmatmul.mubr.f32.gmra.mrb[0].mxu0 %v1418
  %v1547 = vpop.f32.mrb[0].mxu0
  %v1548 = vadd.f32 0.0, %v1547
  %v1549 = vpop.f32.mrb[0].mxu0
  %1550 = vmatprep.mubr.f32.mxu0 0.0
  %1551 = vmatmul.mubr.f32.gmra.mrb[0].mxu0 %v1421
  %v1552 = vpop.f32.mrb[0].mxu0
  %v1553 = vadd.f32 0.0, %v1552
  %v1554 = vpop.f32.mrb[0].mxu0
  %1555 = vmatprep.mubr.f32.mxu0 0.0
  %1556 = vmatmul.mubr.f32.gmra.mrb[0].mxu0 %v1424
  %v1557 = vpop.f32.mrb[0].mxu0
  %v1558 = vadd.f32 0.0, %v1557
  %v1559 = vpop.f32.mrb[0].mxu0
  %1560 = vmatprep.mubr.f32.mxu0 0.0
  %1561 = vmatmul.mubr.f32.gmra.mrb[0].mxu0 %v1427
  %v1562 = vpop.f32.mrb[0].mxu0
  %v1563 = vadd.f32 0.0, %v1562
  %v1564 = vpop.f32.mrb[0].mxu0
  %1565 = vmatprep.mubr.f32.mxu0 0.0
  %1566 = vmatmul.mubr.f32.gmra.mrb[0].mxu0 %v1430
  %v1567 = vpop.f32.mrb[0].mxu0
  %v1568 = vadd.f32 0.0, %v1567
  %v1569 = vpop.f32.mrb[0].mxu0
  %1570 = vmatprep.mubr.f32.mxu0 0.0
  %1571 = vmatmul.mubr.f32.gmra.mrb[0].mxu0 %v1433
  %v1572 = vpop.f32.mrb[0].mxu0
  %v1573 = vadd.f32 0.0, %v1572
  %v1574 = vpop.f32.mrb[0].mxu0
  %1575 = vmatprep.mubr.f32.mxu0 0.0
  %1576 = vmatmul.mubr.f32.gmra.mrb[0].mxu0 %v1436
  %v1577 = vpop.f32.mrb[0].mxu0
  %v1578 = vadd.f32 0.0, %v1577
  %v1579 = vpop.f32.mrb[0].mxu0
  %1580 = vmatprep.mubr.f32.mxu0 0.0
  %1581 = vmatmul.mubr.f32.gmra.mrb[0].mxu0 %v1439
  %v1582 = vpop.f32.mrb[0].mxu0
  %v1583 = vadd.f32 0.0, %v1582
  %v1584 = vpop.f32.mrb[0].mxu0
  %1585 = vdwg.mxu0
  %v1586 = vadd.f32 %v1359, %v1508
  %v1587 = vadd.f32 %v1360, %v1513
  %v1588 = vadd.f32 %v1361, %v1518
  %v1589 = vadd.f32 %v1362, %v1523
  %v1590 = vadd.f32 %v1363, %v1528
  %v1591 = vadd.f32 %v1364, %v1533
  %v1592 = vadd.f32 %v1365, %v1538
  %v1593 = vadd.f32 %v1366, %v1543
  %v1594 = vadd.f32 %v1367, %v1548
  %v1595 = vadd.f32 %v1368, %v1553
  %v1596 = vadd.f32 %v1369, %v1558
  %v1597 = vadd.f32 %v1370, %v1563
  %v1598 = vadd.f32 %v1371, %v1568
  %v1599 = vadd.f32 %v1372, %v1573
  %v1600 = vadd.f32 %v1373, %v1578
  %v1601 = vadd.f32 %v1374, %v1583
  %v1602 = vld [vmem:[%s1375 + $0x1] sm:$0xff]
  %v1603 = vld [vmem:[%s1375 + $0x11] sm:$0xff]
  %v1604 = vld [vmem:[%s1375 + $0x21] sm:$0xff]
  %v1605 = vld [vmem:[%s1375 + $0x31] sm:$0xff]
  %v1606 = vld [vmem:[%s1375 + $0x41] sm:$0xff]
  %v1607 = vld [vmem:[%s1375 + $0x51] sm:$0xff]
  %v1608 = vld [vmem:[%s1375 + $0x61] sm:$0xff]
  %v1609 = vld [vmem:[%s1375 + $0x71] sm:$0xff]
  %v1610 = vld [vmem:[%s1375 + $0xa1] sm:$0xff]
  %v1611 = vld [vmem:[%s1375 + $0xb1] sm:$0xff]
  %v1612 = vld [vmem:[%s1375 + $0xc1] sm:$0xff]
  %v1613 = vld [vmem:[%s1375 + $0xd1] sm:$0xff]
  %v1614 = vld [vmem:[%s1375 + $0xe1] sm:$0xff]
  %v1615 = vld [vmem:[%s1375 + $0xf1] sm:$0xff]
  %v1616 = vld [vmem:[%s1375 + $0x101] sm:$0xff]
  %v1617 = vld [vmem:[%s1375 + $0x111] sm:$0xff]
  %v1618 = vld [vmem:[%s1 + $0x38] sm:$0xff]
  %v1620 = vsel %vm83, %v1602, 0
  %v1623 = vsel %vm83, %v1603, 0
  %v1626 = vsel %vm83, %v1604, 0
  %v1629 = vsel %vm83, %v1605, 0
  %v1632 = vsel %vm83, %v1606, 0
  %v1635 = vsel %vm83, %v1607, 0
  %v1638 = vsel %vm83, %v1608, 0
  %v1641 = vsel %vm83, %v1609, 0
  %v1644 = vsel %vm83, %v1610, 0
  %v1647 = vsel %vm83, %v1611, 0
  %v1650 = vsel %vm83, %v1612, 0
  %v1653 = vsel %vm83, %v1613, 0
  %v1656 = vsel %vm83, %v1614, 0
  %v1659 = vsel %vm83, %v1615, 0
  %v1662 = vsel %vm83, %v1616, 0
  %v1665 = vsel %vm83, %v1617, 0
  %1667 = vmatprep.subr.mxu0 0.0
  %1668 = vmatpush1.msra.mxu0 %v1618
  %1669 = vmatprep.subr.mxu0 0.0
  %1670 = vmatpush1.msra.mxu0 0.0
  %1671 = vmatprep.subr.mxu0 0.0
  %1672 = vmatpush1.msra.mxu0 0.0
  %1673 = vmatprep.subr.mxu0 0.0
  %1674 = vmatpush1.msra.mxu0 0.0
  %1675 = vmatprep.subr.mxu0 0.0
  %1676 = vmatpush1.msra.mxu0 0.0
  %1677 = vmatprep.subr.mxu0 0.0
  %1678 = vmatpush1.msra.mxu0 0.0
  %1679 = vmatprep.subr.mxu0 0.0
  %1680 = vmatpush1.msra.mxu0 0.0
  %1681 = vmatprep.subr.mxu0 0.0
  %1682 = vmatpush1.msra.mxu0 0.0
  %1683 = vmatprep.subr.mxu0 0.0
  %1684 = vmatpush1.msra.mxu0 0.0
  %1685 = vmatprep.subr.mxu0 0.0
  %1686 = vmatpush1.msra.mxu0 0.0
  %1687 = vmatprep.subr.mxu0 0.0
  %1688 = vmatpush1.msra.mxu0 0.0
  %1689 = vmatprep.subr.mxu0 0.0
  %1690 = vmatpush1.msra.mxu0 0.0
  %1691 = vmatprep.subr.mxu0 0.0
  %1692 = vmatpush1.msra.mxu0 0.0
  %1693 = vmatprep.subr.mxu0 0.0
  %1694 = vmatpush1.msra.mxu0 0.0
  %1695 = vmatprep.subr.mxu0 0.0
  %1696 = vmatpush1.msra.mxu0 0.0
  %1697 = vmatprep.subr.mxu0 0.0
  %1698 = vmatpush1.msra.mxu0 0.0
  %1699 = vmatprep.subr.mxu0 0.0
  %1700 = vmatpush1.msra.mxu0 0.0
  %1701 = vmatprep.subr.mxu0 0.0
  %1702 = vmatpush1.msra.mxu0 0.0
  %1703 = vmatprep.subr.mxu0 0.0
  %1704 = vmatpush1.msra.mxu0 0.0
  %1705 = vmatprep.subr.mxu0 0.0
  %1706 = vmatpush1.msra.mxu0 0.0
  %1707 = vmatprep.subr.mxu0 0.0
  %1708 = vmatpush1.msra.mxu0 0.0
  %1709 = vmatprep.subr.mxu0 0.0
  %1710 = vmatpush1.msra.mxu0 0.0
  %1711 = vmatprep.subr.mxu0 0.0
  %1712 = vmatpush1.msra.mxu0 0.0
  %1713 = vmatprep.subr.mxu0 0.0
  %1714 = vmatpush1.msra.mxu0 0.0
  %1715 = vmatprep.subr.mxu0 0.0
  %1716 = vmatpush1.msra.mxu0 0.0
  %1717 = vmatprep.subr.mxu0 0.0
  %1718 = vmatpush1.msra.mxu0 0.0
  %1719 = vmatprep.subr.mxu0 0.0
  %1720 = vmatpush1.msra.mxu0 0.0
  %1721 = vmatprep.subr.mxu0 0.0
  %1722 = vmatpush1.msra.mxu0 0.0
  %1723 = vmatprep.subr.mxu0 0.0
  %1724 = vmatpush1.msra.mxu0 0.0
  %1725 = vmatprep.subr.mxu0 0.0
  %1726 = vmatpush1.msra.mxu0 0.0
  %1727 = vmatprep.subr.mxu0 0.0
  %1728 = vmatpush1.msra.mxu0 0.0
  %1729 = vmatprep.subr.mxu0 0.0
  %1730 = vmatpush1.msra.mxu0 0.0
  %1731 = vmatprep.mubr.f32.mxu0 0.0
  %1732 = vmatmul.mubr.f32.gmra.mrb[0].mxu0 %v1620
  %v1733 = vpop.f32.mrb[0].mxu0
  %v1734 = vadd.f32 0.0, %v1733
  %v1735 = vpop.f32.mrb[0].mxu0
  %1736 = vmatprep.mubr.f32.mxu0 0.0
  %1737 = vmatmul.mubr.f32.gmra.mrb[0].mxu0 %v1623
  %v1738 = vpop.f32.mrb[0].mxu0
  %v1739 = vadd.f32 0.0, %v1738
  %v1740 = vpop.f32.mrb[0].mxu0
  %1741 = vmatprep.mubr.f32.mxu0 0.0
  %1742 = vmatmul.mubr.f32.gmra.mrb[0].mxu0 %v1626
  %v1743 = vpop.f32.mrb[0].mxu0
  %v1744 = vadd.f32 0.0, %v1743
  %v1745 = vpop.f32.mrb[0].mxu0
  %1746 = vmatprep.mubr.f32.mxu0 0.0
  %1747 = vmatmul.mubr.f32.gmra.mrb[0].mxu0 %v1629
  %v1748 = vpop.f32.mrb[0].mxu0
  %v1749 = vadd.f32 0.0, %v1748
  %v1750 = vpop.f32.mrb[0].mxu0
  %1751 = vmatprep.mubr.f32.mxu0 0.0
  %1752 = vmatmul.mubr.f32.gmra.mrb[0].mxu0 %v1632
  %v1753 = vpop.f32.mrb[0].mxu0
  %v1754 = vadd.f32 0.0, %v1753
  %v1755 = vpop.f32.mrb[0].mxu0
  %1756 = vmatprep.mubr.f32.mxu0 0.0
  %1757 = vmatmul.mubr.f32.gmra.mrb[0].mxu0 %v1635
  %v1758 = vpop.f32.mrb[0].mxu0
  %v1759 = vadd.f32 0.0, %v1758
  %v1760 = vpop.f32.mrb[0].mxu0
  %1761 = vmatprep.mubr.f32.mxu0 0.0
  %1762 = vmatmul.mubr.f32.gmra.mrb[0].mxu0 %v1638
  %v1763 = vpop.f32.mrb[0].mxu0
  %v1764 = vadd.f32 0.0, %v1763
  %v1765 = vpop.f32.mrb[0].mxu0
  %1766 = vmatprep.mubr.f32.mxu0 0.0
  %1767 = vmatmul.mubr.f32.gmra.mrb[0].mxu0 %v1641
  %v1768 = vpop.f32.mrb[0].mxu0
  %v1769 = vadd.f32 0.0, %v1768
  %v1770 = vpop.f32.mrb[0].mxu0
  %1771 = vmatprep.mubr.f32.mxu0 0.0
  %1772 = vmatmul.mubr.f32.gmra.mrb[0].mxu0 %v1644
  %v1773 = vpop.f32.mrb[0].mxu0
  %v1774 = vadd.f32 0.0, %v1773
  %v1775 = vpop.f32.mrb[0].mxu0
  %1776 = vmatprep.mubr.f32.mxu0 0.0
  %1777 = vmatmul.mubr.f32.gmra.mrb[0].mxu0 %v1647
  %v1778 = vpop.f32.mrb[0].mxu0
  %v1779 = vadd.f32 0.0, %v1778
  %v1780 = vpop.f32.mrb[0].mxu0
  %1781 = vmatprep.mubr.f32.mxu0 0.0
  %1782 = vmatmul.mubr.f32.gmra.mrb[0].mxu0 %v1650
  %v1783 = vpop.f32.mrb[0].mxu0
  %v1784 = vadd.f32 0.0, %v1783
  %v1785 = vpop.f32.mrb[0].mxu0
  %1786 = vmatprep.mubr.f32.mxu0 0.0
  %1787 = vmatmul.mubr.f32.gmra.mrb[0].mxu0 %v1653
  %v1788 = vpop.f32.mrb[0].mxu0
  %v1789 = vadd.f32 0.0, %v1788
  %v1790 = vpop.f32.mrb[0].mxu0
  %1791 = vmatprep.mubr.f32.mxu0 0.0
  %1792 = vmatmul.mubr.f32.gmra.mrb[0].mxu0 %v1656
  %v1793 = vpop.f32.mrb[0].mxu0
  %v1794 = vadd.f32 0.0, %v1793
  %v1795 = vpop.f32.mrb[0].mxu0
  %1796 = vmatprep.mubr.f32.mxu0 0.0
  %1797 = vmatmul.mubr.f32.gmra.mrb[0].mxu0 %v1659
  %v1798 = vpop.f32.mrb[0].mxu0
  %v1799 = vadd.f32 0.0, %v1798
  %v1800 = vpop.f32.mrb[0].mxu0
  %1801 = vmatprep.mubr.f32.mxu0 0.0
  %1802 = vmatmul.mubr.f32.gmra.mrb[0].mxu0 %v1662
  %v1803 = vpop.f32.mrb[0].mxu0
  %v1804 = vadd.f32 0.0, %v1803
  %v1805 = vpop.f32.mrb[0].mxu0
  %1806 = vmatprep.mubr.f32.mxu0 0.0
  %1807 = vmatmul.mubr.f32.gmra.mrb[0].mxu0 %v1665
  %v1808 = vpop.f32.mrb[0].mxu0
  %v1809 = vadd.f32 0.0, %v1808
  %v1810 = vpop.f32.mrb[0].mxu0
  %1811 = vdwg.mxu0
  %v1812 = vadd.f32 %v1586, %v1734
  %v1813 = vadd.f32 %v1587, %v1739
  %v1814 = vadd.f32 %v1588, %v1744
  %v1815 = vadd.f32 %v1589, %v1749
  %v1816 = vadd.f32 %v1590, %v1754
  %v1817 = vadd.f32 %v1591, %v1759
  %v1818 = vadd.f32 %v1592, %v1764
  %v1819 = vadd.f32 %v1593, %v1769
  %v1820 = vadd.f32 %v1594, %v1774
  %v1821 = vadd.f32 %v1595, %v1779
  %v1822 = vadd.f32 %v1596, %v1784
  %v1823 = vadd.f32 %v1597, %v1789
  %v1824 = vadd.f32 %v1598, %v1794
  %v1825 = vadd.f32 %v1599, %v1799
  %v1826 = vadd.f32 %v1600, %v1804
  %v1827 = vadd.f32 %v1601, %v1809
  %v1828 = vld [vmem:[%s1375 + $0x2] sm:$0xff]
  %v1829 = vld [vmem:[%s1375 + $0x12] sm:$0xff]
  %v1830 = vld [vmem:[%s1375 + $0x22] sm:$0xff]
  %v1831 = vld [vmem:[%s1375 + $0x32] sm:$0xff]
  %v1832 = vld [vmem:[%s1375 + $0x42] sm:$0xff]
  %v1833 = vld [vmem:[%s1375 + $0x52] sm:$0xff]
  %v1834 = vld [vmem:[%s1375 + $0x62] sm:$0xff]
  %v1835 = vld [vmem:[%s1375 + $0x72] sm:$0xff]
  %v1836 = vld [vmem:[%s1375 + $0xa2] sm:$0xff]
  %v1837 = vld [vmem:[%s1375 + $0xb2] sm:$0xff]
  %v1838 = vld [vmem:[%s1375 + $0xc2] sm:$0xff]
  %v1839 = vld [vmem:[%s1375 + $0xd2] sm:$0xff]
  %v1840 = vld [vmem:[%s1375 + $0xe2] sm:$0xff]
  %v1841 = vld [vmem:[%s1375 + $0xf2] sm:$0xff]
  %v1842 = vld [vmem:[%s1375 + $0x102] sm:$0xff]
  %v1843 = vld [vmem:[%s1375 + $0x112] sm:$0xff]
  %v1844 = vld [vmem:[%s1 + $0x40] sm:$0xff]
  %v1846 = vsel %vm83, %v1828, 0
  %v1849 = vsel %vm83, %v1829, 0
  %v1852 = vsel %vm83, %v1830, 0
  %v1855 = vsel %vm83, %v1831, 0
  %v1858 = vsel %vm83, %v1832, 0
  %v1861 = vsel %vm83, %v1833, 0
  %v1864 = vsel %vm83, %v1834, 0
  %v1867 = vsel %vm83, %v1835, 0
  %v1870 = vsel %vm83, %v1836, 0
  %v1873 = vsel %vm83, %v1837, 0
  %v1876 = vsel %vm83, %v1838, 0
  %v1879 = vsel %vm83, %v1839, 0
  %v1882 = vsel %vm83, %v1840, 0
  %v1885 = vsel %vm83, %v1841, 0
  %v1888 = vsel %vm83, %v1842, 0
  %v1891 = vsel %vm83, %v1843, 0
  %1893 = vmatprep.subr.mxu0 0.0
  %1894 = vmatpush1.msra.mxu0 %v1844
  %1895 = vmatprep.subr.mxu0 0.0
  %1896 = vmatpush1.msra.mxu0 0.0
  %1897 = vmatprep.subr.mxu0 0.0
  %1898 = vmatpush1.msra.mxu0 0.0
  %1899 = vmatprep.subr.mxu0 0.0
  %1900 = vmatpush1.msra.mxu0 0.0
  %1901 = vmatprep.subr.mxu0 0.0
  %1902 = vmatpush1.msra.mxu0 0.0
  %1903 = vmatprep.subr.mxu0 0.0
  %1904 = vmatpush1.msra.mxu0 0.0
  %1905 = vmatprep.subr.mxu0 0.0
  %1906 = vmatpush1.msra.mxu0 0.0
  %1907 = vmatprep.subr.mxu0 0.0
  %1908 = vmatpush1.msra.mxu0 0.0
  %1909 = vmatprep.subr.mxu0 0.0
  %1910 = vmatpush1.msra.mxu0 0.0
  %1911 = vmatprep.subr.mxu0 0.0
  %1912 = vmatpush1.msra.mxu0 0.0
  %1913 = vmatprep.subr.mxu0 0.0
  %1914 = vmatpush1.msra.mxu0 0.0
  %1915 = vmatprep.subr.mxu0 0.0
  %1916 = vmatpush1.msra.mxu0 0.0
  %1917 = vmatprep.subr.mxu0 0.0
  %1918 = vmatpush1.msra.mxu0 0.0
  %1919 = vmatprep.subr.mxu0 0.0
  %1920 = vmatpush1.msra.mxu0 0.0
  %1921 = vmatprep.subr.mxu0 0.0
  %1922 = vmatpush1.msra.mxu0 0.0
  %1923 = vmatprep.subr.mxu0 0.0
  %1924 = vmatpush1.msra.mxu0 0.0
  %1925 = vmatprep.subr.mxu0 0.0
  %1926 = vmatpush1.msra.mxu0 0.0
  %1927 = vmatprep.subr.mxu0 0.0
  %1928 = vmatpush1.msra.mxu0 0.0
  %1929 = vmatprep.subr.mxu0 0.0
  %1930 = vmatpush1.msra.mxu0 0.0
  %1931 = vmatprep.subr.mxu0 0.0
  %1932 = vmatpush1.msra.mxu0 0.0
  %1933 = vmatprep.subr.mxu0 0.0
  %1934 = vmatpush1.msra.mxu0 0.0
  %1935 = vmatprep.subr.mxu0 0.0
  %1936 = vmatpush1.msra.mxu0 0.0
  %1937 = vmatprep.subr.mxu0 0.0
  %1938 = vmatpush1.msra.mxu0 0.0
  %1939 = vmatprep.subr.mxu0 0.0
  %1940 = vmatpush1.msra.mxu0 0.0
  %1941 = vmatprep.subr.mxu0 0.0
  %1942 = vmatpush1.msra.mxu0 0.0
  %1943 = vmatprep.subr.mxu0 0.0
  %1944 = vmatpush1.msra.mxu0 0.0
  %1945 = vmatprep.subr.mxu0 0.0
  %1946 = vmatpush1.msra.mxu0 0.0
  %1947 = vmatprep.subr.mxu0 0.0
  %1948 = vmatpush1.msra.mxu0 0.0
  %1949 = vmatprep.subr.mxu0 0.0
  %1950 = vmatpush1.msra.mxu0 0.0
  %1951 = vmatprep.subr.mxu0 0.0
  %1952 = vmatpush1.msra.mxu0 0.0
  %1953 = vmatprep.subr.mxu0 0.0
  %1954 = vmatpush1.msra.mxu0 0.0
  %1955 = vmatprep.subr.mxu0 0.0
  %1956 = vmatpush1.msra.mxu0 0.0
  %1957 = vmatprep.mubr.f32.mxu0 0.0
  %1958 = vmatmul.mubr.f32.gmra.mrb[0].mxu0 %v1846
  %v1959 = vpop.f32.mrb[0].mxu0
  %v1960 = vadd.f32 0.0, %v1959
  %v1961 = vpop.f32.mrb[0].mxu0
  %1962 = vmatprep.mubr.f32.mxu0 0.0
  %1963 = vmatmul.mubr.f32.gmra.mrb[0].mxu0 %v1849
  %v1964 = vpop.f32.mrb[0].mxu0
  %v1965 = vadd.f32 0.0, %v1964
  %v1966 = vpop.f32.mrb[0].mxu0
  %1967 = vmatprep.mubr.f32.mxu0 0.0
  %1968 = vmatmul.mubr.f32.gmra.mrb[0].mxu0 %v1852
  %v1969 = vpop.f32.mrb[0].mxu0
  %v1970 = vadd.f32 0.0, %v1969
  %v1971 = vpop.f32.mrb[0].mxu0
  %1972 = vmatprep.mubr.f32.mxu0 0.0
  %1973 = vmatmul.mubr.f32.gmra.mrb[0].mxu0 %v1855
  %v1974 = vpop.f32.mrb[0].mxu0
  %v1975 = vadd.f32 0.0, %v1974
  %v1976 = vpop.f32.mrb[0].mxu0
  %1977 = vmatprep.mubr.f32.mxu0 0.0
  %1978 = vmatmul.mubr.f32.gmra.mrb[0].mxu0 %v1858
  %v1979 = vpop.f32.mrb[0].mxu0
  %v1980 = vadd.f32 0.0, %v1979
  %v1981 = vpop.f32.mrb[0].mxu0
  %1982 = vmatprep.mubr.f32.mxu0 0.0
  %1983 = vmatmul.mubr.f32.gmra.mrb[0].mxu0 %v1861
  %v1984 = vpop.f32.mrb[0].mxu0
  %v1985 = vadd.f32 0.0, %v1984
  %v1986 = vpop.f32.mrb[0].mxu0
  %1987 = vmatprep.mubr.f32.mxu0 0.0
  %1988 = vmatmul.mubr.f32.gmra.mrb[0].mxu0 %v1864
  %v1989 = vpop.f32.mrb[0].mxu0
  %v1990 = vadd.f32 0.0, %v1989
  %v1991 = vpop.f32.mrb[0].mxu0
  %1992 = vmatprep.mubr.f32.mxu0 0.0
  %1993 = vmatmul.mubr.f32.gmra.mrb[0].mxu0 %v1867
  %v1994 = vpop.f32.mrb[0].mxu0
  %v1995 = vadd.f32 0.0, %v1994
  %v1996 = vpop.f32.mrb[0].mxu0
  %1997 = vmatprep.mubr.f32.mxu0 0.0
  %1998 = vmatmul.mubr.f32.gmra.mrb[0].mxu0 %v1870
  %v1999 = vpop.f32.mrb[0].mxu0
  %v2000 = vadd.f32 0.0, %v1999
  %v2001 = vpop.f32.mrb[0].mxu0
  %2002 = vmatprep.mubr.f32.mxu0 0.0
  %2003 = vmatmul.mubr.f32.gmra.mrb[0].mxu0 %v1873
  %v2004 = vpop.f32.mrb[0].mxu0
  %v2005 = vadd.f32 0.0, %v2004
  %v2006 = vpop.f32.mrb[0].mxu0
  %2007 = vmatprep.mubr.f32.mxu0 0.0
  %2008 = vmatmul.mubr.f32.gmra.mrb[0].mxu0 %v1876
  %v2009 = vpop.f32.mrb[0].mxu0
  %v2010 = vadd.f32 0.0, %v2009
  %v2011 = vpop.f32.mrb[0].mxu0
  %2012 = vmatprep.mubr.f32.mxu0 0.0
  %2013 = vmatmul.mubr.f32.gmra.mrb[0].mxu0 %v1879
  %v2014 = vpop.f32.mrb[0].mxu0
  %v2015 = vadd.f32 0.0, %v2014
  %v2016 = vpop.f32.mrb[0].mxu0
  %2017 = vmatprep.mubr.f32.mxu0 0.0
  %2018 = vmatmul.mubr.f32.gmra.mrb[0].mxu0 %v1882
  %v2019 = vpop.f32.mrb[0].mxu0
  %v2020 = vadd.f32 0.0, %v2019
  %v2021 = vpop.f32.mrb[0].mxu0
  %2022 = vmatprep.mubr.f32.mxu0 0.0
  %2023 = vmatmul.mubr.f32.gmra.mrb[0].mxu0 %v1885
  %v2024 = vpop.f32.mrb[0].mxu0
  %v2025 = vadd.f32 0.0, %v2024
  %v2026 = vpop.f32.mrb[0].mxu0
  %2027 = vmatprep.mubr.f32.mxu0 0.0
  %2028 = vmatmul.mubr.f32.gmra.mrb[0].mxu0 %v1888
  %v2029 = vpop.f32.mrb[0].mxu0
  %v2030 = vadd.f32 0.0, %v2029
  %v2031 = vpop.f32.mrb[0].mxu0
  %2032 = vmatprep.mubr.f32.mxu0 0.0
  %2033 = vmatmul.mubr.f32.gmra.mrb[0].mxu0 %v1891
  %v2034 = vpop.f32.mrb[0].mxu0
  %v2035 = vadd.f32 0.0, %v2034
  %v2036 = vpop.f32.mrb[0].mxu0
  %2037 = vdwg.mxu0
  %v2038 = vadd.f32 %v1812, %v1960
  %v2039 = vadd.f32 %v1813, %v1965
  %v2040 = vadd.f32 %v1814, %v1970
  %v2041 = vadd.f32 %v1815, %v1975
  %v2042 = vadd.f32 %v1816, %v1980
  %v2043 = vadd.f32 %v1817, %v1985
  %v2044 = vadd.f32 %v1818, %v1990
  %v2045 = vadd.f32 %v1819, %v1995
  %v2046 = vadd.f32 %v1820, %v2000
  %v2047 = vadd.f32 %v1821, %v2005
  %v2048 = vadd.f32 %v1822, %v2010
  %v2049 = vadd.f32 %v1823, %v2015
  %v2050 = vadd.f32 %v1824, %v2020
  %v2051 = vadd.f32 %v1825, %v2025
  %v2052 = vadd.f32 %v1826, %v2030
  %v2053 = vadd.f32 %v1827, %v2035
  %v2054 = vld [vmem:[%s2] sm:$0x1]
  %v2056 = vlaneseq
  %v2057 = vshrl.u32 %v2056, 7
  %v2058 = vsub.s32 0, %v2057
  %v2059 = vrot.slane %v2054, %v2058
  %v2061 = vadd.f32 %v2038, %v2059
  %v2062 = vadd.f32 %v2039, %v2059
  %v2063 = vadd.f32 %v2040, %v2059
  %v2064 = vadd.f32 %v2041, %v2059
  %v2065 = vadd.f32 %v2042, %v2059
  %v2066 = vadd.f32 %v2043, %v2059
  %v2067 = vadd.f32 %v2044, %v2059
  %v2068 = vadd.f32 %v2045, %v2059
  %v2069 = vadd.f32 %v2046, %v2059
  %v2070 = vadd.f32 %v2047, %v2059
  %v2071 = vadd.f32 %v2048, %v2059
  %v2072 = vadd.f32 %v2049, %v2059
  %v2073 = vadd.f32 %v2050, %v2059
  %v2074 = vadd.f32 %v2051, %v2059
  %v2075 = vadd.f32 %v2052, %v2059
  %v2076 = vadd.f32 %v2053, %v2059
  %v2077 = vmax.f32 %v2061, 0.0
  %v2078 = vmax.f32 %v2062, 0.0
  %v2079 = vmax.f32 %v2063, 0.0
  %v2080 = vmax.f32 %v2064, 0.0
  %v2081 = vmax.f32 %v2065, 0.0
  %v2082 = vmax.f32 %v2066, 0.0
  %v2083 = vmax.f32 %v2067, 0.0
  %v2084 = vmax.f32 %v2068, 0.0
  %v2085 = vmax.f32 %v2069, 0.0
  %v2086 = vmax.f32 %v2070, 0.0
  %v2087 = vmax.f32 %v2071, 0.0
  %v2088 = vmax.f32 %v2072, 0.0
  %v2089 = vmax.f32 %v2073, 0.0
  %v2090 = vmax.f32 %v2074, 0.0
  %v2091 = vmax.f32 %v2075, 0.0
  %v2092 = vmax.f32 %v2076, 0.0
  %vm2093 = vcmask 261120
  %2094 = vst.msk [vmem:[#allocation2] sm:$0xff] %vm2093, 0.0
  %vm2095 = vcmask 254976
  %2096 = vst.msk [vmem:[#allocation2 + $0x8] sm:$0x3] %vm2095, 0.0
  %2097 = vst.msk [vmem:[#allocation2 + $0x10] sm:$0xff] %vm2093, 0.0
  %2098 = vst.msk [vmem:[#allocation2 + $0x18] sm:$0x3] %vm2095, 0.0
  %2099 = vst.msk [vmem:[#allocation2 + $0x20] sm:$0xff] %vm2093, 0.0
  %2100 = vst.msk [vmem:[#allocation2 + $0x28] sm:$0x3] %vm2095, 0.0
  %2101 = vst.msk [vmem:[#allocation2 + $0x30] sm:$0xff] %vm2093, 0.0
  %2102 = vst.msk [vmem:[#allocation2 + $0x38] sm:$0x3] %vm2095, 0.0
  %2103 = vst.msk [vmem:[#allocation2 + $0x40] sm:$0xff] %vm2093, 0.0
  %2104 = vst.msk [vmem:[#allocation2 + $0x48] sm:$0x3] %vm2095, 0.0
  %2105 = vst.msk [vmem:[#allocation2 + $0x50] sm:$0xff] %vm2093, 0.0
  %2106 = vst.msk [vmem:[#allocation2 + $0x58] sm:$0x3] %vm2095, 0.0
  %2107 = vst.msk [vmem:[#allocation2 + $0x60] sm:$0xff] %vm2093, 0.0
  %2108 = vst.msk [vmem:[#allocation2 + $0x68] sm:$0x3] %vm2095, 0.0
  %2109 = vst.msk [vmem:[#allocation2 + $0x70] sm:$0xff] %vm2093, 0.0
  %2110 = vst.msk [vmem:[#allocation2 + $0x78] sm:$0x3] %vm2095, 0.0
  %2111 = vst.msk [vmem:[#allocation2 + $0x80] sm:$0xff] %vm2093, 0.0
  %2112 = vst.msk [vmem:[#allocation2 + $0x88] sm:$0x3] %vm2095, 0.0
  %2113 = vst.msk [vmem:[#allocation2 + $0x90] sm:$0xff] %vm2093, 0.0
  %2114 = vst.msk [vmem:[#allocation2 + $0x98] sm:$0x3] %vm2095, 0.0
  %2115 = vst.msk [vmem:[#allocation2 + $0xa0] sm:$0xff] %vm2093, 0.0
  %2116 = vst.msk [vmem:[#allocation2 + $0xa8] sm:$0x3] %vm2095, 0.0
  %2117 = vst.msk [vmem:[#allocation2 + $0xb0] sm:$0xff] %vm2093, 0.0
  %2118 = vst.msk [vmem:[#allocation2 + $0xb8] sm:$0x3] %vm2095, 0.0
  %2119 = vst.msk [vmem:[#allocation2 + $0xc0] sm:$0xff] %vm2093, 0.0
  %2120 = vst.msk [vmem:[#allocation2 + $0xc8] sm:$0x3] %vm2095, 0.0
  %2121 = vst.msk [vmem:[#allocation2 + $0xd0] sm:$0xff] %vm2093, 0.0
  %2122 = vst.msk [vmem:[#allocation2 + $0xd8] sm:$0x3] %vm2095, 0.0
  %2123 = vst.msk [vmem:[#allocation2 + $0xe0] sm:$0xff] %vm2093, 0.0
  %2124 = vst.msk [vmem:[#allocation2 + $0xe8] sm:$0x3] %vm2095, 0.0
  %2125 = vst.msk [vmem:[#allocation2 + $0xf0] sm:$0xff] %vm2093, 0.0
  %2126 = vst.msk [vmem:[#allocation2 + $0xf8] sm:$0x3] %vm2095, 0.0
  %2127 = vst.msk [vmem:[#allocation2 + $0x100] sm:$0xff] %vm2093, 0.0
  %2128 = vst.msk [vmem:[#allocation2 + $0x108] sm:$0x3] %vm2095, 0.0
  %2129 = vst.msk [vmem:[#allocation2 + $0x110] sm:$0xff] %vm2093, 0.0
  %2130 = vst.msk [vmem:[#allocation2 + $0x118] sm:$0x3] %vm2095, 0.0
  %2131 = vst.msk [vmem:[#allocation2 + $0x120] sm:$0xff] %vm2093, 0.0
  %2132 = vst.msk [vmem:[#allocation2 + $0x128] sm:$0x3] %vm2095, 0.0
  %2133 = vst.msk [vmem:[#allocation2 + $0x130] sm:$0xff] %vm2093, 0.0
  %2134 = vst.msk [vmem:[#allocation2 + $0x138] sm:$0x3] %vm2095, 0.0
  %s2135 = scalar_lea.vmem [#allocation2], 16
  %2136 = vst.msk [vmem:[%s2135 + $0x1] sm:$0xff] %vm2093, %v2077
  %2137 = vst.msk [vmem:[%s2135 + $0x11] sm:$0xff] %vm2093, %v2078
  %2138 = vst.msk [vmem:[%s2135 + $0x21] sm:$0xff] %vm2093, %v2079
  %2139 = vst.msk [vmem:[%s2135 + $0x31] sm:$0xff] %vm2093, %v2080
  %2140 = vst.msk [vmem:[%s2135 + $0x41] sm:$0xff] %vm2093, %v2081
  %2141 = vst.msk [vmem:[%s2135 + $0x51] sm:$0xff] %vm2093, %v2082
  %2142 = vst.msk [vmem:[%s2135 + $0x61] sm:$0xff] %vm2093, %v2083
  %2143 = vst.msk [vmem:[%s2135 + $0x71] sm:$0xff] %vm2093, %v2084
  %2144 = vst.msk [vmem:[%s2135 + $0xa1] sm:$0xff] %vm2093, %v2085
  %2145 = vst.msk [vmem:[%s2135 + $0xb1] sm:$0xff] %vm2093, %v2086
  %2146 = vst.msk [vmem:[%s2135 + $0xc1] sm:$0xff] %vm2093, %v2087
  %2147 = vst.msk [vmem:[%s2135 + $0xd1] sm:$0xff] %vm2093, %v2088
  %2148 = vst.msk [vmem:[%s2135 + $0xe1] sm:$0xff] %vm2093, %v2089
  %2149 = vst.msk [vmem:[%s2135 + $0xf1] sm:$0xff] %vm2093, %v2090
  %2150 = vst.msk [vmem:[%s2135 + $0x101] sm:$0xff] %vm2093, %v2091
  %2151 = vst.msk [vmem:[%s2135 + $0x111] sm:$0xff] %vm2093, %v2092
  %v2152 = vld [vmem:[#allocation2] sm:$0xff]
  %v2153 = vld [vmem:[#allocation2 + $0x10] sm:$0xff]
  %v2154 = vld [vmem:[#allocation2 + $0x20] sm:$0xff]
  %v2155 = vld [vmem:[#allocation2 + $0x30] sm:$0xff]
  %v2156 = vld [vmem:[#allocation2 + $0x40] sm:$0xff]
  %v2157 = vld [vmem:[#allocation2 + $0x50] sm:$0xff]
  %v2158 = vld [vmem:[#allocation2 + $0x60] sm:$0xff]
  %v2159 = vld [vmem:[#allocation2 + $0x70] sm:$0xff]
  %v2160 = vld [vmem:[#allocation2 + $0xa0] sm:$0xff]
  %v2161 = vld [vmem:[#allocation2 + $0xb0] sm:$0xff]
  %v2162 = vld [vmem:[#allocation2 + $0xc0] sm:$0xff]
  %v2163 = vld [vmem:[#allocation2 + $0xd0] sm:$0xff]
  %v2164 = vld [vmem:[#allocation2 + $0xe0] sm:$0xff]
  %v2165 = vld [vmem:[#allocation2 + $0xf0] sm:$0xff]
  %v2166 = vld [vmem:[#allocation2 + $0x100] sm:$0xff]
  %v2167 = vld [vmem:[#allocation2 + $0x110] sm:$0xff]
  %v2168 = vld [vmem:[%s3] sm:$0xff]
  %v2169 = vld [vmem:[%s3 + $0x8] sm:$0xff]
  %v2170 = vld [vmem:[%s3 + $0x10] sm:$0xff]
  %v2171 = vld [vmem:[%s3 + $0x18] sm:$0xff]
  %v2172 = vld [vmem:[#allocation2 + $0x1] sm:$0xff]
  %v2173 = vld [vmem:[#allocation2 + $0x11] sm:$0xff]
  %v2174 = vld [vmem:[#allocation2 + $0x21] sm:$0xff]
  %v2175 = vld [vmem:[#allocation2 + $0x31] sm:$0xff]
  %v2176 = vld [vmem:[#allocation2 + $0x41] sm:$0xff]
  %v2177 = vld [vmem:[#allocation2 + $0x51] sm:$0xff]
  %v2178 = vld [vmem:[#allocation2 + $0x61] sm:$0xff]
  %v2179 = vld [vmem:[#allocation2 + $0x71] sm:$0xff]
  %v2180 = vld [vmem:[#allocation2 + $0xa1] sm:$0xff]
  %v2181 = vld [vmem:[#allocation2 + $0xb1] sm:$0xff]
  %v2182 = vld [vmem:[#allocation2 + $0xc1] sm:$0xff]
  %v2183 = vld [vmem:[#allocation2 + $0xd1] sm:$0xff]
  %v2184 = vld [vmem:[#allocation2 + $0xe1] sm:$0xff]
  %v2185 = vld [vmem:[#allocation2 + $0xf1] sm:$0xff]
  %v2186 = vld [vmem:[#allocation2 + $0x101] sm:$0xff]
  %v2187 = vld [vmem:[#allocation2 + $0x111] sm:$0xff]
  %v2188 = vld [vmem:[%s3 + $0x20] sm:$0xff]
  %v2189 = vld [vmem:[%s3 + $0x28] sm:$0xff]
  %v2190 = vld [vmem:[%s3 + $0x30] sm:$0xff]
  %v2191 = vld [vmem:[%s3 + $0x38] sm:$0xff]
  %v2193 = vsel %vm2093, %v2172, 0
  %v2196 = vsel %vm2093, %v2173, 0
  %v2199 = vsel %vm2093, %v2174, 0
  %v2202 = vsel %vm2093, %v2175, 0
  %v2205 = vsel %vm2093, %v2176, 0
  %v2208 = vsel %vm2093, %v2177, 0
  %v2211 = vsel %vm2093, %v2178, 0
  %v2214 = vsel %vm2093, %v2179, 0
  %v2217 = vsel %vm2093, %v2180, 0
  %v2220 = vsel %vm2093, %v2181, 0
  %v2223 = vsel %vm2093, %v2182, 0
  %v2226 = vsel %vm2093, %v2183, 0
  %v2229 = vsel %vm2093, %v2184, 0
  %v2232 = vsel %vm2093, %v2185, 0
  %v2235 = vsel %vm2093, %v2186, 0
  %v2238 = vsel %vm2093, %v2187, 0
  %2240 = vmatprep.subr.mxu0 0.0
  %2241 = vmatpush1.msra.mxu0 %v2188
  %2242 = vmatprep.subr.mxu0 0.0
  %2243 = vmatpush1.msra.mxu0 %v2189
  %2244 = vmatprep.subr.mxu0 0.0
  %2245 = vmatpush1.msra.mxu0 %v2190
  %2246 = vmatprep.subr.mxu0 0.0
  %2247 = vmatpush1.msra.mxu0 %v2191
  %2248 = vmatprep.subr.mxu0 0.0
  %2249 = vmatpush1.msra.mxu0 0.0
  %2250 = vmatprep.subr.mxu0 0.0
  %2251 = vmatpush1.msra.mxu0 0.0
  %2252 = vmatprep.subr.mxu0 0.0
  %2253 = vmatpush1.msra.mxu0 0.0
  %2254 = vmatprep.subr.mxu0 0.0
  %2255 = vmatpush1.msra.mxu0 0.0
  %2256 = vmatprep.subr.mxu0 0.0
  %2257 = vmatpush1.msra.mxu0 0.0
  %2258 = vmatprep.subr.mxu0 0.0
  %2259 = vmatpush1.msra.mxu0 0.0
  %2260 = vmatprep.subr.mxu0 0.0
  %2261 = vmatpush1.msra.mxu0 0.0
  %2262 = vmatprep.subr.mxu0 0.0
  %2263 = vmatpush1.msra.mxu0 0.0
  %2264 = vmatprep.subr.mxu0 0.0
  %2265 = vmatpush1.msra.mxu0 0.0
  %2266 = vmatprep.subr.mxu0 0.0
  %2267 = vmatpush1.msra.mxu0 0.0
  %2268 = vmatprep.subr.mxu0 0.0
  %2269 = vmatpush1.msra.mxu0 0.0
  %2270 = vmatprep.subr.mxu0 0.0
  %2271 = vmatpush1.msra.mxu0 0.0
  %2272 = vmatprep.subr.mxu0 0.0
  %2273 = vmatpush1.msra.mxu0 0.0
  %2274 = vmatprep.subr.mxu0 0.0
  %2275 = vmatpush1.msra.mxu0 0.0
  %2276 = vmatprep.subr.mxu0 0.0
  %2277 = vmatpush1.msra.mxu0 0.0
  %2278 = vmatprep.subr.mxu0 0.0
  %2279 = vmatpush1.msra.mxu0 0.0
  %2280 = vmatprep.subr.mxu0 0.0
  %2281 = vmatpush1.msra.mxu0 0.0
  %2282 = vmatprep.subr.mxu0 0.0
  %2283 = vmatpush1.msra.mxu0 0.0
  %2284 = vmatprep.subr.mxu0 0.0
  %2285 = vmatpush1.msra.mxu0 0.0
  %2286 = vmatprep.subr.mxu0 0.0
  %2287 = vmatpush1.msra.mxu0 0.0
  %2288 = vmatprep.subr.mxu0 0.0
  %2289 = vmatpush1.msra.mxu0 0.0
  %2290 = vmatprep.subr.mxu0 0.0
  %2291 = vmatpush1.msra.mxu0 0.0
  %2292 = vmatprep.subr.mxu0 0.0
  %2293 = vmatpush1.msra.mxu0 0.0
  %2294 = vmatprep.subr.mxu0 0.0
  %2295 = vmatpush1.msra.mxu0 0.0
  %2296 = vmatprep.subr.mxu0 0.0
  %2297 = vmatpush1.msra.mxu0 0.0
  %2298 = vmatprep.subr.mxu0 0.0
  %2299 = vmatpush1.msra.mxu0 0.0
  %2300 = vmatprep.subr.mxu0 0.0
  %2301 = vmatpush1.msra.mxu0 0.0
  %2302 = vmatprep.subr.mxu0 0.0
  %2303 = vmatpush1.msra.mxu0 0.0
  %2304 = vmatprep.mubr.f32.mxu0 0.0
  %2305 = vmatmul.mubr.f32.gmra.mrb[0].mxu0 %v2193
  %v2306 = vpop.f32.mrb[0].mxu0
  %v2307 = vadd.f32 0.0, %v2306
  %v2308 = vpop.f32.mrb[0].mxu0
  %2309 = vmatprep.mubr.f32.mxu0 0.0
  %2310 = vmatmul.mubr.f32.gmra.mrb[0].mxu0 %v2196
  %v2311 = vpop.f32.mrb[0].mxu0
  %v2312 = vadd.f32 0.0, %v2311
  %v2313 = vpop.f32.mrb[0].mxu0
  %2314 = vmatprep.mubr.f32.mxu0 0.0
  %2315 = vmatmul.mubr.f32.gmra.mrb[0].mxu0 %v2199
  %v2316 = vpop.f32.mrb[0].mxu0
  %v2317 = vadd.f32 0.0, %v2316
  %v2318 = vpop.f32.mrb[0].mxu0
  %2319 = vmatprep.mubr.f32.mxu0 0.0
  %2320 = vmatmul.mubr.f32.gmra.mrb[0].mxu0 %v2202
  %v2321 = vpop.f32.mrb[0].mxu0
  %v2322 = vadd.f32 0.0, %v2321
  %v2323 = vpop.f32.mrb[0].mxu0
  %2324 = vmatprep.mubr.f32.mxu0 0.0
  %2325 = vmatmul.mubr.f32.gmra.mrb[0].mxu0 %v2205
  %v2326 = vpop.f32.mrb[0].mxu0
  %v2327 = vadd.f32 0.0, %v2326
  %v2328 = vpop.f32.mrb[0].mxu0
  %2329 = vmatprep.mubr.f32.mxu0 0.0
  %2330 = vmatmul.mubr.f32.gmra.mrb[0].mxu0 %v2208
  %v2331 = vpop.f32.mrb[0].mxu0
  %v2332 = vadd.f32 0.0, %v2331
  %v2333 = vpop.f32.mrb[0].mxu0
  %2334 = vmatprep.mubr.f32.mxu0 0.0
  %2335 = vmatmul.mubr.f32.gmra.mrb[0].mxu0 %v2211
  %v2336 = vpop.f32.mrb[0].mxu0
  %v2337 = vadd.f32 0.0, %v2336
  %v2338 = vpop.f32.mrb[0].mxu0
  %2339 = vmatprep.mubr.f32.mxu0 0.0
  %2340 = vmatmul.mubr.f32.gmra.mrb[0].mxu0 %v2214
  %v2341 = vpop.f32.mrb[0].mxu0
  %v2342 = vadd.f32 0.0, %v2341
  %v2343 = vpop.f32.mrb[0].mxu0
  %2344 = vmatprep.mubr.f32.mxu0 0.0
  %2345 = vmatmul.mubr.f32.gmra.mrb[0].mxu0 %v2217
  %v2346 = vpop.f32.mrb[0].mxu0
  %v2347 = vadd.f32 0.0, %v2346
  %v2348 = vpop.f32.mrb[0].mxu0
  %2349 = vmatprep.mubr.f32.mxu0 0.0
  %2350 = vmatmul.mubr.f32.gmra.mrb[0].mxu0 %v2220
  %v2351 = vpop.f32.mrb[0].mxu0
  %v2352 = vadd.f32 0.0, %v2351
  %v2353 = vpop.f32.mrb[0].mxu0
  %2354 = vmatprep.mubr.f32.mxu0 0.0
  %2355 = vmatmul.mubr.f32.gmra.mrb[0].mxu0 %v2223
  %v2356 = vpop.f32.mrb[0].mxu0
  %v2357 = vadd.f32 0.0, %v2356
  %v2358 = vpop.f32.mrb[0].mxu0
  %2359 = vmatprep.mubr.f32.mxu0 0.0
  %2360 = vmatmul.mubr.f32.gmra.mrb[0].mxu0 %v2226
  %v2361 = vpop.f32.mrb[0].mxu0
  %v2362 = vadd.f32 0.0, %v2361
  %v2363 = vpop.f32.mrb[0].mxu0
  %2364 = vmatprep.mubr.f32.mxu0 0.0
  %2365 = vmatmul.mubr.f32.gmra.mrb[0].mxu0 %v2229
  %v2366 = vpop.f32.mrb[0].mxu0
  %v2367 = vadd.f32 0.0, %v2366
  %v2368 = vpop.f32.mrb[0].mxu0
  %2369 = vmatprep.mubr.f32.mxu0 0.0
  %2370 = vmatmul.mubr.f32.gmra.mrb[0].mxu0 %v2232
  %v2371 = vpop.f32.mrb[0].mxu0
  %v2372 = vadd.f32 0.0, %v2371
  %v2373 = vpop.f32.mrb[0].mxu0
  %2374 = vmatprep.mubr.f32.mxu0 0.0
  %2375 = vmatmul.mubr.f32.gmra.mrb[0].mxu0 %v2235
  %v2376 = vpop.f32.mrb[0].mxu0
  %v2377 = vadd.f32 0.0, %v2376
  %v2378 = vpop.f32.mrb[0].mxu0
  %2379 = vmatprep.mubr.f32.mxu0 0.0
  %2380 = vmatmul.mubr.f32.gmra.mrb[0].mxu0 %v2238
  %v2381 = vpop.f32.mrb[0].mxu0
  %v2382 = vadd.f32 0.0, %v2381
  %v2383 = vpop.f32.mrb[0].mxu0
  %2384 = vdwg.mxu0
  %v2386 = vsel %vm2093, %v2152, 0
  %v2389 = vsel %vm2093, %v2153, 0
  %v2392 = vsel %vm2093, %v2154, 0
  %v2395 = vsel %vm2093, %v2155, 0
  %v2398 = vsel %vm2093, %v2156, 0
  %v2401 = vsel %vm2093, %v2157, 0
  %v2404 = vsel %vm2093, %v2158, 0
  %v2407 = vsel %vm2093, %v2159, 0
  %v2410 = vsel %vm2093, %v2160, 0
  %v2413 = vsel %vm2093, %v2161, 0
  %v2416 = vsel %vm2093, %v2162, 0
  %v2419 = vsel %vm2093, %v2163, 0
  %v2422 = vsel %vm2093, %v2164, 0
  %v2425 = vsel %vm2093, %v2165, 0
  %v2428 = vsel %vm2093, %v2166, 0
  %v2431 = vsel %vm2093, %v2167, 0
  %2433 = vmatprep.subr.mxu0 0.0
  %2434 = vmatpush1.msra.mxu0 %v2168
  %2435 = vmatprep.subr.mxu0 0.0
  %2436 = vmatpush1.msra.mxu0 %v2169
  %2437 = vmatprep.subr.mxu0 0.0
  %2438 = vmatpush1.msra.mxu0 %v2170
  %2439 = vmatprep.subr.mxu0 0.0
  %2440 = vmatpush1.msra.mxu0 %v2171
  %2441 = vmatprep.subr.mxu0 0.0
  %2442 = vmatpush1.msra.mxu0 0.0
  %2443 = vmatprep.subr.mxu0 0.0
  %2444 = vmatpush1.msra.mxu0 0.0
  %2445 = vmatprep.subr.mxu0 0.0
  %2446 = vmatpush1.msra.mxu0 0.0
  %2447 = vmatprep.subr.mxu0 0.0
  %2448 = vmatpush1.msra.mxu0 0.0
  %2449 = vmatprep.subr.mxu0 0.0
  %2450 = vmatpush1.msra.mxu0 0.0
  %2451 = vmatprep.subr.mxu0 0.0
  %2452 = vmatpush1.msra.mxu0 0.0
  %2453 = vmatprep.subr.mxu0 0.0
  %2454 = vmatpush1.msra.mxu0 0.0
  %2455 = vmatprep.subr.mxu0 0.0
  %2456 = vmatpush1.msra.mxu0 0.0
  %2457 = vmatprep.subr.mxu0 0.0
  %2458 = vmatpush1.msra.mxu0 0.0
  %2459 = vmatprep.subr.mxu0 0.0
  %2460 = vmatpush1.msra.mxu0 0.0
  %2461 = vmatprep.subr.mxu0 0.0
  %2462 = vmatpush1.msra.mxu0 0.0
  %2463 = vmatprep.subr.mxu0 0.0
  %2464 = vmatpush1.msra.mxu0 0.0
  %2465 = vmatprep.subr.mxu0 0.0
  %2466 = vmatpush1.msra.mxu0 0.0
  %2467 = vmatprep.subr.mxu0 0.0
  %2468 = vmatpush1.msra.mxu0 0.0
  %2469 = vmatprep.subr.mxu0 0.0
  %2470 = vmatpush1.msra.mxu0 0.0
  %2471 = vmatprep.subr.mxu0 0.0
  %2472 = vmatpush1.msra.mxu0 0.0
  %2473 = vmatprep.subr.mxu0 0.0
  %2474 = vmatpush1.msra.mxu0 0.0
  %2475 = vmatprep.subr.mxu0 0.0
  %2476 = vmatpush1.msra.mxu0 0.0
  %2477 = vmatprep.subr.mxu0 0.0
  %2478 = vmatpush1.msra.mxu0 0.0
  %2479 = vmatprep.subr.mxu0 0.0
  %2480 = vmatpush1.msra.mxu0 0.0
  %2481 = vmatprep.subr.mxu0 0.0
  %2482 = vmatpush1.msra.mxu0 0.0
  %2483 = vmatprep.subr.mxu0 0.0
  %2484 = vmatpush1.msra.mxu0 0.0
  %2485 = vmatprep.subr.mxu0 0.0
  %2486 = vmatpush1.msra.mxu0 0.0
  %2487 = vmatprep.subr.mxu0 0.0
  %2488 = vmatpush1.msra.mxu0 0.0
  %2489 = vmatprep.subr.mxu0 0.0
  %2490 = vmatpush1.msra.mxu0 0.0
  %2491 = vmatprep.subr.mxu0 0.0
  %2492 = vmatpush1.msra.mxu0 0.0
  %2493 = vmatprep.subr.mxu0 0.0
  %2494 = vmatpush1.msra.mxu0 0.0
  %2495 = vmatprep.subr.mxu0 0.0
  %2496 = vmatpush1.msra.mxu0 0.0
  %2497 = vmatprep.mubr.f32.mxu0 0.0
  %2498 = vmatmul.mubr.f32.gmra.mrb[0].mxu0 %v2386
  %v2499 = vpop.f32.mrb[0].mxu0
  %v2500 = vadd.f32 %v2307, %v2499
  %v2501 = vpop.f32.mrb[0].mxu0
  %2502 = vmatprep.mubr.f32.mxu0 0.0
  %2503 = vmatmul.mubr.f32.gmra.mrb[0].mxu0 %v2389
  %v2504 = vpop.f32.mrb[0].mxu0
  %v2505 = vadd.f32 %v2312, %v2504
  %v2506 = vpop.f32.mrb[0].mxu0
  %2507 = vmatprep.mubr.f32.mxu0 0.0
  %2508 = vmatmul.mubr.f32.gmra.mrb[0].mxu0 %v2392
  %v2509 = vpop.f32.mrb[0].mxu0
  %v2510 = vadd.f32 %v2317, %v2509
  %v2511 = vpop.f32.mrb[0].mxu0
  %2512 = vmatprep.mubr.f32.mxu0 0.0
  %2513 = vmatmul.mubr.f32.gmra.mrb[0].mxu0 %v2395
  %v2514 = vpop.f32.mrb[0].mxu0
  %v2515 = vadd.f32 %v2322, %v2514
  %v2516 = vpop.f32.mrb[0].mxu0
  %2517 = vmatprep.mubr.f32.mxu0 0.0
  %2518 = vmatmul.mubr.f32.gmra.mrb[0].mxu0 %v2398
  %v2519 = vpop.f32.mrb[0].mxu0
  %v2520 = vadd.f32 %v2327, %v2519
  %v2521 = vpop.f32.mrb[0].mxu0
  %2522 = vmatprep.mubr.f32.mxu0 0.0
  %2523 = vmatmul.mubr.f32.gmra.mrb[0].mxu0 %v2401
  %v2524 = vpop.f32.mrb[0].mxu0
  %v2525 = vadd.f32 %v2332, %v2524
  %v2526 = vpop.f32.mrb[0].mxu0
  %2527 = vmatprep.mubr.f32.mxu0 0.0
  %2528 = vmatmul.mubr.f32.gmra.mrb[0].mxu0 %v2404
  %v2529 = vpop.f32.mrb[0].mxu0
  %v2530 = vadd.f32 %v2337, %v2529
  %v2531 = vpop.f32.mrb[0].mxu0
  %2532 = vmatprep.mubr.f32.mxu0 0.0
  %2533 = vmatmul.mubr.f32.gmra.mrb[0].mxu0 %v2407
  %v2534 = vpop.f32.mrb[0].mxu0
  %v2535 = vadd.f32 %v2342, %v2534
  %v2536 = vpop.f32.mrb[0].mxu0
  %2537 = vmatprep.mubr.f32.mxu0 0.0
  %2538 = vmatmul.mubr.f32.gmra.mrb[0].mxu0 %v2410
  %v2539 = vpop.f32.mrb[0].mxu0
  %v2540 = vadd.f32 %v2347, %v2539
  %v2541 = vpop.f32.mrb[0].mxu0
  %2542 = vmatprep.mubr.f32.mxu0 0.0
  %2543 = vmatmul.mubr.f32.gmra.mrb[0].mxu0 %v2413
  %v2544 = vpop.f32.mrb[0].mxu0
  %v2545 = vadd.f32 %v2352, %v2544
  %v2546 = vpop.f32.mrb[0].mxu0
  %2547 = vmatprep.mubr.f32.mxu0 0.0
  %2548 = vmatmul.mubr.f32.gmra.mrb[0].mxu0 %v2416
  %v2549 = vpop.f32.mrb[0].mxu0
  %v2550 = vadd.f32 %v2357, %v2549
  %v2551 = vpop.f32.mrb[0].mxu0
  %2552 = vmatprep.mubr.f32.mxu0 0.0
  %2553 = vmatmul.mubr.f32.gmra.mrb[0].mxu0 %v2419
  %v2554 = vpop.f32.mrb[0].mxu0
  %v2555 = vadd.f32 %v2362, %v2554
  %v2556 = vpop.f32.mrb[0].mxu0
  %2557 = vmatprep.mubr.f32.mxu0 0.0
  %2558 = vmatmul.mubr.f32.gmra.mrb[0].mxu0 %v2422
  %v2559 = vpop.f32.mrb[0].mxu0
  %v2560 = vadd.f32 %v2367, %v2559
  %v2561 = vpop.f32.mrb[0].mxu0
  %2562 = vmatprep.mubr.f32.mxu0 0.0
  %2563 = vmatmul.mubr.f32.gmra.mrb[0].mxu0 %v2425
  %v2564 = vpop.f32.mrb[0].mxu0
  %v2565 = vadd.f32 %v2372, %v2564
  %v2566 = vpop.f32.mrb[0].mxu0
  %2567 = vmatprep.mubr.f32.mxu0 0.0
  %2568 = vmatmul.mubr.f32.gmra.mrb[0].mxu0 %v2428
  %v2569 = vpop.f32.mrb[0].mxu0
  %v2570 = vadd.f32 %v2377, %v2569
  %v2571 = vpop.f32.mrb[0].mxu0
  %2572 = vmatprep.mubr.f32.mxu0 0.0
  %2573 = vmatmul.mubr.f32.gmra.mrb[0].mxu0 %v2431
  %v2574 = vpop.f32.mrb[0].mxu0
  %v2575 = vadd.f32 %v2382, %v2574
  %v2576 = vpop.f32.mrb[0].mxu0
  %2577 = vdwg.mxu0
  %v2578 = vld [vmem:[#allocation2 + $0x2] sm:$0xff]
  %v2579 = vld [vmem:[#allocation2 + $0x12] sm:$0xff]
  %v2580 = vld [vmem:[#allocation2 + $0x22] sm:$0xff]
  %v2581 = vld [vmem:[#allocation2 + $0x32] sm:$0xff]
  %v2582 = vld [vmem:[#allocation2 + $0x42] sm:$0xff]
  %v2583 = vld [vmem:[#allocation2 + $0x52] sm:$0xff]
  %v2584 = vld [vmem:[#allocation2 + $0x62] sm:$0xff]
  %v2585 = vld [vmem:[#allocation2 + $0x72] sm:$0xff]
  %v2586 = vld [vmem:[#allocation2 + $0xa2] sm:$0xff]
  %v2587 = vld [vmem:[#allocation2 + $0xb2] sm:$0xff]
  %v2588 = vld [vmem:[#allocation2 + $0xc2] sm:$0xff]
  %v2589 = vld [vmem:[#allocation2 + $0xd2] sm:$0xff]
  %v2590 = vld [vmem:[#allocation2 + $0xe2] sm:$0xff]
  %v2591 = vld [vmem:[#allocation2 + $0xf2] sm:$0xff]
  %v2592 = vld [vmem:[#allocation2 + $0x102] sm:$0xff]
  %v2593 = vld [vmem:[#allocation2 + $0x112] sm:$0xff]
  %v2594 = vld [vmem:[%s3 + $0x40] sm:$0xff]
  %v2595 = vld [vmem:[%s3 + $0x48] sm:$0xff]
  %v2596 = vld [vmem:[%s3 + $0x50] sm:$0xff]
  %v2597 = vld [vmem:[%s3 + $0x58] sm:$0xff]
  %v2599 = vsel %vm2093, %v2578, 0
  %v2602 = vsel %vm2093, %v2579, 0
  %v2605 = vsel %vm2093, %v2580, 0
  %v2608 = vsel %vm2093, %v2581, 0
  %v2611 = vsel %vm2093, %v2582, 0
  %v2614 = vsel %vm2093, %v2583, 0
  %v2617 = vsel %vm2093, %v2584, 0
  %v2620 = vsel %vm2093, %v2585, 0
  %v2623 = vsel %vm2093, %v2586, 0
  %v2626 = vsel %vm2093, %v2587, 0
  %v2629 = vsel %vm2093, %v2588, 0
  %v2632 = vsel %vm2093, %v2589, 0
  %v2635 = vsel %vm2093, %v2590, 0
  %v2638 = vsel %vm2093, %v2591, 0
  %v2641 = vsel %vm2093, %v2592, 0
  %v2644 = vsel %vm2093, %v2593, 0
  %2646 = vmatprep.subr.mxu0 0.0
  %2647 = vmatpush1.msra.mxu0 %v2594
  %2648 = vmatprep.subr.mxu0 0.0
  %2649 = vmatpush1.msra.mxu0 %v2595
  %2650 = vmatprep.subr.mxu0 0.0
  %2651 = vmatpush1.msra.mxu0 %v2596
  %2652 = vmatprep.subr.mxu0 0.0
  %2653 = vmatpush1.msra.mxu0 %v2597
  %2654 = vmatprep.subr.mxu0 0.0
  %2655 = vmatpush1.msra.mxu0 0.0
  %2656 = vmatprep.subr.mxu0 0.0
  %2657 = vmatpush1.msra.mxu0 0.0
  %2658 = vmatprep.subr.mxu0 0.0
  %2659 = vmatpush1.msra.mxu0 0.0
  %2660 = vmatprep.subr.mxu0 0.0
  %2661 = vmatpush1.msra.mxu0 0.0
  %2662 = vmatprep.subr.mxu0 0.0
  %2663 = vmatpush1.msra.mxu0 0.0
  %2664 = vmatprep.subr.mxu0 0.0
  %2665 = vmatpush1.msra.mxu0 0.0
  %2666 = vmatprep.subr.mxu0 0.0
  %2667 = vmatpush1.msra.mxu0 0.0
  %2668 = vmatprep.subr.mxu0 0.0
  %2669 = vmatpush1.msra.mxu0 0.0
  %2670 = vmatprep.subr.mxu0 0.0
  %2671 = vmatpush1.msra.mxu0 0.0
  %2672 = vmatprep.subr.mxu0 0.0
  %2673 = vmatpush1.msra.mxu0 0.0
  %2674 = vmatprep.subr.mxu0 0.0
  %2675 = vmatpush1.msra.mxu0 0.0
  %2676 = vmatprep.subr.mxu0 0.0
  %2677 = vmatpush1.msra.mxu0 0.0
  %2678 = vmatprep.subr.mxu0 0.0
  %2679 = vmatpush1.msra.mxu0 0.0
  %2680 = vmatprep.subr.mxu0 0.0
  %2681 = vmatpush1.msra.mxu0 0.0
  %2682 = vmatprep.subr.mxu0 0.0
  %2683 = vmatpush1.msra.mxu0 0.0
  %2684 = vmatprep.subr.mxu0 0.0
  %2685 = vmatpush1.msra.mxu0 0.0
  %2686 = vmatprep.subr.mxu0 0.0
  %2687 = vmatpush1.msra.mxu0 0.0
  %2688 = vmatprep.subr.mxu0 0.0
  %2689 = vmatpush1.msra.mxu0 0.0
  %2690 = vmatprep.subr.mxu0 0.0
  %2691 = vmatpush1.msra.mxu0 0.0
  %2692 = vmatprep.subr.mxu0 0.0
  %2693 = vmatpush1.msra.mxu0 0.0
  %2694 = vmatprep.subr.mxu0 0.0
  %2695 = vmatpush1.msra.mxu0 0.0
  %2696 = vmatprep.subr.mxu0 0.0
  %2697 = vmatpush1.msra.mxu0 0.0
  %2698 = vmatprep.subr.mxu0 0.0
  %2699 = vmatpush1.msra.mxu0 0.0
  %2700 = vmatprep.subr.mxu0 0.0
  %2701 = vmatpush1.msra.mxu0 0.0
  %2702 = vmatprep.subr.mxu0 0.0
  %2703 = vmatpush1.msra.mxu0 0.0
  %2704 = vmatprep.subr.mxu0 0.0
  %2705 = vmatpush1.msra.mxu0 0.0
  %2706 = vmatprep.subr.mxu0 0.0
  %2707 = vmatpush1.msra.mxu0 0.0
  %2708 = vmatprep.subr.mxu0 0.0
  %2709 = vmatpush1.msra.mxu0 0.0
  %2710 = vmatprep.mubr.f32.mxu0 0.0
  %2711 = vmatmul.mubr.f32.gmra.mrb[0].mxu0 %v2599
  %v2712 = vpop.f32.mrb[0].mxu0
  %v2713 = vadd.f32 0.0, %v2712
  %v2714 = vpop.f32.mrb[0].mxu0
  %2715 = vmatprep.mubr.f32.mxu0 0.0
  %2716 = vmatmul.mubr.f32.gmra.mrb[0].mxu0 %v2602
  %v2717 = vpop.f32.mrb[0].mxu0
  %v2718 = vadd.f32 0.0, %v2717
  %v2719 = vpop.f32.mrb[0].mxu0
  %2720 = vmatprep.mubr.f32.mxu0 0.0
  %2721 = vmatmul.mubr.f32.gmra.mrb[0].mxu0 %v2605
  %v2722 = vpop.f32.mrb[0].mxu0
  %v2723 = vadd.f32 0.0, %v2722
  %v2724 = vpop.f32.mrb[0].mxu0
  %2725 = vmatprep.mubr.f32.mxu0 0.0
  %2726 = vmatmul.mubr.f32.gmra.mrb[0].mxu0 %v2608
  %v2727 = vpop.f32.mrb[0].mxu0
  %v2728 = vadd.f32 0.0, %v2727
  %v2729 = vpop.f32.mrb[0].mxu0
  %2730 = vmatprep.mubr.f32.mxu0 0.0
  %2731 = vmatmul.mubr.f32.gmra.mrb[0].mxu0 %v2611
  %v2732 = vpop.f32.mrb[0].mxu0
  %v2733 = vadd.f32 0.0, %v2732
  %v2734 = vpop.f32.mrb[0].mxu0
  %2735 = vmatprep.mubr.f32.mxu0 0.0
  %2736 = vmatmul.mubr.f32.gmra.mrb[0].mxu0 %v2614
  %v2737 = vpop.f32.mrb[0].mxu0
  %v2738 = vadd.f32 0.0, %v2737
  %v2739 = vpop.f32.mrb[0].mxu0
  %2740 = vmatprep.mubr.f32.mxu0 0.0
  %2741 = vmatmul.mubr.f32.gmra.mrb[0].mxu0 %v2617
  %v2742 = vpop.f32.mrb[0].mxu0
  %v2743 = vadd.f32 0.0, %v2742
  %v2744 = vpop.f32.mrb[0].mxu0
  %2745 = vmatprep.mubr.f32.mxu0 0.0
  %2746 = vmatmul.mubr.f32.gmra.mrb[0].mxu0 %v2620
  %v2747 = vpop.f32.mrb[0].mxu0
  %v2748 = vadd.f32 0.0, %v2747
  %v2749 = vpop.f32.mrb[0].mxu0
  %2750 = vmatprep.mubr.f32.mxu0 0.0
  %2751 = vmatmul.mubr.f32.gmra.mrb[0].mxu0 %v2623
  %v2752 = vpop.f32.mrb[0].mxu0
  %v2753 = vadd.f32 0.0, %v2752
  %v2754 = vpop.f32.mrb[0].mxu0
  %2755 = vmatprep.mubr.f32.mxu0 0.0
  %2756 = vmatmul.mubr.f32.gmra.mrb[0].mxu0 %v2626
  %v2757 = vpop.f32.mrb[0].mxu0
  %v2758 = vadd.f32 0.0, %v2757
  %v2759 = vpop.f32.mrb[0].mxu0
  %2760 = vmatprep.mubr.f32.mxu0 0.0
  %2761 = vmatmul.mubr.f32.gmra.mrb[0].mxu0 %v2629
  %v2762 = vpop.f32.mrb[0].mxu0
  %v2763 = vadd.f32 0.0, %v2762
  %v2764 = vpop.f32.mrb[0].mxu0
  %2765 = vmatprep.mubr.f32.mxu0 0.0
  %2766 = vmatmul.mubr.f32.gmra.mrb[0].mxu0 %v2632
  %v2767 = vpop.f32.mrb[0].mxu0
  %v2768 = vadd.f32 0.0, %v2767
  %v2769 = vpop.f32.mrb[0].mxu0
  %2770 = vmatprep.mubr.f32.mxu0 0.0
  %2771 = vmatmul.mubr.f32.gmra.mrb[0].mxu0 %v2635
  %v2772 = vpop.f32.mrb[0].mxu0
  %v2773 = vadd.f32 0.0, %v2772
  %v2774 = vpop.f32.mrb[0].mxu0
  %2775 = vmatprep.mubr.f32.mxu0 0.0
  %2776 = vmatmul.mubr.f32.gmra.mrb[0].mxu0 %v2638
  %v2777 = vpop.f32.mrb[0].mxu0
  %v2778 = vadd.f32 0.0, %v2777
  %v2779 = vpop.f32.mrb[0].mxu0
  %2780 = vmatprep.mubr.f32.mxu0 0.0
  %2781 = vmatmul.mubr.f32.gmra.mrb[0].mxu0 %v2641
  %v2782 = vpop.f32.mrb[0].mxu0
  %v2783 = vadd.f32 0.0, %v2782
  %v2784 = vpop.f32.mrb[0].mxu0
  %2785 = vmatprep.mubr.f32.mxu0 0.0
  %2786 = vmatmul.mubr.f32.gmra.mrb[0].mxu0 %v2644
  %v2787 = vpop.f32.mrb[0].mxu0
  %v2788 = vadd.f32 0.0, %v2787
  %v2789 = vpop.f32.mrb[0].mxu0
  %2790 = vdwg.mxu0
  %v2791 = vadd.f32 %v2500, %v2713
  %v2792 = vadd.f32 %v2505, %v2718
  %v2793 = vadd.f32 %v2510, %v2723
  %v2794 = vadd.f32 %v2515, %v2728
  %v2795 = vadd.f32 %v2520, %v2733
  %v2796 = vadd.f32 %v2525, %v2738
  %v2797 = vadd.f32 %v2530, %v2743
  %v2798 = vadd.f32 %v2535, %v2748
  %v2799 = vadd.f32 %v2540, %v2753
  %v2800 = vadd.f32 %v2545, %v2758
  %v2801 = vadd.f32 %v2550, %v2763
  %v2802 = vadd.f32 %v2555, %v2768
  %v2803 = vadd.f32 %v2560, %v2773
  %v2804 = vadd.f32 %v2565, %v2778
  %v2805 = vadd.f32 %v2570, %v2783
  %v2806 = vadd.f32 %v2575, %v2788
  %v2807 = vld [vmem:[%s2135] sm:$0xff]
  %v2808 = vld [vmem:[%s2135 + $0x10] sm:$0xff]
  %v2809 = vld [vmem:[%s2135 + $0x20] sm:$0xff]
  %v2810 = vld [vmem:[%s2135 + $0x30] sm:$0xff]
  %v2811 = vld [vmem:[%s2135 + $0x40] sm:$0xff]
  %v2812 = vld [vmem:[%s2135 + $0x50] sm:$0xff]
  %v2813 = vld [vmem:[%s2135 + $0x60] sm:$0xff]
  %v2814 = vld [vmem:[%s2135 + $0x70] sm:$0xff]
  %v2815 = vld [vmem:[%s2135 + $0xa0] sm:$0xff]
  %v2816 = vld [vmem:[%s2135 + $0xb0] sm:$0xff]
  %v2817 = vld [vmem:[%s2135 + $0xc0] sm:$0xff]
  %v2818 = vld [vmem:[%s2135 + $0xd0] sm:$0xff]
  %v2819 = vld [vmem:[%s2135 + $0xe0] sm:$0xff]
  %v2820 = vld [vmem:[%s2135 + $0xf0] sm:$0xff]
  %v2821 = vld [vmem:[%s2135 + $0x100] sm:$0xff]
  %v2822 = vld [vmem:[%s2135 + $0x110] sm:$0xff]
  %v2823 = vld [vmem:[%s3 + $0x60] sm:$0xff]
  %v2824 = vld [vmem:[%s3 + $0x68] sm:$0xff]
  %v2825 = vld [vmem:[%s3 + $0x70] sm:$0xff]
  %v2826 = vld [vmem:[%s3 + $0x78] sm:$0xff]
  %v2828 = vsel %vm2093, %v2807, 0
  %v2831 = vsel %vm2093, %v2808, 0
  %v2834 = vsel %vm2093, %v2809, 0
  %v2837 = vsel %vm2093, %v2810, 0
  %v2840 = vsel %vm2093, %v2811, 0
  %v2843 = vsel %vm2093, %v2812, 0
  %v2846 = vsel %vm2093, %v2813, 0
  %v2849 = vsel %vm2093, %v2814, 0
  %v2852 = vsel %vm2093, %v2815, 0
  %v2855 = vsel %vm2093, %v2816, 0
  %v2858 = vsel %vm2093, %v2817, 0
  %v2861 = vsel %vm2093, %v2818, 0
  %v2864 = vsel %vm2093, %v2819, 0
  %v2867 = vsel %vm2093, %v2820, 0
  %v2870 = vsel %vm2093, %v2821, 0
  %v2873 = vsel %vm2093, %v2822, 0
  %2875 = vmatprep.subr.mxu0 0.0
  %2876 = vmatpush1.msra.mxu0 %v2823
  %2877 = vmatprep.subr.mxu0 0.0
  %2878 = vmatpush1.msra.mxu0 %v2824
  %2879 = vmatprep.subr.mxu0 0.0
  %2880 = vmatpush1.msra.mxu0 %v2825
  %2881 = vmatprep.subr.mxu0 0.0
  %2882 = vmatpush1.msra.mxu0 %v2826
  %2883 = vmatprep.subr.mxu0 0.0
  %2884 = vmatpush1.msra.mxu0 0.0
  %2885 = vmatprep.subr.mxu0 0.0
  %2886 = vmatpush1.msra.mxu0 0.0
  %2887 = vmatprep.subr.mxu0 0.0
  %2888 = vmatpush1.msra.mxu0 0.0
  %2889 = vmatprep.subr.mxu0 0.0
  %2890 = vmatpush1.msra.mxu0 0.0
  %2891 = vmatprep.subr.mxu0 0.0
  %2892 = vmatpush1.msra.mxu0 0.0
  %2893 = vmatprep.subr.mxu0 0.0
  %2894 = vmatpush1.msra.mxu0 0.0
  %2895 = vmatprep.subr.mxu0 0.0
  %2896 = vmatpush1.msra.mxu0 0.0
  %2897 = vmatprep.subr.mxu0 0.0
  %2898 = vmatpush1.msra.mxu0 0.0
  %2899 = vmatprep.subr.mxu0 0.0
  %2900 = vmatpush1.msra.mxu0 0.0
  %2901 = vmatprep.subr.mxu0 0.0
  %2902 = vmatpush1.msra.mxu0 0.0
  %2903 = vmatprep.subr.mxu0 0.0
  %2904 = vmatpush1.msra.mxu0 0.0
  %2905 = vmatprep.subr.mxu0 0.0
  %2906 = vmatpush1.msra.mxu0 0.0
  %2907 = vmatprep.subr.mxu0 0.0
  %2908 = vmatpush1.msra.mxu0 0.0
  %2909 = vmatprep.subr.mxu0 0.0
  %2910 = vmatpush1.msra.mxu0 0.0
  %2911 = vmatprep.subr.mxu0 0.0
  %2912 = vmatpush1.msra.mxu0 0.0
  %2913 = vmatprep.subr.mxu0 0.0
  %2914 = vmatpush1.msra.mxu0 0.0
  %2915 = vmatprep.subr.mxu0 0.0
  %2916 = vmatpush1.msra.mxu0 0.0
  %2917 = vmatprep.subr.mxu0 0.0
  %2918 = vmatpush1.msra.mxu0 0.0
  %2919 = vmatprep.subr.mxu0 0.0
  %2920 = vmatpush1.msra.mxu0 0.0
  %2921 = vmatprep.subr.mxu0 0.0
  %2922 = vmatpush1.msra.mxu0 0.0
  %2923 = vmatprep.subr.mxu0 0.0
  %2924 = vmatpush1.msra.mxu0 0.0
  %2925 = vmatprep.subr.mxu0 0.0
  %2926 = vmatpush1.msra.mxu0 0.0
  %2927 = vmatprep.subr.mxu0 0.0
  %2928 = vmatpush1.msra.mxu0 0.0
  %2929 = vmatprep.subr.mxu0 0.0
  %2930 = vmatpush1.msra.mxu0 0.0
  %2931 = vmatprep.subr.mxu0 0.0
  %2932 = vmatpush1.msra.mxu0 0.0
  %2933 = vmatprep.subr.mxu0 0.0
  %2934 = vmatpush1.msra.mxu0 0.0
  %2935 = vmatprep.subr.mxu0 0.0
  %2936 = vmatpush1.msra.mxu0 0.0
  %2937 = vmatprep.subr.mxu0 0.0
  %2938 = vmatpush1.msra.mxu0 0.0
  %2939 = vmatprep.mubr.f32.mxu0 0.0
  %2940 = vmatmul.mubr.f32.gmra.mrb[0].mxu0 %v2828
  %v2941 = vpop.f32.mrb[0].mxu0
  %v2942 = vadd.f32 0.0, %v2941
  %v2943 = vpop.f32.mrb[0].mxu0
  %2944 = vmatprep.mubr.f32.mxu0 0.0
  %2945 = vmatmul.mubr.f32.gmra.mrb[0].mxu0 %v2831
  %v2946 = vpop.f32.mrb[0].mxu0
  %v2947 = vadd.f32 0.0, %v2946
  %v2948 = vpop.f32.mrb[0].mxu0
  %2949 = vmatprep.mubr.f32.mxu0 0.0
  %2950 = vmatmul.mubr.f32.gmra.mrb[0].mxu0 %v2834
  %v2951 = vpop.f32.mrb[0].mxu0
  %v2952 = vadd.f32 0.0, %v2951
  %v2953 = vpop.f32.mrb[0].mxu0
  %2954 = vmatprep.mubr.f32.mxu0 0.0
  %2955 = vmatmul.mubr.f32.gmra.mrb[0].mxu0 %v2837
  %v2956 = vpop.f32.mrb[0].mxu0
  %v2957 = vadd.f32 0.0, %v2956
  %v2958 = vpop.f32.mrb[0].mxu0
  %2959 = vmatprep.mubr.f32.mxu0 0.0
  %2960 = vmatmul.mubr.f32.gmra.mrb[0].mxu0 %v2840
  %v2961 = vpop.f32.mrb[0].mxu0
  %v2962 = vadd.f32 0.0, %v2961
  %v2963 = vpop.f32.mrb[0].mxu0
  %2964 = vmatprep.mubr.f32.mxu0 0.0
  %2965 = vmatmul.mubr.f32.gmra.mrb[0].mxu0 %v2843
  %v2966 = vpop.f32.mrb[0].mxu0
  %v2967 = vadd.f32 0.0, %v2966
  %v2968 = vpop.f32.mrb[0].mxu0
  %2969 = vmatprep.mubr.f32.mxu0 0.0
  %2970 = vmatmul.mubr.f32.gmra.mrb[0].mxu0 %v2846
  %v2971 = vpop.f32.mrb[0].mxu0
  %v2972 = vadd.f32 0.0, %v2971
  %v2973 = vpop.f32.mrb[0].mxu0
  %2974 = vmatprep.mubr.f32.mxu0 0.0
  %2975 = vmatmul.mubr.f32.gmra.mrb[0].mxu0 %v2849
  %v2976 = vpop.f32.mrb[0].mxu0
  %v2977 = vadd.f32 0.0, %v2976
  %v2978 = vpop.f32.mrb[0].mxu0
  %2979 = vmatprep.mubr.f32.mxu0 0.0
  %2980 = vmatmul.mubr.f32.gmra.mrb[0].mxu0 %v2852
  %v2981 = vpop.f32.mrb[0].mxu0
  %v2982 = vadd.f32 0.0, %v2981
  %v2983 = vpop.f32.mrb[0].mxu0
  %2984 = vmatprep.mubr.f32.mxu0 0.0
  %2985 = vmatmul.mubr.f32.gmra.mrb[0].mxu0 %v2855
  %v2986 = vpop.f32.mrb[0].mxu0
  %v2987 = vadd.f32 0.0, %v2986
  %v2988 = vpop.f32.mrb[0].mxu0
  %2989 = vmatprep.mubr.f32.mxu0 0.0
  %2990 = vmatmul.mubr.f32.gmra.mrb[0].mxu0 %v2858
  %v2991 = vpop.f32.mrb[0].mxu0
  %v2992 = vadd.f32 0.0, %v2991
  %v2993 = vpop.f32.mrb[0].mxu0
  %2994 = vmatprep.mubr.f32.mxu0 0.0
  %2995 = vmatmul.mubr.f32.gmra.mrb[0].mxu0 %v2861
  %v2996 = vpop.f32.mrb[0].mxu0
  %v2997 = vadd.f32 0.0, %v2996
  %v2998 = vpop.f32.mrb[0].mxu0
  %2999 = vmatprep.mubr.f32.mxu0 0.0
  %3000 = vmatmul.mubr.f32.gmra.mrb[0].mxu0 %v2864
  %v3001 = vpop.f32.mrb[0].mxu0
  %v3002 = vadd.f32 0.0, %v3001
  %v3003 = vpop.f32.mrb[0].mxu0
  %3004 = vmatprep.mubr.f32.mxu0 0.0
  %3005 = vmatmul.mubr.f32.gmra.mrb[0].mxu0 %v2867
  %v3006 = vpop.f32.mrb[0].mxu0
  %v3007 = vadd.f32 0.0, %v3006
  %v3008 = vpop.f32.mrb[0].mxu0
  %3009 = vmatprep.mubr.f32.mxu0 0.0
  %3010 = vmatmul.mubr.f32.gmra.mrb[0].mxu0 %v2870
  %v3011 = vpop.f32.mrb[0].mxu0
  %v3012 = vadd.f32 0.0, %v3011
  %v3013 = vpop.f32.mrb[0].mxu0
  %3014 = vmatprep.mubr.f32.mxu0 0.0
  %3015 = vmatmul.mubr.f32.gmra.mrb[0].mxu0 %v2873
  %v3016 = vpop.f32.mrb[0].mxu0
  %v3017 = vadd.f32 0.0, %v3016
  %v3018 = vpop.f32.mrb[0].mxu0
  %3019 = vdwg.mxu0
  %v3020 = vadd.f32 %v2791, %v2942
  %v3021 = vadd.f32 %v2792, %v2947
  %v3022 = vadd.f32 %v2793, %v2952
  %v3023 = vadd.f32 %v2794, %v2957
  %v3024 = vadd.f32 %v2795, %v2962
  %v3025 = vadd.f32 %v2796, %v2967
  %v3026 = vadd.f32 %v2797, %v2972
  %v3027 = vadd.f32 %v2798, %v2977
  %v3028 = vadd.f32 %v2799, %v2982
  %v3029 = vadd.f32 %v2800, %v2987
  %v3030 = vadd.f32 %v2801, %v2992
  %v3031 = vadd.f32 %v2802, %v2997
  %v3032 = vadd.f32 %v2803, %v3002
  %v3033 = vadd.f32 %v2804, %v3007
  %v3034 = vadd.f32 %v2805, %v3012
  %v3035 = vadd.f32 %v2806, %v3017
  %v3036 = vld [vmem:[%s2135 + $0x1] sm:$0xff]
  %v3037 = vld [vmem:[%s2135 + $0x11] sm:$0xff]
  %v3038 = vld [vmem:[%s2135 + $0x21] sm:$0xff]
  %v3039 = vld [vmem:[%s2135 + $0x31] sm:$0xff]
  %v3040 = vld [vmem:[%s2135 + $0x41] sm:$0xff]
  %v3041 = vld [vmem:[%s2135 + $0x51] sm:$0xff]
  %v3042 = vld [vmem:[%s2135 + $0x61] sm:$0xff]
  %v3043 = vld [vmem:[%s2135 + $0x71] sm:$0xff]
  %v3044 = vld [vmem:[%s2135 + $0xa1] sm:$0xff]
  %v3045 = vld [vmem:[%s2135 + $0xb1] sm:$0xff]
  %v3046 = vld [vmem:[%s2135 + $0xc1] sm:$0xff]
  %v3047 = vld [vmem:[%s2135 + $0xd1] sm:$0xff]
  %v3048 = vld [vmem:[%s2135 + $0xe1] sm:$0xff]
  %v3049 = vld [vmem:[%s2135 + $0xf1] sm:$0xff]
  %v3050 = vld [vmem:[%s2135 + $0x101] sm:$0xff]
  %v3051 = vld [vmem:[%s2135 + $0x111] sm:$0xff]
  %v3052 = vld [vmem:[%s3 + $0x80] sm:$0xff]
  %v3053 = vld [vmem:[%s3 + $0x88] sm:$0xff]
  %v3054 = vld [vmem:[%s3 + $0x90] sm:$0xff]
  %v3055 = vld [vmem:[%s3 + $0x98] sm:$0xff]
  %v3057 = vsel %vm2093, %v3036, 0
  %v3060 = vsel %vm2093, %v3037, 0
  %v3063 = vsel %vm2093, %v3038, 0
  %v3066 = vsel %vm2093, %v3039, 0
  %v3069 = vsel %vm2093, %v3040, 0
  %v3072 = vsel %vm2093, %v3041, 0
  %v3075 = vsel %vm2093, %v3042, 0
  %v3078 = vsel %vm2093, %v3043, 0
  %v3081 = vsel %vm2093, %v3044, 0
  %v3084 = vsel %vm2093, %v3045, 0
  %v3087 = vsel %vm2093, %v3046, 0
  %v3090 = vsel %vm2093, %v3047, 0
  %v3093 = vsel %vm2093, %v3048, 0
  %v3096 = vsel %vm2093, %v3049, 0
  %v3099 = vsel %vm2093, %v3050, 0
  %v3102 = vsel %vm2093, %v3051, 0
  %3104 = vmatprep.subr.mxu0 0.0
  %3105 = vmatpush1.msra.mxu0 %v3052
  %3106 = vmatprep.subr.mxu0 0.0
  %3107 = vmatpush1.msra.mxu0 %v3053
  %3108 = vmatprep.subr.mxu0 0.0
  %3109 = vmatpush1.msra.mxu0 %v3054
  %3110 = vmatprep.subr.mxu0 0.0
  %3111 = vmatpush1.msra.mxu0 %v3055
  %3112 = vmatprep.subr.mxu0 0.0
  %3113 = vmatpush1.msra.mxu0 0.0
  %3114 = vmatprep.subr.mxu0 0.0
  %3115 = vmatpush1.msra.mxu0 0.0
  %3116 = vmatprep.subr.mxu0 0.0
  %3117 = vmatpush1.msra.mxu0 0.0
  %3118 = vmatprep.subr.mxu0 0.0
  %3119 = vmatpush1.msra.mxu0 0.0
  %3120 = vmatprep.subr.mxu0 0.0
  %3121 = vmatpush1.msra.mxu0 0.0
  %3122 = vmatprep.subr.mxu0 0.0
  %3123 = vmatpush1.msra.mxu0 0.0
  %3124 = vmatprep.subr.mxu0 0.0
  %3125 = vmatpush1.msra.mxu0 0.0
  %3126 = vmatprep.subr.mxu0 0.0
  %3127 = vmatpush1.msra.mxu0 0.0
  %3128 = vmatprep.subr.mxu0 0.0
  %3129 = vmatpush1.msra.mxu0 0.0
  %3130 = vmatprep.subr.mxu0 0.0
  %3131 = vmatpush1.msra.mxu0 0.0
  %3132 = vmatprep.subr.mxu0 0.0
  %3133 = vmatpush1.msra.mxu0 0.0
  %3134 = vmatprep.subr.mxu0 0.0
  %3135 = vmatpush1.msra.mxu0 0.0
  %3136 = vmatprep.subr.mxu0 0.0
  %3137 = vmatpush1.msra.mxu0 0.0
  %3138 = vmatprep.subr.mxu0 0.0
  %3139 = vmatpush1.msra.mxu0 0.0
  %3140 = vmatprep.subr.mxu0 0.0
  %3141 = vmatpush1.msra.mxu0 0.0
  %3142 = vmatprep.subr.mxu0 0.0
  %3143 = vmatpush1.msra.mxu0 0.0
  %3144 = vmatprep.subr.mxu0 0.0
  %3145 = vmatpush1.msra.mxu0 0.0
  %3146 = vmatprep.subr.mxu0 0.0
  %3147 = vmatpush1.msra.mxu0 0.0
  %3148 = vmatprep.subr.mxu0 0.0
  %3149 = vmatpush1.msra.mxu0 0.0
  %3150 = vmatprep.subr.mxu0 0.0
  %3151 = vmatpush1.msra.mxu0 0.0
  %3152 = vmatprep.subr.mxu0 0.0
  %3153 = vmatpush1.msra.mxu0 0.0
  %3154 = vmatprep.subr.mxu0 0.0
  %3155 = vmatpush1.msra.mxu0 0.0
  %3156 = vmatprep.subr.mxu0 0.0
  %3157 = vmatpush1.msra.mxu0 0.0
  %3158 = vmatprep.subr.mxu0 0.0
  %3159 = vmatpush1.msra.mxu0 0.0
  %3160 = vmatprep.subr.mxu0 0.0
  %3161 = vmatpush1.msra.mxu0 0.0
  %3162 = vmatprep.subr.mxu0 0.0
  %3163 = vmatpush1.msra.mxu0 0.0
  %3164 = vmatprep.subr.mxu0 0.0
  %3165 = vmatpush1.msra.mxu0 0.0
  %3166 = vmatprep.subr.mxu0 0.0
  %3167 = vmatpush1.msra.mxu0 0.0
  %3168 = vmatprep.mubr.f32.mxu0 0.0
  %3169 = vmatmul.mubr.f32.gmra.mrb[0].mxu0 %v3057
  %v3170 = vpop.f32.mrb[0].mxu0
  %v3171 = vadd.f32 0.0, %v3170
  %v3172 = vpop.f32.mrb[0].mxu0
  %3173 = vmatprep.mubr.f32.mxu0 0.0
  %3174 = vmatmul.mubr.f32.gmra.mrb[0].mxu0 %v3060
  %v3175 = vpop.f32.mrb[0].mxu0
  %v3176 = vadd.f32 0.0, %v3175
  %v3177 = vpop.f32.mrb[0].mxu0
  %3178 = vmatprep.mubr.f32.mxu0 0.0
  %3179 = vmatmul.mubr.f32.gmra.mrb[0].mxu0 %v3063
  %v3180 = vpop.f32.mrb[0].mxu0
  %v3181 = vadd.f32 0.0, %v3180
  %v3182 = vpop.f32.mrb[0].mxu0
  %3183 = vmatprep.mubr.f32.mxu0 0.0
  %3184 = vmatmul.mubr.f32.gmra.mrb[0].mxu0 %v3066
  %v3185 = vpop.f32.mrb[0].mxu0
  %v3186 = vadd.f32 0.0, %v3185
  %v3187 = vpop.f32.mrb[0].mxu0
  %3188 = vmatprep.mubr.f32.mxu0 0.0
  %3189 = vmatmul.mubr.f32.gmra.mrb[0].mxu0 %v3069
  %v3190 = vpop.f32.mrb[0].mxu0
  %v3191 = vadd.f32 0.0, %v3190
  %v3192 = vpop.f32.mrb[0].mxu0
  %3193 = vmatprep.mubr.f32.mxu0 0.0
  %3194 = vmatmul.mubr.f32.gmra.mrb[0].mxu0 %v3072
  %v3195 = vpop.f32.mrb[0].mxu0
  %v3196 = vadd.f32 0.0, %v3195
  %v3197 = vpop.f32.mrb[0].mxu0
  %3198 = vmatprep.mubr.f32.mxu0 0.0
  %3199 = vmatmul.mubr.f32.gmra.mrb[0].mxu0 %v3075
  %v3200 = vpop.f32.mrb[0].mxu0
  %v3201 = vadd.f32 0.0, %v3200
  %v3202 = vpop.f32.mrb[0].mxu0
  %3203 = vmatprep.mubr.f32.mxu0 0.0
  %3204 = vmatmul.mubr.f32.gmra.mrb[0].mxu0 %v3078
  %v3205 = vpop.f32.mrb[0].mxu0
  %v3206 = vadd.f32 0.0, %v3205
  %v3207 = vpop.f32.mrb[0].mxu0
  %3208 = vmatprep.mubr.f32.mxu0 0.0
  %3209 = vmatmul.mubr.f32.gmra.mrb[0].mxu0 %v3081
  %v3210 = vpop.f32.mrb[0].mxu0
  %v3211 = vadd.f32 0.0, %v3210
  %v3212 = vpop.f32.mrb[0].mxu0
  %3213 = vmatprep.mubr.f32.mxu0 0.0
  %3214 = vmatmul.mubr.f32.gmra.mrb[0].mxu0 %v3084
  %v3215 = vpop.f32.mrb[0].mxu0
  %v3216 = vadd.f32 0.0, %v3215
  %v3217 = vpop.f32.mrb[0].mxu0
  %3218 = vmatprep.mubr.f32.mxu0 0.0
  %3219 = vmatmul.mubr.f32.gmra.mrb[0].mxu0 %v3087
  %v3220 = vpop.f32.mrb[0].mxu0
  %v3221 = vadd.f32 0.0, %v3220
  %v3222 = vpop.f32.mrb[0].mxu0
  %3223 = vmatprep.mubr.f32.mxu0 0.0
  %3224 = vmatmul.mubr.f32.gmra.mrb[0].mxu0 %v3090
  %v3225 = vpop.f32.mrb[0].mxu0
  %v3226 = vadd.f32 0.0, %v3225
  %v3227 = vpop.f32.mrb[0].mxu0
  %3228 = vmatprep.mubr.f32.mxu0 0.0
  %3229 = vmatmul.mubr.f32.gmra.mrb[0].mxu0 %v3093
  %v3230 = vpop.f32.mrb[0].mxu0
  %v3231 = vadd.f32 0.0, %v3230
  %v3232 = vpop.f32.mrb[0].mxu0
  %3233 = vmatprep.mubr.f32.mxu0 0.0
  %3234 = vmatmul.mubr.f32.gmra.mrb[0].mxu0 %v3096
  %v3235 = vpop.f32.mrb[0].mxu0
  %v3236 = vadd.f32 0.0, %v3235
  %v3237 = vpop.f32.mrb[0].mxu0
  %3238 = vmatprep.mubr.f32.mxu0 0.0
  %3239 = vmatmul.mubr.f32.gmra.mrb[0].mxu0 %v3099
  %v3240 = vpop.f32.mrb[0].mxu0
  %v3241 = vadd.f32 0.0, %v3240
  %v3242 = vpop.f32.mrb[0].mxu0
  %3243 = vmatprep.mubr.f32.mxu0 0.0
  %3244 = vmatmul.mubr.f32.gmra.mrb[0].mxu0 %v3102
  %v3245 = vpop.f32.mrb[0].mxu0
  %v3246 = vadd.f32 0.0, %v3245
  %v3247 = vpop.f32.mrb[0].mxu0
  %3248 = vdwg.mxu0
  %v3249 = vadd.f32 %v3020, %v3171
  %v3250 = vadd.f32 %v3021, %v3176
  %v3251 = vadd.f32 %v3022, %v3181
  %v3252 = vadd.f32 %v3023, %v3186
  %v3253 = vadd.f32 %v3024, %v3191
  %v3254 = vadd.f32 %v3025, %v3196
  %v3255 = vadd.f32 %v3026, %v3201
  %v3256 = vadd.f32 %v3027, %v3206
  %v3257 = vadd.f32 %v3028, %v3211
  %v3258 = vadd.f32 %v3029, %v3216
  %v3259 = vadd.f32 %v3030, %v3221
  %v3260 = vadd.f32 %v3031, %v3226
  %v3261 = vadd.f32 %v3032, %v3231
  %v3262 = vadd.f32 %v3033, %v3236
  %v3263 = vadd.f32 %v3034, %v3241
  %v3264 = vadd.f32 %v3035, %v3246
  %v3265 = vld [vmem:[%s2135 + $0x2] sm:$0xff]
  %v3266 = vld [vmem:[%s2135 + $0x12] sm:$0xff]
  %v3267 = vld [vmem:[%s2135 + $0x22] sm:$0xff]
  %v3268 = vld [vmem:[%s2135 + $0x32] sm:$0xff]
  %v3269 = vld [vmem:[%s2135 + $0x42] sm:$0xff]
  %v3270 = vld [vmem:[%s2135 + $0x52] sm:$0xff]
  %v3271 = vld [vmem:[%s2135 + $0x62] sm:$0xff]
  %v3272 = vld [vmem:[%s2135 + $0x72] sm:$0xff]
  %v3273 = vld [vmem:[%s2135 + $0xa2] sm:$0xff]
  %v3274 = vld [vmem:[%s2135 + $0xb2] sm:$0xff]
  %v3275 = vld [vmem:[%s2135 + $0xc2] sm:$0xff]
  %v3276 = vld [vmem:[%s2135 + $0xd2] sm:$0xff]
  %v3277 = vld [vmem:[%s2135 + $0xe2] sm:$0xff]
  %v3278 = vld [vmem:[%s2135 + $0xf2] sm:$0xff]
  %v3279 = vld [vmem:[%s2135 + $0x102] sm:$0xff]
  %v3280 = vld [vmem:[%s2135 + $0x112] sm:$0xff]
  %v3281 = vld [vmem:[%s3 + $0xa0] sm:$0xff]
  %v3282 = vld [vmem:[%s3 + $0xa8] sm:$0xff]
  %v3283 = vld [vmem:[%s3 + $0xb0] sm:$0xff]
  %v3284 = vld [vmem:[%s3 + $0xb8] sm:$0xff]
  %v3286 = vsel %vm2093, %v3265, 0
  %v3289 = vsel %vm2093, %v3266, 0
  %v3292 = vsel %vm2093, %v3267, 0
  %v3295 = vsel %vm2093, %v3268, 0
  %v3298 = vsel %vm2093, %v3269, 0
  %v3301 = vsel %vm2093, %v3270, 0
  %v3304 = vsel %vm2093, %v3271, 0
  %v3307 = vsel %vm2093, %v3272, 0
  %v3310 = vsel %vm2093, %v3273, 0
  %v3313 = vsel %vm2093, %v3274, 0
  %v3316 = vsel %vm2093, %v3275, 0
  %v3319 = vsel %vm2093, %v3276, 0
  %v3322 = vsel %vm2093, %v3277, 0
  %v3325 = vsel %vm2093, %v3278, 0
  %v3328 = vsel %vm2093, %v3279, 0
  %v3331 = vsel %vm2093, %v3280, 0
  %3333 = vmatprep.subr.mxu0 0.0
  %3334 = vmatpush1.msra.mxu0 %v3281
  %3335 = vmatprep.subr.mxu0 0.0
  %3336 = vmatpush1.msra.mxu0 %v3282
  %3337 = vmatprep.subr.mxu0 0.0
  %3338 = vmatpush1.msra.mxu0 %v3283
  %3339 = vmatprep.subr.mxu0 0.0
  %3340 = vmatpush1.msra.mxu0 %v3284
  %3341 = vmatprep.subr.mxu0 0.0
  %3342 = vmatpush1.msra.mxu0 0.0
  %3343 = vmatprep.subr.mxu0 0.0
  %3344 = vmatpush1.msra.mxu0 0.0
  %3345 = vmatprep.subr.mxu0 0.0
  %3346 = vmatpush1.msra.mxu0 0.0
  %3347 = vmatprep.subr.mxu0 0.0
  %3348 = vmatpush1.msra.mxu0 0.0
  %3349 = vmatprep.subr.mxu0 0.0
  %3350 = vmatpush1.msra.mxu0 0.0
  %3351 = vmatprep.subr.mxu0 0.0
  %3352 = vmatpush1.msra.mxu0 0.0
  %3353 = vmatprep.subr.mxu0 0.0
  %3354 = vmatpush1.msra.mxu0 0.0
  %3355 = vmatprep.subr.mxu0 0.0
  %3356 = vmatpush1.msra.mxu0 0.0
  %3357 = vmatprep.subr.mxu0 0.0
  %3358 = vmatpush1.msra.mxu0 0.0
  %3359 = vmatprep.subr.mxu0 0.0
  %3360 = vmatpush1.msra.mxu0 0.0
  %3361 = vmatprep.subr.mxu0 0.0
  %3362 = vmatpush1.msra.mxu0 0.0
  %3363 = vmatprep.subr.mxu0 0.0
  %3364 = vmatpush1.msra.mxu0 0.0
  %3365 = vmatprep.subr.mxu0 0.0
  %3366 = vmatpush1.msra.mxu0 0.0
  %3367 = vmatprep.subr.mxu0 0.0
  %3368 = vmatpush1.msra.mxu0 0.0
  %3369 = vmatprep.subr.mxu0 0.0
  %3370 = vmatpush1.msra.mxu0 0.0
  %3371 = vmatprep.subr.mxu0 0.0
  %3372 = vmatpush1.msra.mxu0 0.0
  %3373 = vmatprep.subr.mxu0 0.0
  %3374 = vmatpush1.msra.mxu0 0.0
  %3375 = vmatprep.subr.mxu0 0.0
  %3376 = vmatpush1.msra.mxu0 0.0
  %3377 = vmatprep.subr.mxu0 0.0
  %3378 = vmatpush1.msra.mxu0 0.0
  %3379 = vmatprep.subr.mxu0 0.0
  %3380 = vmatpush1.msra.mxu0 0.0
  %3381 = vmatprep.subr.mxu0 0.0
  %3382 = vmatpush1.msra.mxu0 0.0
  %3383 = vmatprep.subr.mxu0 0.0
  %3384 = vmatpush1.msra.mxu0 0.0
  %3385 = vmatprep.subr.mxu0 0.0
  %3386 = vmatpush1.msra.mxu0 0.0
  %3387 = vmatprep.subr.mxu0 0.0
  %3388 = vmatpush1.msra.mxu0 0.0
  %3389 = vmatprep.subr.mxu0 0.0
  %3390 = vmatpush1.msra.mxu0 0.0
  %3391 = vmatprep.subr.mxu0 0.0
  %3392 = vmatpush1.msra.mxu0 0.0
  %3393 = vmatprep.subr.mxu0 0.0
  %3394 = vmatpush1.msra.mxu0 0.0
  %3395 = vmatprep.subr.mxu0 0.0
  %3396 = vmatpush1.msra.mxu0 0.0
  %3397 = vmatprep.mubr.f32.mxu0 0.0
  %3398 = vmatmul.mubr.f32.gmra.mrb[0].mxu0 %v3286
  %v3399 = vpop.f32.mrb[0].mxu0
  %v3400 = vadd.f32 0.0, %v3399
  %v3401 = vpop.f32.mrb[0].mxu0
  %3402 = vmatprep.mubr.f32.mxu0 0.0
  %3403 = vmatmul.mubr.f32.gmra.mrb[0].mxu0 %v3289
  %v3404 = vpop.f32.mrb[0].mxu0
  %v3405 = vadd.f32 0.0, %v3404
  %v3406 = vpop.f32.mrb[0].mxu0
  %3407 = vmatprep.mubr.f32.mxu0 0.0
  %3408 = vmatmul.mubr.f32.gmra.mrb[0].mxu0 %v3292
  %v3409 = vpop.f32.mrb[0].mxu0
  %v3410 = vadd.f32 0.0, %v3409
  %v3411 = vpop.f32.mrb[0].mxu0
  %3412 = vmatprep.mubr.f32.mxu0 0.0
  %3413 = vmatmul.mubr.f32.gmra.mrb[0].mxu0 %v3295
  %v3414 = vpop.f32.mrb[0].mxu0
  %v3415 = vadd.f32 0.0, %v3414
  %v3416 = vpop.f32.mrb[0].mxu0
  %3417 = vmatprep.mubr.f32.mxu0 0.0
  %3418 = vmatmul.mubr.f32.gmra.mrb[0].mxu0 %v3298
  %v3419 = vpop.f32.mrb[0].mxu0
  %v3420 = vadd.f32 0.0, %v3419
  %v3421 = vpop.f32.mrb[0].mxu0
  %3422 = vmatprep.mubr.f32.mxu0 0.0
  %3423 = vmatmul.mubr.f32.gmra.mrb[0].mxu0 %v3301
  %v3424 = vpop.f32.mrb[0].mxu0
  %v3425 = vadd.f32 0.0, %v3424
  %v3426 = vpop.f32.mrb[0].mxu0
  %3427 = vmatprep.mubr.f32.mxu0 0.0
  %3428 = vmatmul.mubr.f32.gmra.mrb[0].mxu0 %v3304
  %v3429 = vpop.f32.mrb[0].mxu0
  %v3430 = vadd.f32 0.0, %v3429
  %v3431 = vpop.f32.mrb[0].mxu0
  %3432 = vmatprep.mubr.f32.mxu0 0.0
  %3433 = vmatmul.mubr.f32.gmra.mrb[0].mxu0 %v3307
  %v3434 = vpop.f32.mrb[0].mxu0
  %v3435 = vadd.f32 0.0, %v3434
  %v3436 = vpop.f32.mrb[0].mxu0
  %3437 = vmatprep.mubr.f32.mxu0 0.0
  %3438 = vmatmul.mubr.f32.gmra.mrb[0].mxu0 %v3310
  %v3439 = vpop.f32.mrb[0].mxu0
  %v3440 = vadd.f32 0.0, %v3439
  %v3441 = vpop.f32.mrb[0].mxu0
  %3442 = vmatprep.mubr.f32.mxu0 0.0
  %3443 = vmatmul.mubr.f32.gmra.mrb[0].mxu0 %v3313
  %v3444 = vpop.f32.mrb[0].mxu0
  %v3445 = vadd.f32 0.0, %v3444
  %v3446 = vpop.f32.mrb[0].mxu0
  %3447 = vmatprep.mubr.f32.mxu0 0.0
  %3448 = vmatmul.mubr.f32.gmra.mrb[0].mxu0 %v3316
  %v3449 = vpop.f32.mrb[0].mxu0
  %v3450 = vadd.f32 0.0, %v3449
  %v3451 = vpop.f32.mrb[0].mxu0
  %3452 = vmatprep.mubr.f32.mxu0 0.0
  %3453 = vmatmul.mubr.f32.gmra.mrb[0].mxu0 %v3319
  %v3454 = vpop.f32.mrb[0].mxu0
  %v3455 = vadd.f32 0.0, %v3454
  %v3456 = vpop.f32.mrb[0].mxu0
  %3457 = vmatprep.mubr.f32.mxu0 0.0
  %3458 = vmatmul.mubr.f32.gmra.mrb[0].mxu0 %v3322
  %v3459 = vpop.f32.mrb[0].mxu0
  %v3460 = vadd.f32 0.0, %v3459
  %v3461 = vpop.f32.mrb[0].mxu0
  %3462 = vmatprep.mubr.f32.mxu0 0.0
  %3463 = vmatmul.mubr.f32.gmra.mrb[0].mxu0 %v3325
  %v3464 = vpop.f32.mrb[0].mxu0
  %v3465 = vadd.f32 0.0, %v3464
  %v3466 = vpop.f32.mrb[0].mxu0
  %3467 = vmatprep.mubr.f32.mxu0 0.0
  %3468 = vmatmul.mubr.f32.gmra.mrb[0].mxu0 %v3328
  %v3469 = vpop.f32.mrb[0].mxu0
  %v3470 = vadd.f32 0.0, %v3469
  %v3471 = vpop.f32.mrb[0].mxu0
  %3472 = vmatprep.mubr.f32.mxu0 0.0
  %3473 = vmatmul.mubr.f32.gmra.mrb[0].mxu0 %v3331
  %v3474 = vpop.f32.mrb[0].mxu0
  %v3475 = vadd.f32 0.0, %v3474
  %v3476 = vpop.f32.mrb[0].mxu0
  %3477 = vdwg.mxu0
  %v3478 = vadd.f32 %v3249, %v3400
  %v3479 = vadd.f32 %v3250, %v3405
  %v3480 = vadd.f32 %v3251, %v3410
  %v3481 = vadd.f32 %v3252, %v3415
  %v3482 = vadd.f32 %v3253, %v3420
  %v3483 = vadd.f32 %v3254, %v3425
  %v3484 = vadd.f32 %v3255, %v3430
  %v3485 = vadd.f32 %v3256, %v3435
  %v3486 = vadd.f32 %v3257, %v3440
  %v3487 = vadd.f32 %v3258, %v3445
  %v3488 = vadd.f32 %v3259, %v3450
  %v3489 = vadd.f32 %v3260, %v3455
  %v3490 = vadd.f32 %v3261, %v3460
  %v3491 = vadd.f32 %v3262, %v3465
  %v3492 = vadd.f32 %v3263, %v3470
  %v3493 = vadd.f32 %v3264, %v3475
  %s3494 = scalar_lea.vmem [#allocation2], 32
  %v3495 = vld [vmem:[%s3494] sm:$0xff]
  %v3496 = vld [vmem:[%s3494 + $0x10] sm:$0xff]
  %v3497 = vld [vmem:[%s3494 + $0x20] sm:$0xff]
  %v3498 = vld [vmem:[%s3494 + $0x30] sm:$0xff]
  %v3499 = vld [vmem:[%s3494 + $0x40] sm:$0xff]
  %v3500 = vld [vmem:[%s3494 + $0x50] sm:$0xff]
  %v3501 = vld [vmem:[%s3494 + $0x60] sm:$0xff]
  %v3502 = vld [vmem:[%s3494 + $0x70] sm:$0xff]
  %v3503 = vld [vmem:[%s3494 + $0xa0] sm:$0xff]
  %v3504 = vld [vmem:[%s3494 + $0xb0] sm:$0xff]
  %v3505 = vld [vmem:[%s3494 + $0xc0] sm:$0xff]
  %v3506 = vld [vmem:[%s3494 + $0xd0] sm:$0xff]
  %v3507 = vld [vmem:[%s3494 + $0xe0] sm:$0xff]
  %v3508 = vld [vmem:[%s3494 + $0xf0] sm:$0xff]
  %v3509 = vld [vmem:[%s3494 + $0x100] sm:$0xff]
  %v3510 = vld [vmem:[%s3494 + $0x110] sm:$0xff]
  %v3511 = vld [vmem:[%s3 + $0xc0] sm:$0xff]
  %v3512 = vld [vmem:[%s3 + $0xc8] sm:$0xff]
  %v3513 = vld [vmem:[%s3 + $0xd0] sm:$0xff]
  %v3514 = vld [vmem:[%s3 + $0xd8] sm:$0xff]
  %v3516 = vsel %vm2093, %v3495, 0
  %v3519 = vsel %vm2093, %v3496, 0
  %v3522 = vsel %vm2093, %v3497, 0
  %v3525 = vsel %vm2093, %v3498, 0
  %v3528 = vsel %vm2093, %v3499, 0
  %v3531 = vsel %vm2093, %v3500, 0
  %v3534 = vsel %vm2093, %v3501, 0
  %v3537 = vsel %vm2093, %v3502, 0
  %v3540 = vsel %vm2093, %v3503, 0
  %v3543 = vsel %vm2093, %v3504, 0
  %v3546 = vsel %vm2093, %v3505, 0
  %v3549 = vsel %vm2093, %v3506, 0
  %v3552 = vsel %vm2093, %v3507, 0
  %v3555 = vsel %vm2093, %v3508, 0
  %v3558 = vsel %vm2093, %v3509, 0
  %v3561 = vsel %vm2093, %v3510, 0
  %3563 = vmatprep.subr.mxu0 0.0
  %3564 = vmatpush1.msra.mxu0 %v3511
  %3565 = vmatprep.subr.mxu0 0.0
  %3566 = vmatpush1.msra.mxu0 %v3512
  %3567 = vmatprep.subr.mxu0 0.0
  %3568 = vmatpush1.msra.mxu0 %v3513
  %3569 = vmatprep.subr.mxu0 0.0
  %3570 = vmatpush1.msra.mxu0 %v3514
  %3571 = vmatprep.subr.mxu0 0.0
  %3572 = vmatpush1.msra.mxu0 0.0
  %3573 = vmatprep.subr.mxu0 0.0
  %3574 = vmatpush1.msra.mxu0 0.0
  %3575 = vmatprep.subr.mxu0 0.0
  %3576 = vmatpush1.msra.mxu0 0.0
  %3577 = vmatprep.subr.mxu0 0.0
  %3578 = vmatpush1.msra.mxu0 0.0
  %3579 = vmatprep.subr.mxu0 0.0
  %3580 = vmatpush1.msra.mxu0 0.0
  %3581 = vmatprep.subr.mxu0 0.0
  %3582 = vmatpush1.msra.mxu0 0.0
  %3583 = vmatprep.subr.mxu0 0.0
  %3584 = vmatpush1.msra.mxu0 0.0
  %3585 = vmatprep.subr.mxu0 0.0
  %3586 = vmatpush1.msra.mxu0 0.0
  %3587 = vmatprep.subr.mxu0 0.0
  %3588 = vmatpush1.msra.mxu0 0.0
  %3589 = vmatprep.subr.mxu0 0.0
  %3590 = vmatpush1.msra.mxu0 0.0
  %3591 = vmatprep.subr.mxu0 0.0
  %3592 = vmatpush1.msra.mxu0 0.0
  %3593 = vmatprep.subr.mxu0 0.0
  %3594 = vmatpush1.msra.mxu0 0.0
  %3595 = vmatprep.subr.mxu0 0.0
  %3596 = vmatpush1.msra.mxu0 0.0
  %3597 = vmatprep.subr.mxu0 0.0
  %3598 = vmatpush1.msra.mxu0 0.0
  %3599 = vmatprep.subr.mxu0 0.0
  %3600 = vmatpush1.msra.mxu0 0.0
  %3601 = vmatprep.subr.mxu0 0.0
  %3602 = vmatpush1.msra.mxu0 0.0
  %3603 = vmatprep.subr.mxu0 0.0
  %3604 = vmatpush1.msra.mxu0 0.0
  %3605 = vmatprep.subr.mxu0 0.0
  %3606 = vmatpush1.msra.mxu0 0.0
  %3607 = vmatprep.subr.mxu0 0.0
  %3608 = vmatpush1.msra.mxu0 0.0
  %3609 = vmatprep.subr.mxu0 0.0
  %3610 = vmatpush1.msra.mxu0 0.0
  %3611 = vmatprep.subr.mxu0 0.0
  %3612 = vmatpush1.msra.mxu0 0.0
  %3613 = vmatprep.subr.mxu0 0.0
  %3614 = vmatpush1.msra.mxu0 0.0
  %3615 = vmatprep.subr.mxu0 0.0
  %3616 = vmatpush1.msra.mxu0 0.0
  %3617 = vmatprep.subr.mxu0 0.0
  %3618 = vmatpush1.msra.mxu0 0.0
  %3619 = vmatprep.subr.mxu0 0.0
  %3620 = vmatpush1.msra.mxu0 0.0
  %3621 = vmatprep.subr.mxu0 0.0
  %3622 = vmatpush1.msra.mxu0 0.0
  %3623 = vmatprep.subr.mxu0 0.0
  %3624 = vmatpush1.msra.mxu0 0.0
  %3625 = vmatprep.subr.mxu0 0.0
  %3626 = vmatpush1.msra.mxu0 0.0
  %3627 = vmatprep.mubr.f32.mxu0 0.0
  %3628 = vmatmul.mubr.f32.gmra.mrb[0].mxu0 %v3516
  %v3629 = vpop.f32.mrb[0].mxu0
  %v3630 = vadd.f32 0.0, %v3629
  %v3631 = vpop.f32.mrb[0].mxu0
  %3632 = vmatprep.mubr.f32.mxu0 0.0
  %3633 = vmatmul.mubr.f32.gmra.mrb[0].mxu0 %v3519
  %v3634 = vpop.f32.mrb[0].mxu0
  %v3635 = vadd.f32 0.0, %v3634
  %v3636 = vpop.f32.mrb[0].mxu0
  %3637 = vmatprep.mubr.f32.mxu0 0.0
  %3638 = vmatmul.mubr.f32.gmra.mrb[0].mxu0 %v3522
  %v3639 = vpop.f32.mrb[0].mxu0
  %v3640 = vadd.f32 0.0, %v3639
  %v3641 = vpop.f32.mrb[0].mxu0
  %3642 = vmatprep.mubr.f32.mxu0 0.0
  %3643 = vmatmul.mubr.f32.gmra.mrb[0].mxu0 %v3525
  %v3644 = vpop.f32.mrb[0].mxu0
  %v3645 = vadd.f32 0.0, %v3644
  %v3646 = vpop.f32.mrb[0].mxu0
  %3647 = vmatprep.mubr.f32.mxu0 0.0
  %3648 = vmatmul.mubr.f32.gmra.mrb[0].mxu0 %v3528
  %v3649 = vpop.f32.mrb[0].mxu0
  %v3650 = vadd.f32 0.0, %v3649
  %v3651 = vpop.f32.mrb[0].mxu0
  %3652 = vmatprep.mubr.f32.mxu0 0.0
  %3653 = vmatmul.mubr.f32.gmra.mrb[0].mxu0 %v3531
  %v3654 = vpop.f32.mrb[0].mxu0
  %v3655 = vadd.f32 0.0, %v3654
  %v3656 = vpop.f32.mrb[0].mxu0
  %3657 = vmatprep.mubr.f32.mxu0 0.0
  %3658 = vmatmul.mubr.f32.gmra.mrb[0].mxu0 %v3534
  %v3659 = vpop.f32.mrb[0].mxu0
  %v3660 = vadd.f32 0.0, %v3659
  %v3661 = vpop.f32.mrb[0].mxu0
  %3662 = vmatprep.mubr.f32.mxu0 0.0
  %3663 = vmatmul.mubr.f32.gmra.mrb[0].mxu0 %v3537
  %v3664 = vpop.f32.mrb[0].mxu0
  %v3665 = vadd.f32 0.0, %v3664
  %v3666 = vpop.f32.mrb[0].mxu0
  %3667 = vmatprep.mubr.f32.mxu0 0.0
  %3668 = vmatmul.mubr.f32.gmra.mrb[0].mxu0 %v3540
  %v3669 = vpop.f32.mrb[0].mxu0
  %v3670 = vadd.f32 0.0, %v3669
  %v3671 = vpop.f32.mrb[0].mxu0
  %3672 = vmatprep.mubr.f32.mxu0 0.0
  %3673 = vmatmul.mubr.f32.gmra.mrb[0].mxu0 %v3543
  %v3674 = vpop.f32.mrb[0].mxu0
  %v3675 = vadd.f32 0.0, %v3674
  %v3676 = vpop.f32.mrb[0].mxu0
  %3677 = vmatprep.mubr.f32.mxu0 0.0
  %3678 = vmatmul.mubr.f32.gmra.mrb[0].mxu0 %v3546
  %v3679 = vpop.f32.mrb[0].mxu0
  %v3680 = vadd.f32 0.0, %v3679
  %v3681 = vpop.f32.mrb[0].mxu0
  %3682 = vmatprep.mubr.f32.mxu0 0.0
  %3683 = vmatmul.mubr.f32.gmra.mrb[0].mxu0 %v3549
  %v3684 = vpop.f32.mrb[0].mxu0
  %v3685 = vadd.f32 0.0, %v3684
  %v3686 = vpop.f32.mrb[0].mxu0
  %3687 = vmatprep.mubr.f32.mxu0 0.0
  %3688 = vmatmul.mubr.f32.gmra.mrb[0].mxu0 %v3552
  %v3689 = vpop.f32.mrb[0].mxu0
  %v3690 = vadd.f32 0.0, %v3689
  %v3691 = vpop.f32.mrb[0].mxu0
  %3692 = vmatprep.mubr.f32.mxu0 0.0
  %3693 = vmatmul.mubr.f32.gmra.mrb[0].mxu0 %v3555
  %v3694 = vpop.f32.mrb[0].mxu0
  %v3695 = vadd.f32 0.0, %v3694
  %v3696 = vpop.f32.mrb[0].mxu0
  %3697 = vmatprep.mubr.f32.mxu0 0.0
  %3698 = vmatmul.mubr.f32.gmra.mrb[0].mxu0 %v3558
  %v3699 = vpop.f32.mrb[0].mxu0
  %v3700 = vadd.f32 0.0, %v3699
  %v3701 = vpop.f32.mrb[0].mxu0
  %3702 = vmatprep.mubr.f32.mxu0 0.0
  %3703 = vmatmul.mubr.f32.gmra.mrb[0].mxu0 %v3561
  %v3704 = vpop.f32.mrb[0].mxu0
  %v3705 = vadd.f32 0.0, %v3704
  %v3706 = vpop.f32.mrb[0].mxu0
  %3707 = vdwg.mxu0
  %v3708 = vadd.f32 %v3478, %v3630
  %v3709 = vadd.f32 %v3479, %v3635
  %v3710 = vadd.f32 %v3480, %v3640
  %v3711 = vadd.f32 %v3481, %v3645
  %v3712 = vadd.f32 %v3482, %v3650
  %v3713 = vadd.f32 %v3483, %v3655
  %v3714 = vadd.f32 %v3484, %v3660
  %v3715 = vadd.f32 %v3485, %v3665
  %v3716 = vadd.f32 %v3486, %v3670
  %v3717 = vadd.f32 %v3487, %v3675
  %v3718 = vadd.f32 %v3488, %v3680
  %v3719 = vadd.f32 %v3489, %v3685
  %v3720 = vadd.f32 %v3490, %v3690
  %v3721 = vadd.f32 %v3491, %v3695
  %v3722 = vadd.f32 %v3492, %v3700
  %v3723 = vadd.f32 %v3493, %v3705
  %v3724 = vld [vmem:[%s3494 + $0x1] sm:$0xff]
  %v3725 = vld [vmem:[%s3494 + $0x11] sm:$0xff]
  %v3726 = vld [vmem:[%s3494 + $0x21] sm:$0xff]
  %v3727 = vld [vmem:[%s3494 + $0x31] sm:$0xff]
  %v3728 = vld [vmem:[%s3494 + $0x41] sm:$0xff]
  %v3729 = vld [vmem:[%s3494 + $0x51] sm:$0xff]
  %v3730 = vld [vmem:[%s3494 + $0x61] sm:$0xff]
  %v3731 = vld [vmem:[%s3494 + $0x71] sm:$0xff]
  %v3732 = vld [vmem:[%s3494 + $0xa1] sm:$0xff]
  %v3733 = vld [vmem:[%s3494 + $0xb1] sm:$0xff]
  %v3734 = vld [vmem:[%s3494 + $0xc1] sm:$0xff]
  %v3735 = vld [vmem:[%s3494 + $0xd1] sm:$0xff]
  %v3736 = vld [vmem:[%s3494 + $0xe1] sm:$0xff]
  %v3737 = vld [vmem:[%s3494 + $0xf1] sm:$0xff]
  %v3738 = vld [vmem:[%s3494 + $0x101] sm:$0xff]
  %v3739 = vld [vmem:[%s3494 + $0x111] sm:$0xff]
  %v3740 = vld [vmem:[%s3 + $0xe0] sm:$0xff]
  %v3741 = vld [vmem:[%s3 + $0xe8] sm:$0xff]
  %v3742 = vld [vmem:[%s3 + $0xf0] sm:$0xff]
  %v3743 = vld [vmem:[%s3 + $0xf8] sm:$0xff]
  %v3745 = vsel %vm2093, %v3724, 0
  %v3748 = vsel %vm2093, %v3725, 0
  %v3751 = vsel %vm2093, %v3726, 0
  %v3754 = vsel %vm2093, %v3727, 0
  %v3757 = vsel %vm2093, %v3728, 0
  %v3760 = vsel %vm2093, %v3729, 0
  %v3763 = vsel %vm2093, %v3730, 0
  %v3766 = vsel %vm2093, %v3731, 0
  %v3769 = vsel %vm2093, %v3732, 0
  %v3772 = vsel %vm2093, %v3733, 0
  %v3775 = vsel %vm2093, %v3734, 0
  %v3778 = vsel %vm2093, %v3735, 0
  %v3781 = vsel %vm2093, %v3736, 0
  %v3784 = vsel %vm2093, %v3737, 0
  %v3787 = vsel %vm2093, %v3738, 0
  %v3790 = vsel %vm2093, %v3739, 0
  %3792 = vmatprep.subr.mxu0 0.0
  %3793 = vmatpush1.msra.mxu0 %v3740
  %3794 = vmatprep.subr.mxu0 0.0
  %3795 = vmatpush1.msra.mxu0 %v3741
  %3796 = vmatprep.subr.mxu0 0.0
  %3797 = vmatpush1.msra.mxu0 %v3742
  %3798 = vmatprep.subr.mxu0 0.0
  %3799 = vmatpush1.msra.mxu0 %v3743
  %3800 = vmatprep.subr.mxu0 0.0
  %3801 = vmatpush1.msra.mxu0 0.0
  %3802 = vmatprep.subr.mxu0 0.0
  %3803 = vmatpush1.msra.mxu0 0.0
  %3804 = vmatprep.subr.mxu0 0.0
  %3805 = vmatpush1.msra.mxu0 0.0
  %3806 = vmatprep.subr.mxu0 0.0
  %3807 = vmatpush1.msra.mxu0 0.0
  %3808 = vmatprep.subr.mxu0 0.0
  %3809 = vmatpush1.msra.mxu0 0.0
  %3810 = vmatprep.subr.mxu0 0.0
  %3811 = vmatpush1.msra.mxu0 0.0
  %3812 = vmatprep.subr.mxu0 0.0
  %3813 = vmatpush1.msra.mxu0 0.0
  %3814 = vmatprep.subr.mxu0 0.0
  %3815 = vmatpush1.msra.mxu0 0.0
  %3816 = vmatprep.subr.mxu0 0.0
  %3817 = vmatpush1.msra.mxu0 0.0
  %3818 = vmatprep.subr.mxu0 0.0
  %3819 = vmatpush1.msra.mxu0 0.0
  %3820 = vmatprep.subr.mxu0 0.0
  %3821 = vmatpush1.msra.mxu0 0.0
  %3822 = vmatprep.subr.mxu0 0.0
  %3823 = vmatpush1.msra.mxu0 0.0
  %3824 = vmatprep.subr.mxu0 0.0
  %3825 = vmatpush1.msra.mxu0 0.0
  %3826 = vmatprep.subr.mxu0 0.0
  %3827 = vmatpush1.msra.mxu0 0.0
  %3828 = vmatprep.subr.mxu0 0.0
  %3829 = vmatpush1.msra.mxu0 0.0
  %3830 = vmatprep.subr.mxu0 0.0
  %3831 = vmatpush1.msra.mxu0 0.0
  %3832 = vmatprep.subr.mxu0 0.0
  %3833 = vmatpush1.msra.mxu0 0.0
  %3834 = vmatprep.subr.mxu0 0.0
  %3835 = vmatpush1.msra.mxu0 0.0
  %3836 = vmatprep.subr.mxu0 0.0
  %3837 = vmatpush1.msra.mxu0 0.0
  %3838 = vmatprep.subr.mxu0 0.0
  %3839 = vmatpush1.msra.mxu0 0.0
  %3840 = vmatprep.subr.mxu0 0.0
  %3841 = vmatpush1.msra.mxu0 0.0
  %3842 = vmatprep.subr.mxu0 0.0
  %3843 = vmatpush1.msra.mxu0 0.0
  %3844 = vmatprep.subr.mxu0 0.0
  %3845 = vmatpush1.msra.mxu0 0.0
  %3846 = vmatprep.subr.mxu0 0.0
  %3847 = vmatpush1.msra.mxu0 0.0
  %3848 = vmatprep.subr.mxu0 0.0
  %3849 = vmatpush1.msra.mxu0 0.0
  %3850 = vmatprep.subr.mxu0 0.0
  %3851 = vmatpush1.msra.mxu0 0.0
  %3852 = vmatprep.subr.mxu0 0.0
  %3853 = vmatpush1.msra.mxu0 0.0
  %3854 = vmatprep.subr.mxu0 0.0
  %3855 = vmatpush1.msra.mxu0 0.0
  %3856 = vmatprep.mubr.f32.mxu0 0.0
  %3857 = vmatmul.mubr.f32.gmra.mrb[0].mxu0 %v3745
  %v3858 = vpop.f32.mrb[0].mxu0
  %v3859 = vadd.f32 0.0, %v3858
  %v3860 = vpop.f32.mrb[0].mxu0
  %3861 = vmatprep.mubr.f32.mxu0 0.0
  %3862 = vmatmul.mubr.f32.gmra.mrb[0].mxu0 %v3748
  %v3863 = vpop.f32.mrb[0].mxu0
  %v3864 = vadd.f32 0.0, %v3863
  %v3865 = vpop.f32.mrb[0].mxu0
  %3866 = vmatprep.mubr.f32.mxu0 0.0
  %3867 = vmatmul.mubr.f32.gmra.mrb[0].mxu0 %v3751
  %v3868 = vpop.f32.mrb[0].mxu0
  %v3869 = vadd.f32 0.0, %v3868
  %v3870 = vpop.f32.mrb[0].mxu0
  %3871 = vmatprep.mubr.f32.mxu0 0.0
  %3872 = vmatmul.mubr.f32.gmra.mrb[0].mxu0 %v3754
  %v3873 = vpop.f32.mrb[0].mxu0
  %v3874 = vadd.f32 0.0, %v3873
  %v3875 = vpop.f32.mrb[0].mxu0
  %3876 = vmatprep.mubr.f32.mxu0 0.0
  %3877 = vmatmul.mubr.f32.gmra.mrb[0].mxu0 %v3757
  %v3878 = vpop.f32.mrb[0].mxu0
  %v3879 = vadd.f32 0.0, %v3878
  %v3880 = vpop.f32.mrb[0].mxu0
  %3881 = vmatprep.mubr.f32.mxu0 0.0
  %3882 = vmatmul.mubr.f32.gmra.mrb[0].mxu0 %v3760
  %v3883 = vpop.f32.mrb[0].mxu0
  %v3884 = vadd.f32 0.0, %v3883
  %v3885 = vpop.f32.mrb[0].mxu0
  %3886 = vmatprep.mubr.f32.mxu0 0.0
  %3887 = vmatmul.mubr.f32.gmra.mrb[0].mxu0 %v3763
  %v3888 = vpop.f32.mrb[0].mxu0
  %v3889 = vadd.f32 0.0, %v3888
  %v3890 = vpop.f32.mrb[0].mxu0
  %3891 = vmatprep.mubr.f32.mxu0 0.0
  %3892 = vmatmul.mubr.f32.gmra.mrb[0].mxu0 %v3766
  %v3893 = vpop.f32.mrb[0].mxu0
  %v3894 = vadd.f32 0.0, %v3893
  %v3895 = vpop.f32.mrb[0].mxu0
  %3896 = vmatprep.mubr.f32.mxu0 0.0
  %3897 = vmatmul.mubr.f32.gmra.mrb[0].mxu0 %v3769
  %v3898 = vpop.f32.mrb[0].mxu0
  %v3899 = vadd.f32 0.0, %v3898
  %v3900 = vpop.f32.mrb[0].mxu0
  %3901 = vmatprep.mubr.f32.mxu0 0.0
  %3902 = vmatmul.mubr.f32.gmra.mrb[0].mxu0 %v3772
  %v3903 = vpop.f32.mrb[0].mxu0
  %v3904 = vadd.f32 0.0, %v3903
  %v3905 = vpop.f32.mrb[0].mxu0
  %3906 = vmatprep.mubr.f32.mxu0 0.0
  %3907 = vmatmul.mubr.f32.gmra.mrb[0].mxu0 %v3775
  %v3908 = vpop.f32.mrb[0].mxu0
  %v3909 = vadd.f32 0.0, %v3908
  %v3910 = vpop.f32.mrb[0].mxu0
  %3911 = vmatprep.mubr.f32.mxu0 0.0
  %3912 = vmatmul.mubr.f32.gmra.mrb[0].mxu0 %v3778
  %v3913 = vpop.f32.mrb[0].mxu0
  %v3914 = vadd.f32 0.0, %v3913
  %v3915 = vpop.f32.mrb[0].mxu0
  %3916 = vmatprep.mubr.f32.mxu0 0.0
  %3917 = vmatmul.mubr.f32.gmra.mrb[0].mxu0 %v3781
  %v3918 = vpop.f32.mrb[0].mxu0
  %v3919 = vadd.f32 0.0, %v3918
  %v3920 = vpop.f32.mrb[0].mxu0
  %3921 = vmatprep.mubr.f32.mxu0 0.0
  %3922 = vmatmul.mubr.f32.gmra.mrb[0].mxu0 %v3784
  %v3923 = vpop.f32.mrb[0].mxu0
  %v3924 = vadd.f32 0.0, %v3923
  %v3925 = vpop.f32.mrb[0].mxu0
  %3926 = vmatprep.mubr.f32.mxu0 0.0
  %3927 = vmatmul.mubr.f32.gmra.mrb[0].mxu0 %v3787
  %v3928 = vpop.f32.mrb[0].mxu0
  %v3929 = vadd.f32 0.0, %v3928
  %v3930 = vpop.f32.mrb[0].mxu0
  %3931 = vmatprep.mubr.f32.mxu0 0.0
  %3932 = vmatmul.mubr.f32.gmra.mrb[0].mxu0 %v3790
  %v3933 = vpop.f32.mrb[0].mxu0
  %v3934 = vadd.f32 0.0, %v3933
  %v3935 = vpop.f32.mrb[0].mxu0
  %3936 = vdwg.mxu0
  %v3937 = vadd.f32 %v3708, %v3859
  %v3938 = vadd.f32 %v3709, %v3864
  %v3939 = vadd.f32 %v3710, %v3869
  %v3940 = vadd.f32 %v3711, %v3874
  %v3941 = vadd.f32 %v3712, %v3879
  %v3942 = vadd.f32 %v3713, %v3884
  %v3943 = vadd.f32 %v3714, %v3889
  %v3944 = vadd.f32 %v3715, %v3894
  %v3945 = vadd.f32 %v3716, %v3899
  %v3946 = vadd.f32 %v3717, %v3904
  %v3947 = vadd.f32 %v3718, %v3909
  %v3948 = vadd.f32 %v3719, %v3914
  %v3949 = vadd.f32 %v3720, %v3919
  %v3950 = vadd.f32 %v3721, %v3924
  %v3951 = vadd.f32 %v3722, %v3929
  %v3952 = vadd.f32 %v3723, %v3934
  %v3953 = vld [vmem:[%s3494 + $0x2] sm:$0xff]
  %v3954 = vld [vmem:[%s3494 + $0x12] sm:$0xff]
  %v3955 = vld [vmem:[%s3494 + $0x22] sm:$0xff]
  %v3956 = vld [vmem:[%s3494 + $0x32] sm:$0xff]
  %v3957 = vld [vmem:[%s3494 + $0x42] sm:$0xff]
  %v3958 = vld [vmem:[%s3494 + $0x52] sm:$0xff]
  %v3959 = vld [vmem:[%s3494 + $0x62] sm:$0xff]
  %v3960 = vld [vmem:[%s3494 + $0x72] sm:$0xff]
  %v3961 = vld [vmem:[%s3494 + $0xa2] sm:$0xff]
  %v3962 = vld [vmem:[%s3494 + $0xb2] sm:$0xff]
  %v3963 = vld [vmem:[%s3494 + $0xc2] sm:$0xff]
  %v3964 = vld [vmem:[%s3494 + $0xd2] sm:$0xff]
  %v3965 = vld [vmem:[%s3494 + $0xe2] sm:$0xff]
  %v3966 = vld [vmem:[%s3494 + $0xf2] sm:$0xff]
  %v3967 = vld [vmem:[%s3494 + $0x102] sm:$0xff]
  %v3968 = vld [vmem:[%s3494 + $0x112] sm:$0xff]
  %v3969 = vld [vmem:[%s3 + $0x100] sm:$0xff]
  %v3970 = vld [vmem:[%s3 + $0x108] sm:$0xff]
  %v3971 = vld [vmem:[%s3 + $0x110] sm:$0xff]
  %v3972 = vld [vmem:[%s3 + $0x118] sm:$0xff]
  %v3974 = vsel %vm2093, %v3953, 0
  %v3977 = vsel %vm2093, %v3954, 0
  %v3980 = vsel %vm2093, %v3955, 0
  %v3983 = vsel %vm2093, %v3956, 0
  %v3986 = vsel %vm2093, %v3957, 0
  %v3989 = vsel %vm2093, %v3958, 0
  %v3992 = vsel %vm2093, %v3959, 0
  %v3995 = vsel %vm2093, %v3960, 0
  %v3998 = vsel %vm2093, %v3961, 0
  %v4001 = vsel %vm2093, %v3962, 0
  %v4004 = vsel %vm2093, %v3963, 0
  %v4007 = vsel %vm2093, %v3964, 0
  %v4010 = vsel %vm2093, %v3965, 0
  %v4013 = vsel %vm2093, %v3966, 0
  %v4016 = vsel %vm2093, %v3967, 0
  %v4019 = vsel %vm2093, %v3968, 0
  %4021 = vmatprep.subr.mxu0 0.0
  %4022 = vmatpush1.msra.mxu0 %v3969
  %4023 = vmatprep.subr.mxu0 0.0
  %4024 = vmatpush1.msra.mxu0 %v3970
  %4025 = vmatprep.subr.mxu0 0.0
  %4026 = vmatpush1.msra.mxu0 %v3971
  %4027 = vmatprep.subr.mxu0 0.0
  %4028 = vmatpush1.msra.mxu0 %v3972
  %4029 = vmatprep.subr.mxu0 0.0
  %4030 = vmatpush1.msra.mxu0 0.0
  %4031 = vmatprep.subr.mxu0 0.0
  %4032 = vmatpush1.msra.mxu0 0.0
  %4033 = vmatprep.subr.mxu0 0.0
  %4034 = vmatpush1.msra.mxu0 0.0
  %4035 = vmatprep.subr.mxu0 0.0
  %4036 = vmatpush1.msra.mxu0 0.0
  %4037 = vmatprep.subr.mxu0 0.0
  %4038 = vmatpush1.msra.mxu0 0.0
  %4039 = vmatprep.subr.mxu0 0.0
  %4040 = vmatpush1.msra.mxu0 0.0
  %4041 = vmatprep.subr.mxu0 0.0
  %4042 = vmatpush1.msra.mxu0 0.0
  %4043 = vmatprep.subr.mxu0 0.0
  %4044 = vmatpush1.msra.mxu0 0.0
  %4045 = vmatprep.subr.mxu0 0.0
  %4046 = vmatpush1.msra.mxu0 0.0
  %4047 = vmatprep.subr.mxu0 0.0
  %4048 = vmatpush1.msra.mxu0 0.0
  %4049 = vmatprep.subr.mxu0 0.0
  %4050 = vmatpush1.msra.mxu0 0.0
  %4051 = vmatprep.subr.mxu0 0.0
  %4052 = vmatpush1.msra.mxu0 0.0
  %4053 = vmatprep.subr.mxu0 0.0
  %4054 = vmatpush1.msra.mxu0 0.0
  %4055 = vmatprep.subr.mxu0 0.0
  %4056 = vmatpush1.msra.mxu0 0.0
  %4057 = vmatprep.subr.mxu0 0.0
  %4058 = vmatpush1.msra.mxu0 0.0
  %4059 = vmatprep.subr.mxu0 0.0
  %4060 = vmatpush1.msra.mxu0 0.0
  %4061 = vmatprep.subr.mxu0 0.0
  %4062 = vmatpush1.msra.mxu0 0.0
  %4063 = vmatprep.subr.mxu0 0.0
  %4064 = vmatpush1.msra.mxu0 0.0
  %4065 = vmatprep.subr.mxu0 0.0
  %4066 = vmatpush1.msra.mxu0 0.0
  %4067 = vmatprep.subr.mxu0 0.0
  %4068 = vmatpush1.msra.mxu0 0.0
  %4069 = vmatprep.subr.mxu0 0.0
  %4070 = vmatpush1.msra.mxu0 0.0
  %4071 = vmatprep.subr.mxu0 0.0
  %4072 = vmatpush1.msra.mxu0 0.0
  %4073 = vmatprep.subr.mxu0 0.0
  %4074 = vmatpush1.msra.mxu0 0.0
  %4075 = vmatprep.subr.mxu0 0.0
  %4076 = vmatpush1.msra.mxu0 0.0
  %4077 = vmatprep.subr.mxu0 0.0
  %4078 = vmatpush1.msra.mxu0 0.0
  %4079 = vmatprep.subr.mxu0 0.0
  %4080 = vmatpush1.msra.mxu0 0.0
  %4081 = vmatprep.subr.mxu0 0.0
  %4082 = vmatpush1.msra.mxu0 0.0
  %4083 = vmatprep.subr.mxu0 0.0
  %4084 = vmatpush1.msra.mxu0 0.0
  %4085 = vmatprep.mubr.f32.mxu0 0.0
  %4086 = vmatmul.mubr.f32.gmra.mrb[0].mxu0 %v3974
  %v4087 = vpop.f32.mrb[0].mxu0
  %v4088 = vadd.f32 0.0, %v4087
  %v4089 = vpop.f32.mrb[0].mxu0
  %4090 = vmatprep.mubr.f32.mxu0 0.0
  %4091 = vmatmul.mubr.f32.gmra.mrb[0].mxu0 %v3977
  %v4092 = vpop.f32.mrb[0].mxu0
  %v4093 = vadd.f32 0.0, %v4092
  %v4094 = vpop.f32.mrb[0].mxu0
  %4095 = vmatprep.mubr.f32.mxu0 0.0
  %4096 = vmatmul.mubr.f32.gmra.mrb[0].mxu0 %v3980
  %v4097 = vpop.f32.mrb[0].mxu0
  %v4098 = vadd.f32 0.0, %v4097
  %v4099 = vpop.f32.mrb[0].mxu0
  %4100 = vmatprep.mubr.f32.mxu0 0.0
  %4101 = vmatmul.mubr.f32.gmra.mrb[0].mxu0 %v3983
  %v4102 = vpop.f32.mrb[0].mxu0
  %v4103 = vadd.f32 0.0, %v4102
  %v4104 = vpop.f32.mrb[0].mxu0
  %4105 = vmatprep.mubr.f32.mxu0 0.0
  %4106 = vmatmul.mubr.f32.gmra.mrb[0].mxu0 %v3986
  %v4107 = vpop.f32.mrb[0].mxu0
  %v4108 = vadd.f32 0.0, %v4107
  %v4109 = vpop.f32.mrb[0].mxu0
  %4110 = vmatprep.mubr.f32.mxu0 0.0
  %4111 = vmatmul.mubr.f32.gmra.mrb[0].mxu0 %v3989
  %v4112 = vpop.f32.mrb[0].mxu0
  %v4113 = vadd.f32 0.0, %v4112
  %v4114 = vpop.f32.mrb[0].mxu0
  %4115 = vmatprep.mubr.f32.mxu0 0.0
  %4116 = vmatmul.mubr.f32.gmra.mrb[0].mxu0 %v3992
  %v4117 = vpop.f32.mrb[0].mxu0
  %v4118 = vadd.f32 0.0, %v4117
  %v4119 = vpop.f32.mrb[0].mxu0
  %4120 = vmatprep.mubr.f32.mxu0 0.0
  %4121 = vmatmul.mubr.f32.gmra.mrb[0].mxu0 %v3995
  %v4122 = vpop.f32.mrb[0].mxu0
  %v4123 = vadd.f32 0.0, %v4122
  %v4124 = vpop.f32.mrb[0].mxu0
  %4125 = vmatprep.mubr.f32.mxu0 0.0
  %4126 = vmatmul.mubr.f32.gmra.mrb[0].mxu0 %v3998
  %v4127 = vpop.f32.mrb[0].mxu0
  %v4128 = vadd.f32 0.0, %v4127
  %v4129 = vpop.f32.mrb[0].mxu0
  %4130 = vmatprep.mubr.f32.mxu0 0.0
  %4131 = vmatmul.mubr.f32.gmra.mrb[0].mxu0 %v4001
  %v4132 = vpop.f32.mrb[0].mxu0
  %v4133 = vadd.f32 0.0, %v4132
  %v4134 = vpop.f32.mrb[0].mxu0
  %4135 = vmatprep.mubr.f32.mxu0 0.0
  %4136 = vmatmul.mubr.f32.gmra.mrb[0].mxu0 %v4004
  %v4137 = vpop.f32.mrb[0].mxu0
  %v4138 = vadd.f32 0.0, %v4137
  %v4139 = vpop.f32.mrb[0].mxu0
  %4140 = vmatprep.mubr.f32.mxu0 0.0
  %4141 = vmatmul.mubr.f32.gmra.mrb[0].mxu0 %v4007
  %v4142 = vpop.f32.mrb[0].mxu0
  %v4143 = vadd.f32 0.0, %v4142
  %v4144 = vpop.f32.mrb[0].mxu0
  %4145 = vmatprep.mubr.f32.mxu0 0.0
  %4146 = vmatmul.mubr.f32.gmra.mrb[0].mxu0 %v4010
  %v4147 = vpop.f32.mrb[0].mxu0
  %v4148 = vadd.f32 0.0, %v4147
  %v4149 = vpop.f32.mrb[0].mxu0
  %4150 = vmatprep.mubr.f32.mxu0 0.0
  %4151 = vmatmul.mubr.f32.gmra.mrb[0].mxu0 %v4013
  %v4152 = vpop.f32.mrb[0].mxu0
  %v4153 = vadd.f32 0.0, %v4152
  %v4154 = vpop.f32.mrb[0].mxu0
  %4155 = vmatprep.mubr.f32.mxu0 0.0
  %4156 = vmatmul.mubr.f32.gmra.mrb[0].mxu0 %v4016
  %v4157 = vpop.f32.mrb[0].mxu0
  %v4158 = vadd.f32 0.0, %v4157
  %v4159 = vpop.f32.mrb[0].mxu0
  %4160 = vmatprep.mubr.f32.mxu0 0.0
  %4161 = vmatmul.mubr.f32.gmra.mrb[0].mxu0 %v4019
  %v4162 = vpop.f32.mrb[0].mxu0
  %v4163 = vadd.f32 0.0, %v4162
  %v4164 = vpop.f32.mrb[0].mxu0
  %4165 = vdwg.mxu0
  %v4166 = vadd.f32 %v3937, %v4088
  %v4167 = vadd.f32 %v3938, %v4093
  %v4168 = vadd.f32 %v3939, %v4098
  %v4169 = vadd.f32 %v3940, %v4103
  %v4170 = vadd.f32 %v3941, %v4108
  %v4171 = vadd.f32 %v3942, %v4113
  %v4172 = vadd.f32 %v3943, %v4118
  %v4173 = vadd.f32 %v3944, %v4123
  %v4174 = vadd.f32 %v3945, %v4128
  %v4175 = vadd.f32 %v3946, %v4133
  %v4176 = vadd.f32 %v3947, %v4138
  %v4177 = vadd.f32 %v3948, %v4143
  %v4178 = vadd.f32 %v3949, %v4148
  %v4179 = vadd.f32 %v3950, %v4153
  %v4180 = vadd.f32 %v3951, %v4158
  %v4181 = vadd.f32 %v3952, %v4163
  %v4182 = vld [vmem:[%s4] sm:$0x1]
  %v4184 = vlaneseq
  %v4185 = vshrl.u32 %v4184, 7
  %v4186 = vsub.s32 0, %v4185
  %v4187 = vrot.slane %v4182, %v4186
  %v4189 = vadd.f32 %v4166, %v4187
  %v4190 = vadd.f32 %v4167, %v4187
  %v4191 = vadd.f32 %v4168, %v4187
  %v4192 = vadd.f32 %v4169, %v4187
  %v4193 = vadd.f32 %v4170, %v4187
  %v4194 = vadd.f32 %v4171, %v4187
  %v4195 = vadd.f32 %v4172, %v4187
  %v4196 = vadd.f32 %v4173, %v4187
  %v4197 = vadd.f32 %v4174, %v4187
  %v4198 = vadd.f32 %v4175, %v4187
  %v4199 = vadd.f32 %v4176, %v4187
  %v4200 = vadd.f32 %v4177, %v4187
  %v4201 = vadd.f32 %v4178, %v4187
  %v4202 = vadd.f32 %v4179, %v4187
  %v4203 = vadd.f32 %v4180, %v4187
  %v4204 = vadd.f32 %v4181, %v4187
  %v4205 = vmax.f32 %v4189, 0.0
  %v4206 = vmax.f32 %v4190, 0.0
  %v4207 = vmax.f32 %v4191, 0.0
  %v4208 = vmax.f32 %v4192, 0.0
  %v4209 = vmax.f32 %v4193, 0.0
  %v4210 = vmax.f32 %v4194, 0.0
  %v4211 = vmax.f32 %v4195, 0.0
  %v4212 = vmax.f32 %v4196, 0.0
  %v4213 = vmax.f32 %v4197, 0.0
  %v4214 = vmax.f32 %v4198, 0.0
  %v4215 = vmax.f32 %v4199, 0.0
  %v4216 = vmax.f32 %v4200, 0.0
  %v4217 = vmax.f32 %v4201, 0.0
  %v4218 = vmax.f32 %v4202, 0.0
  %v4219 = vmax.f32 %v4203, 0.0
  %v4220 = vmax.f32 %v4204, 0.0
  %vm4221 = vcmask 523264
  %4222 = vst.msk [vmem:[#allocation3] sm:$0xff] %vm4221, 0.0
  %vm4223 = vcmask 517120
  %4224 = vst.msk [vmem:[#allocation3 + $0x8] sm:$0x3] %vm4223, 0.0
  %4225 = vst.msk [vmem:[#allocation3 + $0x10] sm:$0xff] %vm4221, 0.0
  %4226 = vst.msk [vmem:[#allocation3 + $0x18] sm:$0x3] %vm4223, 0.0
  %4227 = vst.msk [vmem:[#allocation3 + $0x20] sm:$0xff] %vm4221, 0.0
  %4228 = vst.msk [vmem:[#allocation3 + $0x28] sm:$0x3] %vm4223, 0.0
  %4229 = vst.msk [vmem:[#allocation3 + $0x30] sm:$0xff] %vm4221, 0.0
  %4230 = vst.msk [vmem:[#allocation3 + $0x38] sm:$0x3] %vm4223, 0.0
  %4231 = vst.msk [vmem:[#allocation3 + $0x40] sm:$0xff] %vm4221, 0.0
  %4232 = vst.msk [vmem:[#allocation3 + $0x48] sm:$0x3] %vm4223, 0.0
  %4233 = vst.msk [vmem:[#allocation3 + $0x50] sm:$0xff] %vm4221, 0.0
  %4234 = vst.msk [vmem:[#allocation3 + $0x58] sm:$0x3] %vm4223, 0.0
  %4235 = vst.msk [vmem:[#allocation3 + $0x60] sm:$0xff] %vm4221, 0.0
  %4236 = vst.msk [vmem:[#allocation3 + $0x68] sm:$0x3] %vm4223, 0.0
  %4237 = vst.msk [vmem:[#allocation3 + $0x70] sm:$0xff] %vm4221, 0.0
  %4238 = vst.msk [vmem:[#allocation3 + $0x78] sm:$0x3] %vm4223, 0.0
  %4239 = vst.msk [vmem:[#allocation3 + $0x80] sm:$0xff] %vm4221, 0.0
  %4240 = vst.msk [vmem:[#allocation3 + $0x88] sm:$0x3] %vm4223, 0.0
  %4241 = vst.msk [vmem:[#allocation3 + $0x90] sm:$0xff] %vm4221, 0.0
  %4242 = vst.msk [vmem:[#allocation3 + $0x98] sm:$0x3] %vm4223, 0.0
  %4243 = vst.msk [vmem:[#allocation3 + $0xa0] sm:$0xff] %vm4221, 0.0
  %4244 = vst.msk [vmem:[#allocation3 + $0xa8] sm:$0x3] %vm4223, 0.0
  %4245 = vst.msk [vmem:[#allocation3 + $0xb0] sm:$0xff] %vm4221, 0.0
  %4246 = vst.msk [vmem:[#allocation3 + $0xb8] sm:$0x3] %vm4223, 0.0
  %4247 = vst.msk [vmem:[#allocation3 + $0xc0] sm:$0xff] %vm4221, 0.0
  %4248 = vst.msk [vmem:[#allocation3 + $0xc8] sm:$0x3] %vm4223, 0.0
  %4249 = vst.msk [vmem:[#allocation3 + $0xd0] sm:$0xff] %vm4221, 0.0
  %4250 = vst.msk [vmem:[#allocation3 + $0xd8] sm:$0x3] %vm4223, 0.0
  %4251 = vst.msk [vmem:[#allocation3 + $0xe0] sm:$0xff] %vm4221, 0.0
  %4252 = vst.msk [vmem:[#allocation3 + $0xe8] sm:$0x3] %vm4223, 0.0
  %4253 = vst.msk [vmem:[#allocation3 + $0xf0] sm:$0xff] %vm4221, 0.0
  %4254 = vst.msk [vmem:[#allocation3 + $0xf8] sm:$0x3] %vm4223, 0.0
  %4255 = vst.msk [vmem:[#allocation3 + $0x100] sm:$0xff] %vm4221, 0.0
  %4256 = vst.msk [vmem:[#allocation3 + $0x108] sm:$0x3] %vm4223, 0.0
  %4257 = vst.msk [vmem:[#allocation3 + $0x110] sm:$0xff] %vm4221, 0.0
  %4258 = vst.msk [vmem:[#allocation3 + $0x118] sm:$0x3] %vm4223, 0.0
  %4259 = vst.msk [vmem:[#allocation3 + $0x120] sm:$0xff] %vm4221, 0.0
  %4260 = vst.msk [vmem:[#allocation3 + $0x128] sm:$0x3] %vm4223, 0.0
  %4261 = vst.msk [vmem:[#allocation3 + $0x130] sm:$0xff] %vm4221, 0.0
  %4262 = vst.msk [vmem:[#allocation3 + $0x138] sm:$0x3] %vm4223, 0.0
  %s4263 = scalar_lea.vmem [#allocation3], 16
  %4264 = vst.msk [vmem:[%s4263 + $0x1] sm:$0xff] %vm4221, %v4205
  %4265 = vst.msk [vmem:[%s4263 + $0x11] sm:$0xff] %vm4221, %v4206
  %4266 = vst.msk [vmem:[%s4263 + $0x21] sm:$0xff] %vm4221, %v4207
  %4267 = vst.msk [vmem:[%s4263 + $0x31] sm:$0xff] %vm4221, %v4208
  %4268 = vst.msk [vmem:[%s4263 + $0x41] sm:$0xff] %vm4221, %v4209
  %4269 = vst.msk [vmem:[%s4263 + $0x51] sm:$0xff] %vm4221, %v4210
  %4270 = vst.msk [vmem:[%s4263 + $0x61] sm:$0xff] %vm4221, %v4211
  %4271 = vst.msk [vmem:[%s4263 + $0x71] sm:$0xff] %vm4221, %v4212
  %4272 = vst.msk [vmem:[%s4263 + $0xa1] sm:$0xff] %vm4221, %v4213
  %4273 = vst.msk [vmem:[%s4263 + $0xb1] sm:$0xff] %vm4221, %v4214
  %4274 = vst.msk [vmem:[%s4263 + $0xc1] sm:$0xff] %vm4221, %v4215
  %4275 = vst.msk [vmem:[%s4263 + $0xd1] sm:$0xff] %vm4221, %v4216
  %4276 = vst.msk [vmem:[%s4263 + $0xe1] sm:$0xff] %vm4221, %v4217
  %4277 = vst.msk [vmem:[%s4263 + $0xf1] sm:$0xff] %vm4221, %v4218
  %4278 = vst.msk [vmem:[%s4263 + $0x101] sm:$0xff] %vm4221, %v4219
  %4279 = vst.msk [vmem:[%s4263 + $0x111] sm:$0xff] %vm4221, %v4220
  %v4280 = vld [vmem:[#allocation3] sm:$0xff]
  %v4281 = vld [vmem:[#allocation3 + $0x10] sm:$0xff]
  %v4282 = vld [vmem:[#allocation3 + $0x20] sm:$0xff]
  %v4283 = vld [vmem:[#allocation3 + $0x30] sm:$0xff]
  %v4284 = vld [vmem:[#allocation3 + $0x40] sm:$0xff]
  %v4285 = vld [vmem:[#allocation3 + $0x50] sm:$0xff]
  %v4286 = vld [vmem:[#allocation3 + $0x60] sm:$0xff]
  %v4287 = vld [vmem:[#allocation3 + $0x70] sm:$0xff]
  %v4288 = vld [vmem:[#allocation3 + $0xa0] sm:$0xff]
  %v4289 = vld [vmem:[#allocation3 + $0xb0] sm:$0xff]
  %v4290 = vld [vmem:[#allocation3 + $0xc0] sm:$0xff]
  %v4291 = vld [vmem:[#allocation3 + $0xd0] sm:$0xff]
  %v4292 = vld [vmem:[#allocation3 + $0xe0] sm:$0xff]
  %v4293 = vld [vmem:[#allocation3 + $0xf0] sm:$0xff]
  %v4294 = vld [vmem:[#allocation3 + $0x100] sm:$0xff]
  %v4295 = vld [vmem:[#allocation3 + $0x110] sm:$0xff]
  %v4296 = vld [vmem:[%s5] sm:$0xff]
  %v4297 = vld [vmem:[%s5 + $0x8] sm:$0xff]
  %v4298 = vld [vmem:[%s5 + $0x10] sm:$0xff]
  %v4299 = vld [vmem:[%s5 + $0x18] sm:$0xff]
  %v4300 = vld [vmem:[%s5 + $0x20] sm:$0xff]
  %v4301 = vld [vmem:[%s5 + $0x28] sm:$0xff]
  %v4302 = vld [vmem:[%s5 + $0x30] sm:$0xff]
  %v4303 = vld [vmem:[%s5 + $0x38] sm:$0xff]
  %v4304 = vld [vmem:[#allocation3 + $0x1] sm:$0xff]
  %v4305 = vld [vmem:[#allocation3 + $0x11] sm:$0xff]
  %v4306 = vld [vmem:[#allocation3 + $0x21] sm:$0xff]
  %v4307 = vld [vmem:[#allocation3 + $0x31] sm:$0xff]
  %v4308 = vld [vmem:[#allocation3 + $0x41] sm:$0xff]
  %v4309 = vld [vmem:[#allocation3 + $0x51] sm:$0xff]
  %v4310 = vld [vmem:[#allocation3 + $0x61] sm:$0xff]
  %v4311 = vld [vmem:[#allocation3 + $0x71] sm:$0xff]
  %v4312 = vld [vmem:[#allocation3 + $0xa1] sm:$0xff]
  %v4313 = vld [vmem:[#allocation3 + $0xb1] sm:$0xff]
  %v4314 = vld [vmem:[#allocation3 + $0xc1] sm:$0xff]
  %v4315 = vld [vmem:[#allocation3 + $0xd1] sm:$0xff]
  %v4316 = vld [vmem:[#allocation3 + $0xe1] sm:$0xff]
  %v4317 = vld [vmem:[#allocation3 + $0xf1] sm:$0xff]
  %v4318 = vld [vmem:[#allocation3 + $0x101] sm:$0xff]
  %v4319 = vld [vmem:[#allocation3 + $0x111] sm:$0xff]
  %v4320 = vld [vmem:[%s5 + $0x40] sm:$0xff]
  %v4321 = vld [vmem:[%s5 + $0x48] sm:$0xff]
  %v4322 = vld [vmem:[%s5 + $0x50] sm:$0xff]
  %v4323 = vld [vmem:[%s5 + $0x58] sm:$0xff]
  %v4324 = vld [vmem:[%s5 + $0x60] sm:$0xff]
  %v4325 = vld [vmem:[%s5 + $0x68] sm:$0xff]
  %v4326 = vld [vmem:[%s5 + $0x70] sm:$0xff]
  %v4327 = vld [vmem:[%s5 + $0x78] sm:$0xff]
  %v4329 = vsel %vm4221, %v4304, 0
  %v4332 = vsel %vm4221, %v4305, 0
  %v4335 = vsel %vm4221, %v4306, 0
  %v4338 = vsel %vm4221, %v4307, 0
  %v4341 = vsel %vm4221, %v4308, 0
  %v4344 = vsel %vm4221, %v4309, 0
  %v4347 = vsel %vm4221, %v4310, 0
  %v4350 = vsel %vm4221, %v4311, 0
  %v4353 = vsel %vm4221, %v4312, 0
  %v4356 = vsel %vm4221, %v4313, 0
  %v4359 = vsel %vm4221, %v4314, 0
  %v4362 = vsel %vm4221, %v4315, 0
  %v4365 = vsel %vm4221, %v4316, 0
  %v4368 = vsel %vm4221, %v4317, 0
  %v4371 = vsel %vm4221, %v4318, 0
  %v4374 = vsel %vm4221, %v4319, 0
  %4376 = vmatprep.subr.mxu0 0.0
  %4377 = vmatpush1.msra.mxu0 %v4320
  %4378 = vmatprep.subr.mxu0 0.0
  %4379 = vmatpush1.msra.mxu0 %v4321
  %4380 = vmatprep.subr.mxu0 0.0
  %4381 = vmatpush1.msra.mxu0 %v4322
  %4382 = vmatprep.subr.mxu0 0.0
  %4383 = vmatpush1.msra.mxu0 %v4323
  %4384 = vmatprep.subr.mxu0 0.0
  %4385 = vmatpush1.msra.mxu0 %v4324
  %4386 = vmatprep.subr.mxu0 0.0
  %4387 = vmatpush1.msra.mxu0 %v4325
  %4388 = vmatprep.subr.mxu0 0.0
  %4389 = vmatpush1.msra.mxu0 %v4326
  %4390 = vmatprep.subr.mxu0 0.0
  %4391 = vmatpush1.msra.mxu0 %v4327
  %4392 = vmatprep.subr.mxu0 0.0
  %4393 = vmatpush1.msra.mxu0 0.0
  %4394 = vmatprep.subr.mxu0 0.0
  %4395 = vmatpush1.msra.mxu0 0.0
  %4396 = vmatprep.subr.mxu0 0.0
  %4397 = vmatpush1.msra.mxu0 0.0
  %4398 = vmatprep.subr.mxu0 0.0
  %4399 = vmatpush1.msra.mxu0 0.0
  %4400 = vmatprep.subr.mxu0 0.0
  %4401 = vmatpush1.msra.mxu0 0.0
  %4402 = vmatprep.subr.mxu0 0.0
  %4403 = vmatpush1.msra.mxu0 0.0
  %4404 = vmatprep.subr.mxu0 0.0
  %4405 = vmatpush1.msra.mxu0 0.0
  %4406 = vmatprep.subr.mxu0 0.0
  %4407 = vmatpush1.msra.mxu0 0.0
  %4408 = vmatprep.subr.mxu0 0.0
  %4409 = vmatpush1.msra.mxu0 0.0
  %4410 = vmatprep.subr.mxu0 0.0
  %4411 = vmatpush1.msra.mxu0 0.0
  %4412 = vmatprep.subr.mxu0 0.0
  %4413 = vmatpush1.msra.mxu0 0.0
  %4414 = vmatprep.subr.mxu0 0.0
  %4415 = vmatpush1.msra.mxu0 0.0
  %4416 = vmatprep.subr.mxu0 0.0
  %4417 = vmatpush1.msra.mxu0 0.0
  %4418 = vmatprep.subr.mxu0 0.0
  %4419 = vmatpush1.msra.mxu0 0.0
  %4420 = vmatprep.subr.mxu0 0.0
  %4421 = vmatpush1.msra.mxu0 0.0
  %4422 = vmatprep.subr.mxu0 0.0
  %4423 = vmatpush1.msra.mxu0 0.0
  %4424 = vmatprep.subr.mxu0 0.0
  %4425 = vmatpush1.msra.mxu0 0.0
  %4426 = vmatprep.subr.mxu0 0.0
  %4427 = vmatpush1.msra.mxu0 0.0
  %4428 = vmatprep.subr.mxu0 0.0
  %4429 = vmatpush1.msra.mxu0 0.0
  %4430 = vmatprep.subr.mxu0 0.0
  %4431 = vmatpush1.msra.mxu0 0.0
  %4432 = vmatprep.subr.mxu0 0.0
  %4433 = vmatpush1.msra.mxu0 0.0
  %4434 = vmatprep.subr.mxu0 0.0
  %4435 = vmatpush1.msra.mxu0 0.0
  %4436 = vmatprep.subr.mxu0 0.0
  %4437 = vmatpush1.msra.mxu0 0.0
  %4438 = vmatprep.subr.mxu0 0.0
  %4439 = vmatpush1.msra.mxu0 0.0
  %4440 = vmatprep.mubr.f32.mxu0 0.0
  %4441 = vmatmul.mubr.f32.gmra.mrb[0].mxu0 %v4329
  %v4442 = vpop.f32.mrb[0].mxu0
  %v4443 = vadd.f32 0.0, %v4442
  %v4444 = vpop.f32.mrb[0].mxu0
  %4445 = vmatprep.mubr.f32.mxu0 0.0
  %4446 = vmatmul.mubr.f32.gmra.mrb[0].mxu0 %v4332
  %v4447 = vpop.f32.mrb[0].mxu0
  %v4448 = vadd.f32 0.0, %v4447
  %v4449 = vpop.f32.mrb[0].mxu0
  %4450 = vmatprep.mubr.f32.mxu0 0.0
  %4451 = vmatmul.mubr.f32.gmra.mrb[0].mxu0 %v4335
  %v4452 = vpop.f32.mrb[0].mxu0
  %v4453 = vadd.f32 0.0, %v4452
  %v4454 = vpop.f32.mrb[0].mxu0
  %4455 = vmatprep.mubr.f32.mxu0 0.0
  %4456 = vmatmul.mubr.f32.gmra.mrb[0].mxu0 %v4338
  %v4457 = vpop.f32.mrb[0].mxu0
  %v4458 = vadd.f32 0.0, %v4457
  %v4459 = vpop.f32.mrb[0].mxu0
  %4460 = vmatprep.mubr.f32.mxu0 0.0
  %4461 = vmatmul.mubr.f32.gmra.mrb[0].mxu0 %v4341
  %v4462 = vpop.f32.mrb[0].mxu0
  %v4463 = vadd.f32 0.0, %v4462
  %v4464 = vpop.f32.mrb[0].mxu0
  %4465 = vmatprep.mubr.f32.mxu0 0.0
  %4466 = vmatmul.mubr.f32.gmra.mrb[0].mxu0 %v4344
  %v4467 = vpop.f32.mrb[0].mxu0
  %v4468 = vadd.f32 0.0, %v4467
  %v4469 = vpop.f32.mrb[0].mxu0
  %4470 = vmatprep.mubr.f32.mxu0 0.0
  %4471 = vmatmul.mubr.f32.gmra.mrb[0].mxu0 %v4347
  %v4472 = vpop.f32.mrb[0].mxu0
  %v4473 = vadd.f32 0.0, %v4472
  %v4474 = vpop.f32.mrb[0].mxu0
  %4475 = vmatprep.mubr.f32.mxu0 0.0
  %4476 = vmatmul.mubr.f32.gmra.mrb[0].mxu0 %v4350
  %v4477 = vpop.f32.mrb[0].mxu0
  %v4478 = vadd.f32 0.0, %v4477
  %v4479 = vpop.f32.mrb[0].mxu0
  %4480 = vmatprep.mubr.f32.mxu0 0.0
  %4481 = vmatmul.mubr.f32.gmra.mrb[0].mxu0 %v4353
  %v4482 = vpop.f32.mrb[0].mxu0
  %v4483 = vadd.f32 0.0, %v4482
  %v4484 = vpop.f32.mrb[0].mxu0
  %4485 = vmatprep.mubr.f32.mxu0 0.0
  %4486 = vmatmul.mubr.f32.gmra.mrb[0].mxu0 %v4356
  %v4487 = vpop.f32.mrb[0].mxu0
  %v4488 = vadd.f32 0.0, %v4487
  %v4489 = vpop.f32.mrb[0].mxu0
  %4490 = vmatprep.mubr.f32.mxu0 0.0
  %4491 = vmatmul.mubr.f32.gmra.mrb[0].mxu0 %v4359
  %v4492 = vpop.f32.mrb[0].mxu0
  %v4493 = vadd.f32 0.0, %v4492
  %v4494 = vpop.f32.mrb[0].mxu0
  %4495 = vmatprep.mubr.f32.mxu0 0.0
  %4496 = vmatmul.mubr.f32.gmra.mrb[0].mxu0 %v4362
  %v4497 = vpop.f32.mrb[0].mxu0
  %v4498 = vadd.f32 0.0, %v4497
  %v4499 = vpop.f32.mrb[0].mxu0
  %4500 = vmatprep.mubr.f32.mxu0 0.0
  %4501 = vmatmul.mubr.f32.gmra.mrb[0].mxu0 %v4365
  %v4502 = vpop.f32.mrb[0].mxu0
  %v4503 = vadd.f32 0.0, %v4502
  %v4504 = vpop.f32.mrb[0].mxu0
  %4505 = vmatprep.mubr.f32.mxu0 0.0
  %4506 = vmatmul.mubr.f32.gmra.mrb[0].mxu0 %v4368
  %v4507 = vpop.f32.mrb[0].mxu0
  %v4508 = vadd.f32 0.0, %v4507
  %v4509 = vpop.f32.mrb[0].mxu0
  %4510 = vmatprep.mubr.f32.mxu0 0.0
  %4511 = vmatmul.mubr.f32.gmra.mrb[0].mxu0 %v4371
  %v4512 = vpop.f32.mrb[0].mxu0
  %v4513 = vadd.f32 0.0, %v4512
  %v4514 = vpop.f32.mrb[0].mxu0
  %4515 = vmatprep.mubr.f32.mxu0 0.0
  %4516 = vmatmul.mubr.f32.gmra.mrb[0].mxu0 %v4374
  %v4517 = vpop.f32.mrb[0].mxu0
  %v4518 = vadd.f32 0.0, %v4517
  %v4519 = vpop.f32.mrb[0].mxu0
  %4520 = vdwg.mxu0
  %v4522 = vsel %vm4221, %v4280, 0
  %v4525 = vsel %vm4221, %v4281, 0
  %v4528 = vsel %vm4221, %v4282, 0
  %v4531 = vsel %vm4221, %v4283, 0
  %v4534 = vsel %vm4221, %v4284, 0
  %v4537 = vsel %vm4221, %v4285, 0
  %v4540 = vsel %vm4221, %v4286, 0
  %v4543 = vsel %vm4221, %v4287, 0
  %v4546 = vsel %vm4221, %v4288, 0
  %v4549 = vsel %vm4221, %v4289, 0
  %v4552 = vsel %vm4221, %v4290, 0
  %v4555 = vsel %vm4221, %v4291, 0
  %v4558 = vsel %vm4221, %v4292, 0
  %v4561 = vsel %vm4221, %v4293, 0
  %v4564 = vsel %vm4221, %v4294, 0
  %v4567 = vsel %vm4221, %v4295, 0
  %4569 = vmatprep.subr.mxu0 0.0
  %4570 = vmatpush1.msra.mxu0 %v4296
  %4571 = vmatprep.subr.mxu0 0.0
  %4572 = vmatpush1.msra.mxu0 %v4297
  %4573 = vmatprep.subr.mxu0 0.0
  %4574 = vmatpush1.msra.mxu0 %v4298
  %4575 = vmatprep.subr.mxu0 0.0
  %4576 = vmatpush1.msra.mxu0 %v4299
  %4577 = vmatprep.subr.mxu0 0.0
  %4578 = vmatpush1.msra.mxu0 %v4300
  %4579 = vmatprep.subr.mxu0 0.0
  %4580 = vmatpush1.msra.mxu0 %v4301
  %4581 = vmatprep.subr.mxu0 0.0
  %4582 = vmatpush1.msra.mxu0 %v4302
  %4583 = vmatprep.subr.mxu0 0.0
  %4584 = vmatpush1.msra.mxu0 %v4303
  %4585 = vmatprep.subr.mxu0 0.0
  %4586 = vmatpush1.msra.mxu0 0.0
  %4587 = vmatprep.subr.mxu0 0.0
  %4588 = vmatpush1.msra.mxu0 0.0
  %4589 = vmatprep.subr.mxu0 0.0
  %4590 = vmatpush1.msra.mxu0 0.0
  %4591 = vmatprep.subr.mxu0 0.0
  %4592 = vmatpush1.msra.mxu0 0.0
  %4593 = vmatprep.subr.mxu0 0.0
  %4594 = vmatpush1.msra.mxu0 0.0
  %4595 = vmatprep.subr.mxu0 0.0
  %4596 = vmatpush1.msra.mxu0 0.0
  %4597 = vmatprep.subr.mxu0 0.0
  %4598 = vmatpush1.msra.mxu0 0.0
  %4599 = vmatprep.subr.mxu0 0.0
  %4600 = vmatpush1.msra.mxu0 0.0
  %4601 = vmatprep.subr.mxu0 0.0
  %4602 = vmatpush1.msra.mxu0 0.0
  %4603 = vmatprep.subr.mxu0 0.0
  %4604 = vmatpush1.msra.mxu0 0.0
  %4605 = vmatprep.subr.mxu0 0.0
  %4606 = vmatpush1.msra.mxu0 0.0
  %4607 = vmatprep.subr.mxu0 0.0
  %4608 = vmatpush1.msra.mxu0 0.0
  %4609 = vmatprep.subr.mxu0 0.0
  %4610 = vmatpush1.msra.mxu0 0.0
  %4611 = vmatprep.subr.mxu0 0.0
  %4612 = vmatpush1.msra.mxu0 0.0
  %4613 = vmatprep.subr.mxu0 0.0
  %4614 = vmatpush1.msra.mxu0 0.0
  %4615 = vmatprep.subr.mxu0 0.0
  %4616 = vmatpush1.msra.mxu0 0.0
  %4617 = vmatprep.subr.mxu0 0.0
  %4618 = vmatpush1.msra.mxu0 0.0
  %4619 = vmatprep.subr.mxu0 0.0
  %4620 = vmatpush1.msra.mxu0 0.0
  %4621 = vmatprep.subr.mxu0 0.0
  %4622 = vmatpush1.msra.mxu0 0.0
  %4623 = vmatprep.subr.mxu0 0.0
  %4624 = vmatpush1.msra.mxu0 0.0
  %4625 = vmatprep.subr.mxu0 0.0
  %4626 = vmatpush1.msra.mxu0 0.0
  %4627 = vmatprep.subr.mxu0 0.0
  %4628 = vmatpush1.msra.mxu0 0.0
  %4629 = vmatprep.subr.mxu0 0.0
  %4630 = vmatpush1.msra.mxu0 0.0
  %4631 = vmatprep.subr.mxu0 0.0
  %4632 = vmatpush1.msra.mxu0 0.0
  %4633 = vmatprep.mubr.f32.mxu0 0.0
  %4634 = vmatmul.mubr.f32.gmra.mrb[0].mxu0 %v4522
  %v4635 = vpop.f32.mrb[0].mxu0
  %v4636 = vadd.f32 %v4443, %v4635
  %v4637 = vpop.f32.mrb[0].mxu0
  %4638 = vmatprep.mubr.f32.mxu0 0.0
  %4639 = vmatmul.mubr.f32.gmra.mrb[0].mxu0 %v4525
  %v4640 = vpop.f32.mrb[0].mxu0
  %v4641 = vadd.f32 %v4448, %v4640
  %v4642 = vpop.f32.mrb[0].mxu0
  %4643 = vmatprep.mubr.f32.mxu0 0.0
  %4644 = vmatmul.mubr.f32.gmra.mrb[0].mxu0 %v4528
  %v4645 = vpop.f32.mrb[0].mxu0
  %v4646 = vadd.f32 %v4453, %v4645
  %v4647 = vpop.f32.mrb[0].mxu0
  %4648 = vmatprep.mubr.f32.mxu0 0.0
  %4649 = vmatmul.mubr.f32.gmra.mrb[0].mxu0 %v4531
  %v4650 = vpop.f32.mrb[0].mxu0
  %v4651 = vadd.f32 %v4458, %v4650
  %v4652 = vpop.f32.mrb[0].mxu0
  %4653 = vmatprep.mubr.f32.mxu0 0.0
  %4654 = vmatmul.mubr.f32.gmra.mrb[0].mxu0 %v4534
  %v4655 = vpop.f32.mrb[0].mxu0
  %v4656 = vadd.f32 %v4463, %v4655
  %v4657 = vpop.f32.mrb[0].mxu0
  %4658 = vmatprep.mubr.f32.mxu0 0.0
  %4659 = vmatmul.mubr.f32.gmra.mrb[0].mxu0 %v4537
  %v4660 = vpop.f32.mrb[0].mxu0
  %v4661 = vadd.f32 %v4468, %v4660
  %v4662 = vpop.f32.mrb[0].mxu0
  %4663 = vmatprep.mubr.f32.mxu0 0.0
  %4664 = vmatmul.mubr.f32.gmra.mrb[0].mxu0 %v4540
  %v4665 = vpop.f32.mrb[0].mxu0
  %v4666 = vadd.f32 %v4473, %v4665
  %v4667 = vpop.f32.mrb[0].mxu0
  %4668 = vmatprep.mubr.f32.mxu0 0.0
  %4669 = vmatmul.mubr.f32.gmra.mrb[0].mxu0 %v4543
  %v4670 = vpop.f32.mrb[0].mxu0
  %v4671 = vadd.f32 %v4478, %v4670
  %v4672 = vpop.f32.mrb[0].mxu0
  %4673 = vmatprep.mubr.f32.mxu0 0.0
  %4674 = vmatmul.mubr.f32.gmra.mrb[0].mxu0 %v4546
  %v4675 = vpop.f32.mrb[0].mxu0
  %v4676 = vadd.f32 %v4483, %v4675
  %v4677 = vpop.f32.mrb[0].mxu0
  %4678 = vmatprep.mubr.f32.mxu0 0.0
  %4679 = vmatmul.mubr.f32.gmra.mrb[0].mxu0 %v4549
  %v4680 = vpop.f32.mrb[0].mxu0
  %v4681 = vadd.f32 %v4488, %v4680
  %v4682 = vpop.f32.mrb[0].mxu0
  %4683 = vmatprep.mubr.f32.mxu0 0.0
  %4684 = vmatmul.mubr.f32.gmra.mrb[0].mxu0 %v4552
  %v4685 = vpop.f32.mrb[0].mxu0
  %v4686 = vadd.f32 %v4493, %v4685
  %v4687 = vpop.f32.mrb[0].mxu0
  %4688 = vmatprep.mubr.f32.mxu0 0.0
  %4689 = vmatmul.mubr.f32.gmra.mrb[0].mxu0 %v4555
  %v4690 = vpop.f32.mrb[0].mxu0
  %v4691 = vadd.f32 %v4498, %v4690
  %v4692 = vpop.f32.mrb[0].mxu0
  %4693 = vmatprep.mubr.f32.mxu0 0.0
  %4694 = vmatmul.mubr.f32.gmra.mrb[0].mxu0 %v4558
  %v4695 = vpop.f32.mrb[0].mxu0
  %v4696 = vadd.f32 %v4503, %v4695
  %v4697 = vpop.f32.mrb[0].mxu0
  %4698 = vmatprep.mubr.f32.mxu0 0.0
  %4699 = vmatmul.mubr.f32.gmra.mrb[0].mxu0 %v4561
  %v4700 = vpop.f32.mrb[0].mxu0
  %v4701 = vadd.f32 %v4508, %v4700
  %v4702 = vpop.f32.mrb[0].mxu0
  %4703 = vmatprep.mubr.f32.mxu0 0.0
  %4704 = vmatmul.mubr.f32.gmra.mrb[0].mxu0 %v4564
  %v4705 = vpop.f32.mrb[0].mxu0
  %v4706 = vadd.f32 %v4513, %v4705
  %v4707 = vpop.f32.mrb[0].mxu0
  %4708 = vmatprep.mubr.f32.mxu0 0.0
  %4709 = vmatmul.mubr.f32.gmra.mrb[0].mxu0 %v4567
  %v4710 = vpop.f32.mrb[0].mxu0
  %v4711 = vadd.f32 %v4518, %v4710
  %v4712 = vpop.f32.mrb[0].mxu0
  %4713 = vdwg.mxu0
  %v4714 = vld [vmem:[#allocation3 + $0x2] sm:$0xff]
  %v4715 = vld [vmem:[#allocation3 + $0x12] sm:$0xff]
  %v4716 = vld [vmem:[#allocation3 + $0x22] sm:$0xff]
  %v4717 = vld [vmem:[#allocation3 + $0x32] sm:$0xff]
  %v4718 = vld [vmem:[#allocation3 + $0x42] sm:$0xff]
  %v4719 = vld [vmem:[#allocation3 + $0x52] sm:$0xff]
  %v4720 = vld [vmem:[#allocation3 + $0x62] sm:$0xff]
  %v4721 = vld [vmem:[#allocation3 + $0x72] sm:$0xff]
  %v4722 = vld [vmem:[#allocation3 + $0xa2] sm:$0xff]
  %v4723 = vld [vmem:[#allocation3 + $0xb2] sm:$0xff]
  %v4724 = vld [vmem:[#allocation3 + $0xc2] sm:$0xff]
  %v4725 = vld [vmem:[#allocation3 + $0xd2] sm:$0xff]
  %v4726 = vld [vmem:[#allocation3 + $0xe2] sm:$0xff]
  %v4727 = vld [vmem:[#allocation3 + $0xf2] sm:$0xff]
  %v4728 = vld [vmem:[#allocation3 + $0x102] sm:$0xff]
  %v4729 = vld [vmem:[#allocation3 + $0x112] sm:$0xff]
  %v4730 = vld [vmem:[%s5 + $0x80] sm:$0xff]
  %v4731 = vld [vmem:[%s5 + $0x88] sm:$0xff]
  %v4732 = vld [vmem:[%s5 + $0x90] sm:$0xff]
  %v4733 = vld [vmem:[%s5 + $0x98] sm:$0xff]
  %v4734 = vld [vmem:[%s5 + $0xa0] sm:$0xff]
  %v4735 = vld [vmem:[%s5 + $0xa8] sm:$0xff]
  %v4736 = vld [vmem:[%s5 + $0xb0] sm:$0xff]
  %v4737 = vld [vmem:[%s5 + $0xb8] sm:$0xff]
  %v4739 = vsel %vm4221, %v4714, 0
  %v4742 = vsel %vm4221, %v4715, 0
  %v4745 = vsel %vm4221, %v4716, 0
  %v4748 = vsel %vm4221, %v4717, 0
  %v4751 = vsel %vm4221, %v4718, 0
  %v4754 = vsel %vm4221, %v4719, 0
  %v4757 = vsel %vm4221, %v4720, 0
  %v4760 = vsel %vm4221, %v4721, 0
  %v4763 = vsel %vm4221, %v4722, 0
  %v4766 = vsel %vm4221, %v4723, 0
  %v4769 = vsel %vm4221, %v4724, 0
  %v4772 = vsel %vm4221, %v4725, 0
  %v4775 = vsel %vm4221, %v4726, 0
  %v4778 = vsel %vm4221, %v4727, 0
  %v4781 = vsel %vm4221, %v4728, 0
  %v4784 = vsel %vm4221, %v4729, 0
  %4786 = vmatprep.subr.mxu0 0.0
  %4787 = vmatpush1.msra.mxu0 %v4730
  %4788 = vmatprep.subr.mxu0 0.0
  %4789 = vmatpush1.msra.mxu0 %v4731
  %4790 = vmatprep.subr.mxu0 0.0
  %4791 = vmatpush1.msra.mxu0 %v4732
  %4792 = vmatprep.subr.mxu0 0.0
  %4793 = vmatpush1.msra.mxu0 %v4733
  %4794 = vmatprep.subr.mxu0 0.0
  %4795 = vmatpush1.msra.mxu0 %v4734
  %4796 = vmatprep.subr.mxu0 0.0
  %4797 = vmatpush1.msra.mxu0 %v4735
  %4798 = vmatprep.subr.mxu0 0.0
  %4799 = vmatpush1.msra.mxu0 %v4736
  %4800 = vmatprep.subr.mxu0 0.0
  %4801 = vmatpush1.msra.mxu0 %v4737
  %4802 = vmatprep.subr.mxu0 0.0
  %4803 = vmatpush1.msra.mxu0 0.0
  %4804 = vmatprep.subr.mxu0 0.0
  %4805 = vmatpush1.msra.mxu0 0.0
  %4806 = vmatprep.subr.mxu0 0.0
  %4807 = vmatpush1.msra.mxu0 0.0
  %4808 = vmatprep.subr.mxu0 0.0
  %4809 = vmatpush1.msra.mxu0 0.0
  %4810 = vmatprep.subr.mxu0 0.0
  %4811 = vmatpush1.msra.mxu0 0.0
  %4812 = vmatprep.subr.mxu0 0.0
  %4813 = vmatpush1.msra.mxu0 0.0
  %4814 = vmatprep.subr.mxu0 0.0
  %4815 = vmatpush1.msra.mxu0 0.0
  %4816 = vmatprep.subr.mxu0 0.0
  %4817 = vmatpush1.msra.mxu0 0.0
  %4818 = vmatprep.subr.mxu0 0.0
  %4819 = vmatpush1.msra.mxu0 0.0
  %4820 = vmatprep.subr.mxu0 0.0
  %4821 = vmatpush1.msra.mxu0 0.0
  %4822 = vmatprep.subr.mxu0 0.0
  %4823 = vmatpush1.msra.mxu0 0.0
  %4824 = vmatprep.subr.mxu0 0.0
  %4825 = vmatpush1.msra.mxu0 0.0
  %4826 = vmatprep.subr.mxu0 0.0
  %4827 = vmatpush1.msra.mxu0 0.0
  %4828 = vmatprep.subr.mxu0 0.0
  %4829 = vmatpush1.msra.mxu0 0.0
  %4830 = vmatprep.subr.mxu0 0.0
  %4831 = vmatpush1.msra.mxu0 0.0
  %4832 = vmatprep.subr.mxu0 0.0
  %4833 = vmatpush1.msra.mxu0 0.0
  %4834 = vmatprep.subr.mxu0 0.0
  %4835 = vmatpush1.msra.mxu0 0.0
  %4836 = vmatprep.subr.mxu0 0.0
  %4837 = vmatpush1.msra.mxu0 0.0
  %4838 = vmatprep.subr.mxu0 0.0
  %4839 = vmatpush1.msra.mxu0 0.0
  %4840 = vmatprep.subr.mxu0 0.0
  %4841 = vmatpush1.msra.mxu0 0.0
  %4842 = vmatprep.subr.mxu0 0.0
  %4843 = vmatpush1.msra.mxu0 0.0
  %4844 = vmatprep.subr.mxu0 0.0
  %4845 = vmatpush1.msra.mxu0 0.0
  %4846 = vmatprep.subr.mxu0 0.0
  %4847 = vmatpush1.msra.mxu0 0.0
  %4848 = vmatprep.subr.mxu0 0.0
  %4849 = vmatpush1.msra.mxu0 0.0
  %4850 = vmatprep.mubr.f32.mxu0 0.0
  %4851 = vmatmul.mubr.f32.gmra.mrb[0].mxu0 %v4739
  %v4852 = vpop.f32.mrb[0].mxu0
  %v4853 = vadd.f32 0.0, %v4852
  %v4854 = vpop.f32.mrb[0].mxu0
  %4855 = vmatprep.mubr.f32.mxu0 0.0
  %4856 = vmatmul.mubr.f32.gmra.mrb[0].mxu0 %v4742
  %v4857 = vpop.f32.mrb[0].mxu0
  %v4858 = vadd.f32 0.0, %v4857
  %v4859 = vpop.f32.mrb[0].mxu0
  %4860 = vmatprep.mubr.f32.mxu0 0.0
  %4861 = vmatmul.mubr.f32.gmra.mrb[0].mxu0 %v4745
  %v4862 = vpop.f32.mrb[0].mxu0
  %v4863 = vadd.f32 0.0, %v4862
  %v4864 = vpop.f32.mrb[0].mxu0
  %4865 = vmatprep.mubr.f32.mxu0 0.0
  %4866 = vmatmul.mubr.f32.gmra.mrb[0].mxu0 %v4748
  %v4867 = vpop.f32.mrb[0].mxu0
  %v4868 = vadd.f32 0.0, %v4867
  %v4869 = vpop.f32.mrb[0].mxu0
  %4870 = vmatprep.mubr.f32.mxu0 0.0
  %4871 = vmatmul.mubr.f32.gmra.mrb[0].mxu0 %v4751
  %v4872 = vpop.f32.mrb[0].mxu0
  %v4873 = vadd.f32 0.0, %v4872
  %v4874 = vpop.f32.mrb[0].mxu0
  %4875 = vmatprep.mubr.f32.mxu0 0.0
  %4876 = vmatmul.mubr.f32.gmra.mrb[0].mxu0 %v4754
  %v4877 = vpop.f32.mrb[0].mxu0
  %v4878 = vadd.f32 0.0, %v4877
  %v4879 = vpop.f32.mrb[0].mxu0
  %4880 = vmatprep.mubr.f32.mxu0 0.0
  %4881 = vmatmul.mubr.f32.gmra.mrb[0].mxu0 %v4757
  %v4882 = vpop.f32.mrb[0].mxu0
  %v4883 = vadd.f32 0.0, %v4882
  %v4884 = vpop.f32.mrb[0].mxu0
  %4885 = vmatprep.mubr.f32.mxu0 0.0
  %4886 = vmatmul.mubr.f32.gmra.mrb[0].mxu0 %v4760
  %v4887 = vpop.f32.mrb[0].mxu0
  %v4888 = vadd.f32 0.0, %v4887
  %v4889 = vpop.f32.mrb[0].mxu0
  %4890 = vmatprep.mubr.f32.mxu0 0.0
  %4891 = vmatmul.mubr.f32.gmra.mrb[0].mxu0 %v4763
  %v4892 = vpop.f32.mrb[0].mxu0
  %v4893 = vadd.f32 0.0, %v4892
  %v4894 = vpop.f32.mrb[0].mxu0
  %4895 = vmatprep.mubr.f32.mxu0 0.0
  %4896 = vmatmul.mubr.f32.gmra.mrb[0].mxu0 %v4766
  %v4897 = vpop.f32.mrb[0].mxu0
  %v4898 = vadd.f32 0.0, %v4897
  %v4899 = vpop.f32.mrb[0].mxu0
  %4900 = vmatprep.mubr.f32.mxu0 0.0
  %4901 = vmatmul.mubr.f32.gmra.mrb[0].mxu0 %v4769
  %v4902 = vpop.f32.mrb[0].mxu0
  %v4903 = vadd.f32 0.0, %v4902
  %v4904 = vpop.f32.mrb[0].mxu0
  %4905 = vmatprep.mubr.f32.mxu0 0.0
  %4906 = vmatmul.mubr.f32.gmra.mrb[0].mxu0 %v4772
  %v4907 = vpop.f32.mrb[0].mxu0
  %v4908 = vadd.f32 0.0, %v4907
  %v4909 = vpop.f32.mrb[0].mxu0
  %4910 = vmatprep.mubr.f32.mxu0 0.0
  %4911 = vmatmul.mubr.f32.gmra.mrb[0].mxu0 %v4775
  %v4912 = vpop.f32.mrb[0].mxu0
  %v4913 = vadd.f32 0.0, %v4912
  %v4914 = vpop.f32.mrb[0].mxu0
  %4915 = vmatprep.mubr.f32.mxu0 0.0
  %4916 = vmatmul.mubr.f32.gmra.mrb[0].mxu0 %v4778
  %v4917 = vpop.f32.mrb[0].mxu0
  %v4918 = vadd.f32 0.0, %v4917
  %v4919 = vpop.f32.mrb[0].mxu0
  %4920 = vmatprep.mubr.f32.mxu0 0.0
  %4921 = vmatmul.mubr.f32.gmra.mrb[0].mxu0 %v4781
  %v4922 = vpop.f32.mrb[0].mxu0
  %v4923 = vadd.f32 0.0, %v4922
  %v4924 = vpop.f32.mrb[0].mxu0
  %4925 = vmatprep.mubr.f32.mxu0 0.0
  %4926 = vmatmul.mubr.f32.gmra.mrb[0].mxu0 %v4784
  %v4927 = vpop.f32.mrb[0].mxu0
  %v4928 = vadd.f32 0.0, %v4927
  %v4929 = vpop.f32.mrb[0].mxu0
  %4930 = vdwg.mxu0
  %v4931 = vadd.f32 %v4636, %v4853
  %v4932 = vadd.f32 %v4641, %v4858
  %v4933 = vadd.f32 %v4646, %v4863
  %v4934 = vadd.f32 %v4651, %v4868
  %v4935 = vadd.f32 %v4656, %v4873
  %v4936 = vadd.f32 %v4661, %v4878
  %v4937 = vadd.f32 %v4666, %v4883
  %v4938 = vadd.f32 %v4671, %v4888
  %v4939 = vadd.f32 %v4676, %v4893
  %v4940 = vadd.f32 %v4681, %v4898
  %v4941 = vadd.f32 %v4686, %v4903
  %v4942 = vadd.f32 %v4691, %v4908
  %v4943 = vadd.f32 %v4696, %v4913
  %v4944 = vadd.f32 %v4701, %v4918
  %v4945 = vadd.f32 %v4706, %v4923
  %v4946 = vadd.f32 %v4711, %v4928
  %v4947 = vld [vmem:[%s4263] sm:$0xff]
  %v4948 = vld [vmem:[%s4263 + $0x10] sm:$0xff]
  %v4949 = vld [vmem:[%s4263 + $0x20] sm:$0xff]
  %v4950 = vld [vmem:[%s4263 + $0x30] sm:$0xff]
  %v4951 = vld [vmem:[%s4263 + $0x40] sm:$0xff]
  %v4952 = vld [vmem:[%s4263 + $0x50] sm:$0xff]
  %v4953 = vld [vmem:[%s4263 + $0x60] sm:$0xff]
  %v4954 = vld [vmem:[%s4263 + $0x70] sm:$0xff]
  %v4955 = vld [vmem:[%s4263 + $0xa0] sm:$0xff]
  %v4956 = vld [vmem:[%s4263 + $0xb0] sm:$0xff]
  %v4957 = vld [vmem:[%s4263 + $0xc0] sm:$0xff]
  %v4958 = vld [vmem:[%s4263 + $0xd0] sm:$0xff]
  %v4959 = vld [vmem:[%s4263 + $0xe0] sm:$0xff]
  %v4960 = vld [vmem:[%s4263 + $0xf0] sm:$0xff]
  %v4961 = vld [vmem:[%s4263 + $0x100] sm:$0xff]
  %v4962 = vld [vmem:[%s4263 + $0x110] sm:$0xff]
  %v4963 = vld [vmem:[%s5 + $0xc0] sm:$0xff]
  %v4964 = vld [vmem:[%s5 + $0xc8] sm:$0xff]
  %v4965 = vld [vmem:[%s5 + $0xd0] sm:$0xff]
  %v4966 = vld [vmem:[%s5 + $0xd8] sm:$0xff]
  %v4967 = vld [vmem:[%s5 + $0xe0] sm:$0xff]
  %v4968 = vld [vmem:[%s5 + $0xe8] sm:$0xff]
  %v4969 = vld [vmem:[%s5 + $0xf0] sm:$0xff]
  %v4970 = vld [vmem:[%s5 + $0xf8] sm:$0xff]
  %v4972 = vsel %vm4221, %v4947, 0
  %v4975 = vsel %vm4221, %v4948, 0
  %v4978 = vsel %vm4221, %v4949, 0
  %v4981 = vsel %vm4221, %v4950, 0
  %v4984 = vsel %vm4221, %v4951, 0
  %v4987 = vsel %vm4221, %v4952, 0
  %v4990 = vsel %vm4221, %v4953, 0
  %v4993 = vsel %vm4221, %v4954, 0
  %v4996 = vsel %vm4221, %v4955, 0
  %v4999 = vsel %vm4221, %v4956, 0
  %v5002 = vsel %vm4221, %v4957, 0
  %v5005 = vsel %vm4221, %v4958, 0
  %v5008 = vsel %vm4221, %v4959, 0
  %v5011 = vsel %vm4221, %v4960, 0
  %v5014 = vsel %vm4221, %v4961, 0
  %v5017 = vsel %vm4221, %v4962, 0
  %5019 = vmatprep.subr.mxu0 0.0
  %5020 = vmatpush1.msra.mxu0 %v4963
  %5021 = vmatprep.subr.mxu0 0.0
  %5022 = vmatpush1.msra.mxu0 %v4964
  %5023 = vmatprep.subr.mxu0 0.0
  %5024 = vmatpush1.msra.mxu0 %v4965
  %5025 = vmatprep.subr.mxu0 0.0
  %5026 = vmatpush1.msra.mxu0 %v4966
  %5027 = vmatprep.subr.mxu0 0.0
  %5028 = vmatpush1.msra.mxu0 %v4967
  %5029 = vmatprep.subr.mxu0 0.0
  %5030 = vmatpush1.msra.mxu0 %v4968
  %5031 = vmatprep.subr.mxu0 0.0
  %5032 = vmatpush1.msra.mxu0 %v4969
  %5033 = vmatprep.subr.mxu0 0.0
  %5034 = vmatpush1.msra.mxu0 %v4970
  %5035 = vmatprep.subr.mxu0 0.0
  %5036 = vmatpush1.msra.mxu0 0.0
  %5037 = vmatprep.subr.mxu0 0.0
  %5038 = vmatpush1.msra.mxu0 0.0
  %5039 = vmatprep.subr.mxu0 0.0
  %5040 = vmatpush1.msra.mxu0 0.0
  %5041 = vmatprep.subr.mxu0 0.0
  %5042 = vmatpush1.msra.mxu0 0.0
  %5043 = vmatprep.subr.mxu0 0.0
  %5044 = vmatpush1.msra.mxu0 0.0
  %5045 = vmatprep.subr.mxu0 0.0
  %5046 = vmatpush1.msra.mxu0 0.0
  %5047 = vmatprep.subr.mxu0 0.0
  %5048 = vmatpush1.msra.mxu0 0.0
  %5049 = vmatprep.subr.mxu0 0.0
  %5050 = vmatpush1.msra.mxu0 0.0
  %5051 = vmatprep.subr.mxu0 0.0
  %5052 = vmatpush1.msra.mxu0 0.0
  %5053 = vmatprep.subr.mxu0 0.0
  %5054 = vmatpush1.msra.mxu0 0.0
  %5055 = vmatprep.subr.mxu0 0.0
  %5056 = vmatpush1.msra.mxu0 0.0
  %5057 = vmatprep.subr.mxu0 0.0
  %5058 = vmatpush1.msra.mxu0 0.0
  %5059 = vmatprep.subr.mxu0 0.0
  %5060 = vmatpush1.msra.mxu0 0.0
  %5061 = vmatprep.subr.mxu0 0.0
  %5062 = vmatpush1.msra.mxu0 0.0
  %5063 = vmatprep.subr.mxu0 0.0
  %5064 = vmatpush1.msra.mxu0 0.0
  %5065 = vmatprep.subr.mxu0 0.0
  %5066 = vmatpush1.msra.mxu0 0.0
  %5067 = vmatprep.subr.mxu0 0.0
  %5068 = vmatpush1.msra.mxu0 0.0
  %5069 = vmatprep.subr.mxu0 0.0
  %5070 = vmatpush1.msra.mxu0 0.0
  %5071 = vmatprep.subr.mxu0 0.0
  %5072 = vmatpush1.msra.mxu0 0.0
  %5073 = vmatprep.subr.mxu0 0.0
  %5074 = vmatpush1.msra.mxu0 0.0
  %5075 = vmatprep.subr.mxu0 0.0
  %5076 = vmatpush1.msra.mxu0 0.0
  %5077 = vmatprep.subr.mxu0 0.0
  %5078 = vmatpush1.msra.mxu0 0.0
  %5079 = vmatprep.subr.mxu0 0.0
  %5080 = vmatpush1.msra.mxu0 0.0
  %5081 = vmatprep.subr.mxu0 0.0
  %5082 = vmatpush1.msra.mxu0 0.0
  %5083 = vmatprep.mubr.f32.mxu0 0.0
  %5084 = vmatmul.mubr.f32.gmra.mrb[0].mxu0 %v4972
  %v5085 = vpop.f32.mrb[0].mxu0
  %v5086 = vadd.f32 0.0, %v5085
  %v5087 = vpop.f32.mrb[0].mxu0
  %5088 = vmatprep.mubr.f32.mxu0 0.0
  %5089 = vmatmul.mubr.f32.gmra.mrb[0].mxu0 %v4975
  %v5090 = vpop.f32.mrb[0].mxu0
  %v5091 = vadd.f32 0.0, %v5090
  %v5092 = vpop.f32.mrb[0].mxu0
  %5093 = vmatprep.mubr.f32.mxu0 0.0
  %5094 = vmatmul.mubr.f32.gmra.mrb[0].mxu0 %v4978
  %v5095 = vpop.f32.mrb[0].mxu0
  %v5096 = vadd.f32 0.0, %v5095
  %v5097 = vpop.f32.mrb[0].mxu0
  %5098 = vmatprep.mubr.f32.mxu0 0.0
  %5099 = vmatmul.mubr.f32.gmra.mrb[0].mxu0 %v4981
  %v5100 = vpop.f32.mrb[0].mxu0
  %v5101 = vadd.f32 0.0, %v5100
  %v5102 = vpop.f32.mrb[0].mxu0
  %5103 = vmatprep.mubr.f32.mxu0 0.0
  %5104 = vmatmul.mubr.f32.gmra.mrb[0].mxu0 %v4984
  %v5105 = vpop.f32.mrb[0].mxu0
  %v5106 = vadd.f32 0.0, %v5105
  %v5107 = vpop.f32.mrb[0].mxu0
  %5108 = vmatprep.mubr.f32.mxu0 0.0
  %5109 = vmatmul.mubr.f32.gmra.mrb[0].mxu0 %v4987
  %v5110 = vpop.f32.mrb[0].mxu0
  %v5111 = vadd.f32 0.0, %v5110
  %v5112 = vpop.f32.mrb[0].mxu0
  %5113 = vmatprep.mubr.f32.mxu0 0.0
  %5114 = vmatmul.mubr.f32.gmra.mrb[0].mxu0 %v4990
  %v5115 = vpop.f32.mrb[0].mxu0
  %v5116 = vadd.f32 0.0, %v5115
  %v5117 = vpop.f32.mrb[0].mxu0
  %5118 = vmatprep.mubr.f32.mxu0 0.0
  %5119 = vmatmul.mubr.f32.gmra.mrb[0].mxu0 %v4993
  %v5120 = vpop.f32.mrb[0].mxu0
  %v5121 = vadd.f32 0.0, %v5120
  %v5122 = vpop.f32.mrb[0].mxu0
  %5123 = vmatprep.mubr.f32.mxu0 0.0
  %5124 = vmatmul.mubr.f32.gmra.mrb[0].mxu0 %v4996
  %v5125 = vpop.f32.mrb[0].mxu0
  %v5126 = vadd.f32 0.0, %v5125
  %v5127 = vpop.f32.mrb[0].mxu0
  %5128 = vmatprep.mubr.f32.mxu0 0.0
  %5129 = vmatmul.mubr.f32.gmra.mrb[0].mxu0 %v4999
  %v5130 = vpop.f32.mrb[0].mxu0
  %v5131 = vadd.f32 0.0, %v5130
  %v5132 = vpop.f32.mrb[0].mxu0
  %5133 = vmatprep.mubr.f32.mxu0 0.0
  %5134 = vmatmul.mubr.f32.gmra.mrb[0].mxu0 %v5002
  %v5135 = vpop.f32.mrb[0].mxu0
  %v5136 = vadd.f32 0.0, %v5135
  %v5137 = vpop.f32.mrb[0].mxu0
  %5138 = vmatprep.mubr.f32.mxu0 0.0
  %5139 = vmatmul.mubr.f32.gmra.mrb[0].mxu0 %v5005
  %v5140 = vpop.f32.mrb[0].mxu0
  %v5141 = vadd.f32 0.0, %v5140
  %v5142 = vpop.f32.mrb[0].mxu0
  %5143 = vmatprep.mubr.f32.mxu0 0.0
  %5144 = vmatmul.mubr.f32.gmra.mrb[0].mxu0 %v5008
  %v5145 = vpop.f32.mrb[0].mxu0
  %v5146 = vadd.f32 0.0, %v5145
  %v5147 = vpop.f32.mrb[0].mxu0
  %5148 = vmatprep.mubr.f32.mxu0 0.0
  %5149 = vmatmul.mubr.f32.gmra.mrb[0].mxu0 %v5011
  %v5150 = vpop.f32.mrb[0].mxu0
  %v5151 = vadd.f32 0.0, %v5150
  %v5152 = vpop.f32.mrb[0].mxu0
  %5153 = vmatprep.mubr.f32.mxu0 0.0
  %5154 = vmatmul.mubr.f32.gmra.mrb[0].mxu0 %v5014
  %v5155 = vpop.f32.mrb[0].mxu0
  %v5156 = vadd.f32 0.0, %v5155
  %v5157 = vpop.f32.mrb[0].mxu0
  %5158 = vmatprep.mubr.f32.mxu0 0.0
  %5159 = vmatmul.mubr.f32.gmra.mrb[0].mxu0 %v5017
  %v5160 = vpop.f32.mrb[0].mxu0
  %v5161 = vadd.f32 0.0, %v5160
  %v5162 = vpop.f32.mrb[0].mxu0
  %5163 = vdwg.mxu0
  %v5164 = vadd.f32 %v4931, %v5086
  %v5165 = vadd.f32 %v4932, %v5091
  %v5166 = vadd.f32 %v4933, %v5096
  %v5167 = vadd.f32 %v4934, %v5101
  %v5168 = vadd.f32 %v4935, %v5106
  %v5169 = vadd.f32 %v4936, %v5111
  %v5170 = vadd.f32 %v4937, %v5116
  %v5171 = vadd.f32 %v4938, %v5121
  %v5172 = vadd.f32 %v4939, %v5126
  %v5173 = vadd.f32 %v4940, %v5131
  %v5174 = vadd.f32 %v4941, %v5136
  %v5175 = vadd.f32 %v4942, %v5141
  %v5176 = vadd.f32 %v4943, %v5146
  %v5177 = vadd.f32 %v4944, %v5151
  %v5178 = vadd.f32 %v4945, %v5156
  %v5179 = vadd.f32 %v4946, %v5161
  %v5180 = vld [vmem:[%s4263 + $0x1] sm:$0xff]
  %v5181 = vld [vmem:[%s4263 + $0x11] sm:$0xff]
  %v5182 = vld [vmem:[%s4263 + $0x21] sm:$0xff]
  %v5183 = vld [vmem:[%s4263 + $0x31] sm:$0xff]
  %v5184 = vld [vmem:[%s4263 + $0x41] sm:$0xff]
  %v5185 = vld [vmem:[%s4263 + $0x51] sm:$0xff]
  %v5186 = vld [vmem:[%s4263 + $0x61] sm:$0xff]
  %v5187 = vld [vmem:[%s4263 + $0x71] sm:$0xff]
  %v5188 = vld [vmem:[%s4263 + $0xa1] sm:$0xff]
  %v5189 = vld [vmem:[%s4263 + $0xb1] sm:$0xff]
  %v5190 = vld [vmem:[%s4263 + $0xc1] sm:$0xff]
  %v5191 = vld [vmem:[%s4263 + $0xd1] sm:$0xff]
  %v5192 = vld [vmem:[%s4263 + $0xe1] sm:$0xff]
  %v5193 = vld [vmem:[%s4263 + $0xf1] sm:$0xff]
  %v5194 = vld [vmem:[%s4263 + $0x101] sm:$0xff]
  %v5195 = vld [vmem:[%s4263 + $0x111] sm:$0xff]
  %v5196 = vld [vmem:[%s5 + $0x100] sm:$0xff]
  %v5197 = vld [vmem:[%s5 + $0x108] sm:$0xff]
  %v5198 = vld [vmem:[%s5 + $0x110] sm:$0xff]
  %v5199 = vld [vmem:[%s5 + $0x118] sm:$0xff]
  %v5200 = vld [vmem:[%s5 + $0x120] sm:$0xff]
  %v5201 = vld [vmem:[%s5 + $0x128] sm:$0xff]
  %v5202 = vld [vmem:[%s5 + $0x130] sm:$0xff]
  %v5203 = vld [vmem:[%s5 + $0x138] sm:$0xff]
  %v5205 = vsel %vm4221, %v5180, 0
  %v5208 = vsel %vm4221, %v5181, 0
  %v5211 = vsel %vm4221, %v5182, 0
  %v5214 = vsel %vm4221, %v5183, 0
  %v5217 = vsel %vm4221, %v5184, 0
  %v5220 = vsel %vm4221, %v5185, 0
  %v5223 = vsel %vm4221, %v5186, 0
  %v5226 = vsel %vm4221, %v5187, 0
  %v5229 = vsel %vm4221, %v5188, 0
  %v5232 = vsel %vm4221, %v5189, 0
  %v5235 = vsel %vm4221, %v5190, 0
  %v5238 = vsel %vm4221, %v5191, 0
  %v5241 = vsel %vm4221, %v5192, 0
  %v5244 = vsel %vm4221, %v5193, 0
  %v5247 = vsel %vm4221, %v5194, 0
  %v5250 = vsel %vm4221, %v5195, 0
  %5252 = vmatprep.subr.mxu0 0.0
  %5253 = vmatpush1.msra.mxu0 %v5196
  %5254 = vmatprep.subr.mxu0 0.0
  %5255 = vmatpush1.msra.mxu0 %v5197
  %5256 = vmatprep.subr.mxu0 0.0
  %5257 = vmatpush1.msra.mxu0 %v5198
  %5258 = vmatprep.subr.mxu0 0.0
  %5259 = vmatpush1.msra.mxu0 %v5199
  %5260 = vmatprep.subr.mxu0 0.0
  %5261 = vmatpush1.msra.mxu0 %v5200
  %5262 = vmatprep.subr.mxu0 0.0
  %5263 = vmatpush1.msra.mxu0 %v5201
  %5264 = vmatprep.subr.mxu0 0.0
  %5265 = vmatpush1.msra.mxu0 %v5202
  %5266 = vmatprep.subr.mxu0 0.0
  %5267 = vmatpush1.msra.mxu0 %v5203
  %5268 = vmatprep.subr.mxu0 0.0
  %5269 = vmatpush1.msra.mxu0 0.0
  %5270 = vmatprep.subr.mxu0 0.0
  %5271 = vmatpush1.msra.mxu0 0.0
  %5272 = vmatprep.subr.mxu0 0.0
  %5273 = vmatpush1.msra.mxu0 0.0
  %5274 = vmatprep.subr.mxu0 0.0
  %5275 = vmatpush1.msra.mxu0 0.0
  %5276 = vmatprep.subr.mxu0 0.0
  %5277 = vmatpush1.msra.mxu0 0.0
  %5278 = vmatprep.subr.mxu0 0.0
  %5279 = vmatpush1.msra.mxu0 0.0
  %5280 = vmatprep.subr.mxu0 0.0
  %5281 = vmatpush1.msra.mxu0 0.0
  %5282 = vmatprep.subr.mxu0 0.0
  %5283 = vmatpush1.msra.mxu0 0.0
  %5284 = vmatprep.subr.mxu0 0.0
  %5285 = vmatpush1.msra.mxu0 0.0
  %5286 = vmatprep.subr.mxu0 0.0
  %5287 = vmatpush1.msra.mxu0 0.0
  %5288 = vmatprep.subr.mxu0 0.0
  %5289 = vmatpush1.msra.mxu0 0.0
  %5290 = vmatprep.subr.mxu0 0.0
  %5291 = vmatpush1.msra.mxu0 0.0
  %5292 = vmatprep.subr.mxu0 0.0
  %5293 = vmatpush1.msra.mxu0 0.0
  %5294 = vmatprep.subr.mxu0 0.0
  %5295 = vmatpush1.msra.mxu0 0.0
  %5296 = vmatprep.subr.mxu0 0.0
  %5297 = vmatpush1.msra.mxu0 0.0
  %5298 = vmatprep.subr.mxu0 0.0
  %5299 = vmatpush1.msra.mxu0 0.0
  %5300 = vmatprep.subr.mxu0 0.0
  %5301 = vmatpush1.msra.mxu0 0.0
  %5302 = vmatprep.subr.mxu0 0.0
  %5303 = vmatpush1.msra.mxu0 0.0
  %5304 = vmatprep.subr.mxu0 0.0
  %5305 = vmatpush1.msra.mxu0 0.0
  %5306 = vmatprep.subr.mxu0 0.0
  %5307 = vmatpush1.msra.mxu0 0.0
  %5308 = vmatprep.subr.mxu0 0.0
  %5309 = vmatpush1.msra.mxu0 0.0
  %5310 = vmatprep.subr.mxu0 0.0
  %5311 = vmatpush1.msra.mxu0 0.0
  %5312 = vmatprep.subr.mxu0 0.0
  %5313 = vmatpush1.msra.mxu0 0.0
  %5314 = vmatprep.subr.mxu0 0.0
  %5315 = vmatpush1.msra.mxu0 0.0
  %5316 = vmatprep.mubr.f32.mxu0 0.0
  %5317 = vmatmul.mubr.f32.gmra.mrb[0].mxu0 %v5205
  %v5318 = vpop.f32.mrb[0].mxu0
  %v5319 = vadd.f32 0.0, %v5318
  %v5320 = vpop.f32.mrb[0].mxu0
  %5321 = vmatprep.mubr.f32.mxu0 0.0
  %5322 = vmatmul.mubr.f32.gmra.mrb[0].mxu0 %v5208
  %v5323 = vpop.f32.mrb[0].mxu0
  %v5324 = vadd.f32 0.0, %v5323
  %v5325 = vpop.f32.mrb[0].mxu0
  %5326 = vmatprep.mubr.f32.mxu0 0.0
  %5327 = vmatmul.mubr.f32.gmra.mrb[0].mxu0 %v5211
  %v5328 = vpop.f32.mrb[0].mxu0
  %v5329 = vadd.f32 0.0, %v5328
  %v5330 = vpop.f32.mrb[0].mxu0
  %5331 = vmatprep.mubr.f32.mxu0 0.0
  %5332 = vmatmul.mubr.f32.gmra.mrb[0].mxu0 %v5214
  %v5333 = vpop.f32.mrb[0].mxu0
  %v5334 = vadd.f32 0.0, %v5333
  %v5335 = vpop.f32.mrb[0].mxu0
  %5336 = vmatprep.mubr.f32.mxu0 0.0
  %5337 = vmatmul.mubr.f32.gmra.mrb[0].mxu0 %v5217
  %v5338 = vpop.f32.mrb[0].mxu0
  %v5339 = vadd.f32 0.0, %v5338
  %v5340 = vpop.f32.mrb[0].mxu0
  %5341 = vmatprep.mubr.f32.mxu0 0.0
  %5342 = vmatmul.mubr.f32.gmra.mrb[0].mxu0 %v5220
  %v5343 = vpop.f32.mrb[0].mxu0
  %v5344 = vadd.f32 0.0, %v5343
  %v5345 = vpop.f32.mrb[0].mxu0
  %5346 = vmatprep.mubr.f32.mxu0 0.0
  %5347 = vmatmul.mubr.f32.gmra.mrb[0].mxu0 %v5223
  %v5348 = vpop.f32.mrb[0].mxu0
  %v5349 = vadd.f32 0.0, %v5348
  %v5350 = vpop.f32.mrb[0].mxu0
  %5351 = vmatprep.mubr.f32.mxu0 0.0
  %5352 = vmatmul.mubr.f32.gmra.mrb[0].mxu0 %v5226
  %v5353 = vpop.f32.mrb[0].mxu0
  %v5354 = vadd.f32 0.0, %v5353
  %v5355 = vpop.f32.mrb[0].mxu0
  %5356 = vmatprep.mubr.f32.mxu0 0.0
  %5357 = vmatmul.mubr.f32.gmra.mrb[0].mxu0 %v5229
  %v5358 = vpop.f32.mrb[0].mxu0
  %v5359 = vadd.f32 0.0, %v5358
  %v5360 = vpop.f32.mrb[0].mxu0
  %5361 = vmatprep.mubr.f32.mxu0 0.0
  %5362 = vmatmul.mubr.f32.gmra.mrb[0].mxu0 %v5232
  %v5363 = vpop.f32.mrb[0].mxu0
  %v5364 = vadd.f32 0.0, %v5363
  %v5365 = vpop.f32.mrb[0].mxu0
  %5366 = vmatprep.mubr.f32.mxu0 0.0
  %5367 = vmatmul.mubr.f32.gmra.mrb[0].mxu0 %v5235
  %v5368 = vpop.f32.mrb[0].mxu0
  %v5369 = vadd.f32 0.0, %v5368
  %v5370 = vpop.f32.mrb[0].mxu0
  %5371 = vmatprep.mubr.f32.mxu0 0.0
  %5372 = vmatmul.mubr.f32.gmra.mrb[0].mxu0 %v5238
  %v5373 = vpop.f32.mrb[0].mxu0
  %v5374 = vadd.f32 0.0, %v5373
  %v5375 = vpop.f32.mrb[0].mxu0
  %5376 = vmatprep.mubr.f32.mxu0 0.0
  %5377 = vmatmul.mubr.f32.gmra.mrb[0].mxu0 %v5241
  %v5378 = vpop.f32.mrb[0].mxu0
  %v5379 = vadd.f32 0.0, %v5378
  %v5380 = vpop.f32.mrb[0].mxu0
  %5381 = vmatprep.mubr.f32.mxu0 0.0
  %5382 = vmatmul.mubr.f32.gmra.mrb[0].mxu0 %v5244
  %v5383 = vpop.f32.mrb[0].mxu0
  %v5384 = vadd.f32 0.0, %v5383
  %v5385 = vpop.f32.mrb[0].mxu0
  %5386 = vmatprep.mubr.f32.mxu0 0.0
  %5387 = vmatmul.mubr.f32.gmra.mrb[0].mxu0 %v5247
  %v5388 = vpop.f32.mrb[0].mxu0
  %v5389 = vadd.f32 0.0, %v5388
  %v5390 = vpop.f32.mrb[0].mxu0
  %5391 = vmatprep.mubr.f32.mxu0 0.0
  %5392 = vmatmul.mubr.f32.gmra.mrb[0].mxu0 %v5250
  %v5393 = vpop.f32.mrb[0].mxu0
  %v5394 = vadd.f32 0.0, %v5393
  %v5395 = vpop.f32.mrb[0].mxu0
  %5396 = vdwg.mxu0
  %v5397 = vadd.f32 %v5164, %v5319
  %v5398 = vadd.f32 %v5165, %v5324
  %v5399 = vadd.f32 %v5166, %v5329
  %v5400 = vadd.f32 %v5167, %v5334
  %v5401 = vadd.f32 %v5168, %v5339
  %v5402 = vadd.f32 %v5169, %v5344
  %v5403 = vadd.f32 %v5170, %v5349
  %v5404 = vadd.f32 %v5171, %v5354
  %v5405 = vadd.f32 %v5172, %v5359
  %v5406 = vadd.f32 %v5173, %v5364
  %v5407 = vadd.f32 %v5174, %v5369
  %v5408 = vadd.f32 %v5175, %v5374
  %v5409 = vadd.f32 %v5176, %v5379
  %v5410 = vadd.f32 %v5177, %v5384
  %v5411 = vadd.f32 %v5178, %v5389
  %v5412 = vadd.f32 %v5179, %v5394
  %v5413 = vld [vmem:[%s4263 + $0x2] sm:$0xff]
  %v5414 = vld [vmem:[%s4263 + $0x12] sm:$0xff]
  %v5415 = vld [vmem:[%s4263 + $0x22] sm:$0xff]
  %v5416 = vld [vmem:[%s4263 + $0x32] sm:$0xff]
  %v5417 = vld [vmem:[%s4263 + $0x42] sm:$0xff]
  %v5418 = vld [vmem:[%s4263 + $0x52] sm:$0xff]
  %v5419 = vld [vmem:[%s4263 + $0x62] sm:$0xff]
  %v5420 = vld [vmem:[%s4263 + $0x72] sm:$0xff]
  %v5421 = vld [vmem:[%s4263 + $0xa2] sm:$0xff]
  %v5422 = vld [vmem:[%s4263 + $0xb2] sm:$0xff]
  %v5423 = vld [vmem:[%s4263 + $0xc2] sm:$0xff]
  %v5424 = vld [vmem:[%s4263 + $0xd2] sm:$0xff]
  %v5425 = vld [vmem:[%s4263 + $0xe2] sm:$0xff]
  %v5426 = vld [vmem:[%s4263 + $0xf2] sm:$0xff]
  %v5427 = vld [vmem:[%s4263 + $0x102] sm:$0xff]
  %v5428 = vld [vmem:[%s4263 + $0x112] sm:$0xff]
  %v5429 = vld [vmem:[%s5 + $0x140] sm:$0xff]
  %v5430 = vld [vmem:[%s5 + $0x148] sm:$0xff]
  %v5431 = vld [vmem:[%s5 + $0x150] sm:$0xff]
  %v5432 = vld [vmem:[%s5 + $0x158] sm:$0xff]
  %v5433 = vld [vmem:[%s5 + $0x160] sm:$0xff]
  %v5434 = vld [vmem:[%s5 + $0x168] sm:$0xff]
  %v5435 = vld [vmem:[%s5 + $0x170] sm:$0xff]
  %v5436 = vld [vmem:[%s5 + $0x178] sm:$0xff]
  %v5438 = vsel %vm4221, %v5413, 0
  %v5441 = vsel %vm4221, %v5414, 0
  %v5444 = vsel %vm4221, %v5415, 0
  %v5447 = vsel %vm4221, %v5416, 0
  %v5450 = vsel %vm4221, %v5417, 0
  %v5453 = vsel %vm4221, %v5418, 0
  %v5456 = vsel %vm4221, %v5419, 0
  %v5459 = vsel %vm4221, %v5420, 0
  %v5462 = vsel %vm4221, %v5421, 0
  %v5465 = vsel %vm4221, %v5422, 0
  %v5468 = vsel %vm4221, %v5423, 0
  %v5471 = vsel %vm4221, %v5424, 0
  %v5474 = vsel %vm4221, %v5425, 0
  %v5477 = vsel %vm4221, %v5426, 0
  %v5480 = vsel %vm4221, %v5427, 0
  %v5483 = vsel %vm4221, %v5428, 0
  %5485 = vmatprep.subr.mxu0 0.0
  %5486 = vmatpush1.msra.mxu0 %v5429
  %5487 = vmatprep.subr.mxu0 0.0
  %5488 = vmatpush1.msra.mxu0 %v5430
  %5489 = vmatprep.subr.mxu0 0.0
  %5490 = vmatpush1.msra.mxu0 %v5431
  %5491 = vmatprep.subr.mxu0 0.0
  %5492 = vmatpush1.msra.mxu0 %v5432
  %5493 = vmatprep.subr.mxu0 0.0
  %5494 = vmatpush1.msra.mxu0 %v5433
  %5495 = vmatprep.subr.mxu0 0.0
  %5496 = vmatpush1.msra.mxu0 %v5434
  %5497 = vmatprep.subr.mxu0 0.0
  %5498 = vmatpush1.msra.mxu0 %v5435
  %5499 = vmatprep.subr.mxu0 0.0
  %5500 = vmatpush1.msra.mxu0 %v5436
  %5501 = vmatprep.subr.mxu0 0.0
  %5502 = vmatpush1.msra.mxu0 0.0
  %5503 = vmatprep.subr.mxu0 0.0
  %5504 = vmatpush1.msra.mxu0 0.0
  %5505 = vmatprep.subr.mxu0 0.0
  %5506 = vmatpush1.msra.mxu0 0.0
  %5507 = vmatprep.subr.mxu0 0.0
  %5508 = vmatpush1.msra.mxu0 0.0
  %5509 = vmatprep.subr.mxu0 0.0
  %5510 = vmatpush1.msra.mxu0 0.0
  %5511 = vmatprep.subr.mxu0 0.0
  %5512 = vmatpush1.msra.mxu0 0.0
  %5513 = vmatprep.subr.mxu0 0.0
  %5514 = vmatpush1.msra.mxu0 0.0
  %5515 = vmatprep.subr.mxu0 0.0
  %5516 = vmatpush1.msra.mxu0 0.0
  %5517 = vmatprep.subr.mxu0 0.0
  %5518 = vmatpush1.msra.mxu0 0.0
  %5519 = vmatprep.subr.mxu0 0.0
  %5520 = vmatpush1.msra.mxu0 0.0
  %5521 = vmatprep.subr.mxu0 0.0
  %5522 = vmatpush1.msra.mxu0 0.0
  %5523 = vmatprep.subr.mxu0 0.0
  %5524 = vmatpush1.msra.mxu0 0.0
  %5525 = vmatprep.subr.mxu0 0.0
  %5526 = vmatpush1.msra.mxu0 0.0
  %5527 = vmatprep.subr.mxu0 0.0
  %5528 = vmatpush1.msra.mxu0 0.0
  %5529 = vmatprep.subr.mxu0 0.0
  %5530 = vmatpush1.msra.mxu0 0.0
  %5531 = vmatprep.subr.mxu0 0.0
  %5532 = vmatpush1.msra.mxu0 0.0
  %5533 = vmatprep.subr.mxu0 0.0
  %5534 = vmatpush1.msra.mxu0 0.0
  %5535 = vmatprep.subr.mxu0 0.0
  %5536 = vmatpush1.msra.mxu0 0.0
  %5537 = vmatprep.subr.mxu0 0.0
  %5538 = vmatpush1.msra.mxu0 0.0
  %5539 = vmatprep.subr.mxu0 0.0
  %5540 = vmatpush1.msra.mxu0 0.0
  %5541 = vmatprep.subr.mxu0 0.0
  %5542 = vmatpush1.msra.mxu0 0.0
  %5543 = vmatprep.subr.mxu0 0.0
  %5544 = vmatpush1.msra.mxu0 0.0
  %5545 = vmatprep.subr.mxu0 0.0
  %5546 = vmatpush1.msra.mxu0 0.0
  %5547 = vmatprep.subr.mxu0 0.0
  %5548 = vmatpush1.msra.mxu0 0.0
  %5549 = vmatprep.mubr.f32.mxu0 0.0
  %5550 = vmatmul.mubr.f32.gmra.mrb[0].mxu0 %v5438
  %v5551 = vpop.f32.mrb[0].mxu0
  %v5552 = vadd.f32 0.0, %v5551
  %v5553 = vpop.f32.mrb[0].mxu0
  %5554 = vmatprep.mubr.f32.mxu0 0.0
  %5555 = vmatmul.mubr.f32.gmra.mrb[0].mxu0 %v5441
  %v5556 = vpop.f32.mrb[0].mxu0
  %v5557 = vadd.f32 0.0, %v5556
  %v5558 = vpop.f32.mrb[0].mxu0
  %5559 = vmatprep.mubr.f32.mxu0 0.0
  %5560 = vmatmul.mubr.f32.gmra.mrb[0].mxu0 %v5444
  %v5561 = vpop.f32.mrb[0].mxu0
  %v5562 = vadd.f32 0.0, %v5561
  %v5563 = vpop.f32.mrb[0].mxu0
  %5564 = vmatprep.mubr.f32.mxu0 0.0
  %5565 = vmatmul.mubr.f32.gmra.mrb[0].mxu0 %v5447
  %v5566 = vpop.f32.mrb[0].mxu0
  %v5567 = vadd.f32 0.0, %v5566
  %v5568 = vpop.f32.mrb[0].mxu0
  %5569 = vmatprep.mubr.f32.mxu0 0.0
  %5570 = vmatmul.mubr.f32.gmra.mrb[0].mxu0 %v5450
  %v5571 = vpop.f32.mrb[0].mxu0
  %v5572 = vadd.f32 0.0, %v5571
  %v5573 = vpop.f32.mrb[0].mxu0
  %5574 = vmatprep.mubr.f32.mxu0 0.0
  %5575 = vmatmul.mubr.f32.gmra.mrb[0].mxu0 %v5453
  %v5576 = vpop.f32.mrb[0].mxu0
  %v5577 = vadd.f32 0.0, %v5576
  %v5578 = vpop.f32.mrb[0].mxu0
  %5579 = vmatprep.mubr.f32.mxu0 0.0
  %5580 = vmatmul.mubr.f32.gmra.mrb[0].mxu0 %v5456
  %v5581 = vpop.f32.mrb[0].mxu0
  %v5582 = vadd.f32 0.0, %v5581
  %v5583 = vpop.f32.mrb[0].mxu0
  %5584 = vmatprep.mubr.f32.mxu0 0.0
  %5585 = vmatmul.mubr.f32.gmra.mrb[0].mxu0 %v5459
  %v5586 = vpop.f32.mrb[0].mxu0
  %v5587 = vadd.f32 0.0, %v5586
  %v5588 = vpop.f32.mrb[0].mxu0
  %5589 = vmatprep.mubr.f32.mxu0 0.0
  %5590 = vmatmul.mubr.f32.gmra.mrb[0].mxu0 %v5462
  %v5591 = vpop.f32.mrb[0].mxu0
  %v5592 = vadd.f32 0.0, %v5591
  %v5593 = vpop.f32.mrb[0].mxu0
  %5594 = vmatprep.mubr.f32.mxu0 0.0
  %5595 = vmatmul.mubr.f32.gmra.mrb[0].mxu0 %v5465
  %v5596 = vpop.f32.mrb[0].mxu0
  %v5597 = vadd.f32 0.0, %v5596
  %v5598 = vpop.f32.mrb[0].mxu0
  %5599 = vmatprep.mubr.f32.mxu0 0.0
  %5600 = vmatmul.mubr.f32.gmra.mrb[0].mxu0 %v5468
  %v5601 = vpop.f32.mrb[0].mxu0
  %v5602 = vadd.f32 0.0, %v5601
  %v5603 = vpop.f32.mrb[0].mxu0
  %5604 = vmatprep.mubr.f32.mxu0 0.0
  %5605 = vmatmul.mubr.f32.gmra.mrb[0].mxu0 %v5471
  %v5606 = vpop.f32.mrb[0].mxu0
  %v5607 = vadd.f32 0.0, %v5606
  %v5608 = vpop.f32.mrb[0].mxu0
  %5609 = vmatprep.mubr.f32.mxu0 0.0
  %5610 = vmatmul.mubr.f32.gmra.mrb[0].mxu0 %v5474
  %v5611 = vpop.f32.mrb[0].mxu0
  %v5612 = vadd.f32 0.0, %v5611
  %v5613 = vpop.f32.mrb[0].mxu0
  %5614 = vmatprep.mubr.f32.mxu0 0.0
  %5615 = vmatmul.mubr.f32.gmra.mrb[0].mxu0 %v5477
  %v5616 = vpop.f32.mrb[0].mxu0
  %v5617 = vadd.f32 0.0, %v5616
  %v5618 = vpop.f32.mrb[0].mxu0
  %5619 = vmatprep.mubr.f32.mxu0 0.0
  %5620 = vmatmul.mubr.f32.gmra.mrb[0].mxu0 %v5480
  %v5621 = vpop.f32.mrb[0].mxu0
  %v5622 = vadd.f32 0.0, %v5621
  %v5623 = vpop.f32.mrb[0].mxu0
  %5624 = vmatprep.mubr.f32.mxu0 0.0
  %5625 = vmatmul.mubr.f32.gmra.mrb[0].mxu0 %v5483
  %v5626 = vpop.f32.mrb[0].mxu0
  %v5627 = vadd.f32 0.0, %v5626
  %v5628 = vpop.f32.mrb[0].mxu0
  %5629 = vdwg.mxu0
  %v5630 = vadd.f32 %v5397, %v5552
  %v5631 = vadd.f32 %v5398, %v5557
  %v5632 = vadd.f32 %v5399, %v5562
  %v5633 = vadd.f32 %v5400, %v5567
  %v5634 = vadd.f32 %v5401, %v5572
  %v5635 = vadd.f32 %v5402, %v5577
  %v5636 = vadd.f32 %v5403, %v5582
  %v5637 = vadd.f32 %v5404, %v5587
  %v5638 = vadd.f32 %v5405, %v5592
  %v5639 = vadd.f32 %v5406, %v5597
  %v5640 = vadd.f32 %v5407, %v5602
  %v5641 = vadd.f32 %v5408, %v5607
  %v5642 = vadd.f32 %v5409, %v5612
  %v5643 = vadd.f32 %v5410, %v5617
  %v5644 = vadd.f32 %v5411, %v5622
  %v5645 = vadd.f32 %v5412, %v5627
  %s5646 = scalar_lea.vmem [#allocation3], 32
  %v5647 = vld [vmem:[%s5646] sm:$0xff]
  %v5648 = vld [vmem:[%s5646 + $0x10] sm:$0xff]
  %v5649 = vld [vmem:[%s5646 + $0x20] sm:$0xff]
  %v5650 = vld [vmem:[%s5646 + $0x30] sm:$0xff]
  %v5651 = vld [vmem:[%s5646 + $0x40] sm:$0xff]
  %v5652 = vld [vmem:[%s5646 + $0x50] sm:$0xff]
  %v5653 = vld [vmem:[%s5646 + $0x60] sm:$0xff]
  %v5654 = vld [vmem:[%s5646 + $0x70] sm:$0xff]
  %v5655 = vld [vmem:[%s5646 + $0xa0] sm:$0xff]
  %v5656 = vld [vmem:[%s5646 + $0xb0] sm:$0xff]
  %v5657 = vld [vmem:[%s5646 + $0xc0] sm:$0xff]
  %v5658 = vld [vmem:[%s5646 + $0xd0] sm:$0xff]
  %v5659 = vld [vmem:[%s5646 + $0xe0] sm:$0xff]
  %v5660 = vld [vmem:[%s5646 + $0xf0] sm:$0xff]
  %v5661 = vld [vmem:[%s5646 + $0x100] sm:$0xff]
  %v5662 = vld [vmem:[%s5646 + $0x110] sm:$0xff]
  %v5663 = vld [vmem:[%s5 + $0x180] sm:$0xff]
  %v5664 = vld [vmem:[%s5 + $0x188] sm:$0xff]
  %v5665 = vld [vmem:[%s5 + $0x190] sm:$0xff]
  %v5666 = vld [vmem:[%s5 + $0x198] sm:$0xff]
  %v5667 = vld [vmem:[%s5 + $0x1a0] sm:$0xff]
  %v5668 = vld [vmem:[%s5 + $0x1a8] sm:$0xff]
  %v5669 = vld [vmem:[%s5 + $0x1b0] sm:$0xff]
  %v5670 = vld [vmem:[%s5 + $0x1b8] sm:$0xff]
  %v5672 = vsel %vm4221, %v5647, 0
  %v5675 = vsel %vm4221, %v5648, 0
  %v5678 = vsel %vm4221, %v5649, 0
  %v5681 = vsel %vm4221, %v5650, 0
  %v5684 = vsel %vm4221, %v5651, 0
  %v5687 = vsel %vm4221, %v5652, 0
  %v5690 = vsel %vm4221, %v5653, 0
  %v5693 = vsel %vm4221, %v5654, 0
  %v5696 = vsel %vm4221, %v5655, 0
  %v5699 = vsel %vm4221, %v5656, 0
  %v5702 = vsel %vm4221, %v5657, 0
  %v5705 = vsel %vm4221, %v5658, 0
  %v5708 = vsel %vm4221, %v5659, 0
  %v5711 = vsel %vm4221, %v5660, 0
  %v5714 = vsel %vm4221, %v5661, 0
  %v5717 = vsel %vm4221, %v5662, 0
  %5719 = vmatprep.subr.mxu0 0.0
  %5720 = vmatpush1.msra.mxu0 %v5663
  %5721 = vmatprep.subr.mxu0 0.0
  %5722 = vmatpush1.msra.mxu0 %v5664
  %5723 = vmatprep.subr.mxu0 0.0
  %5724 = vmatpush1.msra.mxu0 %v5665
  %5725 = vmatprep.subr.mxu0 0.0
  %5726 = vmatpush1.msra.mxu0 %v5666
  %5727 = vmatprep.subr.mxu0 0.0
  %5728 = vmatpush1.msra.mxu0 %v5667
  %5729 = vmatprep.subr.mxu0 0.0
  %5730 = vmatpush1.msra.mxu0 %v5668
  %5731 = vmatprep.subr.mxu0 0.0
  %5732 = vmatpush1.msra.mxu0 %v5669
  %5733 = vmatprep.subr.mxu0 0.0
  %5734 = vmatpush1.msra.mxu0 %v5670
  %5735 = vmatprep.subr.mxu0 0.0
  %5736 = vmatpush1.msra.mxu0 0.0
  %5737 = vmatprep.subr.mxu0 0.0
  %5738 = vmatpush1.msra.mxu0 0.0
  %5739 = vmatprep.subr.mxu0 0.0
  %5740 = vmatpush1.msra.mxu0 0.0
  %5741 = vmatprep.subr.mxu0 0.0
  %5742 = vmatpush1.msra.mxu0 0.0
  %5743 = vmatprep.subr.mxu0 0.0
  %5744 = vmatpush1.msra.mxu0 0.0
  %5745 = vmatprep.subr.mxu0 0.0
  %5746 = vmatpush1.msra.mxu0 0.0
  %5747 = vmatprep.subr.mxu0 0.0
  %5748 = vmatpush1.msra.mxu0 0.0
  %5749 = vmatprep.subr.mxu0 0.0
  %5750 = vmatpush1.msra.mxu0 0.0
  %5751 = vmatprep.subr.mxu0 0.0
  %5752 = vmatpush1.msra.mxu0 0.0
  %5753 = vmatprep.subr.mxu0 0.0
  %5754 = vmatpush1.msra.mxu0 0.0
  %5755 = vmatprep.subr.mxu0 0.0
  %5756 = vmatpush1.msra.mxu0 0.0
  %5757 = vmatprep.subr.mxu0 0.0
  %5758 = vmatpush1.msra.mxu0 0.0
  %5759 = vmatprep.subr.mxu0 0.0
  %5760 = vmatpush1.msra.mxu0 0.0
  %5761 = vmatprep.subr.mxu0 0.0
  %5762 = vmatpush1.msra.mxu0 0.0
  %5763 = vmatprep.subr.mxu0 0.0
  %5764 = vmatpush1.msra.mxu0 0.0
  %5765 = vmatprep.subr.mxu0 0.0
  %5766 = vmatpush1.msra.mxu0 0.0
  %5767 = vmatprep.subr.mxu0 0.0
  %5768 = vmatpush1.msra.mxu0 0.0
  %5769 = vmatprep.subr.mxu0 0.0
  %5770 = vmatpush1.msra.mxu0 0.0
  %5771 = vmatprep.subr.mxu0 0.0
  %5772 = vmatpush1.msra.mxu0 0.0
  %5773 = vmatprep.subr.mxu0 0.0
  %5774 = vmatpush1.msra.mxu0 0.0
  %5775 = vmatprep.subr.mxu0 0.0
  %5776 = vmatpush1.msra.mxu0 0.0
  %5777 = vmatprep.subr.mxu0 0.0
  %5778 = vmatpush1.msra.mxu0 0.0
  %5779 = vmatprep.subr.mxu0 0.0
  %5780 = vmatpush1.msra.mxu0 0.0
  %5781 = vmatprep.subr.mxu0 0.0
  %5782 = vmatpush1.msra.mxu0 0.0
  %5783 = vmatprep.mubr.f32.mxu0 0.0
  %5784 = vmatmul.mubr.f32.gmra.mrb[0].mxu0 %v5672
  %v5785 = vpop.f32.mrb[0].mxu0
  %v5786 = vadd.f32 0.0, %v5785
  %v5787 = vpop.f32.mrb[0].mxu0
  %5788 = vmatprep.mubr.f32.mxu0 0.0
  %5789 = vmatmul.mubr.f32.gmra.mrb[0].mxu0 %v5675
  %v5790 = vpop.f32.mrb[0].mxu0
  %v5791 = vadd.f32 0.0, %v5790
  %v5792 = vpop.f32.mrb[0].mxu0
  %5793 = vmatprep.mubr.f32.mxu0 0.0
  %5794 = vmatmul.mubr.f32.gmra.mrb[0].mxu0 %v5678
  %v5795 = vpop.f32.mrb[0].mxu0
  %v5796 = vadd.f32 0.0, %v5795
  %v5797 = vpop.f32.mrb[0].mxu0
  %5798 = vmatprep.mubr.f32.mxu0 0.0
  %5799 = vmatmul.mubr.f32.gmra.mrb[0].mxu0 %v5681
  %v5800 = vpop.f32.mrb[0].mxu0
  %v5801 = vadd.f32 0.0, %v5800
  %v5802 = vpop.f32.mrb[0].mxu0
  %5803 = vmatprep.mubr.f32.mxu0 0.0
  %5804 = vmatmul.mubr.f32.gmra.mrb[0].mxu0 %v5684
  %v5805 = vpop.f32.mrb[0].mxu0
  %v5806 = vadd.f32 0.0, %v5805
  %v5807 = vpop.f32.mrb[0].mxu0
  %5808 = vmatprep.mubr.f32.mxu0 0.0
  %5809 = vmatmul.mubr.f32.gmra.mrb[0].mxu0 %v5687
  %v5810 = vpop.f32.mrb[0].mxu0
  %v5811 = vadd.f32 0.0, %v5810
  %v5812 = vpop.f32.mrb[0].mxu0
  %5813 = vmatprep.mubr.f32.mxu0 0.0
  %5814 = vmatmul.mubr.f32.gmra.mrb[0].mxu0 %v5690
  %v5815 = vpop.f32.mrb[0].mxu0
  %v5816 = vadd.f32 0.0, %v5815
  %v5817 = vpop.f32.mrb[0].mxu0
  %5818 = vmatprep.mubr.f32.mxu0 0.0
  %5819 = vmatmul.mubr.f32.gmra.mrb[0].mxu0 %v5693
  %v5820 = vpop.f32.mrb[0].mxu0
  %v5821 = vadd.f32 0.0, %v5820
  %v5822 = vpop.f32.mrb[0].mxu0
  %5823 = vmatprep.mubr.f32.mxu0 0.0
  %5824 = vmatmul.mubr.f32.gmra.mrb[0].mxu0 %v5696
  %v5825 = vpop.f32.mrb[0].mxu0
  %v5826 = vadd.f32 0.0, %v5825
  %v5827 = vpop.f32.mrb[0].mxu0
  %5828 = vmatprep.mubr.f32.mxu0 0.0
  %5829 = vmatmul.mubr.f32.gmra.mrb[0].mxu0 %v5699
  %v5830 = vpop.f32.mrb[0].mxu0
  %v5831 = vadd.f32 0.0, %v5830
  %v5832 = vpop.f32.mrb[0].mxu0
  %5833 = vmatprep.mubr.f32.mxu0 0.0
  %5834 = vmatmul.mubr.f32.gmra.mrb[0].mxu0 %v5702
  %v5835 = vpop.f32.mrb[0].mxu0
  %v5836 = vadd.f32 0.0, %v5835
  %v5837 = vpop.f32.mrb[0].mxu0
  %5838 = vmatprep.mubr.f32.mxu0 0.0
  %5839 = vmatmul.mubr.f32.gmra.mrb[0].mxu0 %v5705
  %v5840 = vpop.f32.mrb[0].mxu0
  %v5841 = vadd.f32 0.0, %v5840
  %v5842 = vpop.f32.mrb[0].mxu0
  %5843 = vmatprep.mubr.f32.mxu0 0.0
  %5844 = vmatmul.mubr.f32.gmra.mrb[0].mxu0 %v5708
  %v5845 = vpop.f32.mrb[0].mxu0
  %v5846 = vadd.f32 0.0, %v5845
  %v5847 = vpop.f32.mrb[0].mxu0
  %5848 = vmatprep.mubr.f32.mxu0 0.0
  %5849 = vmatmul.mubr.f32.gmra.mrb[0].mxu0 %v5711
  %v5850 = vpop.f32.mrb[0].mxu0
  %v5851 = vadd.f32 0.0, %v5850
  %v5852 = vpop.f32.mrb[0].mxu0
  %5853 = vmatprep.mubr.f32.mxu0 0.0
  %5854 = vmatmul.mubr.f32.gmra.mrb[0].mxu0 %v5714
  %v5855 = vpop.f32.mrb[0].mxu0
  %v5856 = vadd.f32 0.0, %v5855
  %v5857 = vpop.f32.mrb[0].mxu0
  %5858 = vmatprep.mubr.f32.mxu0 0.0
  %5859 = vmatmul.mubr.f32.gmra.mrb[0].mxu0 %v5717
  %v5860 = vpop.f32.mrb[0].mxu0
  %v5861 = vadd.f32 0.0, %v5860
  %v5862 = vpop.f32.mrb[0].mxu0
  %5863 = vdwg.mxu0
  %v5864 = vadd.f32 %v5630, %v5786
  %v5865 = vadd.f32 %v5631, %v5791
  %v5866 = vadd.f32 %v5632, %v5796
  %v5867 = vadd.f32 %v5633, %v5801
  %v5868 = vadd.f32 %v5634, %v5806
  %v5869 = vadd.f32 %v5635, %v5811
  %v5870 = vadd.f32 %v5636, %v5816
  %v5871 = vadd.f32 %v5637, %v5821
  %v5872 = vadd.f32 %v5638, %v5826
  %v5873 = vadd.f32 %v5639, %v5831
  %v5874 = vadd.f32 %v5640, %v5836
  %v5875 = vadd.f32 %v5641, %v5841
  %v5876 = vadd.f32 %v5642, %v5846
  %v5877 = vadd.f32 %v5643, %v5851
  %v5878 = vadd.f32 %v5644, %v5856
  %v5879 = vadd.f32 %v5645, %v5861
  %v5880 = vld [vmem:[%s5646 + $0x1] sm:$0xff]
  %v5881 = vld [vmem:[%s5646 + $0x11] sm:$0xff]
  %v5882 = vld [vmem:[%s5646 + $0x21] sm:$0xff]
  %v5883 = vld [vmem:[%s5646 + $0x31] sm:$0xff]
  %v5884 = vld [vmem:[%s5646 + $0x41] sm:$0xff]
  %v5885 = vld [vmem:[%s5646 + $0x51] sm:$0xff]
  %v5886 = vld [vmem:[%s5646 + $0x61] sm:$0xff]
  %v5887 = vld [vmem:[%s5646 + $0x71] sm:$0xff]
  %v5888 = vld [vmem:[%s5646 + $0xa1] sm:$0xff]
  %v5889 = vld [vmem:[%s5646 + $0xb1] sm:$0xff]
  %v5890 = vld [vmem:[%s5646 + $0xc1] sm:$0xff]
  %v5891 = vld [vmem:[%s5646 + $0xd1] sm:$0xff]
  %v5892 = vld [vmem:[%s5646 + $0xe1] sm:$0xff]
  %v5893 = vld [vmem:[%s5646 + $0xf1] sm:$0xff]
  %v5894 = vld [vmem:[%s5646 + $0x101] sm:$0xff]
  %v5895 = vld [vmem:[%s5646 + $0x111] sm:$0xff]
  %v5896 = vld [vmem:[%s5 + $0x1c0] sm:$0xff]
  %v5897 = vld [vmem:[%s5 + $0x1c8] sm:$0xff]
  %v5898 = vld [vmem:[%s5 + $0x1d0] sm:$0xff]
  %v5899 = vld [vmem:[%s5 + $0x1d8] sm:$0xff]
  %v5900 = vld [vmem:[%s5 + $0x1e0] sm:$0xff]
  %v5901 = vld [vmem:[%s5 + $0x1e8] sm:$0xff]
  %v5902 = vld [vmem:[%s5 + $0x1f0] sm:$0xff]
  %v5903 = vld [vmem:[%s5 + $0x1f8] sm:$0xff]
  %v5905 = vsel %vm4221, %v5880, 0
  %v5908 = vsel %vm4221, %v5881, 0
  %v5911 = vsel %vm4221, %v5882, 0
  %v5914 = vsel %vm4221, %v5883, 0
  %v5917 = vsel %vm4221, %v5884, 0
  %v5920 = vsel %vm4221, %v5885, 0
  %v5923 = vsel %vm4221, %v5886, 0
  %v5926 = vsel %vm4221, %v5887, 0
  %v5929 = vsel %vm4221, %v5888, 0
  %v5932 = vsel %vm4221, %v5889, 0
  %v5935 = vsel %vm4221, %v5890, 0
  %v5938 = vsel %vm4221, %v5891, 0
  %v5941 = vsel %vm4221, %v5892, 0
  %v5944 = vsel %vm4221, %v5893, 0
  %v5947 = vsel %vm4221, %v5894, 0
  %v5950 = vsel %vm4221, %v5895, 0
  %5952 = vmatprep.subr.mxu0 0.0
  %5953 = vmatpush1.msra.mxu0 %v5896
  %5954 = vmatprep.subr.mxu0 0.0
  %5955 = vmatpush1.msra.mxu0 %v5897
  %5956 = vmatprep.subr.mxu0 0.0
  %5957 = vmatpush1.msra.mxu0 %v5898
  %5958 = vmatprep.subr.mxu0 0.0
  %5959 = vmatpush1.msra.mxu0 %v5899
  %5960 = vmatprep.subr.mxu0 0.0
  %5961 = vmatpush1.msra.mxu0 %v5900
  %5962 = vmatprep.subr.mxu0 0.0
  %5963 = vmatpush1.msra.mxu0 %v5901
  %5964 = vmatprep.subr.mxu0 0.0
  %5965 = vmatpush1.msra.mxu0 %v5902
  %5966 = vmatprep.subr.mxu0 0.0
  %5967 = vmatpush1.msra.mxu0 %v5903
  %5968 = vmatprep.subr.mxu0 0.0
  %5969 = vmatpush1.msra.mxu0 0.0
  %5970 = vmatprep.subr.mxu0 0.0
  %5971 = vmatpush1.msra.mxu0 0.0
  %5972 = vmatprep.subr.mxu0 0.0
  %5973 = vmatpush1.msra.mxu0 0.0
  %5974 = vmatprep.subr.mxu0 0.0
  %5975 = vmatpush1.msra.mxu0 0.0
  %5976 = vmatprep.subr.mxu0 0.0
  %5977 = vmatpush1.msra.mxu0 0.0
  %5978 = vmatprep.subr.mxu0 0.0
  %5979 = vmatpush1.msra.mxu0 0.0
  %5980 = vmatprep.subr.mxu0 0.0
  %5981 = vmatpush1.msra.mxu0 0.0
  %5982 = vmatprep.subr.mxu0 0.0
  %5983 = vmatpush1.msra.mxu0 0.0
  %5984 = vmatprep.subr.mxu0 0.0
  %5985 = vmatpush1.msra.mxu0 0.0
  %5986 = vmatprep.subr.mxu0 0.0
  %5987 = vmatpush1.msra.mxu0 0.0
  %5988 = vmatprep.subr.mxu0 0.0
  %5989 = vmatpush1.msra.mxu0 0.0
  %5990 = vmatprep.subr.mxu0 0.0
  %5991 = vmatpush1.msra.mxu0 0.0
  %5992 = vmatprep.subr.mxu0 0.0
  %5993 = vmatpush1.msra.mxu0 0.0
  %5994 = vmatprep.subr.mxu0 0.0
  %5995 = vmatpush1.msra.mxu0 0.0
  %5996 = vmatprep.subr.mxu0 0.0
  %5997 = vmatpush1.msra.mxu0 0.0
  %5998 = vmatprep.subr.mxu0 0.0
  %5999 = vmatpush1.msra.mxu0 0.0
  %6000 = vmatprep.subr.mxu0 0.0
  %6001 = vmatpush1.msra.mxu0 0.0
  %6002 = vmatprep.subr.mxu0 0.0
  %6003 = vmatpush1.msra.mxu0 0.0
  %6004 = vmatprep.subr.mxu0 0.0
  %6005 = vmatpush1.msra.mxu0 0.0
  %6006 = vmatprep.subr.mxu0 0.0
  %6007 = vmatpush1.msra.mxu0 0.0
  %6008 = vmatprep.subr.mxu0 0.0
  %6009 = vmatpush1.msra.mxu0 0.0
  %6010 = vmatprep.subr.mxu0 0.0
  %6011 = vmatpush1.msra.mxu0 0.0
  %6012 = vmatprep.subr.mxu0 0.0
  %6013 = vmatpush1.msra.mxu0 0.0
  %6014 = vmatprep.subr.mxu0 0.0
  %6015 = vmatpush1.msra.mxu0 0.0
  %6016 = vmatprep.mubr.f32.mxu0 0.0
  %6017 = vmatmul.mubr.f32.gmra.mrb[0].mxu0 %v5905
  %v6018 = vpop.f32.mrb[0].mxu0
  %v6019 = vadd.f32 0.0, %v6018
  %v6020 = vpop.f32.mrb[0].mxu0
  %6021 = vmatprep.mubr.f32.mxu0 0.0
  %6022 = vmatmul.mubr.f32.gmra.mrb[0].mxu0 %v5908
  %v6023 = vpop.f32.mrb[0].mxu0
  %v6024 = vadd.f32 0.0, %v6023
  %v6025 = vpop.f32.mrb[0].mxu0
  %6026 = vmatprep.mubr.f32.mxu0 0.0
  %6027 = vmatmul.mubr.f32.gmra.mrb[0].mxu0 %v5911
  %v6028 = vpop.f32.mrb[0].mxu0
  %v6029 = vadd.f32 0.0, %v6028
  %v6030 = vpop.f32.mrb[0].mxu0
  %6031 = vmatprep.mubr.f32.mxu0 0.0
  %6032 = vmatmul.mubr.f32.gmra.mrb[0].mxu0 %v5914
  %v6033 = vpop.f32.mrb[0].mxu0
  %v6034 = vadd.f32 0.0, %v6033
  %v6035 = vpop.f32.mrb[0].mxu0
  %6036 = vmatprep.mubr.f32.mxu0 0.0
  %6037 = vmatmul.mubr.f32.gmra.mrb[0].mxu0 %v5917
  %v6038 = vpop.f32.mrb[0].mxu0
  %v6039 = vadd.f32 0.0, %v6038
  %v6040 = vpop.f32.mrb[0].mxu0
  %6041 = vmatprep.mubr.f32.mxu0 0.0
  %6042 = vmatmul.mubr.f32.gmra.mrb[0].mxu0 %v5920
  %v6043 = vpop.f32.mrb[0].mxu0
  %v6044 = vadd.f32 0.0, %v6043
  %v6045 = vpop.f32.mrb[0].mxu0
  %6046 = vmatprep.mubr.f32.mxu0 0.0
  %6047 = vmatmul.mubr.f32.gmra.mrb[0].mxu0 %v5923
  %v6048 = vpop.f32.mrb[0].mxu0
  %v6049 = vadd.f32 0.0, %v6048
  %v6050 = vpop.f32.mrb[0].mxu0
  %6051 = vmatprep.mubr.f32.mxu0 0.0
  %6052 = vmatmul.mubr.f32.gmra.mrb[0].mxu0 %v5926
  %v6053 = vpop.f32.mrb[0].mxu0
  %v6054 = vadd.f32 0.0, %v6053
  %v6055 = vpop.f32.mrb[0].mxu0
  %6056 = vmatprep.mubr.f32.mxu0 0.0
  %6057 = vmatmul.mubr.f32.gmra.mrb[0].mxu0 %v5929
  %v6058 = vpop.f32.mrb[0].mxu0
  %v6059 = vadd.f32 0.0, %v6058
  %v6060 = vpop.f32.mrb[0].mxu0
  %6061 = vmatprep.mubr.f32.mxu0 0.0
  %6062 = vmatmul.mubr.f32.gmra.mrb[0].mxu0 %v5932
  %v6063 = vpop.f32.mrb[0].mxu0
  %v6064 = vadd.f32 0.0, %v6063
  %v6065 = vpop.f32.mrb[0].mxu0
  %6066 = vmatprep.mubr.f32.mxu0 0.0
  %6067 = vmatmul.mubr.f32.gmra.mrb[0].mxu0 %v5935
  %v6068 = vpop.f32.mrb[0].mxu0
  %v6069 = vadd.f32 0.0, %v6068
  %v6070 = vpop.f32.mrb[0].mxu0
  %6071 = vmatprep.mubr.f32.mxu0 0.0
  %6072 = vmatmul.mubr.f32.gmra.mrb[0].mxu0 %v5938
  %v6073 = vpop.f32.mrb[0].mxu0
  %v6074 = vadd.f32 0.0, %v6073
  %v6075 = vpop.f32.mrb[0].mxu0
  %6076 = vmatprep.mubr.f32.mxu0 0.0
  %6077 = vmatmul.mubr.f32.gmra.mrb[0].mxu0 %v5941
  %v6078 = vpop.f32.mrb[0].mxu0
  %v6079 = vadd.f32 0.0, %v6078
  %v6080 = vpop.f32.mrb[0].mxu0
  %6081 = vmatprep.mubr.f32.mxu0 0.0
  %6082 = vmatmul.mubr.f32.gmra.mrb[0].mxu0 %v5944
  %v6083 = vpop.f32.mrb[0].mxu0
  %v6084 = vadd.f32 0.0, %v6083
  %v6085 = vpop.f32.mrb[0].mxu0
  %6086 = vmatprep.mubr.f32.mxu0 0.0
  %6087 = vmatmul.mubr.f32.gmra.mrb[0].mxu0 %v5947
  %v6088 = vpop.f32.mrb[0].mxu0
  %v6089 = vadd.f32 0.0, %v6088
  %v6090 = vpop.f32.mrb[0].mxu0
  %6091 = vmatprep.mubr.f32.mxu0 0.0
  %6092 = vmatmul.mubr.f32.gmra.mrb[0].mxu0 %v5950
  %v6093 = vpop.f32.mrb[0].mxu0
  %v6094 = vadd.f32 0.0, %v6093
  %v6095 = vpop.f32.mrb[0].mxu0
  %6096 = vdwg.mxu0
  %v6097 = vadd.f32 %v5864, %v6019
  %v6098 = vadd.f32 %v5865, %v6024
  %v6099 = vadd.f32 %v5866, %v6029
  %v6100 = vadd.f32 %v5867, %v6034
  %v6101 = vadd.f32 %v5868, %v6039
  %v6102 = vadd.f32 %v5869, %v6044
  %v6103 = vadd.f32 %v5870, %v6049
  %v6104 = vadd.f32 %v5871, %v6054
  %v6105 = vadd.f32 %v5872, %v6059
  %v6106 = vadd.f32 %v5873, %v6064
  %v6107 = vadd.f32 %v5874, %v6069
  %v6108 = vadd.f32 %v5875, %v6074
  %v6109 = vadd.f32 %v5876, %v6079
  %v6110 = vadd.f32 %v5877, %v6084
  %v6111 = vadd.f32 %v5878, %v6089
  %v6112 = vadd.f32 %v5879, %v6094
  %v6113 = vld [vmem:[%s5646 + $0x2] sm:$0xff]
  %v6114 = vld [vmem:[%s5646 + $0x12] sm:$0xff]
  %v6115 = vld [vmem:[%s5646 + $0x22] sm:$0xff]
  %v6116 = vld [vmem:[%s5646 + $0x32] sm:$0xff]
  %v6117 = vld [vmem:[%s5646 + $0x42] sm:$0xff]
  %v6118 = vld [vmem:[%s5646 + $0x52] sm:$0xff]
  %v6119 = vld [vmem:[%s5646 + $0x62] sm:$0xff]
  %v6120 = vld [vmem:[%s5646 + $0x72] sm:$0xff]
  %v6121 = vld [vmem:[%s5646 + $0xa2] sm:$0xff]
  %v6122 = vld [vmem:[%s5646 + $0xb2] sm:$0xff]
  %v6123 = vld [vmem:[%s5646 + $0xc2] sm:$0xff]
  %v6124 = vld [vmem:[%s5646 + $0xd2] sm:$0xff]
  %v6125 = vld [vmem:[%s5646 + $0xe2] sm:$0xff]
  %v6126 = vld [vmem:[%s5646 + $0xf2] sm:$0xff]
  %v6127 = vld [vmem:[%s5646 + $0x102] sm:$0xff]
  %v6128 = vld [vmem:[%s5646 + $0x112] sm:$0xff]
  %v6129 = vld [vmem:[%s5 + $0x200] sm:$0xff]
  %v6130 = vld [vmem:[%s5 + $0x208] sm:$0xff]
  %v6131 = vld [vmem:[%s5 + $0x210] sm:$0xff]
  %v6132 = vld [vmem:[%s5 + $0x218] sm:$0xff]
  %v6133 = vld [vmem:[%s5 + $0x220] sm:$0xff]
  %v6134 = vld [vmem:[%s5 + $0x228] sm:$0xff]
  %v6135 = vld [vmem:[%s5 + $0x230] sm:$0xff]
  %v6136 = vld [vmem:[%s5 + $0x238] sm:$0xff]
  %v6138 = vsel %vm4221, %v6113, 0
  %v6141 = vsel %vm4221, %v6114, 0
  %v6144 = vsel %vm4221, %v6115, 0
  %v6147 = vsel %vm4221, %v6116, 0
  %v6150 = vsel %vm4221, %v6117, 0
  %v6153 = vsel %vm4221, %v6118, 0
  %v6156 = vsel %vm4221, %v6119, 0
  %v6159 = vsel %vm4221, %v6120, 0
  %v6162 = vsel %vm4221, %v6121, 0
  %v6165 = vsel %vm4221, %v6122, 0
  %v6168 = vsel %vm4221, %v6123, 0
  %v6171 = vsel %vm4221, %v6124, 0
  %v6174 = vsel %vm4221, %v6125, 0
  %v6177 = vsel %vm4221, %v6126, 0
  %v6180 = vsel %vm4221, %v6127, 0
  %v6183 = vsel %vm4221, %v6128, 0
  %6185 = vmatprep.subr.mxu0 0.0
  %6186 = vmatpush1.msra.mxu0 %v6129
  %6187 = vmatprep.subr.mxu0 0.0
  %6188 = vmatpush1.msra.mxu0 %v6130
  %6189 = vmatprep.subr.mxu0 0.0
  %6190 = vmatpush1.msra.mxu0 %v6131
  %6191 = vmatprep.subr.mxu0 0.0
  %6192 = vmatpush1.msra.mxu0 %v6132
  %6193 = vmatprep.subr.mxu0 0.0
  %6194 = vmatpush1.msra.mxu0 %v6133
  %6195 = vmatprep.subr.mxu0 0.0
  %6196 = vmatpush1.msra.mxu0 %v6134
  %6197 = vmatprep.subr.mxu0 0.0
  %6198 = vmatpush1.msra.mxu0 %v6135
  %6199 = vmatprep.subr.mxu0 0.0
  %6200 = vmatpush1.msra.mxu0 %v6136
  %6201 = vmatprep.subr.mxu0 0.0
  %6202 = vmatpush1.msra.mxu0 0.0
  %6203 = vmatprep.subr.mxu0 0.0
  %6204 = vmatpush1.msra.mxu0 0.0
  %6205 = vmatprep.subr.mxu0 0.0
  %6206 = vmatpush1.msra.mxu0 0.0
  %6207 = vmatprep.subr.mxu0 0.0
  %6208 = vmatpush1.msra.mxu0 0.0
  %6209 = vmatprep.subr.mxu0 0.0
  %6210 = vmatpush1.msra.mxu0 0.0
  %6211 = vmatprep.subr.mxu0 0.0
  %6212 = vmatpush1.msra.mxu0 0.0
  %6213 = vmatprep.subr.mxu0 0.0
  %6214 = vmatpush1.msra.mxu0 0.0
  %6215 = vmatprep.subr.mxu0 0.0
  %6216 = vmatpush1.msra.mxu0 0.0
  %6217 = vmatprep.subr.mxu0 0.0
  %6218 = vmatpush1.msra.mxu0 0.0
  %6219 = vmatprep.subr.mxu0 0.0
  %6220 = vmatpush1.msra.mxu0 0.0
  %6221 = vmatprep.subr.mxu0 0.0
  %6222 = vmatpush1.msra.mxu0 0.0
  %6223 = vmatprep.subr.mxu0 0.0
  %6224 = vmatpush1.msra.mxu0 0.0
  %6225 = vmatprep.subr.mxu0 0.0
  %6226 = vmatpush1.msra.mxu0 0.0
  %6227 = vmatprep.subr.mxu0 0.0
  %6228 = vmatpush1.msra.mxu0 0.0
  %6229 = vmatprep.subr.mxu0 0.0
  %6230 = vmatpush1.msra.mxu0 0.0
  %6231 = vmatprep.subr.mxu0 0.0
  %6232 = vmatpush1.msra.mxu0 0.0
  %6233 = vmatprep.subr.mxu0 0.0
  %6234 = vmatpush1.msra.mxu0 0.0
  %6235 = vmatprep.subr.mxu0 0.0
  %6236 = vmatpush1.msra.mxu0 0.0
  %6237 = vmatprep.subr.mxu0 0.0
  %6238 = vmatpush1.msra.mxu0 0.0
  %6239 = vmatprep.subr.mxu0 0.0
  %6240 = vmatpush1.msra.mxu0 0.0
  %6241 = vmatprep.subr.mxu0 0.0
  %6242 = vmatpush1.msra.mxu0 0.0
  %6243 = vmatprep.subr.mxu0 0.0
  %6244 = vmatpush1.msra.mxu0 0.0
  %6245 = vmatprep.subr.mxu0 0.0
  %6246 = vmatpush1.msra.mxu0 0.0
  %6247 = vmatprep.subr.mxu0 0.0
  %6248 = vmatpush1.msra.mxu0 0.0
  %6249 = vmatprep.mubr.f32.mxu0 0.0
  %6250 = vmatmul.mubr.f32.gmra.mrb[0].mxu0 %v6138
  %v6251 = vpop.f32.mrb[0].mxu0
  %v6252 = vadd.f32 0.0, %v6251
  %v6253 = vpop.f32.mrb[0].mxu0
  %6254 = vmatprep.mubr.f32.mxu0 0.0
  %6255 = vmatmul.mubr.f32.gmra.mrb[0].mxu0 %v6141
  %v6256 = vpop.f32.mrb[0].mxu0
  %v6257 = vadd.f32 0.0, %v6256
  %v6258 = vpop.f32.mrb[0].mxu0
  %6259 = vmatprep.mubr.f32.mxu0 0.0
  %6260 = vmatmul.mubr.f32.gmra.mrb[0].mxu0 %v6144
  %v6261 = vpop.f32.mrb[0].mxu0
  %v6262 = vadd.f32 0.0, %v6261
  %v6263 = vpop.f32.mrb[0].mxu0
  %6264 = vmatprep.mubr.f32.mxu0 0.0
  %6265 = vmatmul.mubr.f32.gmra.mrb[0].mxu0 %v6147
  %v6266 = vpop.f32.mrb[0].mxu0
  %v6267 = vadd.f32 0.0, %v6266
  %v6268 = vpop.f32.mrb[0].mxu0
  %6269 = vmatprep.mubr.f32.mxu0 0.0
  %6270 = vmatmul.mubr.f32.gmra.mrb[0].mxu0 %v6150
  %v6271 = vpop.f32.mrb[0].mxu0
  %v6272 = vadd.f32 0.0, %v6271
  %v6273 = vpop.f32.mrb[0].mxu0
  %6274 = vmatprep.mubr.f32.mxu0 0.0
  %6275 = vmatmul.mubr.f32.gmra.mrb[0].mxu0 %v6153
  %v6276 = vpop.f32.mrb[0].mxu0
  %v6277 = vadd.f32 0.0, %v6276
  %v6278 = vpop.f32.mrb[0].mxu0
  %6279 = vmatprep.mubr.f32.mxu0 0.0
  %6280 = vmatmul.mubr.f32.gmra.mrb[0].mxu0 %v6156
  %v6281 = vpop.f32.mrb[0].mxu0
  %v6282 = vadd.f32 0.0, %v6281
  %v6283 = vpop.f32.mrb[0].mxu0
  %6284 = vmatprep.mubr.f32.mxu0 0.0
  %6285 = vmatmul.mubr.f32.gmra.mrb[0].mxu0 %v6159
  %v6286 = vpop.f32.mrb[0].mxu0
  %v6287 = vadd.f32 0.0, %v6286
  %v6288 = vpop.f32.mrb[0].mxu0
  %6289 = vmatprep.mubr.f32.mxu0 0.0
  %6290 = vmatmul.mubr.f32.gmra.mrb[0].mxu0 %v6162
  %v6291 = vpop.f32.mrb[0].mxu0
  %v6292 = vadd.f32 0.0, %v6291
  %v6293 = vpop.f32.mrb[0].mxu0
  %6294 = vmatprep.mubr.f32.mxu0 0.0
  %6295 = vmatmul.mubr.f32.gmra.mrb[0].mxu0 %v6165
  %v6296 = vpop.f32.mrb[0].mxu0
  %v6297 = vadd.f32 0.0, %v6296
  %v6298 = vpop.f32.mrb[0].mxu0
  %6299 = vmatprep.mubr.f32.mxu0 0.0
  %6300 = vmatmul.mubr.f32.gmra.mrb[0].mxu0 %v6168
  %v6301 = vpop.f32.mrb[0].mxu0
  %v6302 = vadd.f32 0.0, %v6301
  %v6303 = vpop.f32.mrb[0].mxu0
  %6304 = vmatprep.mubr.f32.mxu0 0.0
  %6305 = vmatmul.mubr.f32.gmra.mrb[0].mxu0 %v6171
  %v6306 = vpop.f32.mrb[0].mxu0
  %v6307 = vadd.f32 0.0, %v6306
  %v6308 = vpop.f32.mrb[0].mxu0
  %6309 = vmatprep.mubr.f32.mxu0 0.0
  %6310 = vmatmul.mubr.f32.gmra.mrb[0].mxu0 %v6174
  %v6311 = vpop.f32.mrb[0].mxu0
  %v6312 = vadd.f32 0.0, %v6311
  %v6313 = vpop.f32.mrb[0].mxu0
  %6314 = vmatprep.mubr.f32.mxu0 0.0
  %6315 = vmatmul.mubr.f32.gmra.mrb[0].mxu0 %v6177
  %v6316 = vpop.f32.mrb[0].mxu0
  %v6317 = vadd.f32 0.0, %v6316
  %v6318 = vpop.f32.mrb[0].mxu0
  %6319 = vmatprep.mubr.f32.mxu0 0.0
  %6320 = vmatmul.mubr.f32.gmra.mrb[0].mxu0 %v6180
  %v6321 = vpop.f32.mrb[0].mxu0
  %v6322 = vadd.f32 0.0, %v6321
  %v6323 = vpop.f32.mrb[0].mxu0
  %6324 = vmatprep.mubr.f32.mxu0 0.0
  %6325 = vmatmul.mubr.f32.gmra.mrb[0].mxu0 %v6183
  %v6326 = vpop.f32.mrb[0].mxu0
  %v6327 = vadd.f32 0.0, %v6326
  %v6328 = vpop.f32.mrb[0].mxu0
  %6329 = vdwg.mxu0
  %v6330 = vadd.f32 %v6097, %v6252
  %v6331 = vadd.f32 %v6098, %v6257
  %v6332 = vadd.f32 %v6099, %v6262
  %v6333 = vadd.f32 %v6100, %v6267
  %v6334 = vadd.f32 %v6101, %v6272
  %v6335 = vadd.f32 %v6102, %v6277
  %v6336 = vadd.f32 %v6103, %v6282
  %v6337 = vadd.f32 %v6104, %v6287
  %v6338 = vadd.f32 %v6105, %v6292
  %v6339 = vadd.f32 %v6106, %v6297
  %v6340 = vadd.f32 %v6107, %v6302
  %v6341 = vadd.f32 %v6108, %v6307
  %v6342 = vadd.f32 %v6109, %v6312
  %v6343 = vadd.f32 %v6110, %v6317
  %v6344 = vadd.f32 %v6111, %v6322
  %v6345 = vadd.f32 %v6112, %v6327
  %v6346 = vld [vmem:[%s6] sm:$0x1]
  %v6348 = vlaneseq
  %v6349 = vshrl.u32 %v6348, 7
  %v6350 = vsub.s32 0, %v6349
  %v6351 = vrot.slane %v6346, %v6350
  %v6353 = vadd.f32 %v6330, %v6351
  %v6354 = vadd.f32 %v6331, %v6351
  %v6355 = vadd.f32 %v6332, %v6351
  %v6356 = vadd.f32 %v6333, %v6351
  %v6357 = vadd.f32 %v6334, %v6351
  %v6358 = vadd.f32 %v6335, %v6351
  %v6359 = vadd.f32 %v6336, %v6351
  %v6360 = vadd.f32 %v6337, %v6351
  %v6361 = vadd.f32 %v6338, %v6351
  %v6362 = vadd.f32 %v6339, %v6351
  %v6363 = vadd.f32 %v6340, %v6351
  %v6364 = vadd.f32 %v6341, %v6351
  %v6365 = vadd.f32 %v6342, %v6351
  %v6366 = vadd.f32 %v6343, %v6351
  %v6367 = vadd.f32 %v6344, %v6351
  %v6368 = vadd.f32 %v6345, %v6351
  %v6369 = vmax.f32 %v6353, 0.0
  %v6370 = vmax.f32 %v6354, 0.0
  %v6371 = vmax.f32 %v6355, 0.0
  %v6372 = vmax.f32 %v6356, 0.0
  %v6373 = vmax.f32 %v6357, 0.0
  %v6374 = vmax.f32 %v6358, 0.0
  %v6375 = vmax.f32 %v6359, 0.0
  %v6376 = vmax.f32 %v6360, 0.0
  %v6377 = vmax.f32 %v6361, 0.0
  %v6378 = vmax.f32 %v6362, 0.0
  %v6379 = vmax.f32 %v6363, 0.0
  %v6380 = vmax.f32 %v6364, 0.0
  %v6381 = vmax.f32 %v6365, 0.0
  %v6382 = vmax.f32 %v6366, 0.0
  %v6383 = vmax.f32 %v6367, 0.0
  %v6384 = vmax.f32 %v6368, 0.0
  %v6385 = vld [vmem:[%s7] sm:$0xff]
  %v6386 = vld [vmem:[%s7 + $0x8] sm:$0xff]
  %v6387 = vld [vmem:[%s7 + $0x10] sm:$0xff]
  %v6388 = vld [vmem:[%s7 + $0x18] sm:$0xff]
  %v6389 = vld [vmem:[%s7 + $0x20] sm:$0xff]
  %v6390 = vld [vmem:[%s7 + $0x28] sm:$0xff]
  %v6391 = vld [vmem:[%s7 + $0x30] sm:$0xff]
  %v6392 = vld [vmem:[%s7 + $0x38] sm:$0xff]
  %v6393 = vld [vmem:[%s7 + $0x40] sm:$0xff]
  %v6394 = vld [vmem:[%s7 + $0x48] sm:$0xff]
  %v6395 = vld [vmem:[%s7 + $0x50] sm:$0xff]
  %v6396 = vld [vmem:[%s7 + $0x58] sm:$0xff]
  %v6397 = vld [vmem:[%s7 + $0x60] sm:$0xff]
  %v6398 = vld [vmem:[%s7 + $0x68] sm:$0xff]
  %v6399 = vld [vmem:[%s7 + $0x70] sm:$0xff]
  %v6400 = vld [vmem:[%s7 + $0x78] sm:$0xff]
  %v6401 = vld [vmem:[%s8] sm:$0x1]
  %v6403 = vlaneseq
  %v6404 = vshrl.u32 %v6403, 7
  %v6405 = vsub.s32 0, %v6404
  %v6406 = vrot.slane %v6401, %v6405
  %6408 = vmatprep.subr.mxu0 0.0
  %6409 = vmatpush1.msra.mxu0 %v6385
  %6410 = vmatprep.subr.mxu0 0.0
  %6411 = vmatpush1.msra.mxu0 %v6386
  %6412 = vmatprep.subr.mxu0 0.0
  %6413 = vmatpush1.msra.mxu0 %v6387
  %6414 = vmatprep.subr.mxu0 0.0
  %6415 = vmatpush1.msra.mxu0 %v6388
  %6416 = vmatprep.subr.mxu0 0.0
  %6417 = vmatpush1.msra.mxu0 %v6389
  %6418 = vmatprep.subr.mxu0 0.0
  %6419 = vmatpush1.msra.mxu0 %v6390
  %6420 = vmatprep.subr.mxu0 0.0
  %6421 = vmatpush1.msra.mxu0 %v6391
  %6422 = vmatprep.subr.mxu0 0.0
  %6423 = vmatpush1.msra.mxu0 %v6392
  %6424 = vmatprep.subr.mxu0 0.0
  %6425 = vmatpush1.msra.mxu0 %v6393
  %6426 = vmatprep.subr.mxu0 0.0
  %6427 = vmatpush1.msra.mxu0 %v6394
  %6428 = vmatprep.subr.mxu0 0.0
  %6429 = vmatpush1.msra.mxu0 %v6395
  %6430 = vmatprep.subr.mxu0 0.0
  %6431 = vmatpush1.msra.mxu0 %v6396
  %6432 = vmatprep.subr.mxu0 0.0
  %6433 = vmatpush1.msra.mxu0 %v6397
  %6434 = vmatprep.subr.mxu0 0.0
  %6435 = vmatpush1.msra.mxu0 %v6398
  %6436 = vmatprep.subr.mxu0 0.0
  %6437 = vmatpush1.msra.mxu0 %v6399
  %6438 = vmatprep.subr.mxu0 0.0
  %6439 = vmatpush1.msra.mxu0 %v6400
  %6440 = vmatprep.subr.mxu0 0.0
  %6441 = vmatpush1.msra.mxu0 0.0
  %6442 = vmatprep.subr.mxu0 0.0
  %6443 = vmatpush1.msra.mxu0 0.0
  %6444 = vmatprep.subr.mxu0 0.0
  %6445 = vmatpush1.msra.mxu0 0.0
  %6446 = vmatprep.subr.mxu0 0.0
  %6447 = vmatpush1.msra.mxu0 0.0
  %6448 = vmatprep.subr.mxu0 0.0
  %6449 = vmatpush1.msra.mxu0 0.0
  %6450 = vmatprep.subr.mxu0 0.0
  %6451 = vmatpush1.msra.mxu0 0.0
  %6452 = vmatprep.subr.mxu0 0.0
  %6453 = vmatpush1.msra.mxu0 0.0
  %6454 = vmatprep.subr.mxu0 0.0
  %6455 = vmatpush1.msra.mxu0 0.0
  %6456 = vmatprep.subr.mxu0 0.0
  %6457 = vmatpush1.msra.mxu0 0.0
  %6458 = vmatprep.subr.mxu0 0.0
  %6459 = vmatpush1.msra.mxu0 0.0
  %6460 = vmatprep.subr.mxu0 0.0
  %6461 = vmatpush1.msra.mxu0 0.0
  %6462 = vmatprep.subr.mxu0 0.0
  %6463 = vmatpush1.msra.mxu0 0.0
  %6464 = vmatprep.subr.mxu0 0.0
  %6465 = vmatpush1.msra.mxu0 0.0
  %6466 = vmatprep.subr.mxu0 0.0
  %6467 = vmatpush1.msra.mxu0 0.0
  %6468 = vmatprep.subr.mxu0 0.0
  %6469 = vmatpush1.msra.mxu0 0.0
  %6470 = vmatprep.subr.mxu0 0.0
  %6471 = vmatpush1.msra.mxu0 0.0
  %6472 = vmatprep.mubr.f32.mxu0 0.0
  %6473 = vmatmul.mubr.f32.gmra.mrb[0].mxu0 %v6369
  %v6474 = vpop.f32.mrb[0].mxu0
  %v6475 = vadd.f32 %v6406, %v6474
  %v6476 = vpop.f32.mrb[0].mxu0
  %6477 = vmatprep.mubr.f32.mxu0 0.0
  %6478 = vmatmul.mubr.f32.gmra.mrb[0].mxu0 %v6370
  %v6479 = vpop.f32.mrb[0].mxu0
  %v6480 = vadd.f32 %v6406, %v6479
  %v6481 = vpop.f32.mrb[0].mxu0
  %6482 = vmatprep.mubr.f32.mxu0 0.0
  %6483 = vmatmul.mubr.f32.gmra.mrb[0].mxu0 %v6371
  %v6484 = vpop.f32.mrb[0].mxu0
  %v6485 = vadd.f32 %v6406, %v6484
  %v6486 = vpop.f32.mrb[0].mxu0
  %6487 = vmatprep.mubr.f32.mxu0 0.0
  %6488 = vmatmul.mubr.f32.gmra.mrb[0].mxu0 %v6372
  %v6489 = vpop.f32.mrb[0].mxu0
  %v6490 = vadd.f32 %v6406, %v6489
  %v6491 = vpop.f32.mrb[0].mxu0
  %6492 = vmatprep.mubr.f32.mxu0 0.0
  %6493 = vmatmul.mubr.f32.gmra.mrb[0].mxu0 %v6373
  %v6494 = vpop.f32.mrb[0].mxu0
  %v6495 = vadd.f32 %v6406, %v6494
  %v6496 = vpop.f32.mrb[0].mxu0
  %6497 = vmatprep.mubr.f32.mxu0 0.0
  %6498 = vmatmul.mubr.f32.gmra.mrb[0].mxu0 %v6374
  %v6499 = vpop.f32.mrb[0].mxu0
  %v6500 = vadd.f32 %v6406, %v6499
  %v6501 = vpop.f32.mrb[0].mxu0
  %6502 = vmatprep.mubr.f32.mxu0 0.0
  %6503 = vmatmul.mubr.f32.gmra.mrb[0].mxu0 %v6375
  %v6504 = vpop.f32.mrb[0].mxu0
  %v6505 = vadd.f32 %v6406, %v6504
  %v6506 = vpop.f32.mrb[0].mxu0
  %6507 = vmatprep.mubr.f32.mxu0 0.0
  %6508 = vmatmul.mubr.f32.gmra.mrb[0].mxu0 %v6376
  %v6509 = vpop.f32.mrb[0].mxu0
  %v6510 = vadd.f32 %v6406, %v6509
  %v6511 = vpop.f32.mrb[0].mxu0
  %6512 = vmatprep.mubr.f32.mxu0 0.0
  %6513 = vmatmul.mubr.f32.gmra.mrb[0].mxu0 %v6377
  %v6514 = vpop.f32.mrb[0].mxu0
  %v6515 = vadd.f32 %v6406, %v6514
  %v6516 = vpop.f32.mrb[0].mxu0
  %6517 = vmatprep.mubr.f32.mxu0 0.0
  %6518 = vmatmul.mubr.f32.gmra.mrb[0].mxu0 %v6378
  %v6519 = vpop.f32.mrb[0].mxu0
  %v6520 = vadd.f32 %v6406, %v6519
  %v6521 = vpop.f32.mrb[0].mxu0
  %6522 = vmatprep.mubr.f32.mxu0 0.0
  %6523 = vmatmul.mubr.f32.gmra.mrb[0].mxu0 %v6379
  %v6524 = vpop.f32.mrb[0].mxu0
  %v6525 = vadd.f32 %v6406, %v6524
  %v6526 = vpop.f32.mrb[0].mxu0
  %6527 = vmatprep.mubr.f32.mxu0 0.0
  %6528 = vmatmul.mubr.f32.gmra.mrb[0].mxu0 %v6380
  %v6529 = vpop.f32.mrb[0].mxu0
  %v6530 = vadd.f32 %v6406, %v6529
  %v6531 = vpop.f32.mrb[0].mxu0
  %6532 = vmatprep.mubr.f32.mxu0 0.0
  %6533 = vmatmul.mubr.f32.gmra.mrb[0].mxu0 %v6381
  %v6534 = vpop.f32.mrb[0].mxu0
  %v6535 = vadd.f32 %v6406, %v6534
  %v6536 = vpop.f32.mrb[0].mxu0
  %6537 = vmatprep.mubr.f32.mxu0 0.0
  %6538 = vmatmul.mubr.f32.gmra.mrb[0].mxu0 %v6382
  %v6539 = vpop.f32.mrb[0].mxu0
  %v6540 = vadd.f32 %v6406, %v6539
  %v6541 = vpop.f32.mrb[0].mxu0
  %6542 = vmatprep.mubr.f32.mxu0 0.0
  %6543 = vmatmul.mubr.f32.gmra.mrb[0].mxu0 %v6383
  %v6544 = vpop.f32.mrb[0].mxu0
  %v6545 = vadd.f32 %v6406, %v6544
  %v6546 = vpop.f32.mrb[0].mxu0
  %6547 = vmatprep.mubr.f32.mxu0 0.0
  %6548 = vmatmul.mubr.f32.gmra.mrb[0].mxu0 %v6384
  %v6549 = vpop.f32.mrb[0].mxu0
  %v6550 = vadd.f32 %v6406, %v6549
  %v6551 = vpop.f32.mrb[0].mxu0
  %6552 = vdwg.mxu0
  %v6553 = vmax.f32 %v6475, 0.0
  %v6554 = vmax.f32 %v6480, 0.0
  %v6555 = vmax.f32 %v6485, 0.0
  %v6556 = vmax.f32 %v6490, 0.0
  %v6557 = vmax.f32 %v6495, 0.0
  %v6558 = vmax.f32 %v6500, 0.0
  %v6559 = vmax.f32 %v6505, 0.0
  %v6560 = vmax.f32 %v6510, 0.0
  %v6561 = vmax.f32 %v6515, 0.0
  %v6562 = vmax.f32 %v6520, 0.0
  %v6563 = vmax.f32 %v6525, 0.0
  %v6564 = vmax.f32 %v6530, 0.0
  %v6565 = vmax.f32 %v6535, 0.0
  %v6566 = vmax.f32 %v6540, 0.0
  %v6567 = vmax.f32 %v6545, 0.0
  %v6568 = vmax.f32 %v6550, 0.0
  %6577 = vrot.lane.b32.xlu0 %v6561, 1
  %v6578 = vpop.permute.xlu0 %6577
  %6579 = vrot.lane.b32.xlu0 %v6562, 1
  %v6580 = vpop.permute.xlu0 %6579
  %6581 = vrot.lane.b32.xlu0 %v6563, 1
  %v6582 = vpop.permute.xlu0 %6581
  %6583 = vrot.lane.b32.xlu0 %v6564, 1
  %v6584 = vpop.permute.xlu0 %6583
  %6585 = vrot.lane.b32.xlu0 %v6565, 1
  %v6586 = vpop.permute.xlu0 %6585
  %6587 = vrot.lane.b32.xlu0 %v6566, 1
  %v6588 = vpop.permute.xlu0 %6587
  %6589 = vrot.lane.b32.xlu0 %v6567, 1
  %v6590 = vpop.permute.xlu0 %6589
  %6591 = vrot.lane.b32.xlu0 %v6568, 1
  %v6592 = vpop.permute.xlu0 %6591
  %vm6601 = vcmask 7168
  %v6602 = vsel %vm6601, %v6553, %v6578
  %v6603 = vsel %vm6601, %v6554, %v6580
  %v6604 = vsel %vm6601, %v6555, %v6582
  %v6605 = vsel %vm6601, %v6556, %v6584
  %v6606 = vsel %vm6601, %v6557, %v6586
  %v6607 = vsel %vm6601, %v6558, %v6588
  %v6608 = vsel %vm6601, %v6559, %v6590
  %v6609 = vsel %vm6601, %v6560, %v6592
  %6618 = vrot.lane.b32.xlu0 %v6553, 127
  %v6619 = vpop.permute.xlu0 %6618
  %6620 = vrot.lane.b32.xlu0 %v6554, 127
  %v6621 = vpop.permute.xlu0 %6620
  %6622 = vrot.lane.b32.xlu0 %v6555, 127
  %v6623 = vpop.permute.xlu0 %6622
  %6624 = vrot.lane.b32.xlu0 %v6556, 127
  %v6625 = vpop.permute.xlu0 %6624
  %6626 = vrot.lane.b32.xlu0 %v6557, 127
  %v6627 = vpop.permute.xlu0 %6626
  %6628 = vrot.lane.b32.xlu0 %v6558, 127
  %v6629 = vpop.permute.xlu0 %6628
  %6630 = vrot.lane.b32.xlu0 %v6559, 127
  %v6631 = vpop.permute.xlu0 %6630
  %6632 = vrot.lane.b32.xlu0 %v6560, 127
  %v6633 = vpop.permute.xlu0 %6632
  %v6642 = vsel %vm6601, %v6619, %v6561
  %v6643 = vsel %vm6601, %v6621, %v6562
  %v6644 = vsel %vm6601, %v6623, %v6563
  %v6645 = vsel %vm6601, %v6625, %v6564
  %v6646 = vsel %vm6601, %v6627, %v6565
  %v6647 = vsel %vm6601, %v6629, %v6566
  %v6648 = vsel %vm6601, %v6631, %v6567
  %v6649 = vsel %vm6601, %v6633, %v6568
  %v6650 = vld [vmem:[%s9] sm:$0xff]
  %v6651 = vld [vmem:[%s9 + $0x8] sm:$0xff]
  %v6652 = vld [vmem:[%s9 + $0x10] sm:$0xff]
  %v6653 = vld [vmem:[%s9 + $0x18] sm:$0xff]
  %v6654 = vld [vmem:[%s9 + $0x20] sm:$0xff]
  %v6655 = vld [vmem:[%s9 + $0x28] sm:$0xff]
  %v6656 = vld [vmem:[%s9 + $0x30] sm:$0xff]
  %v6657 = vld [vmem:[%s9 + $0x38] sm:$0xff]
  %v6658 = vld [vmem:[%s10] sm:$0xff]
  %v6659 = vld [vmem:[%s10 + $0x8] sm:$0xff]
  %v6660 = vld [vmem:[%s10 + $0x10] sm:$0xff]
  %v6661 = vld [vmem:[%s10 + $0x18] sm:$0xff]
  %v6662 = vld [vmem:[%s10 + $0x20] sm:$0xff]
  %v6663 = vld [vmem:[%s10 + $0x28] sm:$0xff]
  %v6664 = vld [vmem:[%s10 + $0x30] sm:$0xff]
  %v6665 = vld [vmem:[%s10 + $0x38] sm:$0xff]
  %v6667 = vsel %vm4221, %v6658, 0
  %v6670 = vsel %vm4221, %v6659, 0
  %v6673 = vsel %vm4221, %v6660, 0
  %v6676 = vsel %vm4221, %v6661, 0
  %v6679 = vsel %vm4221, %v6662, 0
  %v6682 = vsel %vm4221, %v6663, 0
  %v6685 = vsel %vm4221, %v6664, 0
  %v6688 = vsel %vm4221, %v6665, 0
  %6690 = vmatprep.subr.mxu0 0.0
  %6691 = vmatpush1.msra.mxu0 %v6642
  %6692 = vmatprep.subr.mxu0 0.0
  %6693 = vmatpush1.msra.mxu0 %v6643
  %6694 = vmatprep.subr.mxu0 0.0
  %6695 = vmatpush1.msra.mxu0 %v6644
  %6696 = vmatprep.subr.mxu0 0.0
  %6697 = vmatpush1.msra.mxu0 %v6645
  %6698 = vmatprep.subr.mxu0 0.0
  %6699 = vmatpush1.msra.mxu0 %v6646
  %6700 = vmatprep.subr.mxu0 0.0
  %6701 = vmatpush1.msra.mxu0 %v6647
  %6702 = vmatprep.subr.mxu0 0.0
  %6703 = vmatpush1.msra.mxu0 %v6648
  %6704 = vmatprep.subr.mxu0 0.0
  %6705 = vmatpush1.msra.mxu0 %v6649
  %6706 = vmatprep.subr.mxu0 0.0
  %6707 = vmatpush1.msra.mxu0 0.0
  %6708 = vmatprep.subr.mxu0 0.0
  %6709 = vmatpush1.msra.mxu0 0.0
  %6710 = vmatprep.subr.mxu0 0.0
  %6711 = vmatpush1.msra.mxu0 0.0
  %6712 = vmatprep.subr.mxu0 0.0
  %6713 = vmatpush1.msra.mxu0 0.0
  %6714 = vmatprep.subr.mxu0 0.0
  %6715 = vmatpush1.msra.mxu0 0.0
  %6716 = vmatprep.subr.mxu0 0.0
  %6717 = vmatpush1.msra.mxu0 0.0
  %6718 = vmatprep.subr.mxu0 0.0
  %6719 = vmatpush1.msra.mxu0 0.0
  %6720 = vmatprep.subr.mxu0 0.0
  %6721 = vmatpush1.msra.mxu0 0.0
  %6722 = vmatprep.subr.mxu0 0.0
  %6723 = vmatpush1.msra.mxu0 0.0
  %6724 = vmatprep.subr.mxu0 0.0
  %6725 = vmatpush1.msra.mxu0 0.0
  %6726 = vmatprep.subr.mxu0 0.0
  %6727 = vmatpush1.msra.mxu0 0.0
  %6728 = vmatprep.subr.mxu0 0.0
  %6729 = vmatpush1.msra.mxu0 0.0
  %6730 = vmatprep.subr.mxu0 0.0
  %6731 = vmatpush1.msra.mxu0 0.0
  %6732 = vmatprep.subr.mxu0 0.0
  %6733 = vmatpush1.msra.mxu0 0.0
  %6734 = vmatprep.subr.mxu0 0.0
  %6735 = vmatpush1.msra.mxu0 0.0
  %6736 = vmatprep.subr.mxu0 0.0
  %6737 = vmatpush1.msra.mxu0 0.0
  %6738 = vmatprep.subr.mxu0 0.0
  %6739 = vmatpush1.msra.mxu0 0.0
  %6740 = vmatprep.subr.mxu0 0.0
  %6741 = vmatpush1.msra.mxu0 0.0
  %6742 = vmatprep.subr.mxu0 0.0
  %6743 = vmatpush1.msra.mxu0 0.0
  %6744 = vmatprep.subr.mxu0 0.0
  %6745 = vmatpush1.msra.mxu0 0.0
  %6746 = vmatprep.subr.mxu0 0.0
  %6747 = vmatpush1.msra.mxu0 0.0
  %6748 = vmatprep.subr.mxu0 0.0
  %6749 = vmatpush1.msra.mxu0 0.0
  %6750 = vmatprep.subr.mxu0 0.0
  %6751 = vmatpush1.msra.mxu0 0.0
  %6752 = vmatprep.subr.mxu0 0.0
  %6753 = vmatpush1.msra.mxu0 0.0
  %6754 = vmatprep.mubr.f32.mxu0 0.0
  %6755 = vmatmul.mubr.f32.gmra.mrb[0].mxu0 %v6667
  %v6756 = vpop.f32.mrb[0].mxu0
  %v6757 = vadd.f32 0.0, %v6756
  %v6758 = vpop.f32.mrb[0].mxu0
  %6759 = vmatprep.mubr.f32.mxu0 0.0
  %6760 = vmatmul.mubr.f32.gmra.mrb[0].mxu0 %v6670
  %v6761 = vpop.f32.mrb[0].mxu0
  %v6762 = vadd.f32 0.0, %v6761
  %v6763 = vpop.f32.mrb[0].mxu0
  %6764 = vmatprep.mubr.f32.mxu0 0.0
  %6765 = vmatmul.mubr.f32.gmra.mrb[0].mxu0 %v6673
  %v6766 = vpop.f32.mrb[0].mxu0
  %v6767 = vadd.f32 0.0, %v6766
  %v6768 = vpop.f32.mrb[0].mxu0
  %6769 = vmatprep.mubr.f32.mxu0 0.0
  %6770 = vmatmul.mubr.f32.gmra.mrb[0].mxu0 %v6676
  %v6771 = vpop.f32.mrb[0].mxu0
  %v6772 = vadd.f32 0.0, %v6771
  %v6773 = vpop.f32.mrb[0].mxu0
  %6774 = vmatprep.mubr.f32.mxu0 0.0
  %6775 = vmatmul.mubr.f32.gmra.mrb[0].mxu0 %v6679
  %v6776 = vpop.f32.mrb[0].mxu0
  %v6777 = vadd.f32 0.0, %v6776
  %v6778 = vpop.f32.mrb[0].mxu0
  %6779 = vmatprep.mubr.f32.mxu0 0.0
  %6780 = vmatmul.mubr.f32.gmra.mrb[0].mxu0 %v6682
  %v6781 = vpop.f32.mrb[0].mxu0
  %v6782 = vadd.f32 0.0, %v6781
  %v6783 = vpop.f32.mrb[0].mxu0
  %6784 = vmatprep.mubr.f32.mxu0 0.0
  %6785 = vmatmul.mubr.f32.gmra.mrb[0].mxu0 %v6685
  %v6786 = vpop.f32.mrb[0].mxu0
  %v6787 = vadd.f32 0.0, %v6786
  %v6788 = vpop.f32.mrb[0].mxu0
  %6789 = vmatprep.mubr.f32.mxu0 0.0
  %6790 = vmatmul.mubr.f32.gmra.mrb[0].mxu0 %v6688
  %v6791 = vpop.f32.mrb[0].mxu0
  %v6792 = vadd.f32 0.0, %v6791
  %v6793 = vpop.f32.mrb[0].mxu0
  %6794 = vdwg.mxu0
  %v6796 = vsel %vm4221, %v6650, 0
  %v6799 = vsel %vm4221, %v6651, 0
  %v6802 = vsel %vm4221, %v6652, 0
  %v6805 = vsel %vm4221, %v6653, 0
  %v6808 = vsel %vm4221, %v6654, 0
  %v6811 = vsel %vm4221, %v6655, 0
  %v6814 = vsel %vm4221, %v6656, 0
  %v6817 = vsel %vm4221, %v6657, 0
  %6819 = vmatprep.subr.mxu0 0.0
  %6820 = vmatpush1.msra.mxu0 %v6602
  %6821 = vmatprep.subr.mxu0 0.0
  %6822 = vmatpush1.msra.mxu0 %v6603
  %6823 = vmatprep.subr.mxu0 0.0
  %6824 = vmatpush1.msra.mxu0 %v6604
  %6825 = vmatprep.subr.mxu0 0.0
  %6826 = vmatpush1.msra.mxu0 %v6605
  %6827 = vmatprep.subr.mxu0 0.0
  %6828 = vmatpush1.msra.mxu0 %v6606
  %6829 = vmatprep.subr.mxu0 0.0
  %6830 = vmatpush1.msra.mxu0 %v6607
  %6831 = vmatprep.subr.mxu0 0.0
  %6832 = vmatpush1.msra.mxu0 %v6608
  %6833 = vmatprep.subr.mxu0 0.0
  %6834 = vmatpush1.msra.mxu0 %v6609
  %6835 = vmatprep.subr.mxu0 0.0
  %6836 = vmatpush1.msra.mxu0 0.0
  %6837 = vmatprep.subr.mxu0 0.0
  %6838 = vmatpush1.msra.mxu0 0.0
  %6839 = vmatprep.subr.mxu0 0.0
  %6840 = vmatpush1.msra.mxu0 0.0
  %6841 = vmatprep.subr.mxu0 0.0
  %6842 = vmatpush1.msra.mxu0 0.0
  %6843 = vmatprep.subr.mxu0 0.0
  %6844 = vmatpush1.msra.mxu0 0.0
  %6845 = vmatprep.subr.mxu0 0.0
  %6846 = vmatpush1.msra.mxu0 0.0
  %6847 = vmatprep.subr.mxu0 0.0
  %6848 = vmatpush1.msra.mxu0 0.0
  %6849 = vmatprep.subr.mxu0 0.0
  %6850 = vmatpush1.msra.mxu0 0.0
  %6851 = vmatprep.subr.mxu0 0.0
  %6852 = vmatpush1.msra.mxu0 0.0
  %6853 = vmatprep.subr.mxu0 0.0
  %6854 = vmatpush1.msra.mxu0 0.0
  %6855 = vmatprep.subr.mxu0 0.0
  %6856 = vmatpush1.msra.mxu0 0.0
  %6857 = vmatprep.subr.mxu0 0.0
  %6858 = vmatpush1.msra.mxu0 0.0
  %6859 = vmatprep.subr.mxu0 0.0
  %6860 = vmatpush1.msra.mxu0 0.0
  %6861 = vmatprep.subr.mxu0 0.0
  %6862 = vmatpush1.msra.mxu0 0.0
  %6863 = vmatprep.subr.mxu0 0.0
  %6864 = vmatpush1.msra.mxu0 0.0
  %6865 = vmatprep.subr.mxu0 0.0
  %6866 = vmatpush1.msra.mxu0 0.0
  %6867 = vmatprep.subr.mxu0 0.0
  %6868 = vmatpush1.msra.mxu0 0.0
  %6869 = vmatprep.subr.mxu0 0.0
  %6870 = vmatpush1.msra.mxu0 0.0
  %6871 = vmatprep.subr.mxu0 0.0
  %6872 = vmatpush1.msra.mxu0 0.0
  %6873 = vmatprep.subr.mxu0 0.0
  %6874 = vmatpush1.msra.mxu0 0.0
  %6875 = vmatprep.subr.mxu0 0.0
  %6876 = vmatpush1.msra.mxu0 0.0
  %6877 = vmatprep.subr.mxu0 0.0
  %6878 = vmatpush1.msra.mxu0 0.0
  %6879 = vmatprep.subr.mxu0 0.0
  %6880 = vmatpush1.msra.mxu0 0.0
  %6881 = vmatprep.subr.mxu0 0.0
  %6882 = vmatpush1.msra.mxu0 0.0
  %6883 = vmatprep.mubr.f32.mxu0 0.0
  %6884 = vmatmul.mubr.f32.gmra.mrb[0].mxu0 %v6796
  %v6885 = vpop.f32.mrb[0].mxu0
  %v6886 = vadd.f32 %v6757, %v6885
  %v6887 = vpop.f32.mrb[0].mxu0
  %6888 = vmatprep.mubr.f32.mxu0 0.0
  %6889 = vmatmul.mubr.f32.gmra.mrb[0].mxu0 %v6799
  %v6890 = vpop.f32.mrb[0].mxu0
  %v6891 = vadd.f32 %v6762, %v6890
  %v6892 = vpop.f32.mrb[0].mxu0
  %6893 = vmatprep.mubr.f32.mxu0 0.0
  %6894 = vmatmul.mubr.f32.gmra.mrb[0].mxu0 %v6802
  %v6895 = vpop.f32.mrb[0].mxu0
  %v6896 = vadd.f32 %v6767, %v6895
  %v6897 = vpop.f32.mrb[0].mxu0
  %6898 = vmatprep.mubr.f32.mxu0 0.0
  %6899 = vmatmul.mubr.f32.gmra.mrb[0].mxu0 %v6805
  %v6900 = vpop.f32.mrb[0].mxu0
  %v6901 = vadd.f32 %v6772, %v6900
  %v6902 = vpop.f32.mrb[0].mxu0
  %6903 = vmatprep.mubr.f32.mxu0 0.0
  %6904 = vmatmul.mubr.f32.gmra.mrb[0].mxu0 %v6808
  %v6905 = vpop.f32.mrb[0].mxu0
  %v6906 = vadd.f32 %v6777, %v6905
  %v6907 = vpop.f32.mrb[0].mxu0
  %6908 = vmatprep.mubr.f32.mxu0 0.0
  %6909 = vmatmul.mubr.f32.gmra.mrb[0].mxu0 %v6811
  %v6910 = vpop.f32.mrb[0].mxu0
  %v6911 = vadd.f32 %v6782, %v6910
  %v6912 = vpop.f32.mrb[0].mxu0
  %6913 = vmatprep.mubr.f32.mxu0 0.0
  %6914 = vmatmul.mubr.f32.gmra.mrb[0].mxu0 %v6814
  %v6915 = vpop.f32.mrb[0].mxu0
  %v6916 = vadd.f32 %v6787, %v6915
  %v6917 = vpop.f32.mrb[0].mxu0
  %6918 = vmatprep.mubr.f32.mxu0 0.0
  %6919 = vmatmul.mubr.f32.gmra.mrb[0].mxu0 %v6817
  %v6920 = vpop.f32.mrb[0].mxu0
  %v6921 = vadd.f32 %v6792, %v6920
  %v6922 = vpop.f32.mrb[0].mxu0
  %6923 = vdwg.mxu0
  %v6924 = vld [vmem:[%s11] sm:$0xff]
  %v6925 = vld [vmem:[%s11 + $0x8] sm:$0xff]
  %v6926 = vld [vmem:[%s11 + $0x10] sm:$0xff]
  %v6927 = vld [vmem:[%s11 + $0x18] sm:$0xff]
  %v6928 = vld [vmem:[%s11 + $0x20] sm:$0xff]
  %v6929 = vld [vmem:[%s11 + $0x28] sm:$0xff]
  %v6930 = vld [vmem:[%s11 + $0x30] sm:$0xff]
  %v6931 = vld [vmem:[%s11 + $0x38] sm:$0xff]
  %6933 = vset.pattern.permute.xlu0 0
  %6934 = vperm.xlu0 %6933, %v6924
  %v6935 = vpop.permute.xlu0 %6934
  %6938 = vset.pattern.permute.xlu0 0
  %6939 = vperm.xlu0 %6938, %v6925
  %v6940 = vpop.permute.xlu0 %6939
  %6943 = vset.pattern.permute.xlu0 0
  %6944 = vperm.xlu0 %6943, %v6926
  %v6945 = vpop.permute.xlu0 %6944
  %6948 = vset.pattern.permute.xlu0 0
  %6949 = vperm.xlu0 %6948, %v6927
  %v6950 = vpop.permute.xlu0 %6949
  %6953 = vset.pattern.permute.xlu0 0
  %6954 = vperm.xlu0 %6953, %v6928
  %v6955 = vpop.permute.xlu0 %6954
  %6958 = vset.pattern.permute.xlu0 0
  %6959 = vperm.xlu0 %6958, %v6929
  %v6960 = vpop.permute.xlu0 %6959
  %6963 = vset.pattern.permute.xlu0 0
  %6964 = vperm.xlu0 %6963, %v6930
  %v6965 = vpop.permute.xlu0 %6964
  %6968 = vset.pattern.permute.xlu0 0
  %6969 = vperm.xlu0 %6968, %v6931
  %v6970 = vpop.permute.xlu0 %6969
  %v6972 = vadd.f32 %v6886, %v6935
  %v6973 = vadd.f32 %v6891, %v6940
  %v6974 = vadd.f32 %v6896, %v6945
  %v6975 = vadd.f32 %v6901, %v6950
  %v6976 = vadd.f32 %v6906, %v6955
  %v6977 = vadd.f32 %v6911, %v6960
  %v6978 = vadd.f32 %v6916, %v6965
  %v6979 = vadd.f32 %v6921, %v6970
  %v6980 = vmax.f32 %v6972, 0.0
  %v6981 = vmax.f32 %v6973, 0.0
  %v6982 = vmax.f32 %v6974, 0.0
  %v6983 = vmax.f32 %v6975, 0.0
  %v6984 = vmax.f32 %v6976, 0.0
  %v6985 = vmax.f32 %v6977, 0.0
  %v6986 = vmax.f32 %v6978, 0.0
  %v6987 = vmax.f32 %v6979, 0.0
  %v6988 = vld [vmem:[%s12] sm:$0xff]
  %v6989 = vld [vmem:[%s12 + $0x8] sm:$0xff]
  %v6990 = vld [vmem:[%s12 + $0x10] sm:$0xff]
  %v6991 = vld [vmem:[%s12 + $0x18] sm:$0xff]
  %v6992 = vld [vmem:[%s12 + $0x20] sm:$0xff]
  %v6993 = vld [vmem:[%s12 + $0x28] sm:$0xff]
  %v6994 = vld [vmem:[%s12 + $0x30] sm:$0xff]
  %v6995 = vld [vmem:[%s12 + $0x38] sm:$0xff]
  %v6996 = vld [vmem:[%s13] sm:$0xff]
  %v6997 = vld [vmem:[%s13 + $0x8] sm:$0xff]
  %v6998 = vld [vmem:[%s13 + $0x10] sm:$0xff]
  %v6999 = vld [vmem:[%s13 + $0x18] sm:$0xff]
  %v7000 = vld [vmem:[%s13 + $0x20] sm:$0xff]
  %v7001 = vld [vmem:[%s13 + $0x28] sm:$0xff]
  %v7002 = vld [vmem:[%s13 + $0x30] sm:$0xff]
  %v7003 = vld [vmem:[%s13 + $0x38] sm:$0xff]
  %7005 = vset.pattern.permute.xlu0 0
  %7006 = vperm.xlu0 %7005, %v6996
  %v7007 = vpop.permute.xlu0 %7006
  %7010 = vset.pattern.permute.xlu0 0
  %7011 = vperm.xlu0 %7010, %v6997
  %v7012 = vpop.permute.xlu0 %7011
  %7015 = vset.pattern.permute.xlu0 0
  %7016 = vperm.xlu0 %7015, %v6998
  %v7017 = vpop.permute.xlu0 %7016
  %7020 = vset.pattern.permute.xlu0 0
  %7021 = vperm.xlu0 %7020, %v6999
  %v7022 = vpop.permute.xlu0 %7021
  %7025 = vset.pattern.permute.xlu0 0
  %7026 = vperm.xlu0 %7025, %v7000
  %v7027 = vpop.permute.xlu0 %7026
  %7030 = vset.pattern.permute.xlu0 0
  %7031 = vperm.xlu0 %7030, %v7001
  %v7032 = vpop.permute.xlu0 %7031
  %7035 = vset.pattern.permute.xlu0 0
  %7036 = vperm.xlu0 %7035, %v7002
  %v7037 = vpop.permute.xlu0 %7036
  %7040 = vset.pattern.permute.xlu0 0
  %7041 = vperm.xlu0 %7040, %v7003
  %v7042 = vpop.permute.xlu0 %7041
  %v7045 = vsel %vm4221, %v6988, 0
  %v7048 = vsel %vm4221, %v6989, 0
  %v7051 = vsel %vm4221, %v6990, 0
  %v7054 = vsel %vm4221, %v6991, 0
  %v7057 = vsel %vm4221, %v6992, 0
  %v7060 = vsel %vm4221, %v6993, 0
  %v7063 = vsel %vm4221, %v6994, 0
  %v7066 = vsel %vm4221, %v6995, 0
  %7068 = vmatprep.subr.mxu0 0.0
  %7069 = vmatpush1.msra.mxu0 %v6980
  %7070 = vmatprep.subr.mxu0 0.0
  %7071 = vmatpush1.msra.mxu0 %v6981
  %7072 = vmatprep.subr.mxu0 0.0
  %7073 = vmatpush1.msra.mxu0 %v6982
  %7074 = vmatprep.subr.mxu0 0.0
  %7075 = vmatpush1.msra.mxu0 %v6983
  %7076 = vmatprep.subr.mxu0 0.0
  %7077 = vmatpush1.msra.mxu0 %v6984
  %7078 = vmatprep.subr.mxu0 0.0
  %7079 = vmatpush1.msra.mxu0 %v6985
  %7080 = vmatprep.subr.mxu0 0.0
  %7081 = vmatpush1.msra.mxu0 %v6986
  %7082 = vmatprep.subr.mxu0 0.0
  %7083 = vmatpush1.msra.mxu0 %v6987
  %7084 = vmatprep.subr.mxu0 0.0
  %7085 = vmatpush1.msra.mxu0 0.0
  %7086 = vmatprep.subr.mxu0 0.0
  %7087 = vmatpush1.msra.mxu0 0.0
  %7088 = vmatprep.subr.mxu0 0.0
  %7089 = vmatpush1.msra.mxu0 0.0
  %7090 = vmatprep.subr.mxu0 0.0
  %7091 = vmatpush1.msra.mxu0 0.0
  %7092 = vmatprep.subr.mxu0 0.0
  %7093 = vmatpush1.msra.mxu0 0.0
  %7094 = vmatprep.subr.mxu0 0.0
  %7095 = vmatpush1.msra.mxu0 0.0
  %7096 = vmatprep.subr.mxu0 0.0
  %7097 = vmatpush1.msra.mxu0 0.0
  %7098 = vmatprep.subr.mxu0 0.0
  %7099 = vmatpush1.msra.mxu0 0.0
  %7100 = vmatprep.subr.mxu0 0.0
  %7101 = vmatpush1.msra.mxu0 0.0
  %7102 = vmatprep.subr.mxu0 0.0
  %7103 = vmatpush1.msra.mxu0 0.0
  %7104 = vmatprep.subr.mxu0 0.0
  %7105 = vmatpush1.msra.mxu0 0.0
  %7106 = vmatprep.subr.mxu0 0.0
  %7107 = vmatpush1.msra.mxu0 0.0
  %7108 = vmatprep.subr.mxu0 0.0
  %7109 = vmatpush1.msra.mxu0 0.0
  %7110 = vmatprep.subr.mxu0 0.0
  %7111 = vmatpush1.msra.mxu0 0.0
  %7112 = vmatprep.subr.mxu0 0.0
  %7113 = vmatpush1.msra.mxu0 0.0
  %7114 = vmatprep.subr.mxu0 0.0
  %7115 = vmatpush1.msra.mxu0 0.0
  %7116 = vmatprep.subr.mxu0 0.0
  %7117 = vmatpush1.msra.mxu0 0.0
  %7118 = vmatprep.subr.mxu0 0.0
  %7119 = vmatpush1.msra.mxu0 0.0
  %7120 = vmatprep.subr.mxu0 0.0
  %7121 = vmatpush1.msra.mxu0 0.0
  %7122 = vmatprep.subr.mxu0 0.0
  %7123 = vmatpush1.msra.mxu0 0.0
  %7124 = vmatprep.subr.mxu0 0.0
  %7125 = vmatpush1.msra.mxu0 0.0
  %7126 = vmatprep.subr.mxu0 0.0
  %7127 = vmatpush1.msra.mxu0 0.0
  %7128 = vmatprep.subr.mxu0 0.0
  %7129 = vmatpush1.msra.mxu0 0.0
  %7130 = vmatprep.subr.mxu0 0.0
  %7131 = vmatpush1.msra.mxu0 0.0
  %7132 = vmatprep.mubr.f32.mxu0 0.0
  %7133 = vmatmul.mubr.f32.gmra.mrb[0].mxu0 %v7045
  %v7134 = vpop.f32.mrb[0].mxu0
  %v7135 = vadd.f32 %v7007, %v7134
  %v7136 = vpop.f32.mrb[0].mxu0
  %7137 = vmatprep.mubr.f32.mxu0 0.0
  %7138 = vmatmul.mubr.f32.gmra.mrb[0].mxu0 %v7048
  %v7139 = vpop.f32.mrb[0].mxu0
  %v7140 = vadd.f32 %v7012, %v7139
  %v7141 = vpop.f32.mrb[0].mxu0
  %7142 = vmatprep.mubr.f32.mxu0 0.0
  %7143 = vmatmul.mubr.f32.gmra.mrb[0].mxu0 %v7051
  %v7144 = vpop.f32.mrb[0].mxu0
  %v7145 = vadd.f32 %v7017, %v7144
  %v7146 = vpop.f32.mrb[0].mxu0
  %7147 = vmatprep.mubr.f32.mxu0 0.0
  %7148 = vmatmul.mubr.f32.gmra.mrb[0].mxu0 %v7054
  %v7149 = vpop.f32.mrb[0].mxu0
  %v7150 = vadd.f32 %v7022, %v7149
  %v7151 = vpop.f32.mrb[0].mxu0
  %7152 = vmatprep.mubr.f32.mxu0 0.0
  %7153 = vmatmul.mubr.f32.gmra.mrb[0].mxu0 %v7057
  %v7154 = vpop.f32.mrb[0].mxu0
  %v7155 = vadd.f32 %v7027, %v7154
  %v7156 = vpop.f32.mrb[0].mxu0
  %7157 = vmatprep.mubr.f32.mxu0 0.0
  %7158 = vmatmul.mubr.f32.gmra.mrb[0].mxu0 %v7060
  %v7159 = vpop.f32.mrb[0].mxu0
  %v7160 = vadd.f32 %v7032, %v7159
  %v7161 = vpop.f32.mrb[0].mxu0
  %7162 = vmatprep.mubr.f32.mxu0 0.0
  %7163 = vmatmul.mubr.f32.gmra.mrb[0].mxu0 %v7063
  %v7164 = vpop.f32.mrb[0].mxu0
  %v7165 = vadd.f32 %v7037, %v7164
  %v7166 = vpop.f32.mrb[0].mxu0
  %7167 = vmatprep.mubr.f32.mxu0 0.0
  %7168 = vmatmul.mubr.f32.gmra.mrb[0].mxu0 %v7066
  %v7169 = vpop.f32.mrb[0].mxu0
  %v7170 = vadd.f32 %v7042, %v7169
  %v7171 = vpop.f32.mrb[0].mxu0
  %7172 = vdwg.mxu0
  %vm7173 = vcmask 15360
  %7174 = vst.msk [vmem:[%s14] sm:$0xff] %vm7173, %v7135
  %7175 = vst.msk [vmem:[%s14 + $0x8] sm:$0xff] %vm7173, %v7140
  %7176 = vst.msk [vmem:[%s14 + $0x10] sm:$0xff] %vm7173, %v7145
  %7177 = vst.msk [vmem:[%s14 + $0x18] sm:$0xff] %vm7173, %v7150
  %7178 = vst.msk [vmem:[%s14 + $0x20] sm:$0xff] %vm7173, %v7155
  %7179 = vst.msk [vmem:[%s14 + $0x28] sm:$0xff] %vm7173, %v7160
  %7180 = vst.msk [vmem:[%s14 + $0x30] sm:$0xff] %vm7173, %v7165
  %7181 = vst.msk [vmem:[%s14 + $0x38] sm:$0xff] %vm7173, %v7170
  %v7182 = vsel %vm7173, %v7135, -inf
  %v7183 = vsel %vm7173, %v7140, -inf
  %v7184 = vsel %vm7173, %v7145, -inf
  %v7185 = vsel %vm7173, %v7150, -inf
  %v7186 = vsel %vm7173, %v7155, -inf
  %v7187 = vmax.f32 %v7182, %v7186
  %v7188 = vsel %vm7173, %v7160, -inf
  %v7189 = vmax.f32 %v7183, %v7188
  %v7190 = vsel %vm7173, %v7165, -inf
  %v7191 = vmax.f32 %v7184, %v7190
  %v7192 = vsel %vm7173, %v7170, -inf
  %v7193 = vmax.f32 %v7185, %v7192
  %v7194 = vmax.f32 %v7187, %v7189
  %v7195 = vmax.f32 %v7191, %v7193
  %v7196 = vmax.f32 %v7194, %v7195
  %v7197 = vrot.slane %v7196, 4
  %v7198 = vmax.f32 %v7196, %v7197
  %v7199 = vrot.slane %v7198, 2
  %v7200 = vmax.f32 %v7198, %v7199
  %v7201 = vrot.slane %v7200, 1
  %v7202 = vmax.f32 %v7200, %v7201
  %v7203 = vsub.f32 %v7135, %v7202
  %v7204 = vsub.f32 %v7140, %v7202
  %v7205 = vsub.f32 %v7145, %v7202
  %v7206 = vsub.f32 %v7150, %v7202
  %v7207 = vsub.f32 %v7155, %v7202
  %v7208 = vsub.f32 %v7160, %v7202
  %v7209 = vsub.f32 %v7165, %v7202
  %v7210 = vsub.f32 %v7170, %v7202
  %v7211 = vmul.f32 %v7203, 1.442695
  %v7212 = vpow.pop %v7211
  %v7213 = vmul.f32 %v7204, 1.442695
  %v7214 = vpow.pop %v7213
  %v7215 = vmul.f32 %v7205, 1.442695
  %v7216 = vpow.pop %v7215
  %v7217 = vmul.f32 %v7206, 1.442695
  %v7218 = vpow.pop %v7217
  %v7219 = vmul.f32 %v7207, 1.442695
  %v7220 = vpow.pop %v7219
  %v7221 = vmul.f32 %v7208, 1.442695
  %v7222 = vpow.pop %v7221
  %v7223 = vmul.f32 %v7209, 1.442695
  %v7224 = vpow.pop %v7223
  %v7225 = vmul.f32 %v7210, 1.442695
  %v7226 = vpow.pop %v7225
  %v7227 = vsel %vm7173, %v7212, 0.0
  %v7228 = vsel %vm7173, %v7214, 0.0
  %v7229 = vadd.f32 %v7227, %v7228
  %v7230 = vsel %vm7173, %v7216, 0.0
  %v7231 = vadd.f32 %v7229, %v7230
  %v7232 = vsel %vm7173, %v7218, 0.0
  %v7233 = vadd.f32 %v7231, %v7232
  %v7234 = vsel %vm7173, %v7220, 0.0
  %v7235 = vadd.f32 %v7233, %v7234
  %v7236 = vsel %vm7173, %v7222, 0.0
  %v7237 = vadd.f32 %v7235, %v7236
  %v7238 = vsel %vm7173, %v7224, 0.0
  %v7239 = vadd.f32 %v7237, %v7238
  %v7240 = vsel %vm7173, %v7226, 0.0
  %v7241 = vadd.f32 %v7239, %v7240
  %v7242 = vrot.slane %v7241, 4
  %v7243 = vadd.f32 %v7241, %v7242
  %v7244 = vrot.slane %v7243, 2
  %v7245 = vadd.f32 %v7243, %v7244
  %v7246 = vrot.slane %v7245, 1
  %v7247 = vadd.f32 %v7245, %v7246
  %v7248 = vlog2.pop %v7247
  %v7249 = vmul.f32 %v7248, 0.6931472
  %v7250 = vsub.f32 %v7203, %v7249
  %v7251 = vsub.f32 %v7204, %v7249
  %v7252 = vsub.f32 %v7205, %v7249
  %v7253 = vsub.f32 %v7206, %v7249
  %v7254 = vsub.f32 %v7207, %v7249
  %v7255 = vsub.f32 %v7208, %v7249
  %v7256 = vsub.f32 %v7209, %v7249
  %v7257 = vsub.f32 %v7210, %v7249
  %7258 = vst.msk [vmem:[%s15] sm:$0xff] %vm7173, %v7250
  %7259 = vst.msk [vmem:[%s15 + $0x8] sm:$0xff] %vm7173, %v7251
  %7260 = vst.msk [vmem:[%s15 + $0x10] sm:$0xff] %vm7173, %v7252
  %7261 = vst.msk [vmem:[%s15 + $0x18] sm:$0xff] %vm7173, %v7253
  %7262 = vst.msk [vmem:[%s15 + $0x20] sm:$0xff] %vm7173, %v7254
  %7263 = vst.msk [vmem:[%s15 + $0x28] sm:$0xff] %vm7173, %v7255
  %7264 = vst.msk [vmem:[%s15 + $0x30] sm:$0xff] %vm7173, %v7256
  %7265 = vst.msk [vmem:[%s15 + $0x38] sm:$0xff] %vm7173, %v7257
  // Predicated region
  $region58: #{dqn_forward.1} parent=0 // pred_check
    _
  $region59: #{dqn_forward.1} parent=0 // pred_check_branch
    %7267 = sbr.rel (0) target = $region61
  $region60: #{dqn_forward.1} parent=0 // pred_region
    _
  $region61: #{dqn_forward.1} parent=0 // pred_fallthru
    _
  // Predicated region
  $region62: #{dqn_forward.1} parent=0 // pred_check
    _
  $region63: #{dqn_forward.1} parent=0 // pred_check_branch
    %7269 = sbr.rel (0) target = $region65
  $region64: #{dqn_forward.1} parent=0 // pred_region
    _
  $region65: #{dqn_forward.1} parent=0 // pred_fallthru
    _
  // Predicated region
  $region66: #{dqn_forward.1} parent=0 // pred_check
    _
  $region67: #{dqn_forward.1} parent=0 // pred_check_branch
    %7271 = sbr.rel (0) target = $region69
  $region68: #{dqn_forward.1} parent=0 // pred_region
    _
  $region69: #{dqn_forward.1} parent=0 // pred_fallthru
    _
  // Predicated region
  $region70: #{dqn_forward.1} parent=0 // pred_check
    _
  $region71: #{dqn_forward.1} parent=0 // pred_check_branch
    %7273 = sbr.rel (0) target = $region73
  $region72: #{dqn_forward.1} parent=0 // pred_region
    _
  $region73: #{dqn_forward.1} parent=0 // pred_fallthru
    _

</llo_original>
